<compile_context>
chip_gen: v6e
topology: v6e:2x2x1
jax: 0.10.0
libtpu: 0.0.40
codegen_flags: <defaults>
</compile_context>

<pallas_src>
import functools

import jax
import jax.numpy as jnp
from jax import lax
from jax.experimental import pallas as pl
from jax.experimental.pallas import tpu as pltpu


def _round_up(x, m):
    return (x + m - 1) // m * m


def _choose_chunk(T, target):
    """Pick a time-chunk size <= target that balances padding vs per-chunk overhead."""
    target = max(1, min(target, T))
    best_c, best_cost = 1, None
    for c in range(1, target + 1):
        steps = _round_up(T, c)              # padded serial steps
        cost = steps + 4 * (steps // c)      # + ~per-chunk grid/DMA overhead
        if best_cost is None or cost <= best_cost:
            best_cost, best_c = cost, c      # ties -> larger chunk
    return best_c


# --------------------------- fused recurrent kernel --------------------------

def _lstm_fused_kernel(x_ref, wih_ref, whh_ref, bias_ref, out_ref,
                       h_ref, c_ref, gx_ref, *,
                       hidden_pad, chunk, batch_pad, n_chunks, t_real):
    """One grid step = one direction (axis 0) x one time-chunk (axis 1).

      x_ref:    (Tc*Bp, Fp)        layer input slab for this chunk (bf16/f32)
      wih_ref:  (1, Fp, 4*Hp)      input-projection weights (resident per dir)
      whh_ref:  (1, Hp, 4*Hp)      recurrent weights (resident per dir)
      bias_ref: (1, 1, 4*Hp) f32   b_ih + b_hh
      out_ref:  (Tc*Bp, Hp)        hidden-state outputs for this chunk
      h/c_ref:  (Bp, Hp) f32       state carried across chunks (per core)
      gx_ref:   (Tc*Bp, 4*Hp) f32  in-kernel scratch for the chunk's input GEMM
    """
    d = pl.program_id(0)            # direction (0 = forward, 1 = reverse)
    t = pl.program_id(1)            # chunk counter along the grid
    Hp, Tc, Bp = hidden_pad, chunk, batch_pad

    @pl.when(t == 0)
    def _():
        h_ref[...] = jnp.zeros_like(h_ref)
        c_ref[...] = jnp.zeros_like(c_ref)

    # Fused input projection for the whole chunk: one big GEMM, M = Tc*Bp.
    gx_ref[...] = (jnp.dot(x_ref[...], wih_ref[0],
                           preferred_element_type=jnp.float32)
                   + bias_ref[0])

    pad = Tc * n_chunks - t_real          # static python int
    if pad:
        # global time of the first row of this chunk (mirrored for reverse dir)
        base_t = (t + d * (n_chunks - 1 - 2 * t)) * Tc

    h = h_ref[...]
    c = c_ref[...]
    w_dtype = whh_ref.dtype

    def _sig(v):  # sigmoid via a single tanh push on the EUP
        return 0.5 * jnp.tanh(0.5 * v) + 0.5

    # TODO(synk): on v5e, hold W_hh in MXU staging registers across the chunk
    # (pltpu.matmul_push_rhs / matmul_acc_lhs) to avoid re-pushing weights.
    for s in range(Tc):
        idx = s + d * (Tc - 1 - 2 * s)            # forward: s ; reverse: Tc-1-s
        row = pl.multiple_of(idx * Bp, Bp)
        gates = gx_ref[pl.ds(row, Bp), :] + jnp.dot(
            h.astype(w_dtype), whh_ref[0], preferred_element_type=jnp.float32)
        i = _sig(gates[:, 0 * Hp:1 * Hp])
        f = _sig(gates[:, 1 * Hp:2 * Hp])
        g = jnp.tanh(gates[:, 2 * Hp:3 * Hp])
        o = _sig(gates[:, 3 * Hp:4 * Hp])
        c_new = f * c + i * g
        h_new = o * jnp.tanh(c_new)
        if pad:
            # Freeze the state on zero-padded timesteps; without this the
            # reverse direction (which meets the trailing pad first) would be
            # corrupted by bias-driven state.
            valid = (base_t + idx) < t_real
            c = jnp.where(valid, c_new, c)
            h = jnp.where(valid, h_new, h)
        else:
            c, h = c_new, h_new
        out_ref[pl.ds(row, Bp), :] = h.astype(out_ref.dtype)

    h_ref[...] = h
    c_ref[...] = c


def _lstm_layer(feats2d, wih_all, whh_all, bias_all, *,
                chunk, batch_pad, hidden_pad, t_real, out_dtype):
    """Run one LSTM layer (all directions fused) over a (T_pad*Bp, Fp) slab."""
    TB, Fp = feats2d.shape
    ndirs = wih_all.shape[0]
    Hp, Tc, Bp = hidden_pad, chunk, batch_pad
    nT = TB // (Tc * Bp)

    def x_map(d, t):
        return (t + d * (nT - 1 - 2 * t), 0)      # fwd: t ; rev: nT-1-t

    def w_map(d, t):
        return (d, 0, 0)

    def out_map(d, t):
        return (t + d * (nT - 1 - 2 * t), d)      # each dir owns its Hp lane slab

    kernel = functools.partial(_lstm_fused_kernel, hidden_pad=Hp, chunk=Tc,
                               batch_pad=Bp, n_chunks=nT, t_real=t_real)

    # Rough VMEM budget (double-buffered blocks + scratch); only raise the
    # scoped limit when the default would be too small, capped by device VMEM.
    isz = jnp.dtype(out_dtype).itemsize
    wsz = jnp.dtype(wih_all.dtype).itemsize
    est = (2 * Tc * Bp * Fp * isz + 2 * Tc * Bp * Hp * isz
           + 2 * Fp * 4 * Hp * wsz + 2 * Hp * 4 * Hp * wsz + 2 * 4 * Hp * 4
           + 2 * Bp * Hp * 4 + Tc * Bp * 4 * Hp * 4)
    cp_kwargs = dict(dimension_semantics=("parallel", "arbitrary"))
    if est > 12 * 1024 * 1024:
        try:
            cap = pltpu.get_tpu_info().vmem_capacity_bytes
        except Exception:
            cap = 64 * 1024 * 1024                 # assume the tightest (v7x)
        cp_kwargs["vmem_limit_bytes"] = max(16 << 20,
                                            min(int(est * 5 // 4), cap - (8 << 20)))

    return pl.pallas_call(
        kernel,
        out_shape=jax.ShapeDtypeStruct((TB, ndirs * Hp), out_dtype),
        grid_spec=pltpu.PrefetchScalarGridSpec(
            num_scalar_prefetch=0,
            grid=(ndirs, nT),
            in_specs=[
                pl.BlockSpec((Tc * Bp, Fp), x_map),
                pl.BlockSpec((1, Fp, 4 * Hp), w_map),
                pl.BlockSpec((1, Hp, 4 * Hp), w_map),
                pl.BlockSpec((1, 1, 4 * Hp), w_map),
            ],
            out_specs=pl.BlockSpec((Tc * Bp, Hp), out_map),
            scratch_shapes=[
                pltpu.VMEM((Bp, Hp), jnp.float32),          # h
                pltpu.VMEM((Bp, Hp), jnp.float32),          # c
                pltpu.VMEM((Tc * Bp, 4 * Hp), jnp.float32),  # gx chunk
            ],
        ),
        compiler_params=pltpu.CompilerParams(**cp_kwargs),
    )(feats2d, wih_all, whh_all, bias_all)


# --------------------------- weight packing ----------------------------------

def _pack_dir_weights(w_ih, w_hh, b_ih, b_hh, H, Hp, in_raw, in_pad, dtype):
    """Pad/transpose one direction's weights to the lane-dense [i|f|g|o] layout.

    Returns:
      wih_p:  (Fp, 4*Hp)  with Fp = sum(in_pad); padded rows/cols are zero
      whh_p:  (Hp, 4*Hp)
      bias_p: (1, 4*Hp) f32   (b_ih + b_hh)
    Padded hidden lanes produce exactly-zero h through the recurrence.
    """
    G = 4 * Hp
    Fp = sum(in_pad)
    w_ih = jnp.asarray(w_ih)
    w_hh = jnp.asarray(w_hh)
    b = (jnp.asarray(b_ih) + jnp.asarray(b_hh)).astype(jnp.float32)
    wih_p = jnp.zeros((Fp, G), dtype)
    whh_p = jnp.zeros((Hp, G), dtype)
    bias_p = jnp.zeros((1, G), jnp.float32)
    for k in range(4):
        cols = slice(k * Hp, k * Hp + H)
        rows = slice(k * H, (k + 1) * H)
        whh_p = whh_p.at[:H, cols].set(w_hh[rows, :].T.astype(dtype))
        bias_p = bias_p.at[0, cols].set(b[rows])
        src_off, dst_off = 0, 0
        for fr, fp in zip(in_raw, in_pad):
            wih_p = wih_p.at[dst_off:dst_off + fr, cols].set(
                w_ih[rows, src_off:src_off + fr].T.astype(dtype))
            src_off += fr
            dst_off += fp
    return wih_p, whh_p, bias_p


# --------------------------- full forward ------------------------------------

def lstm_forward(x_btd, params, hidden_size, bidirectional, *,
                 time_chunk=32, matmul_dtype=jnp.bfloat16):
    """Mirrors Lstm.forward with hidden_state=None (fresh zero state).

    x_btd: (B, T, D) batch_first input.
    params: list over layers; each layer is a list over directions of
            (w_ih(4H,in), w_hh(4H,H), b_ih(4H,), b_hh(4H,)).
    Returns output (B, T, H * num_directions).
    matmul_dtype: bf16 by default (MXU inputs / inter-layer activations); gate
                  math, accumulation and h/c state stay f32.
    """
    # TODO(synk): final (h_n, c_n) are not returned (module only returns `output`).
    B, T, D = x_btd.shape
    H = hidden_size
    ndirs = 2 if bidirectional else 1
    Bp = _round_up(B, 8)            # sublane-dense batch
    Hp = _round_up(H, 128)          # lane-dense hidden / gate slabs
    Dp = _round_up(D, 128)

    Tc = _choose_chunk(T, time_chunk)
    T_pad = _round_up(T, Tc)

    x = x_btd.astype(matmul_dtype)
    x = jnp.pad(x, ((0, Bp - B), (0, T_pad - T), (0, Dp - D)))
    # time-major, flattened (T*B, F) lane-dense slab; reshaped once here only.
    feats = jnp.transpose(x, (1, 0, 2)).reshape(T_pad * Bp, Dp)

    in_raw, in_pad = [D], [Dp]
    for layer_params in params:
        packed = [_pack_dir_weights(w_ih, w_hh, b_ih, b_hh, H, Hp,
                                    in_raw, in_pad, matmul_dtype)
                  for (w_ih, w_hh, b_ih, b_hh) in layer_params]
        wih_all = jnp.stack([p[0] for p in packed])    # (ndirs, Fp, 4Hp)
        whh_all = jnp.stack([p[1] for p in packed])    # (ndirs, Hp, 4Hp)
        bias_all = jnp.stack([p[2] for p in packed])   # (ndirs, 1, 4Hp)

        feats = _lstm_layer(feats, wih_all, whh_all, bias_all,
                            chunk=Tc, batch_pad=Bp, hidden_pad=Hp,
                            t_real=T, out_dtype=matmul_dtype)
        in_raw, in_pad = [H] * ndirs, [Hp] * ndirs

    out = feats.reshape(T_pad, Bp, ndirs * Hp)
    parts = [out[:T, :B, dd * Hp:dd * Hp + H] for dd in range(ndirs)]
    out = jnp.concatenate(parts, axis=-1) if ndirs > 1 else parts[0]
    return jnp.transpose(out, (1, 0, 2)).astype(x_btd.dtype)   # (B, T, H*dirs)


# ---------------- pure-JAX reference (for correctness check) ----------------

def _ref_single_direction(x_tbd, w_ih, w_hh, b_ih, b_hh):
    T, B, _ = x_tbd.shape
    H = w_hh.shape[1]

    def step(carry, x_t):
        h, c = carry
        gates = x_t @ w_ih.T + h @ w_hh.T + b_ih + b_hh
        i, f, g, o = jnp.split(gates, 4, axis=-1)
        i, f, o = jax.nn.sigmoid(i), jax.nn.sigmoid(f), jax.nn.sigmoid(o)
        g = jnp.tanh(g)
        c = f * c + i * g
        h = o * jnp.tanh(c)
        return (h, c), h

    init = (jnp.zeros((B, H), x_tbd.dtype), jnp.zeros((B, H), x_tbd.dtype))
    _, ys = lax.scan(step, init, x_tbd)
    return ys


def _ref_lstm_forward(x_btd, params):
    h = jnp.transpose(x_btd, (1, 0, 2))
    for layer_params in params:
        outs = []
        for d, (w_ih, w_hh, b_ih, b_hh) in enumerate(layer_params):
            inp = h if d == 0 else jnp.flip(h, axis=0)
            y = _ref_single_direction(inp, w_ih, w_hh, b_ih, b_hh)
            if d == 1:
                y = jnp.flip(y, axis=0)
            outs.append(y)
        h = jnp.concatenate(outs, axis=-1) if len(outs) > 1 else outs[0]
    return jnp.transpose(h, (1, 0, 2))


# ---------------- parameter init (PyTorch nn.LSTM default) ------------------

def init_lstm_params(key, latent_dim, hidden_size, lstm_layers, bidirectional):
    num_dirs = 2 if bidirectional else 1
    stdv = 1.0 / (hidden_size ** 0.5)
    params = []
    for layer in range(lstm_layers):
        in_dim = latent_dim if layer == 0 else hidden_size * num_dirs
        layer_params = []
        for _ in range(num_dirs):
            key, k1, k2, k3, k4 = jax.random.split(key, 5)
            w_ih = jax.random.uniform(k1, (4 * hidden_size, in_dim), jnp.float32, -stdv, stdv)
            w_hh = jax.random.uniform(k2, (4 * hidden_size, hidden_size), jnp.float32, -stdv, stdv)
            b_ih = jax.random.uniform(k3, (4 * hidden_size,), jnp.float32, -stdv, stdv)
            b_hh = jax.random.uniform(k4, (4 * hidden_size,), jnp.float32, -stdv, stdv)
            layer_params.append((w_ih, w_hh, b_ih, b_hh))
        params.append(layer_params)
    return params


if __name__ == "__main__":
    # Small config consistent with Lstm(latent_dim, hidden_size, lstm_layers, bidirectional)
    latent_dim, hidden_size, lstm_layers, bidirectional = 32, 32, 2, True
    batch, seq = 2, 8

    key = jax.random.PRNGKey(0)
    kx, kp = jax.random.split(key)
    x = jax.random.normal(kx, (batch, seq, latent_dim), jnp.float32)   # (B, T, D) batch_first
    params = init_lstm_params(kp, latent_dim, hidden_size, lstm_layers, bidirectional)

    ref = jax.block_until_ready(_ref_lstm_forward(x, params))

    # Default path: bf16 MXU inputs / activations, f32 gate math & state.
    fwd = jax.jit(lambda xx, pp: lstm_forward(xx, pp, hidden_size, bidirectional))
    out = jax.block_until_ready(fwd(x, params))
    assert out.shape == (batch, seq, hidden_size * (2 if bidirectional else 1))
    assert jnp.allclose(out, ref, atol=5e-2, rtol=5e-2), "bf16 kernel mismatch vs reference"

    # Full-precision path: tight tolerance against the f32 reference.
    fwd32 = jax.jit(lambda xx, pp: lstm_forward(xx, pp, hidden_size, bidirectional,
                                                matmul_dtype=jnp.float32))
    out32 = jax.block_until_ready(fwd32(x, params))
    assert jnp.allclose(out32, ref, atol=1e-3, rtol=1e-3), "f32 kernel mismatch vs reference"

    print("KERNEL_OK")
</pallas_src>

<mosaic_0001>
module attributes {stable_mosaic.version = 11 : i64} {
  func.func @_lstm_fused_kernel(%arg0: i32, %arg1: i32, %arg2: memref<64x128xbf16, #tpu.memory_space<vmem>>, %arg3: memref<1x128x512xbf16, #tpu.memory_space<vmem>>, %arg4: memref<1x128x512xbf16, #tpu.memory_space<vmem>>, %arg5: memref<1x1x512xf32, #tpu.memory_space<vmem>>, %arg6: memref<64x128xbf16, #tpu.memory_space<vmem>>, %arg7: memref<8x128xf32, #tpu.memory_space<vmem>>, %arg8: memref<8x128xf32, #tpu.memory_space<vmem>>, %arg9: memref<64x512xf32, #tpu.memory_space<vmem>>) attributes {dimension_semantics = [#tpu.dimension_semantics<parallel>, #tpu.dimension_semantics<arbitrary>], iteration_bounds = array<i64: 2, 1>, scalar_prefetch = 0 : i64, scratch_operands = 3 : i64, tpu.core_type = #tpu.core_type<tc>, window_params = [{transform_indices = @transform_0, window_bounds = array<i64: 64, 128>}, {transform_indices = @transform_1, window_bounds = array<i64: 1, 128, 512>}, {transform_indices = @transform_2, window_bounds = array<i64: 1, 128, 512>}, {transform_indices = @transform_3, window_bounds = array<i64: 1, 1, 512>}, {transform_indices = @transform_4, window_bounds = array<i64: 64, 128>}]} {
    %c0_i32 = arith.constant 0 : i32
    %0 = arith.cmpi eq, %arg1, %c0_i32 : i32
    %1 = arith.extui %0 : i1 to i32
    %c0_i32_0 = arith.constant 0 : i32
    %2 = arith.cmpi ne, %1, %c0_i32_0 : i32
    scf.if %2 {
      %cst_150 = arith.constant 0.000000e+00 : f32
      %376 = vector.broadcast %cst_150 : f32 to vector<8x128xf32>
      %c0_151 = arith.constant 0 : index
      %c0_152 = arith.constant 0 : index
      %377 = vector.load %arg7[%c0_151, %c0_152] : memref<8x128xf32, #tpu.memory_space<vmem>>, vector<8x128xf32>
      tpu.vector_store %arg7[%c0_151, %c0_152], %376 {strides = array<i32>} : memref<8x128xf32, #tpu.memory_space<vmem>>, vector<8x128xf32>,
      %cst_153 = arith.constant 0.000000e+00 : f32
      %378 = vector.broadcast %cst_153 : f32 to vector<8x128xf32>
      %c0_154 = arith.constant 0 : index
      %c0_155 = arith.constant 0 : index
      %379 = vector.load %arg8[%c0_154, %c0_155] : memref<8x128xf32, #tpu.memory_space<vmem>>, vector<8x128xf32>
      tpu.vector_store %arg8[%c0_154, %c0_155], %378 {strides = array<i32>} : memref<8x128xf32, #tpu.memory_space<vmem>>, vector<8x128xf32>,
    } else {
    }
    %c0 = arith.constant 0 : index
    %c0_1 = arith.constant 0 : index
    %3 = vector.load %arg2[%c0, %c0_1] : memref<64x128xbf16, #tpu.memory_space<vmem>>, vector<64x128xbf16>
    %c0_2 = arith.constant 0 : index
    %c0_3 = arith.constant 0 : index
    %c0_4 = arith.constant 0 : index
    %4 = vector.load %arg3[%c0_2, %c0_3, %c0_4] : memref<1x128x512xbf16, #tpu.memory_space<vmem>>, vector<1x128x512xbf16>
    %5 = vector.shape_cast %4 : vector<1x128x512xbf16> to vector<128x512xbf16>
    %cst = arith.constant dense<0.000000e+00> : vector<64x512xf32>
    %6 = tpu.matmul %3, %5, %cst {dimension_numbers = #tpu.dot_dimension_numbers<[1], [0], [0], [1], [0, 0, 1, 1], [], []>} : vector<64x128xbf16>, vector<128x512xbf16>, vector<64x512xf32> -> vector<64x512xf32>
    %c0_5 = arith.constant 0 : index
    %c0_6 = arith.constant 0 : index
    %c0_7 = arith.constant 0 : index
    %7 = vector.load %arg5[%c0_5, %c0_6, %c0_7] : memref<1x1x512xf32, #tpu.memory_space<vmem>>, vector<1x1x512xf32>
    %8 = vector.shape_cast %7 : vector<1x1x512xf32> to vector<1x512xf32>
    %9 = vector.broadcast %8 : vector<1x512xf32> to vector<64x512xf32>
    %10 = arith.addf %6, %9 : vector<64x512xf32>
    %c0_8 = arith.constant 0 : index
    %c0_9 = arith.constant 0 : index
    %11 = vector.load %arg9[%c0_8, %c0_9] : memref<64x512xf32, #tpu.memory_space<vmem>>, vector<64x512xf32>
    tpu.vector_store %arg9[%c0_8, %c0_9], %10 {strides = array<i32>} : memref<64x512xf32, #tpu.memory_space<vmem>>, vector<64x512xf32>,
    %c0_10 = arith.constant 0 : index
    %c0_11 = arith.constant 0 : index
    %12 = vector.load %arg7[%c0_10, %c0_11] : memref<8x128xf32, #tpu.memory_space<vmem>>, vector<8x128xf32>
    %c0_12 = arith.constant 0 : index
    %c0_13 = arith.constant 0 : index
    %13 = vector.load %arg8[%c0_12, %c0_13] : memref<8x128xf32, #tpu.memory_space<vmem>>, vector<8x128xf32>
    %c7_i32 = arith.constant 7 : i32
    %14 = arith.muli %arg0, %c7_i32 : i32
    %c0_i32_14 = arith.constant 0 : i32
    %15 = arith.addi %c0_i32_14, %14 : i32
    %c8_i32 = arith.constant 8 : i32
    %16 = arith.muli %15, %c8_i32 : i32
    %17 = tpu.assume_multiple %16, 8 : i32
    %18 = arith.index_cast %17 : i32 to index
    %c0_15 = arith.constant 0 : index
    %19 = vector.load %arg9[%18, %c0_15] : memref<64x512xf32, #tpu.memory_space<vmem>>, vector<8x512xf32>
    %20 = arith.truncf %12 : vector<8x128xf32> to vector<8x128xbf16>
    %c0_16 = arith.constant 0 : index
    %c0_17 = arith.constant 0 : index
    %c0_18 = arith.constant 0 : index
    %21 = vector.load %arg4[%c0_16, %c0_17, %c0_18] : memref<1x128x512xbf16, #tpu.memory_space<vmem>>, vector<1x128x512xbf16>
    %22 = vector.shape_cast %21 : vector<1x128x512xbf16> to vector<128x512xbf16>
    %cst_19 = arith.constant dense<0.000000e+00> : vector<8x512xf32>
    %23 = tpu.matmul %20, %22, %cst_19 {dimension_numbers = #tpu.dot_dimension_numbers<[1], [0], [0], [1], [0, 0, 1, 1], [], []>} : vector<8x128xbf16>, vector<128x512xbf16>, vector<8x512xf32> -> vector<8x512xf32>
    %24 = arith.addf %19, %23 : vector<8x512xf32>
    %25 = vector.extract_strided_slice %24 {offsets = [0, 0], sizes = [8, 128], strides = [1, 1]} : vector<8x512xf32> to vector<8x128xf32>
    %cst_20 = arith.constant 5.000000e-01 : f32
    %26 = vector.broadcast %cst_20 : f32 to vector<8x128xf32>
    %27 = arith.mulf %26, %25 : vector<8x128xf32>
    %28 = math.tanh %27 : vector<8x128xf32>
    %cst_21 = arith.constant 5.000000e-01 : f32
    %29 = vector.broadcast %cst_21 : f32 to vector<8x128xf32>
    %30 = arith.mulf %29, %28 : vector<8x128xf32>
    %cst_22 = arith.constant 5.000000e-01 : f32
    %31 = vector.broadcast %cst_22 : f32 to vector<8x128xf32>
    %32 = arith.addf %30, %31 : vector<8x128xf32>
    %33 = vector.extract_strided_slice %24 {offsets = [0, 128], sizes = [8, 128], strides = [1, 1]} : vector<8x512xf32> to vector<8x128xf32>
    %cst_23 = arith.constant 5.000000e-01 : f32
    %34 = vector.broadcast %cst_23 : f32 to vector<8x128xf32>
    %35 = arith.mulf %34, %33 : vector<8x128xf32>
    %36 = math.tanh %35 : vector<8x128xf32>
    %cst_24 = arith.constant 5.000000e-01 : f32
    %37 = vector.broadcast %cst_24 : f32 to vector<8x128xf32>
    %38 = arith.mulf %37, %36 : vector<8x128xf32>
    %cst_25 = arith.constant 5.000000e-01 : f32
    %39 = vector.broadcast %cst_25 : f32 to vector<8x128xf32>
    %40 = arith.addf %38, %39 : vector<8x128xf32>
    %41 = vector.extract_strided_slice %24 {offsets = [0, 256], sizes = [8, 128], strides = [1, 1]} : vector<8x512xf32> to vector<8x128xf32>
    %42 = math.tanh %41 : vector<8x128xf32>
    %43 = vector.extract_strided_slice %24 {offsets = [0, 384], sizes = [8, 128], strides = [1, 1]} : vector<8x512xf32> to vector<8x128xf32>
    %cst_26 = arith.constant 5.000000e-01 : f32
    %44 = vector.broadcast %cst_26 : f32 to vector<8x128xf32>
    %45 = arith.mulf %44, %43 : vector<8x128xf32>
    %46 = math.tanh %45 : vector<8x128xf32>
    %cst_27 = arith.constant 5.000000e-01 : f32
    %47 = vector.broadcast %cst_27 : f32 to vector<8x128xf32>
    %48 = arith.mulf %47, %46 : vector<8x128xf32>
    %cst_28 = arith.constant 5.000000e-01 : f32
    %49 = vector.broadcast %cst_28 : f32 to vector<8x128xf32>
    %50 = arith.addf %48, %49 : vector<8x128xf32>
    %51 = arith.mulf %40, %13 : vector<8x128xf32>
    %52 = arith.mulf %32, %42 : vector<8x128xf32>
    %53 = arith.addf %51, %52 : vector<8x128xf32>
    %54 = math.tanh %53 : vector<8x128xf32>
    %55 = arith.mulf %50, %54 : vector<8x128xf32>
    %56 = arith.truncf %55 : vector<8x128xf32> to vector<8x128xbf16>
    %57 = arith.index_cast %17 : i32 to index
    %c0_29 = arith.constant 0 : index
    %58 = vector.load %arg6[%57, %c0_29] : memref<64x128xbf16, #tpu.memory_space<vmem>>, vector<8x128xbf16>
    tpu.vector_store %arg6[%57, %c0_29], %56 {strides = array<i32>} : memref<64x128xbf16, #tpu.memory_space<vmem>>, vector<8x128xbf16>,
    %c5_i32 = arith.constant 5 : i32
    %59 = arith.muli %arg0, %c5_i32 : i32
    %c1_i32 = arith.constant 1 : i32
    %60 = arith.addi %c1_i32, %59 : i32
    %c8_i32_30 = arith.constant 8 : i32
    %61 = arith.muli %60, %c8_i32_30 : i32
    %62 = tpu.assume_multiple %61, 8 : i32
    %63 = arith.index_cast %62 : i32 to index
    %c0_31 = arith.constant 0 : index
    %64 = vector.load %arg9[%63, %c0_31] : memref<64x512xf32, #tpu.memory_space<vmem>>, vector<8x512xf32>
    %65 = arith.truncf %55 : vector<8x128xf32> to vector<8x128xbf16>
    %c0_32 = arith.constant 0 : index
    %c0_33 = arith.constant 0 : index
    %c0_34 = arith.constant 0 : index
    %66 = vector.load %arg4[%c0_32, %c0_33, %c0_34] : memref<1x128x512xbf16, #tpu.memory_space<vmem>>, vector<1x128x512xbf16>
    %67 = vector.shape_cast %66 : vector<1x128x512xbf16> to vector<128x512xbf16>
    %cst_35 = arith.constant dense<0.000000e+00> : vector<8x512xf32>
    %68 = tpu.matmul %65, %67, %cst_35 {dimension_numbers = #tpu.dot_dimension_numbers<[1], [0], [0], [1], [0, 0, 1, 1], [], []>} : vector<8x128xbf16>, vector<128x512xbf16>, vector<8x512xf32> -> vector<8x512xf32>
    %69 = arith.addf %64, %68 : vector<8x512xf32>
    %70 = vector.extract_strided_slice %69 {offsets = [0, 0], sizes = [8, 128], strides = [1, 1]} : vector<8x512xf32> to vector<8x128xf32>
    %cst_36 = arith.constant 5.000000e-01 : f32
    %71 = vector.broadcast %cst_36 : f32 to vector<8x128xf32>
    %72 = arith.mulf %71, %70 : vector<8x128xf32>
    %73 = math.tanh %72 : vector<8x128xf32>
    %cst_37 = arith.constant 5.000000e-01 : f32
    %74 = vector.broadcast %cst_37 : f32 to vector<8x128xf32>
    %75 = arith.mulf %74, %73 : vector<8x128xf32>
    %cst_38 = arith.constant 5.000000e-01 : f32
    %76 = vector.broadcast %cst_38 : f32 to vector<8x128xf32>
    %77 = arith.addf %75, %76 : vector<8x128xf32>
    %78 = vector.extract_strided_slice %69 {offsets = [0, 128], sizes = [8, 128], strides = [1, 1]} : vector<8x512xf32> to vector<8x128xf32>
    %cst_39 = arith.constant 5.000000e-01 : f32
    %79 = vector.broadcast %cst_39 : f32 to vector<8x128xf32>
    %80 = arith.mulf %79, %78 : vector<8x128xf32>
    %81 = math.tanh %80 : vector<8x128xf32>
    %cst_40 = arith.constant 5.000000e-01 : f32
    %82 = vector.broadcast %cst_40 : f32 to vector<8x128xf32>
    %83 = arith.mulf %82, %81 : vector<8x128xf32>
    %cst_41 = arith.constant 5.000000e-01 : f32
    %84 = vector.broadcast %cst_41 : f32 to vector<8x128xf32>
    %85 = arith.addf %83, %84 : vector<8x128xf32>
    %86 = vector.extract_strided_slice %69 {offsets = [0, 256], sizes = [8, 128], strides = [1, 1]} : vector<8x512xf32> to vector<8x128xf32>
    %87 = math.tanh %86 : vector<8x128xf32>
    %88 = vector.extract_strided_slice %69 {offsets = [0, 384], sizes = [8, 128], strides = [1, 1]} : vector<8x512xf32> to vector<8x128xf32>
    %cst_42 = arith.constant 5.000000e-01 : f32
    %89 = vector.broadcast %cst_42 : f32 to vector<8x128xf32>
    %90 = arith.mulf %89, %88 : vector<8x128xf32>
    %91 = math.tanh %90 : vector<8x128xf32>
    %cst_43 = arith.constant 5.000000e-01 : f32
    %92 = vector.broadcast %cst_43 : f32 to vector<8x128xf32>
    %93 = arith.mulf %92, %91 : vector<8x128xf32>
    %cst_44 = arith.constant 5.000000e-01 : f32
    %94 = vector.broadcast %cst_44 : f32 to vector<8x128xf32>
    %95 = arith.addf %93, %94 : vector<8x128xf32>
    %96 = arith.mulf %85, %53 : vector<8x128xf32>
    %97 = arith.mulf %77, %87 : vector<8x128xf32>
    %98 = arith.addf %96, %97 : vector<8x128xf32>
    %99 = math.tanh %98 : vector<8x128xf32>
    %100 = arith.mulf %95, %99 : vector<8x128xf32>
    %101 = arith.truncf %100 : vector<8x128xf32> to vector<8x128xbf16>
    %102 = arith.index_cast %62 : i32 to index
    %c0_45 = arith.constant 0 : index
    %103 = vector.load %arg6[%102, %c0_45] : memref<64x128xbf16, #tpu.memory_space<vmem>>, vector<8x128xbf16>
    tpu.vector_store %arg6[%102, %c0_45], %101 {strides = array<i32>} : memref<64x128xbf16, #tpu.memory_space<vmem>>, vector<8x128xbf16>,
    %c3_i32 = arith.constant 3 : i32
    %104 = arith.muli %arg0, %c3_i32 : i32
    %c2_i32 = arith.constant 2 : i32
    %105 = arith.addi %c2_i32, %104 : i32
    %c8_i32_46 = arith.constant 8 : i32
    %106 = arith.muli %105, %c8_i32_46 : i32
    %107 = tpu.assume_multiple %106, 8 : i32
    %108 = arith.index_cast %107 : i32 to index
    %c0_47 = arith.constant 0 : index
    %109 = vector.load %arg9[%108, %c0_47] : memref<64x512xf32, #tpu.memory_space<vmem>>, vector<8x512xf32>
    %110 = arith.truncf %100 : vector<8x128xf32> to vector<8x128xbf16>
    %c0_48 = arith.constant 0 : index
    %c0_49 = arith.constant 0 : index
    %c0_50 = arith.constant 0 : index
    %111 = vector.load %arg4[%c0_48, %c0_49, %c0_50] : memref<1x128x512xbf16, #tpu.memory_space<vmem>>, vector<1x128x512xbf16>
    %112 = vector.shape_cast %111 : vector<1x128x512xbf16> to vector<128x512xbf16>
    %cst_51 = arith.constant dense<0.000000e+00> : vector<8x512xf32>
    %113 = tpu.matmul %110, %112, %cst_51 {dimension_numbers = #tpu.dot_dimension_numbers<[1], [0], [0], [1], [0, 0, 1, 1], [], []>} : vector<8x128xbf16>, vector<128x512xbf16>, vector<8x512xf32> -> vector<8x512xf32>
    %114 = arith.addf %109, %113 : vector<8x512xf32>
    %115 = vector.extract_strided_slice %114 {offsets = [0, 0], sizes = [8, 128], strides = [1, 1]} : vector<8x512xf32> to vector<8x128xf32>
    %cst_52 = arith.constant 5.000000e-01 : f32
    %116 = vector.broadcast %cst_52 : f32 to vector<8x128xf32>
    %117 = arith.mulf %116, %115 : vector<8x128xf32>
    %118 = math.tanh %117 : vector<8x128xf32>
    %cst_53 = arith.constant 5.000000e-01 : f32
    %119 = vector.broadcast %cst_53 : f32 to vector<8x128xf32>
    %120 = arith.mulf %119, %118 : vector<8x128xf32>
    %cst_54 = arith.constant 5.000000e-01 : f32
    %121 = vector.broadcast %cst_54 : f32 to vector<8x128xf32>
    %122 = arith.addf %120, %121 : vector<8x128xf32>
    %123 = vector.extract_strided_slice %114 {offsets = [0, 128], sizes = [8, 128], strides = [1, 1]} : vector<8x512xf32> to vector<8x128xf32>
    %cst_55 = arith.constant 5.000000e-01 : f32
    %124 = vector.broadcast %cst_55 : f32 to vector<8x128xf32>
    %125 = arith.mulf %124, %123 : vector<8x128xf32>
    %126 = math.tanh %125 : vector<8x128xf32>
    %cst_56 = arith.constant 5.000000e-01 : f32
    %127 = vector.broadcast %cst_56 : f32 to vector<8x128xf32>
    %128 = arith.mulf %127, %126 : vector<8x128xf32>
    %cst_57 = arith.constant 5.000000e-01 : f32
    %129 = vector.broadcast %cst_57 : f32 to vector<8x128xf32>
    %130 = arith.addf %128, %129 : vector<8x128xf32>
    %131 = vector.extract_strided_slice %114 {offsets = [0, 256], sizes = [8, 128], strides = [1, 1]} : vector<8x512xf32> to vector<8x128xf32>
    %132 = math.tanh %131 : vector<8x128xf32>
    %133 = vector.extract_strided_slice %114 {offsets = [0, 384], sizes = [8, 128], strides = [1, 1]} : vector<8x512xf32> to vector<8x128xf32>
    %cst_58 = arith.constant 5.000000e-01 : f32
    %134 = vector.broadcast %cst_58 : f32 to vector<8x128xf32>
    %135 = arith.mulf %134, %133 : vector<8x128xf32>
    %136 = math.tanh %135 : vector<8x128xf32>
    %cst_59 = arith.constant 5.000000e-01 : f32
    %137 = vector.broadcast %cst_59 : f32 to vector<8x128xf32>
    %138 = arith.mulf %137, %136 : vector<8x128xf32>
    %cst_60 = arith.constant 5.000000e-01 : f32
    %139 = vector.broadcast %cst_60 : f32 to vector<8x128xf32>
    %140 = arith.addf %138, %139 : vector<8x128xf32>
    %141 = arith.mulf %130, %98 : vector<8x128xf32>
    %142 = arith.mulf %122, %132 : vector<8x128xf32>
    %143 = arith.addf %141, %142 : vector<8x128xf32>
    %144 = math.tanh %143 : vector<8x128xf32>
    %145 = arith.mulf %140, %144 : vector<8x128xf32>
    %146 = arith.truncf %145 : vector<8x128xf32> to vector<8x128xbf16>
    %147 = arith.index_cast %107 : i32 to index
    %c0_61 = arith.constant 0 : index
    %148 = vector.load %arg6[%147, %c0_61] : memref<64x128xbf16, #tpu.memory_space<vmem>>, vector<8x128xbf16>
    tpu.vector_store %arg6[%147, %c0_61], %146 {strides = array<i32>} : memref<64x128xbf16, #tpu.memory_space<vmem>>, vector<8x128xbf16>,
    %c1_i32_62 = arith.constant 1 : i32
    %149 = arith.muli %arg0, %c1_i32_62 : i32
    %c3_i32_63 = arith.constant 3 : i32
    %150 = arith.addi %c3_i32_63, %149 : i32
    %c8_i32_64 = arith.constant 8 : i32
    %151 = arith.muli %150, %c8_i32_64 : i32
    %152 = tpu.assume_multiple %151, 8 : i32
    %153 = arith.index_cast %152 : i32 to index
    %c0_65 = arith.constant 0 : index
    %154 = vector.load %arg9[%153, %c0_65] : memref<64x512xf32, #tpu.memory_space<vmem>>, vector<8x512xf32>
    %155 = arith.truncf %145 : vector<8x128xf32> to vector<8x128xbf16>
    %c0_66 = arith.constant 0 : index
    %c0_67 = arith.constant 0 : index
    %c0_68 = arith.constant 0 : index
    %156 = vector.load %arg4[%c0_66, %c0_67, %c0_68] : memref<1x128x512xbf16, #tpu.memory_space<vmem>>, vector<1x128x512xbf16>
    %157 = vector.shape_cast %156 : vector<1x128x512xbf16> to vector<128x512xbf16>
    %cst_69 = arith.constant dense<0.000000e+00> : vector<8x512xf32>
    %158 = tpu.matmul %155, %157, %cst_69 {dimension_numbers = #tpu.dot_dimension_numbers<[1], [0], [0], [1], [0, 0, 1, 1], [], []>} : vector<8x128xbf16>, vector<128x512xbf16>, vector<8x512xf32> -> vector<8x512xf32>
    %159 = arith.addf %154, %158 : vector<8x512xf32>
    %160 = vector.extract_strided_slice %159 {offsets = [0, 0], sizes = [8, 128], strides = [1, 1]} : vector<8x512xf32> to vector<8x128xf32>
    %cst_70 = arith.constant 5.000000e-01 : f32
    %161 = vector.broadcast %cst_70 : f32 to vector<8x128xf32>
    %162 = arith.mulf %161, %160 : vector<8x128xf32>
    %163 = math.tanh %162 : vector<8x128xf32>
    %cst_71 = arith.constant 5.000000e-01 : f32
    %164 = vector.broadcast %cst_71 : f32 to vector<8x128xf32>
    %165 = arith.mulf %164, %163 : vector<8x128xf32>
    %cst_72 = arith.constant 5.000000e-01 : f32
    %166 = vector.broadcast %cst_72 : f32 to vector<8x128xf32>
    %167 = arith.addf %165, %166 : vector<8x128xf32>
    %168 = vector.extract_strided_slice %159 {offsets = [0, 128], sizes = [8, 128], strides = [1, 1]} : vector<8x512xf32> to vector<8x128xf32>
    %cst_73 = arith.constant 5.000000e-01 : f32
    %169 = vector.broadcast %cst_73 : f32 to vector<8x128xf32>
    %170 = arith.mulf %169, %168 : vector<8x128xf32>
    %171 = math.tanh %170 : vector<8x128xf32>
    %cst_74 = arith.constant 5.000000e-01 : f32
    %172 = vector.broadcast %cst_74 : f32 to vector<8x128xf32>
    %173 = arith.mulf %172, %171 : vector<8x128xf32>
    %cst_75 = arith.constant 5.000000e-01 : f32
    %174 = vector.broadcast %cst_75 : f32 to vector<8x128xf32>
    %175 = arith.addf %173, %174 : vector<8x128xf32>
    %176 = vector.extract_strided_slice %159 {offsets = [0, 256], sizes = [8, 128], strides = [1, 1]} : vector<8x512xf32> to vector<8x128xf32>
    %177 = math.tanh %176 : vector<8x128xf32>
    %178 = vector.extract_strided_slice %159 {offsets = [0, 384], sizes = [8, 128], strides = [1, 1]} : vector<8x512xf32> to vector<8x128xf32>
    %cst_76 = arith.constant 5.000000e-01 : f32
    %179 = vector.broadcast %cst_76 : f32 to vector<8x128xf32>
    %180 = arith.mulf %179, %178 : vector<8x128xf32>
    %181 = math.tanh %180 : vector<8x128xf32>
    %cst_77 = arith.constant 5.000000e-01 : f32
    %182 = vector.broadcast %cst_77 : f32 to vector<8x128xf32>
    %183 = arith.mulf %182, %181 : vector<8x128xf32>
    %cst_78 = arith.constant 5.000000e-01 : f32
    %184 = vector.broadcast %cst_78 : f32 to vector<8x128xf32>
    %185 = arith.addf %183, %184 : vector<8x128xf32>
    %186 = arith.mulf %175, %143 : vector<8x128xf32>
    %187 = arith.mulf %167, %177 : vector<8x128xf32>
    %188 = arith.addf %186, %187 : vector<8x128xf32>
    %189 = math.tanh %188 : vector<8x128xf32>
    %190 = arith.mulf %185, %189 : vector<8x128xf32>
    %191 = arith.truncf %190 : vector<8x128xf32> to vector<8x128xbf16>
    %192 = arith.index_cast %152 : i32 to index
    %c0_79 = arith.constant 0 : index
    %193 = vector.load %arg6[%192, %c0_79] : memref<64x128xbf16, #tpu.memory_space<vmem>>, vector<8x128xbf16>
    tpu.vector_store %arg6[%192, %c0_79], %191 {strides = array<i32>} : memref<64x128xbf16, #tpu.memory_space<vmem>>, vector<8x128xbf16>,
    %c-1_i32 = arith.constant -1 : i32
    %194 = arith.muli %arg0, %c-1_i32 : i32
    %c4_i32 = arith.constant 4 : i32
    %195 = arith.addi %c4_i32, %194 : i32
    %c8_i32_80 = arith.constant 8 : i32
    %196 = arith.muli %195, %c8_i32_80 : i32
    %197 = tpu.assume_multiple %196, 8 : i32
    %198 = arith.index_cast %197 : i32 to index
    %c0_81 = arith.constant 0 : index
    %199 = vector.load %arg9[%198, %c0_81] : memref<64x512xf32, #tpu.memory_space<vmem>>, vector<8x512xf32>
    %200 = arith.truncf %190 : vector<8x128xf32> to vector<8x128xbf16>
    %c0_82 = arith.constant 0 : index
    %c0_83 = arith.constant 0 : index
    %c0_84 = arith.constant 0 : index
    %201 = vector.load %arg4[%c0_82, %c0_83, %c0_84] : memref<1x128x512xbf16, #tpu.memory_space<vmem>>, vector<1x128x512xbf16>
    %202 = vector.shape_cast %201 : vector<1x128x512xbf16> to vector<128x512xbf16>
    %cst_85 = arith.constant dense<0.000000e+00> : vector<8x512xf32>
    %203 = tpu.matmul %200, %202, %cst_85 {dimension_numbers = #tpu.dot_dimension_numbers<[1], [0], [0], [1], [0, 0, 1, 1], [], []>} : vector<8x128xbf16>, vector<128x512xbf16>, vector<8x512xf32> -> vector<8x512xf32>
    %204 = arith.addf %199, %203 : vector<8x512xf32>
    %205 = vector.extract_strided_slice %204 {offsets = [0, 0], sizes = [8, 128], strides = [1, 1]} : vector<8x512xf32> to vector<8x128xf32>
    %cst_86 = arith.constant 5.000000e-01 : f32
    %206 = vector.broadcast %cst_86 : f32 to vector<8x128xf32>
    %207 = arith.mulf %206, %205 : vector<8x128xf32>
    %208 = math.tanh %207 : vector<8x128xf32>
    %cst_87 = arith.constant 5.000000e-01 : f32
    %209 = vector.broadcast %cst_87 : f32 to vector<8x128xf32>
    %210 = arith.mulf %209, %208 : vector<8x128xf32>
    %cst_88 = arith.constant 5.000000e-01 : f32
    %211 = vector.broadcast %cst_88 : f32 to vector<8x128xf32>
    %212 = arith.addf %210, %211 : vector<8x128xf32>
    %213 = vector.extract_strided_slice %204 {offsets = [0, 128], sizes = [8, 128], strides = [1, 1]} : vector<8x512xf32> to vector<8x128xf32>
    %cst_89 = arith.constant 5.000000e-01 : f32
    %214 = vector.broadcast %cst_89 : f32 to vector<8x128xf32>
    %215 = arith.mulf %214, %213 : vector<8x128xf32>
    %216 = math.tanh %215 : vector<8x128xf32>
    %cst_90 = arith.constant 5.000000e-01 : f32
    %217 = vector.broadcast %cst_90 : f32 to vector<8x128xf32>
    %218 = arith.mulf %217, %216 : vector<8x128xf32>
    %cst_91 = arith.constant 5.000000e-01 : f32
    %219 = vector.broadcast %cst_91 : f32 to vector<8x128xf32>
    %220 = arith.addf %218, %219 : vector<8x128xf32>
    %221 = vector.extract_strided_slice %204 {offsets = [0, 256], sizes = [8, 128], strides = [1, 1]} : vector<8x512xf32> to vector<8x128xf32>
    %222 = math.tanh %221 : vector<8x128xf32>
    %223 = vector.extract_strided_slice %204 {offsets = [0, 384], sizes = [8, 128], strides = [1, 1]} : vector<8x512xf32> to vector<8x128xf32>
    %cst_92 = arith.constant 5.000000e-01 : f32
    %224 = vector.broadcast %cst_92 : f32 to vector<8x128xf32>
    %225 = arith.mulf %224, %223 : vector<8x128xf32>
    %226 = math.tanh %225 : vector<8x128xf32>
    %cst_93 = arith.constant 5.000000e-01 : f32
    %227 = vector.broadcast %cst_93 : f32 to vector<8x128xf32>
    %228 = arith.mulf %227, %226 : vector<8x128xf32>
    %cst_94 = arith.constant 5.000000e-01 : f32
    %229 = vector.broadcast %cst_94 : f32 to vector<8x128xf32>
    %230 = arith.addf %228, %229 : vector<8x128xf32>
    %231 = arith.mulf %220, %188 : vector<8x128xf32>
    %232 = arith.mulf %212, %222 : vector<8x128xf32>
    %233 = arith.addf %231, %232 : vector<8x128xf32>
    %234 = math.tanh %233 : vector<8x128xf32>
    %235 = arith.mulf %230, %234 : vector<8x128xf32>
    %236 = arith.truncf %235 : vector<8x128xf32> to vector<8x128xbf16>
    %237 = arith.index_cast %197 : i32 to index
    %c0_95 = arith.constant 0 : index
    %238 = vector.load %arg6[%237, %c0_95] : memref<64x128xbf16, #tpu.memory_space<vmem>>, vector<8x128xbf16>
    tpu.vector_store %arg6[%237, %c0_95], %236 {strides = array<i32>} : memref<64x128xbf16, #tpu.memory_space<vmem>>, vector<8x128xbf16>,
    %c-3_i32 = arith.constant -3 : i32
    %239 = arith.muli %arg0, %c-3_i32 : i32
    %c5_i32_96 = arith.constant 5 : i32
    %240 = arith.addi %c5_i32_96, %239 : i32
    %c8_i32_97 = arith.constant 8 : i32
    %241 = arith.muli %240, %c8_i32_97 : i32
    %242 = tpu.assume_multiple %241, 8 : i32
    %243 = arith.index_cast %242 : i32 to index
    %c0_98 = arith.constant 0 : index
    %244 = vector.load %arg9[%243, %c0_98] : memref<64x512xf32, #tpu.memory_space<vmem>>, vector<8x512xf32>
    %245 = arith.truncf %235 : vector<8x128xf32> to vector<8x128xbf16>
    %c0_99 = arith.constant 0 : index
    %c0_100 = arith.constant 0 : index
    %c0_101 = arith.constant 0 : index
    %246 = vector.load %arg4[%c0_99, %c0_100, %c0_101] : memref<1x128x512xbf16, #tpu.memory_space<vmem>>, vector<1x128x512xbf16>
    %247 = vector.shape_cast %246 : vector<1x128x512xbf16> to vector<128x512xbf16>
    %cst_102 = arith.constant dense<0.000000e+00> : vector<8x512xf32>
    %248 = tpu.matmul %245, %247, %cst_102 {dimension_numbers = #tpu.dot_dimension_numbers<[1], [0], [0], [1], [0, 0, 1, 1], [], []>} : vector<8x128xbf16>, vector<128x512xbf16>, vector<8x512xf32> -> vector<8x512xf32>
    %249 = arith.addf %244, %248 : vector<8x512xf32>
    %250 = vector.extract_strided_slice %249 {offsets = [0, 0], sizes = [8, 128], strides = [1, 1]} : vector<8x512xf32> to vector<8x128xf32>
    %cst_103 = arith.constant 5.000000e-01 : f32
    %251 = vector.broadcast %cst_103 : f32 to vector<8x128xf32>
    %252 = arith.mulf %251, %250 : vector<8x128xf32>
    %253 = math.tanh %252 : vector<8x128xf32>
    %cst_104 = arith.constant 5.000000e-01 : f32
    %254 = vector.broadcast %cst_104 : f32 to vector<8x128xf32>
    %255 = arith.mulf %254, %253 : vector<8x128xf32>
    %cst_105 = arith.constant 5.000000e-01 : f32
    %256 = vector.broadcast %cst_105 : f32 to vector<8x128xf32>
    %257 = arith.addf %255, %256 : vector<8x128xf32>
    %258 = vector.extract_strided_slice %249 {offsets = [0, 128], sizes = [8, 128], strides = [1, 1]} : vector<8x512xf32> to vector<8x128xf32>
    %cst_106 = arith.constant 5.000000e-01 : f32
    %259 = vector.broadcast %cst_106 : f32 to vector<8x128xf32>
    %260 = arith.mulf %259, %258 : vector<8x128xf32>
    %261 = math.tanh %260 : vector<8x128xf32>
    %cst_107 = arith.constant 5.000000e-01 : f32
    %262 = vector.broadcast %cst_107 : f32 to vector<8x128xf32>
    %263 = arith.mulf %262, %261 : vector<8x128xf32>
    %cst_108 = arith.constant 5.000000e-01 : f32
    %264 = vector.broadcast %cst_108 : f32 to vector<8x128xf32>
    %265 = arith.addf %263, %264 : vector<8x128xf32>
    %266 = vector.extract_strided_slice %249 {offsets = [0, 256], sizes = [8, 128], strides = [1, 1]} : vector<8x512xf32> to vector<8x128xf32>
    %267 = math.tanh %266 : vector<8x128xf32>
    %268 = vector.extract_strided_slice %249 {offsets = [0, 384], sizes = [8, 128], strides = [1, 1]} : vector<8x512xf32> to vector<8x128xf32>
    %cst_109 = arith.constant 5.000000e-01 : f32
    %269 = vector.broadcast %cst_109 : f32 to vector<8x128xf32>
    %270 = arith.mulf %269, %268 : vector<8x128xf32>
    %271 = math.tanh %270 : vector<8x128xf32>
    %cst_110 = arith.constant 5.000000e-01 : f32
    %272 = vector.broadcast %cst_110 : f32 to vector<8x128xf32>
    %273 = arith.mulf %272, %271 : vector<8x128xf32>
    %cst_111 = arith.constant 5.000000e-01 : f32
    %274 = vector.broadcast %cst_111 : f32 to vector<8x128xf32>
    %275 = arith.addf %273, %274 : vector<8x128xf32>
    %276 = arith.mulf %265, %233 : vector<8x128xf32>
    %277 = arith.mulf %257, %267 : vector<8x128xf32>
    %278 = arith.addf %276, %277 : vector<8x128xf32>
    %279 = math.tanh %278 : vector<8x128xf32>
    %280 = arith.mulf %275, %279 : vector<8x128xf32>
    %281 = arith.truncf %280 : vector<8x128xf32> to vector<8x128xbf16>
    %282 = arith.index_cast %242 : i32 to index
    %c0_112 = arith.constant 0 : index
    %283 = vector.load %arg6[%282, %c0_112] : memref<64x128xbf16, #tpu.memory_space<vmem>>, vector<8x128xbf16>
    tpu.vector_store %arg6[%282, %c0_112], %281 {strides = array<i32>} : memref<64x128xbf16, #tpu.memory_space<vmem>>, vector<8x128xbf16>,
    %c-5_i32 = arith.constant -5 : i32
    %284 = arith.muli %arg0, %c-5_i32 : i32
    %c6_i32 = arith.constant 6 : i32
    %285 = arith.addi %c6_i32, %284 : i32
    %c8_i32_113 = arith.constant 8 : i32
    %286 = arith.muli %285, %c8_i32_113 : i32
    %287 = tpu.assume_multiple %286, 8 : i32
    %288 = arith.index_cast %287 : i32 to index
    %c0_114 = arith.constant 0 : index
    %289 = vector.load %arg9[%288, %c0_114] : memref<64x512xf32, #tpu.memory_space<vmem>>, vector<8x512xf32>
    %290 = arith.truncf %280 : vector<8x128xf32> to vector<8x128xbf16>
    %c0_115 = arith.constant 0 : index
    %c0_116 = arith.constant 0 : index
    %c0_117 = arith.constant 0 : index
    %291 = vector.load %arg4[%c0_115, %c0_116, %c0_117] : memref<1x128x512xbf16, #tpu.memory_space<vmem>>, vector<1x128x512xbf16>
    %292 = vector.shape_cast %291 : vector<1x128x512xbf16> to vector<128x512xbf16>
    %cst_118 = arith.constant dense<0.000000e+00> : vector<8x512xf32>
    %293 = tpu.matmul %290, %292, %cst_118 {dimension_numbers = #tpu.dot_dimension_numbers<[1], [0], [0], [1], [0, 0, 1, 1], [], []>} : vector<8x128xbf16>, vector<128x512xbf16>, vector<8x512xf32> -> vector<8x512xf32>
    %294 = arith.addf %289, %293 : vector<8x512xf32>
    %295 = vector.extract_strided_slice %294 {offsets = [0, 0], sizes = [8, 128], strides = [1, 1]} : vector<8x512xf32> to vector<8x128xf32>
    %cst_119 = arith.constant 5.000000e-01 : f32
    %296 = vector.broadcast %cst_119 : f32 to vector<8x128xf32>
    %297 = arith.mulf %296, %295 : vector<8x128xf32>
    %298 = math.tanh %297 : vector<8x128xf32>
    %cst_120 = arith.constant 5.000000e-01 : f32
    %299 = vector.broadcast %cst_120 : f32 to vector<8x128xf32>
    %300 = arith.mulf %299, %298 : vector<8x128xf32>
    %cst_121 = arith.constant 5.000000e-01 : f32
    %301 = vector.broadcast %cst_121 : f32 to vector<8x128xf32>
    %302 = arith.addf %300, %301 : vector<8x128xf32>
    %303 = vector.extract_strided_slice %294 {offsets = [0, 128], sizes = [8, 128], strides = [1, 1]} : vector<8x512xf32> to vector<8x128xf32>
    %cst_122 = arith.constant 5.000000e-01 : f32
    %304 = vector.broadcast %cst_122 : f32 to vector<8x128xf32>
    %305 = arith.mulf %304, %303 : vector<8x128xf32>
    %306 = math.tanh %305 : vector<8x128xf32>
    %cst_123 = arith.constant 5.000000e-01 : f32
    %307 = vector.broadcast %cst_123 : f32 to vector<8x128xf32>
    %308 = arith.mulf %307, %306 : vector<8x128xf32>
    %cst_124 = arith.constant 5.000000e-01 : f32
    %309 = vector.broadcast %cst_124 : f32 to vector<8x128xf32>
    %310 = arith.addf %308, %309 : vector<8x128xf32>
    %311 = vector.extract_strided_slice %294 {offsets = [0, 256], sizes = [8, 128], strides = [1, 1]} : vector<8x512xf32> to vector<8x128xf32>
    %312 = math.tanh %311 : vector<8x128xf32>
    %313 = vector.extract_strided_slice %294 {offsets = [0, 384], sizes = [8, 128], strides = [1, 1]} : vector<8x512xf32> to vector<8x128xf32>
    %cst_125 = arith.constant 5.000000e-01 : f32
    %314 = vector.broadcast %cst_125 : f32 to vector<8x128xf32>
    %315 = arith.mulf %314, %313 : vector<8x128xf32>
    %316 = math.tanh %315 : vector<8x128xf32>
    %cst_126 = arith.constant 5.000000e-01 : f32
    %317 = vector.broadcast %cst_126 : f32 to vector<8x128xf32>
    %318 = arith.mulf %317, %316 : vector<8x128xf32>
    %cst_127 = arith.constant 5.000000e-01 : f32
    %319 = vector.broadcast %cst_127 : f32 to vector<8x128xf32>
    %320 = arith.addf %318, %319 : vector<8x128xf32>
    %321 = arith.mulf %310, %278 : vector<8x128xf32>
    %322 = arith.mulf %302, %312 : vector<8x128xf32>
    %323 = arith.addf %321, %322 : vector<8x128xf32>
    %324 = math.tanh %323 : vector<8x128xf32>
    %325 = arith.mulf %320, %324 : vector<8x128xf32>
    %326 = arith.truncf %325 : vector<8x128xf32> to vector<8x128xbf16>
    %327 = arith.index_cast %287 : i32 to index
    %c0_128 = arith.constant 0 : index
    %328 = vector.load %arg6[%327, %c0_128] : memref<64x128xbf16, #tpu.memory_space<vmem>>, vector<8x128xbf16>
    tpu.vector_store %arg6[%327, %c0_128], %326 {strides = array<i32>} : memref<64x128xbf16, #tpu.memory_space<vmem>>, vector<8x128xbf16>,
    %c-7_i32 = arith.constant -7 : i32
    %329 = arith.muli %arg0, %c-7_i32 : i32
    %c7_i32_129 = arith.constant 7 : i32
    %330 = arith.addi %c7_i32_129, %329 : i32
    %c8_i32_130 = arith.constant 8 : i32
    %331 = arith.muli %330, %c8_i32_130 : i32
    %332 = tpu.assume_multiple %331, 8 : i32
    %333 = arith.index_cast %332 : i32 to index
    %c0_131 = arith.constant 0 : index
    %334 = vector.load %arg9[%333, %c0_131] : memref<64x512xf32, #tpu.memory_space<vmem>>, vector<8x512xf32>
    %335 = arith.truncf %325 : vector<8x128xf32> to vector<8x128xbf16>
    %c0_132 = arith.constant 0 : index
    %c0_133 = arith.constant 0 : index
    %c0_134 = arith.constant 0 : index
    %336 = vector.load %arg4[%c0_132, %c0_133, %c0_134] : memref<1x128x512xbf16, #tpu.memory_space<vmem>>, vector<1x128x512xbf16>
    %337 = vector.shape_cast %336 : vector<1x128x512xbf16> to vector<128x512xbf16>
    %cst_135 = arith.constant dense<0.000000e+00> : vector<8x512xf32>
    %338 = tpu.matmul %335, %337, %cst_135 {dimension_numbers = #tpu.dot_dimension_numbers<[1], [0], [0], [1], [0, 0, 1, 1], [], []>} : vector<8x128xbf16>, vector<128x512xbf16>, vector<8x512xf32> -> vector<8x512xf32>
    %339 = arith.addf %334, %338 : vector<8x512xf32>
    %340 = vector.extract_strided_slice %339 {offsets = [0, 0], sizes = [8, 128], strides = [1, 1]} : vector<8x512xf32> to vector<8x128xf32>
    %cst_136 = arith.constant 5.000000e-01 : f32
    %341 = vector.broadcast %cst_136 : f32 to vector<8x128xf32>
    %342 = arith.mulf %341, %340 : vector<8x128xf32>
    %343 = math.tanh %342 : vector<8x128xf32>
    %cst_137 = arith.constant 5.000000e-01 : f32
    %344 = vector.broadcast %cst_137 : f32 to vector<8x128xf32>
    %345 = arith.mulf %344, %343 : vector<8x128xf32>
    %cst_138 = arith.constant 5.000000e-01 : f32
    %346 = vector.broadcast %cst_138 : f32 to vector<8x128xf32>
    %347 = arith.addf %345, %346 : vector<8x128xf32>
    %348 = vector.extract_strided_slice %339 {offsets = [0, 128], sizes = [8, 128], strides = [1, 1]} : vector<8x512xf32> to vector<8x128xf32>
    %cst_139 = arith.constant 5.000000e-01 : f32
    %349 = vector.broadcast %cst_139 : f32 to vector<8x128xf32>
    %350 = arith.mulf %349, %348 : vector<8x128xf32>
    %351 = math.tanh %350 : vector<8x128xf32>
    %cst_140 = arith.constant 5.000000e-01 : f32
    %352 = vector.broadcast %cst_140 : f32 to vector<8x128xf32>
    %353 = arith.mulf %352, %351 : vector<8x128xf32>
    %cst_141 = arith.constant 5.000000e-01 : f32
    %354 = vector.broadcast %cst_141 : f32 to vector<8x128xf32>
    %355 = arith.addf %353, %354 : vector<8x128xf32>
    %356 = vector.extract_strided_slice %339 {offsets = [0, 256], sizes = [8, 128], strides = [1, 1]} : vector<8x512xf32> to vector<8x128xf32>
    %357 = math.tanh %356 : vector<8x128xf32>
    %358 = vector.extract_strided_slice %339 {offsets = [0, 384], sizes = [8, 128], strides = [1, 1]} : vector<8x512xf32> to vector<8x128xf32>
    %cst_142 = arith.constant 5.000000e-01 : f32
    %359 = vector.broadcast %cst_142 : f32 to vector<8x128xf32>
    %360 = arith.mulf %359, %358 : vector<8x128xf32>
    %361 = math.tanh %360 : vector<8x128xf32>
    %cst_143 = arith.constant 5.000000e-01 : f32
    %362 = vector.broadcast %cst_143 : f32 to vector<8x128xf32>
    %363 = arith.mulf %362, %361 : vector<8x128xf32>
    %cst_144 = arith.constant 5.000000e-01 : f32
    %364 = vector.broadcast %cst_144 : f32 to vector<8x128xf32>
    %365 = arith.addf %363, %364 : vector<8x128xf32>
    %366 = arith.mulf %355, %323 : vector<8x128xf32>
    %367 = arith.mulf %347, %357 : vector<8x128xf32>
    %368 = arith.addf %366, %367 : vector<8x128xf32>
    %369 = math.tanh %368 : vector<8x128xf32>
    %370 = arith.mulf %365, %369 : vector<8x128xf32>
    %371 = arith.truncf %370 : vector<8x128xf32> to vector<8x128xbf16>
    %372 = arith.index_cast %332 : i32 to index
    %c0_145 = arith.constant 0 : index
    %373 = vector.load %arg6[%372, %c0_145] : memref<64x128xbf16, #tpu.memory_space<vmem>>, vector<8x128xbf16>
    tpu.vector_store %arg6[%372, %c0_145], %371 {strides = array<i32>} : memref<64x128xbf16, #tpu.memory_space<vmem>>, vector<8x128xbf16>,
    %c0_146 = arith.constant 0 : index
    %c0_147 = arith.constant 0 : index
    %374 = vector.load %arg7[%c0_146, %c0_147] : memref<8x128xf32, #tpu.memory_space<vmem>>, vector<8x128xf32>
    tpu.vector_store %arg7[%c0_146, %c0_147], %370 {strides = array<i32>} : memref<8x128xf32, #tpu.memory_space<vmem>>, vector<8x128xf32>,
    %c0_148 = arith.constant 0 : index
    %c0_149 = arith.constant 0 : index
    %375 = vector.load %arg8[%c0_148, %c0_149] : memref<8x128xf32, #tpu.memory_space<vmem>>, vector<8x128xf32>
    tpu.vector_store %arg8[%c0_148, %c0_149], %368 {strides = array<i32>} : memref<8x128xf32, #tpu.memory_space<vmem>>, vector<8x128xf32>,
    return
  }
  func.func @transform_0(%arg0: i32, %arg1: i32) -> (i32, i32) {
    %c2_i32 = arith.constant 2 : i32
    %0 = arith.muli %c2_i32, %arg1 : i32
    %c0_i32 = arith.constant 0 : i32
    %1 = arith.subi %c0_i32, %0 : i32
    %2 = arith.muli %arg0, %1 : i32
    %3 = arith.addi %arg1, %2 : i32
    %c0_i32_0 = arith.constant 0 : i32
    %c0_i32_1 = arith.constant 0 : i32
    return %3, %c0_i32_0 : i32, i32
  }
  func.func @transform_1(%arg0: i32, %arg1: i32) -> (i32, i32, i32) {
    %c0_i32 = arith.constant 0 : i32
    %c0_i32_0 = arith.constant 0 : i32
    %c0_i32_1 = arith.constant 0 : i32
    return %arg0, %c0_i32, %c0_i32_0 : i32, i32, i32
  }
  func.func @transform_2(%arg0: i32, %arg1: i32) -> (i32, i32, i32) {
    %c0_i32 = arith.constant 0 : i32
    %c0_i32_0 = arith.constant 0 : i32
    %c0_i32_1 = arith.constant 0 : i32
    return %arg0, %c0_i32, %c0_i32_0 : i32, i32, i32
  }
  func.func @transform_3(%arg0: i32, %arg1: i32) -> (i32, i32, i32) {
    %c0_i32 = arith.constant 0 : i32
    %c0_i32_0 = arith.constant 0 : i32
    %c0_i32_1 = arith.constant 0 : i32
    return %arg0, %c0_i32, %c0_i32_0 : i32, i32, i32
  }
  func.func @transform_4(%arg0: i32, %arg1: i32) -> (i32, i32) {
    %c2_i32 = arith.constant 2 : i32
    %0 = arith.muli %c2_i32, %arg1 : i32
    %c0_i32 = arith.constant 0 : i32
    %1 = arith.subi %c0_i32, %0 : i32
    %2 = arith.muli %arg0, %1 : i32
    %3 = arith.addi %arg1, %2 : i32
    %c0_i32_0 = arith.constant 0 : i32
    return %3, %arg0 : i32, i32
  }
}

module attributes {stable_mosaic.version = 11 : i64} {
  func.func @_lstm_fused_kernel(%arg0: i32, %arg1: i32, %arg2: memref<64x256xbf16, #tpu.memory_space<vmem>>, %arg3: memref<1x256x512xbf16, #tpu.memory_space<vmem>>, %arg4: memref<1x128x512xbf16, #tpu.memory_space<vmem>>, %arg5: memref<1x1x512xf32, #tpu.memory_space<vmem>>, %arg6: memref<64x128xbf16, #tpu.memory_space<vmem>>, %arg7: memref<8x128xf32, #tpu.memory_space<vmem>>, %arg8: memref<8x128xf32, #tpu.memory_space<vmem>>, %arg9: memref<64x512xf32, #tpu.memory_space<vmem>>) attributes {dimension_semantics = [#tpu.dimension_semantics<parallel>, #tpu.dimension_semantics<arbitrary>], iteration_bounds = array<i64: 2, 1>, scalar_prefetch = 0 : i64, scratch_operands = 3 : i64, tpu.core_type = #tpu.core_type<tc>, window_params = [{transform_indices = @transform_0, window_bounds = array<i64: 64, 256>}, {transform_indices = @transform_1, window_bounds = array<i64: 1, 256, 512>}, {transform_indices = @transform_2, window_bounds = array<i64: 1, 128, 512>}, {transform_indices = @transform_3, window_bounds = array<i64: 1, 1, 512>}, {transform_indices = @transform_4, window_bounds = array<i64: 64, 128>}]} {
    %c0_i32 = arith.constant 0 : i32
    %0 = arith.cmpi eq, %arg1, %c0_i32 : i32
    %1 = arith.extui %0 : i1 to i32
    %c0_i32_0 = arith.constant 0 : i32
    %2 = arith.cmpi ne, %1, %c0_i32_0 : i32
    scf.if %2 {
      %cst_150 = arith.constant 0.000000e+00 : f32
      %376 = vector.broadcast %cst_150 : f32 to vector<8x128xf32>
      %c0_151 = arith.constant 0 : index
      %c0_152 = arith.constant 0 : index
      %377 = vector.load %arg7[%c0_151, %c0_152] : memref<8x128xf32, #tpu.memory_space<vmem>>, vector<8x128xf32>
      tpu.vector_store %arg7[%c0_151, %c0_152], %376 {strides = array<i32>} : memref<8x128xf32, #tpu.memory_space<vmem>>, vector<8x128xf32>,
      %cst_153 = arith.constant 0.000000e+00 : f32
      %378 = vector.broadcast %cst_153 : f32 to vector<8x128xf32>
      %c0_154 = arith.constant 0 : index
      %c0_155 = arith.constant 0 : index
      %379 = vector.load %arg8[%c0_154, %c0_155] : memref<8x128xf32, #tpu.memory_space<vmem>>, vector<8x128xf32>
      tpu.vector_store %arg8[%c0_154, %c0_155], %378 {strides = array<i32>} : memref<8x128xf32, #tpu.memory_space<vmem>>, vector<8x128xf32>,
    } else {
    }
    %c0 = arith.constant 0 : index
    %c0_1 = arith.constant 0 : index
    %3 = vector.load %arg2[%c0, %c0_1] : memref<64x256xbf16, #tpu.memory_space<vmem>>, vector<64x256xbf16>
    %c0_2 = arith.constant 0 : index
    %c0_3 = arith.constant 0 : index
    %c0_4 = arith.constant 0 : index
    %4 = vector.load %arg3[%c0_2, %c0_3, %c0_4] : memref<1x256x512xbf16, #tpu.memory_space<vmem>>, vector<1x256x512xbf16>
    %5 = vector.shape_cast %4 : vector<1x256x512xbf16> to vector<256x512xbf16>
    %cst = arith.constant dense<0.000000e+00> : vector<64x512xf32>
    %6 = tpu.matmul %3, %5, %cst {dimension_numbers = #tpu.dot_dimension_numbers<[1], [0], [0], [1], [0, 0, 1, 1], [], []>} : vector<64x256xbf16>, vector<256x512xbf16>, vector<64x512xf32> -> vector<64x512xf32>
    %c0_5 = arith.constant 0 : index
    %c0_6 = arith.constant 0 : index
    %c0_7 = arith.constant 0 : index
    %7 = vector.load %arg5[%c0_5, %c0_6, %c0_7] : memref<1x1x512xf32, #tpu.memory_space<vmem>>, vector<1x1x512xf32>
    %8 = vector.shape_cast %7 : vector<1x1x512xf32> to vector<1x512xf32>
    %9 = vector.broadcast %8 : vector<1x512xf32> to vector<64x512xf32>
    %10 = arith.addf %6, %9 : vector<64x512xf32>
    %c0_8 = arith.constant 0 : index
    %c0_9 = arith.constant 0 : index
    %11 = vector.load %arg9[%c0_8, %c0_9] : memref<64x512xf32, #tpu.memory_space<vmem>>, vector<64x512xf32>
    tpu.vector_store %arg9[%c0_8, %c0_9], %10 {strides = array<i32>} : memref<64x512xf32, #tpu.memory_space<vmem>>, vector<64x512xf32>,
    %c0_10 = arith.constant 0 : index
    %c0_11 = arith.constant 0 : index
    %12 = vector.load %arg7[%c0_10, %c0_11] : memref<8x128xf32, #tpu.memory_space<vmem>>, vector<8x128xf32>
    %c0_12 = arith.constant 0 : index
    %c0_13 = arith.constant 0 : index
    %13 = vector.load %arg8[%c0_12, %c0_13] : memref<8x128xf32, #tpu.memory_space<vmem>>, vector<8x128xf32>
    %c7_i32 = arith.constant 7 : i32
    %14 = arith.muli %arg0, %c7_i32 : i32
    %c0_i32_14 = arith.constant 0 : i32
    %15 = arith.addi %c0_i32_14, %14 : i32
    %c8_i32 = arith.constant 8 : i32
    %16 = arith.muli %15, %c8_i32 : i32
    %17 = tpu.assume_multiple %16, 8 : i32
    %18 = arith.index_cast %17 : i32 to index
    %c0_15 = arith.constant 0 : index
    %19 = vector.load %arg9[%18, %c0_15] : memref<64x512xf32, #tpu.memory_space<vmem>>, vector<8x512xf32>
    %20 = arith.truncf %12 : vector<8x128xf32> to vector<8x128xbf16>
    %c0_16 = arith.constant 0 : index
    %c0_17 = arith.constant 0 : index
    %c0_18 = arith.constant 0 : index
    %21 = vector.load %arg4[%c0_16, %c0_17, %c0_18] : memref<1x128x512xbf16, #tpu.memory_space<vmem>>, vector<1x128x512xbf16>
    %22 = vector.shape_cast %21 : vector<1x128x512xbf16> to vector<128x512xbf16>
    %cst_19 = arith.constant dense<0.000000e+00> : vector<8x512xf32>
    %23 = tpu.matmul %20, %22, %cst_19 {dimension_numbers = #tpu.dot_dimension_numbers<[1], [0], [0], [1], [0, 0, 1, 1], [], []>} : vector<8x128xbf16>, vector<128x512xbf16>, vector<8x512xf32> -> vector<8x512xf32>
    %24 = arith.addf %19, %23 : vector<8x512xf32>
    %25 = vector.extract_strided_slice %24 {offsets = [0, 0], sizes = [8, 128], strides = [1, 1]} : vector<8x512xf32> to vector<8x128xf32>
    %cst_20 = arith.constant 5.000000e-01 : f32
    %26 = vector.broadcast %cst_20 : f32 to vector<8x128xf32>
    %27 = arith.mulf %26, %25 : vector<8x128xf32>
    %28 = math.tanh %27 : vector<8x128xf32>
    %cst_21 = arith.constant 5.000000e-01 : f32
    %29 = vector.broadcast %cst_21 : f32 to vector<8x128xf32>
    %30 = arith.mulf %29, %28 : vector<8x128xf32>
    %cst_22 = arith.constant 5.000000e-01 : f32
    %31 = vector.broadcast %cst_22 : f32 to vector<8x128xf32>
    %32 = arith.addf %30, %31 : vector<8x128xf32>
    %33 = vector.extract_strided_slice %24 {offsets = [0, 128], sizes = [8, 128], strides = [1, 1]} : vector<8x512xf32> to vector<8x128xf32>
    %cst_23 = arith.constant 5.000000e-01 : f32
    %34 = vector.broadcast %cst_23 : f32 to vector<8x128xf32>
    %35 = arith.mulf %34, %33 : vector<8x128xf32>
    %36 = math.tanh %35 : vector<8x128xf32>
    %cst_24 = arith.constant 5.000000e-01 : f32
    %37 = vector.broadcast %cst_24 : f32 to vector<8x128xf32>
    %38 = arith.mulf %37, %36 : vector<8x128xf32>
    %cst_25 = arith.constant 5.000000e-01 : f32
    %39 = vector.broadcast %cst_25 : f32 to vector<8x128xf32>
    %40 = arith.addf %38, %39 : vector<8x128xf32>
    %41 = vector.extract_strided_slice %24 {offsets = [0, 256], sizes = [8, 128], strides = [1, 1]} : vector<8x512xf32> to vector<8x128xf32>
    %42 = math.tanh %41 : vector<8x128xf32>
    %43 = vector.extract_strided_slice %24 {offsets = [0, 384], sizes = [8, 128], strides = [1, 1]} : vector<8x512xf32> to vector<8x128xf32>
    %cst_26 = arith.constant 5.000000e-01 : f32
    %44 = vector.broadcast %cst_26 : f32 to vector<8x128xf32>
    %45 = arith.mulf %44, %43 : vector<8x128xf32>
    %46 = math.tanh %45 : vector<8x128xf32>
    %cst_27 = arith.constant 5.000000e-01 : f32
    %47 = vector.broadcast %cst_27 : f32 to vector<8x128xf32>
    %48 = arith.mulf %47, %46 : vector<8x128xf32>
    %cst_28 = arith.constant 5.000000e-01 : f32
    %49 = vector.broadcast %cst_28 : f32 to vector<8x128xf32>
    %50 = arith.addf %48, %49 : vector<8x128xf32>
    %51 = arith.mulf %40, %13 : vector<8x128xf32>
    %52 = arith.mulf %32, %42 : vector<8x128xf32>
    %53 = arith.addf %51, %52 : vector<8x128xf32>
    %54 = math.tanh %53 : vector<8x128xf32>
    %55 = arith.mulf %50, %54 : vector<8x128xf32>
    %56 = arith.truncf %55 : vector<8x128xf32> to vector<8x128xbf16>
    %57 = arith.index_cast %17 : i32 to index
    %c0_29 = arith.constant 0 : index
    %58 = vector.load %arg6[%57, %c0_29] : memref<64x128xbf16, #tpu.memory_space<vmem>>, vector<8x128xbf16>
    tpu.vector_store %arg6[%57, %c0_29], %56 {strides = array<i32>} : memref<64x128xbf16, #tpu.memory_space<vmem>>, vector<8x128xbf16>,
    %c5_i32 = arith.constant 5 : i32
    %59 = arith.muli %arg0, %c5_i32 : i32
    %c1_i32 = arith.constant 1 : i32
    %60 = arith.addi %c1_i32, %59 : i32
    %c8_i32_30 = arith.constant 8 : i32
    %61 = arith.muli %60, %c8_i32_30 : i32
    %62 = tpu.assume_multiple %61, 8 : i32
    %63 = arith.index_cast %62 : i32 to index
    %c0_31 = arith.constant 0 : index
    %64 = vector.load %arg9[%63, %c0_31] : memref<64x512xf32, #tpu.memory_space<vmem>>, vector<8x512xf32>
    %65 = arith.truncf %55 : vector<8x128xf32> to vector<8x128xbf16>
    %c0_32 = arith.constant 0 : index
    %c0_33 = arith.constant 0 : index
    %c0_34 = arith.constant 0 : index
    %66 = vector.load %arg4[%c0_32, %c0_33, %c0_34] : memref<1x128x512xbf16, #tpu.memory_space<vmem>>, vector<1x128x512xbf16>
    %67 = vector.shape_cast %66 : vector<1x128x512xbf16> to vector<128x512xbf16>
    %cst_35 = arith.constant dense<0.000000e+00> : vector<8x512xf32>
    %68 = tpu.matmul %65, %67, %cst_35 {dimension_numbers = #tpu.dot_dimension_numbers<[1], [0], [0], [1], [0, 0, 1, 1], [], []>} : vector<8x128xbf16>, vector<128x512xbf16>, vector<8x512xf32> -> vector<8x512xf32>
    %69 = arith.addf %64, %68 : vector<8x512xf32>
    %70 = vector.extract_strided_slice %69 {offsets = [0, 0], sizes = [8, 128], strides = [1, 1]} : vector<8x512xf32> to vector<8x128xf32>
    %cst_36 = arith.constant 5.000000e-01 : f32
    %71 = vector.broadcast %cst_36 : f32 to vector<8x128xf32>
    %72 = arith.mulf %71, %70 : vector<8x128xf32>
    %73 = math.tanh %72 : vector<8x128xf32>
    %cst_37 = arith.constant 5.000000e-01 : f32
    %74 = vector.broadcast %cst_37 : f32 to vector<8x128xf32>
    %75 = arith.mulf %74, %73 : vector<8x128xf32>
    %cst_38 = arith.constant 5.000000e-01 : f32
    %76 = vector.broadcast %cst_38 : f32 to vector<8x128xf32>
    %77 = arith.addf %75, %76 : vector<8x128xf32>
    %78 = vector.extract_strided_slice %69 {offsets = [0, 128], sizes = [8, 128], strides = [1, 1]} : vector<8x512xf32> to vector<8x128xf32>
    %cst_39 = arith.constant 5.000000e-01 : f32
    %79 = vector.broadcast %cst_39 : f32 to vector<8x128xf32>
    %80 = arith.mulf %79, %78 : vector<8x128xf32>
    %81 = math.tanh %80 : vector<8x128xf32>
    %cst_40 = arith.constant 5.000000e-01 : f32
    %82 = vector.broadcast %cst_40 : f32 to vector<8x128xf32>
    %83 = arith.mulf %82, %81 : vector<8x128xf32>
    %cst_41 = arith.constant 5.000000e-01 : f32
    %84 = vector.broadcast %cst_41 : f32 to vector<8x128xf32>
    %85 = arith.addf %83, %84 : vector<8x128xf32>
    %86 = vector.extract_strided_slice %69 {offsets = [0, 256], sizes = [8, 128], strides = [1, 1]} : vector<8x512xf32> to vector<8x128xf32>
    %87 = math.tanh %86 : vector<8x128xf32>
    %88 = vector.extract_strided_slice %69 {offsets = [0, 384], sizes = [8, 128], strides = [1, 1]} : vector<8x512xf32> to vector<8x128xf32>
    %cst_42 = arith.constant 5.000000e-01 : f32
    %89 = vector.broadcast %cst_42 : f32 to vector<8x128xf32>
    %90 = arith.mulf %89, %88 : vector<8x128xf32>
    %91 = math.tanh %90 : vector<8x128xf32>
    %cst_43 = arith.constant 5.000000e-01 : f32
    %92 = vector.broadcast %cst_43 : f32 to vector<8x128xf32>
    %93 = arith.mulf %92, %91 : vector<8x128xf32>
    %cst_44 = arith.constant 5.000000e-01 : f32
    %94 = vector.broadcast %cst_44 : f32 to vector<8x128xf32>
    %95 = arith.addf %93, %94 : vector<8x128xf32>
    %96 = arith.mulf %85, %53 : vector<8x128xf32>
    %97 = arith.mulf %77, %87 : vector<8x128xf32>
    %98 = arith.addf %96, %97 : vector<8x128xf32>
    %99 = math.tanh %98 : vector<8x128xf32>
    %100 = arith.mulf %95, %99 : vector<8x128xf32>
    %101 = arith.truncf %100 : vector<8x128xf32> to vector<8x128xbf16>
    %102 = arith.index_cast %62 : i32 to index
    %c0_45 = arith.constant 0 : index
    %103 = vector.load %arg6[%102, %c0_45] : memref<64x128xbf16, #tpu.memory_space<vmem>>, vector<8x128xbf16>
    tpu.vector_store %arg6[%102, %c0_45], %101 {strides = array<i32>} : memref<64x128xbf16, #tpu.memory_space<vmem>>, vector<8x128xbf16>,
    %c3_i32 = arith.constant 3 : i32
    %104 = arith.muli %arg0, %c3_i32 : i32
    %c2_i32 = arith.constant 2 : i32
    %105 = arith.addi %c2_i32, %104 : i32
    %c8_i32_46 = arith.constant 8 : i32
    %106 = arith.muli %105, %c8_i32_46 : i32
    %107 = tpu.assume_multiple %106, 8 : i32
    %108 = arith.index_cast %107 : i32 to index
    %c0_47 = arith.constant 0 : index
    %109 = vector.load %arg9[%108, %c0_47] : memref<64x512xf32, #tpu.memory_space<vmem>>, vector<8x512xf32>
    %110 = arith.truncf %100 : vector<8x128xf32> to vector<8x128xbf16>
    %c0_48 = arith.constant 0 : index
    %c0_49 = arith.constant 0 : index
    %c0_50 = arith.constant 0 : index
    %111 = vector.load %arg4[%c0_48, %c0_49, %c0_50] : memref<1x128x512xbf16, #tpu.memory_space<vmem>>, vector<1x128x512xbf16>
    %112 = vector.shape_cast %111 : vector<1x128x512xbf16> to vector<128x512xbf16>
    %cst_51 = arith.constant dense<0.000000e+00> : vector<8x512xf32>
    %113 = tpu.matmul %110, %112, %cst_51 {dimension_numbers = #tpu.dot_dimension_numbers<[1], [0], [0], [1], [0, 0, 1, 1], [], []>} : vector<8x128xbf16>, vector<128x512xbf16>, vector<8x512xf32> -> vector<8x512xf32>
    %114 = arith.addf %109, %113 : vector<8x512xf32>
    %115 = vector.extract_strided_slice %114 {offsets = [0, 0], sizes = [8, 128], strides = [1, 1]} : vector<8x512xf32> to vector<8x128xf32>
    %cst_52 = arith.constant 5.000000e-01 : f32
    %116 = vector.broadcast %cst_52 : f32 to vector<8x128xf32>
    %117 = arith.mulf %116, %115 : vector<8x128xf32>
    %118 = math.tanh %117 : vector<8x128xf32>
    %cst_53 = arith.constant 5.000000e-01 : f32
    %119 = vector.broadcast %cst_53 : f32 to vector<8x128xf32>
    %120 = arith.mulf %119, %118 : vector<8x128xf32>
    %cst_54 = arith.constant 5.000000e-01 : f32
    %121 = vector.broadcast %cst_54 : f32 to vector<8x128xf32>
    %122 = arith.addf %120, %121 : vector<8x128xf32>
    %123 = vector.extract_strided_slice %114 {offsets = [0, 128], sizes = [8, 128], strides = [1, 1]} : vector<8x512xf32> to vector<8x128xf32>
    %cst_55 = arith.constant 5.000000e-01 : f32
    %124 = vector.broadcast %cst_55 : f32 to vector<8x128xf32>
    %125 = arith.mulf %124, %123 : vector<8x128xf32>
    %126 = math.tanh %125 : vector<8x128xf32>
    %cst_56 = arith.constant 5.000000e-01 : f32
    %127 = vector.broadcast %cst_56 : f32 to vector<8x128xf32>
    %128 = arith.mulf %127, %126 : vector<8x128xf32>
    %cst_57 = arith.constant 5.000000e-01 : f32
    %129 = vector.broadcast %cst_57 : f32 to vector<8x128xf32>
    %130 = arith.addf %128, %129 : vector<8x128xf32>
    %131 = vector.extract_strided_slice %114 {offsets = [0, 256], sizes = [8, 128], strides = [1, 1]} : vector<8x512xf32> to vector<8x128xf32>
    %132 = math.tanh %131 : vector<8x128xf32>
    %133 = vector.extract_strided_slice %114 {offsets = [0, 384], sizes = [8, 128], strides = [1, 1]} : vector<8x512xf32> to vector<8x128xf32>
    %cst_58 = arith.constant 5.000000e-01 : f32
    %134 = vector.broadcast %cst_58 : f32 to vector<8x128xf32>
    %135 = arith.mulf %134, %133 : vector<8x128xf32>
    %136 = math.tanh %135 : vector<8x128xf32>
    %cst_59 = arith.constant 5.000000e-01 : f32
    %137 = vector.broadcast %cst_59 : f32 to vector<8x128xf32>
    %138 = arith.mulf %137, %136 : vector<8x128xf32>
    %cst_60 = arith.constant 5.000000e-01 : f32
    %139 = vector.broadcast %cst_60 : f32 to vector<8x128xf32>
    %140 = arith.addf %138, %139 : vector<8x128xf32>
    %141 = arith.mulf %130, %98 : vector<8x128xf32>
    %142 = arith.mulf %122, %132 : vector<8x128xf32>
    %143 = arith.addf %141, %142 : vector<8x128xf32>
    %144 = math.tanh %143 : vector<8x128xf32>
    %145 = arith.mulf %140, %144 : vector<8x128xf32>
    %146 = arith.truncf %145 : vector<8x128xf32> to vector<8x128xbf16>
    %147 = arith.index_cast %107 : i32 to index
    %c0_61 = arith.constant 0 : index
    %148 = vector.load %arg6[%147, %c0_61] : memref<64x128xbf16, #tpu.memory_space<vmem>>, vector<8x128xbf16>
    tpu.vector_store %arg6[%147, %c0_61], %146 {strides = array<i32>} : memref<64x128xbf16, #tpu.memory_space<vmem>>, vector<8x128xbf16>,
    %c1_i32_62 = arith.constant 1 : i32
    %149 = arith.muli %arg0, %c1_i32_62 : i32
    %c3_i32_63 = arith.constant 3 : i32
    %150 = arith.addi %c3_i32_63, %149 : i32
    %c8_i32_64 = arith.constant 8 : i32
    %151 = arith.muli %150, %c8_i32_64 : i32
    %152 = tpu.assume_multiple %151, 8 : i32
    %153 = arith.index_cast %152 : i32 to index
    %c0_65 = arith.constant 0 : index
    %154 = vector.load %arg9[%153, %c0_65] : memref<64x512xf32, #tpu.memory_space<vmem>>, vector<8x512xf32>
    %155 = arith.truncf %145 : vector<8x128xf32> to vector<8x128xbf16>
    %c0_66 = arith.constant 0 : index
    %c0_67 = arith.constant 0 : index
    %c0_68 = arith.constant 0 : index
    %156 = vector.load %arg4[%c0_66, %c0_67, %c0_68] : memref<1x128x512xbf16, #tpu.memory_space<vmem>>, vector<1x128x512xbf16>
    %157 = vector.shape_cast %156 : vector<1x128x512xbf16> to vector<128x512xbf16>
    %cst_69 = arith.constant dense<0.000000e+00> : vector<8x512xf32>
    %158 = tpu.matmul %155, %157, %cst_69 {dimension_numbers = #tpu.dot_dimension_numbers<[1], [0], [0], [1], [0, 0, 1, 1], [], []>} : vector<8x128xbf16>, vector<128x512xbf16>, vector<8x512xf32> -> vector<8x512xf32>
    %159 = arith.addf %154, %158 : vector<8x512xf32>
    %160 = vector.extract_strided_slice %159 {offsets = [0, 0], sizes = [8, 128], strides = [1, 1]} : vector<8x512xf32> to vector<8x128xf32>
    %cst_70 = arith.constant 5.000000e-01 : f32
    %161 = vector.broadcast %cst_70 : f32 to vector<8x128xf32>
    %162 = arith.mulf %161, %160 : vector<8x128xf32>
    %163 = math.tanh %162 : vector<8x128xf32>
    %cst_71 = arith.constant 5.000000e-01 : f32
    %164 = vector.broadcast %cst_71 : f32 to vector<8x128xf32>
    %165 = arith.mulf %164, %163 : vector<8x128xf32>
    %cst_72 = arith.constant 5.000000e-01 : f32
    %166 = vector.broadcast %cst_72 : f32 to vector<8x128xf32>
    %167 = arith.addf %165, %166 : vector<8x128xf32>
    %168 = vector.extract_strided_slice %159 {offsets = [0, 128], sizes = [8, 128], strides = [1, 1]} : vector<8x512xf32> to vector<8x128xf32>
    %cst_73 = arith.constant 5.000000e-01 : f32
    %169 = vector.broadcast %cst_73 : f32 to vector<8x128xf32>
    %170 = arith.mulf %169, %168 : vector<8x128xf32>
    %171 = math.tanh %170 : vector<8x128xf32>
    %cst_74 = arith.constant 5.000000e-01 : f32
    %172 = vector.broadcast %cst_74 : f32 to vector<8x128xf32>
    %173 = arith.mulf %172, %171 : vector<8x128xf32>
    %cst_75 = arith.constant 5.000000e-01 : f32
    %174 = vector.broadcast %cst_75 : f32 to vector<8x128xf32>
    %175 = arith.addf %173, %174 : vector<8x128xf32>
    %176 = vector.extract_strided_slice %159 {offsets = [0, 256], sizes = [8, 128], strides = [1, 1]} : vector<8x512xf32> to vector<8x128xf32>
    %177 = math.tanh %176 : vector<8x128xf32>
    %178 = vector.extract_strided_slice %159 {offsets = [0, 384], sizes = [8, 128], strides = [1, 1]} : vector<8x512xf32> to vector<8x128xf32>
    %cst_76 = arith.constant 5.000000e-01 : f32
    %179 = vector.broadcast %cst_76 : f32 to vector<8x128xf32>
    %180 = arith.mulf %179, %178 : vector<8x128xf32>
    %181 = math.tanh %180 : vector<8x128xf32>
    %cst_77 = arith.constant 5.000000e-01 : f32
    %182 = vector.broadcast %cst_77 : f32 to vector<8x128xf32>
    %183 = arith.mulf %182, %181 : vector<8x128xf32>
    %cst_78 = arith.constant 5.000000e-01 : f32
    %184 = vector.broadcast %cst_78 : f32 to vector<8x128xf32>
    %185 = arith.addf %183, %184 : vector<8x128xf32>
    %186 = arith.mulf %175, %143 : vector<8x128xf32>
    %187 = arith.mulf %167, %177 : vector<8x128xf32>
    %188 = arith.addf %186, %187 : vector<8x128xf32>
    %189 = math.tanh %188 : vector<8x128xf32>
    %190 = arith.mulf %185, %189 : vector<8x128xf32>
    %191 = arith.truncf %190 : vector<8x128xf32> to vector<8x128xbf16>
    %192 = arith.index_cast %152 : i32 to index
    %c0_79 = arith.constant 0 : index
    %193 = vector.load %arg6[%192, %c0_79] : memref<64x128xbf16, #tpu.memory_space<vmem>>, vector<8x128xbf16>
    tpu.vector_store %arg6[%192, %c0_79], %191 {strides = array<i32>} : memref<64x128xbf16, #tpu.memory_space<vmem>>, vector<8x128xbf16>,
    %c-1_i32 = arith.constant -1 : i32
    %194 = arith.muli %arg0, %c-1_i32 : i32
    %c4_i32 = arith.constant 4 : i32
    %195 = arith.addi %c4_i32, %194 : i32
    %c8_i32_80 = arith.constant 8 : i32
    %196 = arith.muli %195, %c8_i32_80 : i32
    %197 = tpu.assume_multiple %196, 8 : i32
    %198 = arith.index_cast %197 : i32 to index
    %c0_81 = arith.constant 0 : index
    %199 = vector.load %arg9[%198, %c0_81] : memref<64x512xf32, #tpu.memory_space<vmem>>, vector<8x512xf32>
    %200 = arith.truncf %190 : vector<8x128xf32> to vector<8x128xbf16>
    %c0_82 = arith.constant 0 : index
    %c0_83 = arith.constant 0 : index
    %c0_84 = arith.constant 0 : index
    %201 = vector.load %arg4[%c0_82, %c0_83, %c0_84] : memref<1x128x512xbf16, #tpu.memory_space<vmem>>, vector<1x128x512xbf16>
    %202 = vector.shape_cast %201 : vector<1x128x512xbf16> to vector<128x512xbf16>
    %cst_85 = arith.constant dense<0.000000e+00> : vector<8x512xf32>
    %203 = tpu.matmul %200, %202, %cst_85 {dimension_numbers = #tpu.dot_dimension_numbers<[1], [0], [0], [1], [0, 0, 1, 1], [], []>} : vector<8x128xbf16>, vector<128x512xbf16>, vector<8x512xf32> -> vector<8x512xf32>
    %204 = arith.addf %199, %203 : vector<8x512xf32>
    %205 = vector.extract_strided_slice %204 {offsets = [0, 0], sizes = [8, 128], strides = [1, 1]} : vector<8x512xf32> to vector<8x128xf32>
    %cst_86 = arith.constant 5.000000e-01 : f32
    %206 = vector.broadcast %cst_86 : f32 to vector<8x128xf32>
    %207 = arith.mulf %206, %205 : vector<8x128xf32>
    %208 = math.tanh %207 : vector<8x128xf32>
    %cst_87 = arith.constant 5.000000e-01 : f32
    %209 = vector.broadcast %cst_87 : f32 to vector<8x128xf32>
    %210 = arith.mulf %209, %208 : vector<8x128xf32>
    %cst_88 = arith.constant 5.000000e-01 : f32
    %211 = vector.broadcast %cst_88 : f32 to vector<8x128xf32>
    %212 = arith.addf %210, %211 : vector<8x128xf32>
    %213 = vector.extract_strided_slice %204 {offsets = [0, 128], sizes = [8, 128], strides = [1, 1]} : vector<8x512xf32> to vector<8x128xf32>
    %cst_89 = arith.constant 5.000000e-01 : f32
    %214 = vector.broadcast %cst_89 : f32 to vector<8x128xf32>
    %215 = arith.mulf %214, %213 : vector<8x128xf32>
    %216 = math.tanh %215 : vector<8x128xf32>
    %cst_90 = arith.constant 5.000000e-01 : f32
    %217 = vector.broadcast %cst_90 : f32 to vector<8x128xf32>
    %218 = arith.mulf %217, %216 : vector<8x128xf32>
    %cst_91 = arith.constant 5.000000e-01 : f32
    %219 = vector.broadcast %cst_91 : f32 to vector<8x128xf32>
    %220 = arith.addf %218, %219 : vector<8x128xf32>
    %221 = vector.extract_strided_slice %204 {offsets = [0, 256], sizes = [8, 128], strides = [1, 1]} : vector<8x512xf32> to vector<8x128xf32>
    %222 = math.tanh %221 : vector<8x128xf32>
    %223 = vector.extract_strided_slice %204 {offsets = [0, 384], sizes = [8, 128], strides = [1, 1]} : vector<8x512xf32> to vector<8x128xf32>
    %cst_92 = arith.constant 5.000000e-01 : f32
    %224 = vector.broadcast %cst_92 : f32 to vector<8x128xf32>
    %225 = arith.mulf %224, %223 : vector<8x128xf32>
    %226 = math.tanh %225 : vector<8x128xf32>
    %cst_93 = arith.constant 5.000000e-01 : f32
    %227 = vector.broadcast %cst_93 : f32 to vector<8x128xf32>
    %228 = arith.mulf %227, %226 : vector<8x128xf32>
    %cst_94 = arith.constant 5.000000e-01 : f32
    %229 = vector.broadcast %cst_94 : f32 to vector<8x128xf32>
    %230 = arith.addf %228, %229 : vector<8x128xf32>
    %231 = arith.mulf %220, %188 : vector<8x128xf32>
    %232 = arith.mulf %212, %222 : vector<8x128xf32>
    %233 = arith.addf %231, %232 : vector<8x128xf32>
    %234 = math.tanh %233 : vector<8x128xf32>
    %235 = arith.mulf %230, %234 : vector<8x128xf32>
    %236 = arith.truncf %235 : vector<8x128xf32> to vector<8x128xbf16>
    %237 = arith.index_cast %197 : i32 to index
    %c0_95 = arith.constant 0 : index
    %238 = vector.load %arg6[%237, %c0_95] : memref<64x128xbf16, #tpu.memory_space<vmem>>, vector<8x128xbf16>
    tpu.vector_store %arg6[%237, %c0_95], %236 {strides = array<i32>} : memref<64x128xbf16, #tpu.memory_space<vmem>>, vector<8x128xbf16>,
    %c-3_i32 = arith.constant -3 : i32
    %239 = arith.muli %arg0, %c-3_i32 : i32
    %c5_i32_96 = arith.constant 5 : i32
    %240 = arith.addi %c5_i32_96, %239 : i32
    %c8_i32_97 = arith.constant 8 : i32
    %241 = arith.muli %240, %c8_i32_97 : i32
    %242 = tpu.assume_multiple %241, 8 : i32
    %243 = arith.index_cast %242 : i32 to index
    %c0_98 = arith.constant 0 : index
    %244 = vector.load %arg9[%243, %c0_98] : memref<64x512xf32, #tpu.memory_space<vmem>>, vector<8x512xf32>
    %245 = arith.truncf %235 : vector<8x128xf32> to vector<8x128xbf16>
    %c0_99 = arith.constant 0 : index
    %c0_100 = arith.constant 0 : index
    %c0_101 = arith.constant 0 : index
    %246 = vector.load %arg4[%c0_99, %c0_100, %c0_101] : memref<1x128x512xbf16, #tpu.memory_space<vmem>>, vector<1x128x512xbf16>
    %247 = vector.shape_cast %246 : vector<1x128x512xbf16> to vector<128x512xbf16>
    %cst_102 = arith.constant dense<0.000000e+00> : vector<8x512xf32>
    %248 = tpu.matmul %245, %247, %cst_102 {dimension_numbers = #tpu.dot_dimension_numbers<[1], [0], [0], [1], [0, 0, 1, 1], [], []>} : vector<8x128xbf16>, vector<128x512xbf16>, vector<8x512xf32> -> vector<8x512xf32>
    %249 = arith.addf %244, %248 : vector<8x512xf32>
    %250 = vector.extract_strided_slice %249 {offsets = [0, 0], sizes = [8, 128], strides = [1, 1]} : vector<8x512xf32> to vector<8x128xf32>
    %cst_103 = arith.constant 5.000000e-01 : f32
    %251 = vector.broadcast %cst_103 : f32 to vector<8x128xf32>
    %252 = arith.mulf %251, %250 : vector<8x128xf32>
    %253 = math.tanh %252 : vector<8x128xf32>
    %cst_104 = arith.constant 5.000000e-01 : f32
    %254 = vector.broadcast %cst_104 : f32 to vector<8x128xf32>
    %255 = arith.mulf %254, %253 : vector<8x128xf32>
    %cst_105 = arith.constant 5.000000e-01 : f32
    %256 = vector.broadcast %cst_105 : f32 to vector<8x128xf32>
    %257 = arith.addf %255, %256 : vector<8x128xf32>
    %258 = vector.extract_strided_slice %249 {offsets = [0, 128], sizes = [8, 128], strides = [1, 1]} : vector<8x512xf32> to vector<8x128xf32>
    %cst_106 = arith.constant 5.000000e-01 : f32
    %259 = vector.broadcast %cst_106 : f32 to vector<8x128xf32>
    %260 = arith.mulf %259, %258 : vector<8x128xf32>
    %261 = math.tanh %260 : vector<8x128xf32>
    %cst_107 = arith.constant 5.000000e-01 : f32
    %262 = vector.broadcast %cst_107 : f32 to vector<8x128xf32>
    %263 = arith.mulf %262, %261 : vector<8x128xf32>
    %cst_108 = arith.constant 5.000000e-01 : f32
    %264 = vector.broadcast %cst_108 : f32 to vector<8x128xf32>
    %265 = arith.addf %263, %264 : vector<8x128xf32>
    %266 = vector.extract_strided_slice %249 {offsets = [0, 256], sizes = [8, 128], strides = [1, 1]} : vector<8x512xf32> to vector<8x128xf32>
    %267 = math.tanh %266 : vector<8x128xf32>
    %268 = vector.extract_strided_slice %249 {offsets = [0, 384], sizes = [8, 128], strides = [1, 1]} : vector<8x512xf32> to vector<8x128xf32>
    %cst_109 = arith.constant 5.000000e-01 : f32
    %269 = vector.broadcast %cst_109 : f32 to vector<8x128xf32>
    %270 = arith.mulf %269, %268 : vector<8x128xf32>
    %271 = math.tanh %270 : vector<8x128xf32>
    %cst_110 = arith.constant 5.000000e-01 : f32
    %272 = vector.broadcast %cst_110 : f32 to vector<8x128xf32>
    %273 = arith.mulf %272, %271 : vector<8x128xf32>
    %cst_111 = arith.constant 5.000000e-01 : f32
    %274 = vector.broadcast %cst_111 : f32 to vector<8x128xf32>
    %275 = arith.addf %273, %274 : vector<8x128xf32>
    %276 = arith.mulf %265, %233 : vector<8x128xf32>
    %277 = arith.mulf %257, %267 : vector<8x128xf32>
    %278 = arith.addf %276, %277 : vector<8x128xf32>
    %279 = math.tanh %278 : vector<8x128xf32>
    %280 = arith.mulf %275, %279 : vector<8x128xf32>
    %281 = arith.truncf %280 : vector<8x128xf32> to vector<8x128xbf16>
    %282 = arith.index_cast %242 : i32 to index
    %c0_112 = arith.constant 0 : index
    %283 = vector.load %arg6[%282, %c0_112] : memref<64x128xbf16, #tpu.memory_space<vmem>>, vector<8x128xbf16>
    tpu.vector_store %arg6[%282, %c0_112], %281 {strides = array<i32>} : memref<64x128xbf16, #tpu.memory_space<vmem>>, vector<8x128xbf16>,
    %c-5_i32 = arith.constant -5 : i32
    %284 = arith.muli %arg0, %c-5_i32 : i32
    %c6_i32 = arith.constant 6 : i32
    %285 = arith.addi %c6_i32, %284 : i32
    %c8_i32_113 = arith.constant 8 : i32
    %286 = arith.muli %285, %c8_i32_113 : i32
    %287 = tpu.assume_multiple %286, 8 : i32
    %288 = arith.index_cast %287 : i32 to index
    %c0_114 = arith.constant 0 : index
    %289 = vector.load %arg9[%288, %c0_114] : memref<64x512xf32, #tpu.memory_space<vmem>>, vector<8x512xf32>
    %290 = arith.truncf %280 : vector<8x128xf32> to vector<8x128xbf16>
    %c0_115 = arith.constant 0 : index
    %c0_116 = arith.constant 0 : index
    %c0_117 = arith.constant 0 : index
    %291 = vector.load %arg4[%c0_115, %c0_116, %c0_117] : memref<1x128x512xbf16, #tpu.memory_space<vmem>>, vector<1x128x512xbf16>
    %292 = vector.shape_cast %291 : vector<1x128x512xbf16> to vector<128x512xbf16>
    %cst_118 = arith.constant dense<0.000000e+00> : vector<8x512xf32>
    %293 = tpu.matmul %290, %292, %cst_118 {dimension_numbers = #tpu.dot_dimension_numbers<[1], [0], [0], [1], [0, 0, 1, 1], [], []>} : vector<8x128xbf16>, vector<128x512xbf16>, vector<8x512xf32> -> vector<8x512xf32>
    %294 = arith.addf %289, %293 : vector<8x512xf32>
    %295 = vector.extract_strided_slice %294 {offsets = [0, 0], sizes = [8, 128], strides = [1, 1]} : vector<8x512xf32> to vector<8x128xf32>
    %cst_119 = arith.constant 5.000000e-01 : f32
    %296 = vector.broadcast %cst_119 : f32 to vector<8x128xf32>
    %297 = arith.mulf %296, %295 : vector<8x128xf32>
    %298 = math.tanh %297 : vector<8x128xf32>
    %cst_120 = arith.constant 5.000000e-01 : f32
    %299 = vector.broadcast %cst_120 : f32 to vector<8x128xf32>
    %300 = arith.mulf %299, %298 : vector<8x128xf32>
    %cst_121 = arith.constant 5.000000e-01 : f32
    %301 = vector.broadcast %cst_121 : f32 to vector<8x128xf32>
    %302 = arith.addf %300, %301 : vector<8x128xf32>
    %303 = vector.extract_strided_slice %294 {offsets = [0, 128], sizes = [8, 128], strides = [1, 1]} : vector<8x512xf32> to vector<8x128xf32>
    %cst_122 = arith.constant 5.000000e-01 : f32
    %304 = vector.broadcast %cst_122 : f32 to vector<8x128xf32>
    %305 = arith.mulf %304, %303 : vector<8x128xf32>
    %306 = math.tanh %305 : vector<8x128xf32>
    %cst_123 = arith.constant 5.000000e-01 : f32
    %307 = vector.broadcast %cst_123 : f32 to vector<8x128xf32>
    %308 = arith.mulf %307, %306 : vector<8x128xf32>
    %cst_124 = arith.constant 5.000000e-01 : f32
    %309 = vector.broadcast %cst_124 : f32 to vector<8x128xf32>
    %310 = arith.addf %308, %309 : vector<8x128xf32>
    %311 = vector.extract_strided_slice %294 {offsets = [0, 256], sizes = [8, 128], strides = [1, 1]} : vector<8x512xf32> to vector<8x128xf32>
    %312 = math.tanh %311 : vector<8x128xf32>
    %313 = vector.extract_strided_slice %294 {offsets = [0, 384], sizes = [8, 128], strides = [1, 1]} : vector<8x512xf32> to vector<8x128xf32>
    %cst_125 = arith.constant 5.000000e-01 : f32
    %314 = vector.broadcast %cst_125 : f32 to vector<8x128xf32>
    %315 = arith.mulf %314, %313 : vector<8x128xf32>
    %316 = math.tanh %315 : vector<8x128xf32>
    %cst_126 = arith.constant 5.000000e-01 : f32
    %317 = vector.broadcast %cst_126 : f32 to vector<8x128xf32>
    %318 = arith.mulf %317, %316 : vector<8x128xf32>
    %cst_127 = arith.constant 5.000000e-01 : f32
    %319 = vector.broadcast %cst_127 : f32 to vector<8x128xf32>
    %320 = arith.addf %318, %319 : vector<8x128xf32>
    %321 = arith.mulf %310, %278 : vector<8x128xf32>
    %322 = arith.mulf %302, %312 : vector<8x128xf32>
    %323 = arith.addf %321, %322 : vector<8x128xf32>
    %324 = math.tanh %323 : vector<8x128xf32>
    %325 = arith.mulf %320, %324 : vector<8x128xf32>
    %326 = arith.truncf %325 : vector<8x128xf32> to vector<8x128xbf16>
    %327 = arith.index_cast %287 : i32 to index
    %c0_128 = arith.constant 0 : index
    %328 = vector.load %arg6[%327, %c0_128] : memref<64x128xbf16, #tpu.memory_space<vmem>>, vector<8x128xbf16>
    tpu.vector_store %arg6[%327, %c0_128], %326 {strides = array<i32>} : memref<64x128xbf16, #tpu.memory_space<vmem>>, vector<8x128xbf16>,
    %c-7_i32 = arith.constant -7 : i32
    %329 = arith.muli %arg0, %c-7_i32 : i32
    %c7_i32_129 = arith.constant 7 : i32
    %330 = arith.addi %c7_i32_129, %329 : i32
    %c8_i32_130 = arith.constant 8 : i32
    %331 = arith.muli %330, %c8_i32_130 : i32
    %332 = tpu.assume_multiple %331, 8 : i32
    %333 = arith.index_cast %332 : i32 to index
    %c0_131 = arith.constant 0 : index
    %334 = vector.load %arg9[%333, %c0_131] : memref<64x512xf32, #tpu.memory_space<vmem>>, vector<8x512xf32>
    %335 = arith.truncf %325 : vector<8x128xf32> to vector<8x128xbf16>
    %c0_132 = arith.constant 0 : index
    %c0_133 = arith.constant 0 : index
    %c0_134 = arith.constant 0 : index
    %336 = vector.load %arg4[%c0_132, %c0_133, %c0_134] : memref<1x128x512xbf16, #tpu.memory_space<vmem>>, vector<1x128x512xbf16>
    %337 = vector.shape_cast %336 : vector<1x128x512xbf16> to vector<128x512xbf16>
    %cst_135 = arith.constant dense<0.000000e+00> : vector<8x512xf32>
    %338 = tpu.matmul %335, %337, %cst_135 {dimension_numbers = #tpu.dot_dimension_numbers<[1], [0], [0], [1], [0, 0, 1, 1], [], []>} : vector<8x128xbf16>, vector<128x512xbf16>, vector<8x512xf32> -> vector<8x512xf32>
    %339 = arith.addf %334, %338 : vector<8x512xf32>
    %340 = vector.extract_strided_slice %339 {offsets = [0, 0], sizes = [8, 128], strides = [1, 1]} : vector<8x512xf32> to vector<8x128xf32>
    %cst_136 = arith.constant 5.000000e-01 : f32
    %341 = vector.broadcast %cst_136 : f32 to vector<8x128xf32>
    %342 = arith.mulf %341, %340 : vector<8x128xf32>
    %343 = math.tanh %342 : vector<8x128xf32>
    %cst_137 = arith.constant 5.000000e-01 : f32
    %344 = vector.broadcast %cst_137 : f32 to vector<8x128xf32>
    %345 = arith.mulf %344, %343 : vector<8x128xf32>
    %cst_138 = arith.constant 5.000000e-01 : f32
    %346 = vector.broadcast %cst_138 : f32 to vector<8x128xf32>
    %347 = arith.addf %345, %346 : vector<8x128xf32>
    %348 = vector.extract_strided_slice %339 {offsets = [0, 128], sizes = [8, 128], strides = [1, 1]} : vector<8x512xf32> to vector<8x128xf32>
    %cst_139 = arith.constant 5.000000e-01 : f32
    %349 = vector.broadcast %cst_139 : f32 to vector<8x128xf32>
    %350 = arith.mulf %349, %348 : vector<8x128xf32>
    %351 = math.tanh %350 : vector<8x128xf32>
    %cst_140 = arith.constant 5.000000e-01 : f32
    %352 = vector.broadcast %cst_140 : f32 to vector<8x128xf32>
    %353 = arith.mulf %352, %351 : vector<8x128xf32>
    %cst_141 = arith.constant 5.000000e-01 : f32
    %354 = vector.broadcast %cst_141 : f32 to vector<8x128xf32>
    %355 = arith.addf %353, %354 : vector<8x128xf32>
    %356 = vector.extract_strided_slice %339 {offsets = [0, 256], sizes = [8, 128], strides = [1, 1]} : vector<8x512xf32> to vector<8x128xf32>
    %357 = math.tanh %356 : vector<8x128xf32>
    %358 = vector.extract_strided_slice %339 {offsets = [0, 384], sizes = [8, 128], strides = [1, 1]} : vector<8x512xf32> to vector<8x128xf32>
    %cst_142 = arith.constant 5.000000e-01 : f32
    %359 = vector.broadcast %cst_142 : f32 to vector<8x128xf32>
    %360 = arith.mulf %359, %358 : vector<8x128xf32>
    %361 = math.tanh %360 : vector<8x128xf32>
    %cst_143 = arith.constant 5.000000e-01 : f32
    %362 = vector.broadcast %cst_143 : f32 to vector<8x128xf32>
    %363 = arith.mulf %362, %361 : vector<8x128xf32>
    %cst_144 = arith.constant 5.000000e-01 : f32
    %364 = vector.broadcast %cst_144 : f32 to vector<8x128xf32>
    %365 = arith.addf %363, %364 : vector<8x128xf32>
    %366 = arith.mulf %355, %323 : vector<8x128xf32>
    %367 = arith.mulf %347, %357 : vector<8x128xf32>
    %368 = arith.addf %366, %367 : vector<8x128xf32>
    %369 = math.tanh %368 : vector<8x128xf32>
    %370 = arith.mulf %365, %369 : vector<8x128xf32>
    %371 = arith.truncf %370 : vector<8x128xf32> to vector<8x128xbf16>
    %372 = arith.index_cast %332 : i32 to index
    %c0_145 = arith.constant 0 : index
    %373 = vector.load %arg6[%372, %c0_145] : memref<64x128xbf16, #tpu.memory_space<vmem>>, vector<8x128xbf16>
    tpu.vector_store %arg6[%372, %c0_145], %371 {strides = array<i32>} : memref<64x128xbf16, #tpu.memory_space<vmem>>, vector<8x128xbf16>,
    %c0_146 = arith.constant 0 : index
    %c0_147 = arith.constant 0 : index
    %374 = vector.load %arg7[%c0_146, %c0_147] : memref<8x128xf32, #tpu.memory_space<vmem>>, vector<8x128xf32>
    tpu.vector_store %arg7[%c0_146, %c0_147], %370 {strides = array<i32>} : memref<8x128xf32, #tpu.memory_space<vmem>>, vector<8x128xf32>,
    %c0_148 = arith.constant 0 : index
    %c0_149 = arith.constant 0 : index
    %375 = vector.load %arg8[%c0_148, %c0_149] : memref<8x128xf32, #tpu.memory_space<vmem>>, vector<8x128xf32>
    tpu.vector_store %arg8[%c0_148, %c0_149], %368 {strides = array<i32>} : memref<8x128xf32, #tpu.memory_space<vmem>>, vector<8x128xf32>,
    return
  }
  func.func @transform_0(%arg0: i32, %arg1: i32) -> (i32, i32) {
    %c2_i32 = arith.constant 2 : i32
    %0 = arith.muli %c2_i32, %arg1 : i32
    %c0_i32 = arith.constant 0 : i32
    %1 = arith.subi %c0_i32, %0 : i32
    %2 = arith.muli %arg0, %1 : i32
    %3 = arith.addi %arg1, %2 : i32
    %c0_i32_0 = arith.constant 0 : i32
    %c0_i32_1 = arith.constant 0 : i32
    return %3, %c0_i32_0 : i32, i32
  }
  func.func @transform_1(%arg0: i32, %arg1: i32) -> (i32, i32, i32) {
    %c0_i32 = arith.constant 0 : i32
    %c0_i32_0 = arith.constant 0 : i32
    %c0_i32_1 = arith.constant 0 : i32
    return %arg0, %c0_i32, %c0_i32_0 : i32, i32, i32
  }
  func.func @transform_2(%arg0: i32, %arg1: i32) -> (i32, i32, i32) {
    %c0_i32 = arith.constant 0 : i32
    %c0_i32_0 = arith.constant 0 : i32
    %c0_i32_1 = arith.constant 0 : i32
    return %arg0, %c0_i32, %c0_i32_0 : i32, i32, i32
  }
  func.func @transform_3(%arg0: i32, %arg1: i32) -> (i32, i32, i32) {
    %c0_i32 = arith.constant 0 : i32
    %c0_i32_0 = arith.constant 0 : i32
    %c0_i32_1 = arith.constant 0 : i32
    return %arg0, %c0_i32, %c0_i32_0 : i32, i32, i32
  }
  func.func @transform_4(%arg0: i32, %arg1: i32) -> (i32, i32) {
    %c2_i32 = arith.constant 2 : i32
    %0 = arith.muli %c2_i32, %arg1 : i32
    %c0_i32 = arith.constant 0 : i32
    %1 = arith.subi %c0_i32, %0 : i32
    %2 = arith.muli %arg0, %1 : i32
    %3 = arith.addi %arg1, %2 : i32
    %c0_i32_0 = arith.constant 0 : i32
    return %3, %arg0 : i32, i32
  }
}

</mosaic_0001>

<llo_original>
// kernel: _lambda_.2
$region0: #{_lambda_.2}
  #allocation0 [shape = 'u32[]', space=smem, size = 0x4, offset = 0x4, fixed_abs, tag = 'smem constant byte address 0x4 - core index']
  #allocation1 [shape = 'u32[144,128]{1,0:T(1,128)}', space=vmem, size = 0x12000, scoped, tag = 'internal scratch']
  #allocation2 [shape = 'f32[8,128]{1,0:T(8,128)}', space=vmem, size = 0x1000, scoped, tag = 'scratch operand']
  #allocation3 [shape = 'f32[8,128]{1,0:T(8,128)}', space=vmem, size = 0x1000, scoped, tag = 'scratch operand']
  #allocation4 [shape = 'f32[64,512]{1,0:T(8,128)}', space=vmem, size = 0x20000, scoped, tag = 'scratch operand']
  %s0 = inlined_call_operand.vmem [shape: bf16[64,128], index: 0, kind: input, shape index: {}]
  %s1 = inlined_call_operand.vmem [shape: bf16[2,128,512], index: 1, kind: input, shape index: {}]
  %s2 = inlined_call_operand.vmem [shape: bf16[2,128,512], index: 2, kind: input, shape index: {}]
  %s3 = inlined_call_operand.vmem [shape: f32[2,1,512], index: 3, kind: input, shape index: {}]
  %s4 = inlined_call_operand.vmem [shape: bf16[64,256], index: 4, kind: output, shape index: {}]
  %s5 = sld [smem:[#allocation0]]
  $region90: #{_lambda_.2} parent=0
    _
  %s7 = ssub.s32 1, %s5
  %s8 = scalar_select 0, %s7, %s5
  $region1: #{_lambda_.2} parent=0
    #allocation5 [shape = 'u8[32768]{0}', space=vmem, size = 0x8000, scoped, tag = 'output window, operand 0']
    loop: start=0, step=1, limit=4
    $region2: #{_lambda_.2} parent=1 // loop_pre_header
      _
    $region3: #{_lambda_.2} parent=1 // loop_header
      %s10 = sphi 0, %s14
      %p11 = scmp.ge.s32.totalorder %s10, 4
      %s17 = sphi 0, %s29
      %s18 = sphi 0, %s25
      %s19 = sphi 0, %s17
      %s20 = sphi 0, %s18
      %s21 = sphi 0, %s19
      %s22 = sphi 0, %s20
      %s40 = sphi 0, %s42
      %s43 = sphi 0, %s40
      %s44 = sphi 0, %s43
      %s60 = sphi 0, %s44
      %s66 = sphi 0, %s68
      %s69 = sphi 0, %s66
      %s70 = sphi 0, %s69
      %s86 = sphi 0, %s70
      %s92 = sphi 0, %s94
      %s95 = sphi 0, %s92
      %s96 = sphi 0, %s95
      %s112 = sphi 0, %s96
      %s118 = sphi 0, %s120
      %s121 = sphi 0, %s118
      %s122 = sphi 0, %s121
      %s138 = sphi 0, %s122
      %s154 = sphi 0, %s156
      %s157 = sphi 0, %s154
      %s158 = sphi 0, %s157
      %s174 = sphi 0, %s158
    $region4: #{_lambda_.2} parent=1 // loop_header_branch
      %13 = sbr.rel (%p11) target = $region8
    $region5: #{_lambda_.2} parent=1 // loop_body
      %s15 = ssub.s32 %s10, 1
      %s16 = ssub.s32 %s10, 2
      %s23 = sadd.s32 1, %s18
      %p24 = scmp.ge.s32.totalorder %s23, 1
      %s25 = scalar_select %p24, 0, %s23
      %s26 = sadd.s32 1, %s17
      %s27 = scalar_select %p24, %s26, %s17
      %p28 = scmp.ge.s32.totalorder %s27, 2
      %s29 = scalar_select %p28, 0, %s27
      %s30 = smul.u32 %s18, 2
      %s31 = ssub.s32 0, %s30
      %s32 = smul.u32 %s17, %s31
      %s33 = sadd.s32 %s18, %s32
      %s34 = smul.u32 %s25, 2
      %s35 = ssub.s32 0, %s34
      %s36 = smul.u32 %s29, %s35
      %s37 = sadd.s32 %s25, %s36
      %s38 = ssub.s32 %s33, %s37
      %p39 = scmp.eq.s32.totalorder %s38, 0
      %s41 = sadd.s32 %s40, 1
      %s42 = scalar_select %p39, %s40, %s41
      %p45 = pneg %p39
      %p46 = scmp.eq.s32.totalorder %s10, 1
      %p47 = por %p45, %p46
      %p48 = scmp.ne.s32.totalorder %s40, %s43
      %p49 = scmp.eq.s32.totalorder %s10, 0
      %p50 = por %p48, %p49
      %p51 = scmp.ne.s32.totalorder %s40, %s43
      %p52 = scmp.eq.s32.totalorder %s15, 1
      %p53 = por %p51, %p52
      %p54 = scmp.ne.s32.totalorder %s43, %s44
      %p55 = scmp.eq.s32.totalorder %s15, 0
      %p56 = por %p54, %p55
      %p57 = scmp.ne.s32.totalorder %s43, %s44
      %p58 = scmp.eq.s32.totalorder %s16, 1
      %p59 = por %p57, %p58
      %p61 = scmp.ne.s32.totalorder %s44, %s60
      %p62 = scmp.eq.s32.totalorder %s16, 0
      %p63 = por %p61, %p62
      %s64 = ssub.s32 %s17, %s29
      %p65 = scmp.eq.s32.totalorder %s64, 0
      %s67 = sadd.s32 %s66, 1
      %s68 = scalar_select %p65, %s66, %s67
      %p71 = pneg %p65
      %p72 = scmp.eq.s32.totalorder %s10, 1
      %p73 = por %p71, %p72
      %p74 = scmp.ne.s32.totalorder %s66, %s69
      %p75 = scmp.eq.s32.totalorder %s10, 0
      %p76 = por %p74, %p75
      %p77 = scmp.ne.s32.totalorder %s66, %s69
      %p78 = scmp.eq.s32.totalorder %s15, 1
      %p79 = por %p77, %p78
      %p80 = scmp.ne.s32.totalorder %s69, %s70
      %p81 = scmp.eq.s32.totalorder %s15, 0
      %p82 = por %p80, %p81
      %p83 = scmp.ne.s32.totalorder %s69, %s70
      %p84 = scmp.eq.s32.totalorder %s16, 1
      %p85 = por %p83, %p84
      %p87 = scmp.ne.s32.totalorder %s70, %s86
      %p88 = scmp.eq.s32.totalorder %s16, 0
      %p89 = por %p87, %p88
      %s90 = ssub.s32 %s17, %s29
      %p91 = scmp.eq.s32.totalorder %s90, 0
      %s93 = sadd.s32 %s92, 1
      %s94 = scalar_select %p91, %s92, %s93
      %p97 = pneg %p91
      %p98 = scmp.eq.s32.totalorder %s10, 1
      %p99 = por %p97, %p98
      %p100 = scmp.ne.s32.totalorder %s92, %s95
      %p101 = scmp.eq.s32.totalorder %s10, 0
      %p102 = por %p100, %p101
      %p103 = scmp.ne.s32.totalorder %s92, %s95
      %p104 = scmp.eq.s32.totalorder %s15, 1
      %p105 = por %p103, %p104
      %p106 = scmp.ne.s32.totalorder %s95, %s96
      %p107 = scmp.eq.s32.totalorder %s15, 0
      %p108 = por %p106, %p107
      %p109 = scmp.ne.s32.totalorder %s95, %s96
      %p110 = scmp.eq.s32.totalorder %s16, 1
      %p111 = por %p109, %p110
      %p113 = scmp.ne.s32.totalorder %s96, %s112
      %p114 = scmp.eq.s32.totalorder %s16, 0
      %p115 = por %p113, %p114
      %s116 = ssub.s32 %s17, %s29
      %p117 = scmp.eq.s32.totalorder %s116, 0
      %s119 = sadd.s32 %s118, 1
      %s120 = scalar_select %p117, %s118, %s119
      %p123 = pneg %p117
      %p124 = scmp.eq.s32.totalorder %s10, 1
      %p125 = por %p123, %p124
      %p126 = scmp.ne.s32.totalorder %s118, %s121
      %p127 = scmp.eq.s32.totalorder %s10, 0
      %p128 = por %p126, %p127
      %p129 = scmp.ne.s32.totalorder %s118, %s121
      %p130 = scmp.eq.s32.totalorder %s15, 1
      %p131 = por %p129, %p130
      %p132 = scmp.ne.s32.totalorder %s121, %s122
      %p133 = scmp.eq.s32.totalorder %s15, 0
      %p134 = por %p132, %p133
      %p135 = scmp.ne.s32.totalorder %s121, %s122
      %p136 = scmp.eq.s32.totalorder %s16, 1
      %p137 = por %p135, %p136
      %p139 = scmp.ne.s32.totalorder %s122, %s138
      %p140 = scmp.eq.s32.totalorder %s16, 0
      %p141 = por %p139, %p140
      %s142 = smul.u32 %s18, 2
      %s143 = ssub.s32 0, %s142
      %s144 = smul.u32 %s17, %s143
      %s145 = sadd.s32 %s18, %s144
      %s146 = smul.u32 %s25, 2
      %s147 = ssub.s32 0, %s146
      %s148 = smul.u32 %s29, %s147
      %s149 = sadd.s32 %s25, %s148
      %s150 = ssub.s32 %s145, %s149
      %s151 = ssub.s32 %s17, %s29
      %s152 = sor.u32 %s150, %s151
      %p153 = scmp.eq.s32.totalorder %s152, 0
      %s155 = sadd.s32 %s154, 1
      %s156 = scalar_select %p153, %s154, %s155
      %p159 = pneg %p153
      %p160 = scmp.eq.s32.totalorder %s10, 1
      %p161 = por %p159, %p160
      %p162 = scmp.ne.s32.totalorder %s154, %s157
      %p163 = scmp.eq.s32.totalorder %s10, 0
      %p164 = por %p162, %p163
      %p165 = scmp.ne.s32.totalorder %s154, %s157
      %p166 = scmp.eq.s32.totalorder %s15, 1
      %p167 = por %p165, %p166
      %p168 = scmp.ne.s32.totalorder %s157, %s158
      %p169 = scmp.eq.s32.totalorder %s15, 0
      %p170 = por %p168, %p169
      %p171 = scmp.ne.s32.totalorder %s157, %s158
      %p172 = scmp.eq.s32.totalorder %s16, 1
      %p173 = por %p171, %p172
      %p175 = scmp.ne.s32.totalorder %s158, %s174
      %p176 = scmp.eq.s32.totalorder %s16, 0
      %p177 = por %p175, %p176
      %p178 = scmp.le.s32.totalorder 1, %s10
      %p179 = scmp.lt.s32.totalorder %s10, 3
      %p180 = pnand %p178, %p179
      %p181 = pneg %p180
      // Predicated region
      $region9: #{_lambda_.2} parent=5 // pred_check
        _
      $region10: #{_lambda_.2} parent=5 // pred_check_branch
        %183 = sbr.rel (%p180) target = $region12
      $region11: #{_lambda_.2} parent=5 // pred_region
        %s184 = ssub.s32 %s10, 1
      $region12: #{_lambda_.2} parent=5 // pred_fallthru
        _
      %p185 = scmp.lt.s32.totalorder %s10, 2
      // Predicated region
      $region13: #{_lambda_.2} parent=5 // pred_check
        %p186 = pneg %p185
      $region14: #{_lambda_.2} parent=5 // pred_check_branch
        %188 = sbr.rel (%p186) target = $region16
      $region15: #{_lambda_.2} parent=5 // pred_region
        // Predicated region
        $region17: #{_lambda_.2} parent=15 // pred_check
          %p189 = pneg %p50
        $region18: #{_lambda_.2} parent=15 // pred_check_branch
          %191 = sbr.rel (%p189) target = $region20
        $region19: #{_lambda_.2} parent=15 // pred_region
          %s192 = smul.u32 %s18, 2
          %s193 = ssub.s32 0, %s192
          %s194 = smul.u32 %s17, %s193
          %s195 = sadd.s32 %s18, %s194
          %s196 = smul.u32 8, %s195
          %p197 = scmp.lt.s32.totalorder %s196, 7
          %s198 = scalar_select %p197, %s196, 7
          %s199 = smul.addr %s198, 4
          %s200 = scalar_lea.vmem %s0, %s199
          %s201 = smul.u32 %s18, 2
          %s202 = ssub.s32 0, %s201
          %s203 = smul.u32 %s17, %s202
          %s204 = sadd.s32 %s18, %s203
          %s205 = smul.u32 8, %s204
        $region20: #{_lambda_.2} parent=15 // pred_fallthru
          _
        // Predicated region
        $region21: #{_lambda_.2} parent=15 // pred_check
          %p206 = pneg %p76
        $region22: #{_lambda_.2} parent=15 // pred_check_branch
          %208 = sbr.rel (%p206) target = $region24
        $region23: #{_lambda_.2} parent=15 // pred_region
          %p209 = scmp.lt.s32.totalorder %s17, 1
          %s210 = scalar_select %p209, %s17, 1
          %s211 = smul.addr %s210, 64
          %s212 = smul.addr %s211, 4
          %s213 = scalar_lea.vmem %s1, %s212
        $region24: #{_lambda_.2} parent=15 // pred_fallthru
          _
        // Predicated region
        $region25: #{_lambda_.2} parent=15 // pred_check
          %p214 = pneg %p102
        $region26: #{_lambda_.2} parent=15 // pred_check_branch
          %216 = sbr.rel (%p214) target = $region28
        $region27: #{_lambda_.2} parent=15 // pred_region
          %p217 = scmp.lt.s32.totalorder %s17, 1
          %s218 = scalar_select %p217, %s17, 1
          %s219 = smul.addr %s218, 64
          %s220 = smul.addr %s219, 4
          %s221 = scalar_lea.vmem %s2, %s220
        $region28: #{_lambda_.2} parent=15 // pred_fallthru
          _
        // Predicated region
        $region29: #{_lambda_.2} parent=15 // pred_check
          %p222 = pneg %p128
        $region30: #{_lambda_.2} parent=15 // pred_check_branch
          %224 = sbr.rel (%p222) target = $region32
        $region31: #{_lambda_.2} parent=15 // pred_region
          %p225 = scmp.lt.s32.totalorder %s17, 1
          %s226 = scalar_select %p225, %s17, 1
          %s227 = smul.addr %s226, 4
          %s228 = scalar_lea.vmem %s3, %s227
        $region32: #{_lambda_.2} parent=15 // pred_fallthru
          _
      $region16: #{_lambda_.2} parent=5 // pred_fallthru
        _
      %p229 = scmp.le.s32.totalorder 1, %s10
      %p230 = scmp.lt.s32.totalorder %s10, 3
      %p231 = pnand %p229, %p230
      %p232 = pneg %p231
      // Predicated region
      $region33: #{_lambda_.2} parent=5 // pred_check
        _
      $region34: #{_lambda_.2} parent=5 // pred_check_branch
        %234 = sbr.rel (%p231) target = $region36
      $region35: #{_lambda_.2} parent=5 // pred_region
        %s235 = ssub.s32 %s10, 1
        %s236 = smul.u32 %s20, 2
        %s237 = ssub.s32 0, %s236
        %s238 = smul.u32 %s19, %s237
        %s239 = sadd.s32 %s20, %s238
        %s240 = smul.u32 8, %s239
        %p241 = scmp.lt.s32.totalorder %s240, 7
        %s242 = scalar_select %p241, %s240, 7
        %s243 = smul.addr %s242, 4
        %s244 = scalar_lea.vmem %s0, %s243
        %p245 = pneg %p56
        %p246 = pneg %p53
        %p247 = scmp.lt.s32.totalorder %s19, 1
        %s248 = scalar_select %p247, %s19, 1
        %s249 = smul.addr %s248, 64
        %s250 = smul.addr %s249, 4
        %s251 = scalar_lea.vmem %s1, %s250
        %p252 = pneg %p82
        %p253 = pneg %p79
        %p254 = scmp.lt.s32.totalorder %s19, 1
        %s255 = scalar_select %p254, %s19, 1
        %s256 = smul.addr %s255, 64
        %s257 = smul.addr %s256, 4
        %s258 = scalar_lea.vmem %s2, %s257
        %p259 = pneg %p108
        %p260 = pneg %p105
        %p261 = scmp.lt.s32.totalorder %s19, 1
        %s262 = scalar_select %p261, %s19, 1
        %s263 = smul.addr %s262, 4
        %s264 = scalar_lea.vmem %s3, %s263
        %p265 = pneg %p134
        %p266 = pneg %p131
        %p267 = pneg %p170
        %p268 = pneg %p167
        %s269 = sand.u32 %s157, 1
        %s270 = sand.u32 %s157, 1
        %s271 = smul.addr %s270, 32
        %s272 = scalar_lea.vmem [#allocation5], %s271
        %s273 = smul.u32 %s20, 2
        %s274 = ssub.s32 0, %s273
        %s275 = smul.u32 %s19, %s274
        %s276 = sadd.s32 %s20, %s275
        %s277 = smul.u32 8, %s276
        %p278 = scmp.lt.s32.totalorder %s277, 7
        %s279 = scalar_select %p278, %s277, 7
        %s280 = smul.addr %s279, 4
        %s281 = scalar_lea.vmem %s0, %s280
        %s282 = smul.u32 %s20, 2
        %s283 = ssub.s32 0, %s282
        %s284 = smul.u32 %s19, %s283
        %s285 = sadd.s32 %s20, %s284
        %s286 = smul.u32 8, %s285
        %p287 = scmp.lt.s32.totalorder %s19, 1
        %s288 = scalar_select %p287, %s19, 1
        %s289 = smul.addr %s288, 64
        %s290 = smul.addr %s289, 4
        %s291 = scalar_lea.vmem %s1, %s290
        %p292 = scmp.lt.s32.totalorder %s19, 1
        %s293 = scalar_select %p292, %s19, 1
        %s294 = smul.addr %s293, 64
        %s295 = smul.addr %s294, 4
        %s296 = scalar_lea.vmem %s2, %s295
        %p297 = scmp.lt.s32.totalorder %s19, 1
        %s298 = scalar_select %p297, %s19, 1
        %s299 = smul.addr %s298, 4
        %s300 = scalar_lea.vmem %s3, %s299
        %s301 = smul.u32 %s20, 2
        %s302 = ssub.s32 0, %s301
        %s303 = smul.u32 %s19, %s302
        %s304 = sadd.s32 %s20, %s303
        %s305 = smul.u32 8, %s304
        %p307 = scmp.eq.s32.totalorder %s20, 0
        // Predicated region
        $region37: #{_lambda_.2} parent=35 // pred_check
          %p308 = pneg %p307
        $region38: #{_lambda_.2} parent=35 // pred_check_branch
          %310 = sbr.rel (%p308) target = $region40
        $region39: #{_lambda_.2} parent=35 // pred_region
          %311 = vst [vmem:[#allocation2] sm:$0xff] 0.0
          %312 = vst [vmem:[#allocation3] sm:$0xff] 0.0
        $region40: #{_lambda_.2} parent=35 // pred_fallthru
          _
        %v313 = vld [vmem:[%s281] sm:$0xf]
        %v314 = vld [vmem:[%s281 + $0x4] sm:$0xf]
        %v315 = vld [vmem:[%s281 + $0x8] sm:$0xf]
        %v316 = vld [vmem:[%s281 + $0xc] sm:$0xf]
        %v317 = vld [vmem:[%s281 + $0x10] sm:$0xf]
        %v318 = vld [vmem:[%s281 + $0x14] sm:$0xf]
        %v319 = vld [vmem:[%s281 + $0x18] sm:$0xf]
        %v320 = vld [vmem:[%s281 + $0x1c] sm:$0xf]
        %v321 = vld [vmem:[%s291] sm:$0xff]
        %v322 = vld [vmem:[%s291 + $0x8] sm:$0xff]
        %v323 = vld [vmem:[%s291 + $0x10] sm:$0xff]
        %v324 = vld [vmem:[%s291 + $0x18] sm:$0xff]
        %v325 = vld [vmem:[%s291 + $0x20] sm:$0xff]
        %v326 = vld [vmem:[%s291 + $0x28] sm:$0xff]
        %v327 = vld [vmem:[%s291 + $0x30] sm:$0xff]
        %v328 = vld [vmem:[%s291 + $0x38] sm:$0xff]
        %v329 = vld [vmem:[%s291 + $0x40] sm:$0xff]
        %v330 = vld [vmem:[%s291 + $0x48] sm:$0xff]
        %v331 = vld [vmem:[%s291 + $0x50] sm:$0xff]
        %v332 = vld [vmem:[%s291 + $0x58] sm:$0xff]
        %v333 = vld [vmem:[%s291 + $0x60] sm:$0xff]
        %v334 = vld [vmem:[%s291 + $0x68] sm:$0xff]
        %v335 = vld [vmem:[%s291 + $0x70] sm:$0xff]
        %v336 = vld [vmem:[%s291 + $0x78] sm:$0xff]
        %v337 = vld [vmem:[%s291 + $0x80] sm:$0xff]
        %v338 = vld [vmem:[%s291 + $0x88] sm:$0xff]
        %v339 = vld [vmem:[%s291 + $0x90] sm:$0xff]
        %v340 = vld [vmem:[%s291 + $0x98] sm:$0xff]
        %v341 = vld [vmem:[%s291 + $0xa0] sm:$0xff]
        %v342 = vld [vmem:[%s291 + $0xa8] sm:$0xff]
        %v343 = vld [vmem:[%s291 + $0xb0] sm:$0xff]
        %v344 = vld [vmem:[%s291 + $0xb8] sm:$0xff]
        %v345 = vld [vmem:[%s291 + $0xc0] sm:$0xff]
        %v346 = vld [vmem:[%s291 + $0xc8] sm:$0xff]
        %v347 = vld [vmem:[%s291 + $0xd0] sm:$0xff]
        %v348 = vld [vmem:[%s291 + $0xd8] sm:$0xff]
        %v349 = vld [vmem:[%s291 + $0xe0] sm:$0xff]
        %v350 = vld [vmem:[%s291 + $0xe8] sm:$0xff]
        %v351 = vld [vmem:[%s291 + $0xf0] sm:$0xff]
        %v352 = vld [vmem:[%s291 + $0xf8] sm:$0xff]
        %v353 = vld [vmem:[%s300] sm:$0xf]
        %v355 = vlaneseq
        %v356 = vshrl.u32 %v355, 7
        %v357 = vsub.s32 0, %v356
        %v358 = vrot.slane %v353, %v357
        %v359 = vlaneseq
        %v360 = vshrl.u32 %v359, 7
        %v361 = vsub.s32 1, %v360
        %v362 = vrot.slane %v353, %v361
        %v363 = vlaneseq
        %v364 = vshrl.u32 %v363, 7
        %v365 = vsub.s32 2, %v364
        %v366 = vrot.slane %v353, %v365
        %v367 = vlaneseq
        %v368 = vshrl.u32 %v367, 7
        %v369 = vsub.s32 3, %v368
        %v370 = vrot.slane %v353, %v369
        %v383 = vunpack.c.l.b16 %v313
        %v384 = vunpack.c.l.b16 %v314
        %v385 = vunpack.c.l.b16 %v315
        %v386 = vunpack.c.l.b16 %v316
        %v387 = vunpack.c.l.b16 %v317
        %v388 = vunpack.c.l.b16 %v318
        %v389 = vunpack.c.l.b16 %v319
        %v390 = vunpack.c.l.b16 %v320
        %v391 = vpack.c.b16 %v384, %v383
        %v392 = vpack.c.b16 %v386, %v385
        %v393 = vpack.c.b16 %v388, %v387
        %v394 = vpack.c.b16 %v390, %v389
        %v431 = vunpack.c.l.b16 %v321
        %v432 = vunpack.c.h.b16 %v321
        %v433 = vunpack.c.l.b16 %v322
        %v434 = vunpack.c.h.b16 %v322
        %v435 = vunpack.c.l.b16 %v323
        %v436 = vunpack.c.h.b16 %v323
        %v437 = vunpack.c.l.b16 %v324
        %v438 = vunpack.c.h.b16 %v324
        %v439 = vunpack.c.l.b16 %v325
        %v440 = vunpack.c.h.b16 %v325
        %v441 = vunpack.c.l.b16 %v326
        %v442 = vunpack.c.h.b16 %v326
        %v443 = vunpack.c.l.b16 %v327
        %v444 = vunpack.c.h.b16 %v327
        %v445 = vunpack.c.l.b16 %v328
        %v446 = vunpack.c.h.b16 %v328
        %v447 = vunpack.c.l.b16 %v329
        %v448 = vunpack.c.h.b16 %v329
        %v449 = vunpack.c.l.b16 %v330
        %v450 = vunpack.c.h.b16 %v330
        %v451 = vunpack.c.l.b16 %v331
        %v452 = vunpack.c.h.b16 %v331
        %v453 = vunpack.c.l.b16 %v332
        %v454 = vunpack.c.h.b16 %v332
        %v455 = vunpack.c.l.b16 %v333
        %v456 = vunpack.c.h.b16 %v333
        %v457 = vunpack.c.l.b16 %v334
        %v458 = vunpack.c.h.b16 %v334
        %v459 = vunpack.c.l.b16 %v335
        %v460 = vunpack.c.h.b16 %v335
        %v461 = vunpack.c.l.b16 %v336
        %v462 = vunpack.c.h.b16 %v336
        %v463 = vunpack.c.l.b16 %v337
        %v464 = vunpack.c.h.b16 %v337
        %v465 = vunpack.c.l.b16 %v338
        %v466 = vunpack.c.h.b16 %v338
        %v467 = vunpack.c.l.b16 %v339
        %v468 = vunpack.c.h.b16 %v339
        %v469 = vunpack.c.l.b16 %v340
        %v470 = vunpack.c.h.b16 %v340
        %v471 = vunpack.c.l.b16 %v341
        %v472 = vunpack.c.h.b16 %v341
        %v473 = vunpack.c.l.b16 %v342
        %v474 = vunpack.c.h.b16 %v342
        %v475 = vunpack.c.l.b16 %v343
        %v476 = vunpack.c.h.b16 %v343
        %v477 = vunpack.c.l.b16 %v344
        %v478 = vunpack.c.h.b16 %v344
        %v479 = vunpack.c.l.b16 %v345
        %v480 = vunpack.c.h.b16 %v345
        %v481 = vunpack.c.l.b16 %v346
        %v482 = vunpack.c.h.b16 %v346
        %v483 = vunpack.c.l.b16 %v347
        %v484 = vunpack.c.h.b16 %v347
        %v485 = vunpack.c.l.b16 %v348
        %v486 = vunpack.c.h.b16 %v348
        %v487 = vunpack.c.l.b16 %v349
        %v488 = vunpack.c.h.b16 %v349
        %v489 = vunpack.c.l.b16 %v350
        %v490 = vunpack.c.h.b16 %v350
        %v491 = vunpack.c.l.b16 %v351
        %v492 = vunpack.c.h.b16 %v351
        %v493 = vunpack.c.l.b16 %v352
        %v494 = vunpack.c.h.b16 %v352
        %v495 = vpack.c.b16 %v435, %v431
        %v496 = vpack.c.b16 %v436, %v432
        %v497 = vpack.c.b16 %v437, %v433
        %v498 = vpack.c.b16 %v438, %v434
        %v499 = vpack.c.b16 %v443, %v439
        %v500 = vpack.c.b16 %v444, %v440
        %v501 = vpack.c.b16 %v445, %v441
        %v502 = vpack.c.b16 %v446, %v442
        %v503 = vpack.c.b16 %v451, %v447
        %v504 = vpack.c.b16 %v452, %v448
        %v505 = vpack.c.b16 %v453, %v449
        %v506 = vpack.c.b16 %v454, %v450
        %v507 = vpack.c.b16 %v459, %v455
        %v508 = vpack.c.b16 %v460, %v456
        %v509 = vpack.c.b16 %v461, %v457
        %v510 = vpack.c.b16 %v462, %v458
        %v511 = vpack.c.b16 %v467, %v463
        %v512 = vpack.c.b16 %v468, %v464
        %v513 = vpack.c.b16 %v469, %v465
        %v514 = vpack.c.b16 %v470, %v466
        %v515 = vpack.c.b16 %v475, %v471
        %v516 = vpack.c.b16 %v476, %v472
        %v517 = vpack.c.b16 %v477, %v473
        %v518 = vpack.c.b16 %v478, %v474
        %v519 = vpack.c.b16 %v483, %v479
        %v520 = vpack.c.b16 %v484, %v480
        %v521 = vpack.c.b16 %v485, %v481
        %v522 = vpack.c.b16 %v486, %v482
        %v523 = vpack.c.b16 %v491, %v487
        %v524 = vpack.c.b16 %v492, %v488
        %v525 = vpack.c.b16 %v493, %v489
        %v526 = vpack.c.b16 %v494, %v490
        %559 = vmatprep.subr.bf16.mxu0 %v524
        %560 = vmatpush1.bf16.msra.mxu0 %v523
        %561 = vmatprep.subr.bf16.mxu0 %v520
        %562 = vmatpush1.bf16.msra.mxu0 %v519
        %563 = vmatprep.subr.bf16.mxu0 %v516
        %564 = vmatpush1.bf16.msra.mxu0 %v515
        %565 = vmatprep.subr.bf16.mxu0 %v512
        %566 = vmatpush1.bf16.msra.mxu0 %v511
        %567 = vmatprep.subr.bf16.mxu0 %v508
        %568 = vmatpush1.bf16.msra.mxu0 %v507
        %569 = vmatprep.subr.bf16.mxu0 %v504
        %570 = vmatpush1.bf16.msra.mxu0 %v503
        %571 = vmatprep.subr.bf16.mxu0 %v500
        %572 = vmatpush1.bf16.msra.mxu0 %v499
        %573 = vmatprep.subr.bf16.mxu0 %v496
        %574 = vmatpush1.bf16.msra.mxu0 %v495
        %575 = vmatprep.subr.bf16.mxu0 0
        %576 = vmatpush2.bf16.msra.mxu0 0
        %577 = vmatprep.subr.bf16.mxu0 0
        %578 = vmatpush2.bf16.msra.mxu0 0
        %579 = vmatprep.subr.bf16.mxu0 0
        %580 = vmatpush2.bf16.msra.mxu0 0
        %581 = vmatprep.subr.bf16.mxu0 0
        %582 = vmatpush2.bf16.msra.mxu0 0
        %583 = vmatprep.subr.bf16.mxu0 0
        %584 = vmatpush2.bf16.msra.mxu0 0
        %585 = vmatprep.subr.bf16.mxu0 0
        %586 = vmatpush2.bf16.msra.mxu0 0
        %587 = vmatprep.subr.bf16.mxu0 0
        %588 = vmatpush2.bf16.msra.mxu0 0
        %589 = vmatprep.subr.bf16.mxu0 0
        %590 = vmatpush2.bf16.msra.mxu0 0
        %591 = vmatprep.mubr.bf16.mxu0 0
        %592 = vmatmul.mubr.bf16.gmra.mxu0 %v391
        %v593 = vpop.f32.mrf.mxu0
        %v594 = vadd.f32 %v358, %v593
        %v595 = vpop.f32.mrf.mxu0
        %v596 = vadd.f32 %v362, %v595
        %v597 = vpop.f32.mrf.mxu0
        %v598 = vadd.f32 %v358, %v597
        %v599 = vpop.f32.mrf.mxu0
        %v600 = vadd.f32 %v362, %v599
        %601 = vmatprep.mubr.bf16.mxu0 0
        %602 = vmatmul.mubr.bf16.gmra.mxu0 %v392
        %v603 = vpop.f32.mrf.mxu0
        %v604 = vadd.f32 %v358, %v603
        %v605 = vpop.f32.mrf.mxu0
        %v606 = vadd.f32 %v362, %v605
        %v607 = vpop.f32.mrf.mxu0
        %v608 = vadd.f32 %v358, %v607
        %v609 = vpop.f32.mrf.mxu0
        %v610 = vadd.f32 %v362, %v609
        %611 = vmatprep.mubr.bf16.mxu0 0
        %612 = vmatmul.mubr.bf16.gmra.mxu0 %v393
        %v613 = vpop.f32.mrf.mxu0
        %v614 = vadd.f32 %v358, %v613
        %v615 = vpop.f32.mrf.mxu0
        %v616 = vadd.f32 %v362, %v615
        %v617 = vpop.f32.mrf.mxu0
        %v618 = vadd.f32 %v358, %v617
        %v619 = vpop.f32.mrf.mxu0
        %v620 = vadd.f32 %v362, %v619
        %621 = vmatprep.mubr.bf16.mxu0 0
        %622 = vmatmul.mubr.bf16.gmra.mxu0 %v394
        %v623 = vpop.f32.mrf.mxu0
        %v624 = vadd.f32 %v358, %v623
        %v625 = vpop.f32.mrf.mxu0
        %v626 = vadd.f32 %v362, %v625
        %v627 = vpop.f32.mrf.mxu0
        %v628 = vadd.f32 %v358, %v627
        %v629 = vpop.f32.mrf.mxu0
        %v630 = vadd.f32 %v362, %v629
        %631 = vdwg.mxu0
        %632 = vmatprep.subr.bf16.mxu0 %v526
        %633 = vmatpush1.bf16.msra.mxu0 %v525
        %634 = vmatprep.subr.bf16.mxu0 %v522
        %635 = vmatpush1.bf16.msra.mxu0 %v521
        %636 = vmatprep.subr.bf16.mxu0 %v518
        %637 = vmatpush1.bf16.msra.mxu0 %v517
        %638 = vmatprep.subr.bf16.mxu0 %v514
        %639 = vmatpush1.bf16.msra.mxu0 %v513
        %640 = vmatprep.subr.bf16.mxu0 %v510
        %641 = vmatpush1.bf16.msra.mxu0 %v509
        %642 = vmatprep.subr.bf16.mxu0 %v506
        %643 = vmatpush1.bf16.msra.mxu0 %v505
        %644 = vmatprep.subr.bf16.mxu0 %v502
        %645 = vmatpush1.bf16.msra.mxu0 %v501
        %646 = vmatprep.subr.bf16.mxu0 %v498
        %647 = vmatpush1.bf16.msra.mxu0 %v497
        %648 = vmatprep.subr.bf16.mxu0 0
        %649 = vmatpush2.bf16.msra.mxu0 0
        %650 = vmatprep.subr.bf16.mxu0 0
        %651 = vmatpush2.bf16.msra.mxu0 0
        %652 = vmatprep.subr.bf16.mxu0 0
        %653 = vmatpush2.bf16.msra.mxu0 0
        %654 = vmatprep.subr.bf16.mxu0 0
        %655 = vmatpush2.bf16.msra.mxu0 0
        %656 = vmatprep.subr.bf16.mxu0 0
        %657 = vmatpush2.bf16.msra.mxu0 0
        %658 = vmatprep.subr.bf16.mxu0 0
        %659 = vmatpush2.bf16.msra.mxu0 0
        %660 = vmatprep.subr.bf16.mxu0 0
        %661 = vmatpush2.bf16.msra.mxu0 0
        %662 = vmatprep.subr.bf16.mxu0 0
        %663 = vmatpush2.bf16.msra.mxu0 0
        %664 = vmatprep.mubr.bf16.mxu0 0
        %665 = vmatmul.mubr.bf16.gmra.mxu0 %v391
        %v666 = vpop.f32.mrf.mxu0
        %v667 = vadd.f32 %v366, %v666
        %v668 = vpop.f32.mrf.mxu0
        %v669 = vadd.f32 %v370, %v668
        %v670 = vpop.f32.mrf.mxu0
        %v671 = vadd.f32 %v366, %v670
        %v672 = vpop.f32.mrf.mxu0
        %v673 = vadd.f32 %v370, %v672
        %674 = vmatprep.mubr.bf16.mxu0 0
        %675 = vmatmul.mubr.bf16.gmra.mxu0 %v392
        %v676 = vpop.f32.mrf.mxu0
        %v677 = vadd.f32 %v366, %v676
        %v678 = vpop.f32.mrf.mxu0
        %v679 = vadd.f32 %v370, %v678
        %v680 = vpop.f32.mrf.mxu0
        %v681 = vadd.f32 %v366, %v680
        %v682 = vpop.f32.mrf.mxu0
        %v683 = vadd.f32 %v370, %v682
        %684 = vmatprep.mubr.bf16.mxu0 0
        %685 = vmatmul.mubr.bf16.gmra.mxu0 %v393
        %v686 = vpop.f32.mrf.mxu0
        %v687 = vadd.f32 %v366, %v686
        %v688 = vpop.f32.mrf.mxu0
        %v689 = vadd.f32 %v370, %v688
        %v690 = vpop.f32.mrf.mxu0
        %v691 = vadd.f32 %v366, %v690
        %v692 = vpop.f32.mrf.mxu0
        %v693 = vadd.f32 %v370, %v692
        %694 = vmatprep.mubr.bf16.mxu0 0
        %695 = vmatmul.mubr.bf16.gmra.mxu0 %v394
        %v696 = vpop.f32.mrf.mxu0
        %v697 = vadd.f32 %v366, %v696
        %v698 = vpop.f32.mrf.mxu0
        %v699 = vadd.f32 %v370, %v698
        %v700 = vpop.f32.mrf.mxu0
        %v701 = vadd.f32 %v366, %v700
        %v702 = vpop.f32.mrf.mxu0
        %v703 = vadd.f32 %v370, %v702
        %704 = vdwg.mxu0
        %705 = vst [vmem:[#allocation4] sm:$0xff] %v594
        %706 = vst [vmem:[#allocation4 + $0x8] sm:$0xff] %v596
        %707 = vst [vmem:[#allocation4 + $0x10] sm:$0xff] %v667
        %708 = vst [vmem:[#allocation4 + $0x18] sm:$0xff] %v669
        %709 = vst [vmem:[#allocation4 + $0x20] sm:$0xff] %v598
        %710 = vst [vmem:[#allocation4 + $0x28] sm:$0xff] %v600
        %711 = vst [vmem:[#allocation4 + $0x30] sm:$0xff] %v671
        %712 = vst [vmem:[#allocation4 + $0x38] sm:$0xff] %v673
        %713 = vst [vmem:[#allocation4 + $0x40] sm:$0xff] %v604
        %714 = vst [vmem:[#allocation4 + $0x48] sm:$0xff] %v606
        %715 = vst [vmem:[#allocation4 + $0x50] sm:$0xff] %v677
        %716 = vst [vmem:[#allocation4 + $0x58] sm:$0xff] %v679
        %717 = vst [vmem:[#allocation4 + $0x60] sm:$0xff] %v608
        %718 = vst [vmem:[#allocation4 + $0x68] sm:$0xff] %v610
        %719 = vst [vmem:[#allocation4 + $0x70] sm:$0xff] %v681
        %720 = vst [vmem:[#allocation4 + $0x78] sm:$0xff] %v683
        %721 = vst [vmem:[#allocation4 + $0x80] sm:$0xff] %v614
        %722 = vst [vmem:[#allocation4 + $0x88] sm:$0xff] %v616
        %723 = vst [vmem:[#allocation4 + $0x90] sm:$0xff] %v687
        %724 = vst [vmem:[#allocation4 + $0x98] sm:$0xff] %v689
        %725 = vst [vmem:[#allocation4 + $0xa0] sm:$0xff] %v618
        %726 = vst [vmem:[#allocation4 + $0xa8] sm:$0xff] %v620
        %727 = vst [vmem:[#allocation4 + $0xb0] sm:$0xff] %v691
        %728 = vst [vmem:[#allocation4 + $0xb8] sm:$0xff] %v693
        %729 = vst [vmem:[#allocation4 + $0xc0] sm:$0xff] %v624
        %730 = vst [vmem:[#allocation4 + $0xc8] sm:$0xff] %v626
        %731 = vst [vmem:[#allocation4 + $0xd0] sm:$0xff] %v697
        %732 = vst [vmem:[#allocation4 + $0xd8] sm:$0xff] %v699
        %733 = vst [vmem:[#allocation4 + $0xe0] sm:$0xff] %v628
        %734 = vst [vmem:[#allocation4 + $0xe8] sm:$0xff] %v630
        %735 = vst [vmem:[#allocation4 + $0xf0] sm:$0xff] %v701
        %736 = vst [vmem:[#allocation4 + $0xf8] sm:$0xff] %v703
        %v737 = vld [vmem:[#allocation2] sm:$0xff]
        %v738 = vld [vmem:[#allocation3] sm:$0xff]
        %s739 = smul.u32 %s19, 56
        %s740 = sshra.s32 %s739, 3
        %s741 = sand.u32 %s739, 7
        %s742 = smul.u32 %s740, 4
        %s743 = smul.addr %s742, 8
        %s744 = scalar_lea.vmem [#allocation4], %s743
        %v745 = vld [vmem:[%s744] sm:$0xff]
        %v746 = vld [vmem:[%s744 + $0x8] sm:$0xff]
        %v747 = vld [vmem:[%s744 + $0x10] sm:$0xff]
        %v748 = vld [vmem:[%s744 + $0x18] sm:$0xff]
        %v749 = vpack.c.bf16 %v737, %v737
        %v750 = vld [vmem:[%s296] sm:$0xff]
        %v751 = vld [vmem:[%s296 + $0x8] sm:$0xff]
        %v752 = vld [vmem:[%s296 + $0x10] sm:$0xff]
        %v753 = vld [vmem:[%s296 + $0x18] sm:$0xff]
        %v754 = vld [vmem:[%s296 + $0x20] sm:$0xff]
        %v755 = vld [vmem:[%s296 + $0x28] sm:$0xff]
        %v756 = vld [vmem:[%s296 + $0x30] sm:$0xff]
        %v757 = vld [vmem:[%s296 + $0x38] sm:$0xff]
        %v758 = vld [vmem:[%s296 + $0x40] sm:$0xff]
        %v759 = vld [vmem:[%s296 + $0x48] sm:$0xff]
        %v760 = vld [vmem:[%s296 + $0x50] sm:$0xff]
        %v761 = vld [vmem:[%s296 + $0x58] sm:$0xff]
        %v762 = vld [vmem:[%s296 + $0x60] sm:$0xff]
        %v763 = vld [vmem:[%s296 + $0x68] sm:$0xff]
        %v764 = vld [vmem:[%s296 + $0x70] sm:$0xff]
        %v765 = vld [vmem:[%s296 + $0x78] sm:$0xff]
        %v766 = vld [vmem:[%s296 + $0x80] sm:$0xff]
        %v767 = vld [vmem:[%s296 + $0x88] sm:$0xff]
        %v768 = vld [vmem:[%s296 + $0x90] sm:$0xff]
        %v769 = vld [vmem:[%s296 + $0x98] sm:$0xff]
        %v770 = vld [vmem:[%s296 + $0xa0] sm:$0xff]
        %v771 = vld [vmem:[%s296 + $0xa8] sm:$0xff]
        %v772 = vld [vmem:[%s296 + $0xb0] sm:$0xff]
        %v773 = vld [vmem:[%s296 + $0xb8] sm:$0xff]
        %v774 = vld [vmem:[%s296 + $0xc0] sm:$0xff]
        %v775 = vld [vmem:[%s296 + $0xc8] sm:$0xff]
        %v776 = vld [vmem:[%s296 + $0xd0] sm:$0xff]
        %v777 = vld [vmem:[%s296 + $0xd8] sm:$0xff]
        %v778 = vld [vmem:[%s296 + $0xe0] sm:$0xff]
        %v779 = vld [vmem:[%s296 + $0xe8] sm:$0xff]
        %v780 = vld [vmem:[%s296 + $0xf0] sm:$0xff]
        %v781 = vld [vmem:[%s296 + $0xf8] sm:$0xff]
        %v814 = vunpack.c.l.b16 %v750
        %v815 = vunpack.c.h.b16 %v750
        %v816 = vunpack.c.l.b16 %v751
        %v817 = vunpack.c.h.b16 %v751
        %v818 = vunpack.c.l.b16 %v752
        %v819 = vunpack.c.h.b16 %v752
        %v820 = vunpack.c.l.b16 %v753
        %v821 = vunpack.c.h.b16 %v753
        %v822 = vunpack.c.l.b16 %v754
        %v823 = vunpack.c.h.b16 %v754
        %v824 = vunpack.c.l.b16 %v755
        %v825 = vunpack.c.h.b16 %v755
        %v826 = vunpack.c.l.b16 %v756
        %v827 = vunpack.c.h.b16 %v756
        %v828 = vunpack.c.l.b16 %v757
        %v829 = vunpack.c.h.b16 %v757
        %v830 = vunpack.c.l.b16 %v758
        %v831 = vunpack.c.h.b16 %v758
        %v832 = vunpack.c.l.b16 %v759
        %v833 = vunpack.c.h.b16 %v759
        %v834 = vunpack.c.l.b16 %v760
        %v835 = vunpack.c.h.b16 %v760
        %v836 = vunpack.c.l.b16 %v761
        %v837 = vunpack.c.h.b16 %v761
        %v838 = vunpack.c.l.b16 %v762
        %v839 = vunpack.c.h.b16 %v762
        %v840 = vunpack.c.l.b16 %v763
        %v841 = vunpack.c.h.b16 %v763
        %v842 = vunpack.c.l.b16 %v764
        %v843 = vunpack.c.h.b16 %v764
        %v844 = vunpack.c.l.b16 %v765
        %v845 = vunpack.c.h.b16 %v765
        %v846 = vunpack.c.l.b16 %v766
        %v847 = vunpack.c.h.b16 %v766
        %v848 = vunpack.c.l.b16 %v767
        %v849 = vunpack.c.h.b16 %v767
        %v850 = vunpack.c.l.b16 %v768
        %v851 = vunpack.c.h.b16 %v768
        %v852 = vunpack.c.l.b16 %v769
        %v853 = vunpack.c.h.b16 %v769
        %v854 = vunpack.c.l.b16 %v770
        %v855 = vunpack.c.h.b16 %v770
        %v856 = vunpack.c.l.b16 %v771
        %v857 = vunpack.c.h.b16 %v771
        %v858 = vunpack.c.l.b16 %v772
        %v859 = vunpack.c.h.b16 %v772
        %v860 = vunpack.c.l.b16 %v773
        %v861 = vunpack.c.h.b16 %v773
        %v862 = vunpack.c.l.b16 %v774
        %v863 = vunpack.c.h.b16 %v774
        %v864 = vunpack.c.l.b16 %v775
        %v865 = vunpack.c.h.b16 %v775
        %v866 = vunpack.c.l.b16 %v776
        %v867 = vunpack.c.h.b16 %v776
        %v868 = vunpack.c.l.b16 %v777
        %v869 = vunpack.c.h.b16 %v777
        %v870 = vunpack.c.l.b16 %v778
        %v871 = vunpack.c.h.b16 %v778
        %v872 = vunpack.c.l.b16 %v779
        %v873 = vunpack.c.h.b16 %v779
        %v874 = vunpack.c.l.b16 %v780
        %v875 = vunpack.c.h.b16 %v780
        %v876 = vunpack.c.l.b16 %v781
        %v877 = vunpack.c.h.b16 %v781
        %v878 = vpack.c.b16 %v818, %v814
        %v879 = vpack.c.b16 %v819, %v815
        %v880 = vpack.c.b16 %v820, %v816
        %v881 = vpack.c.b16 %v821, %v817
        %v882 = vpack.c.b16 %v826, %v822
        %v883 = vpack.c.b16 %v827, %v823
        %v884 = vpack.c.b16 %v828, %v824
        %v885 = vpack.c.b16 %v829, %v825
        %v886 = vpack.c.b16 %v834, %v830
        %v887 = vpack.c.b16 %v835, %v831
        %v888 = vpack.c.b16 %v836, %v832
        %v889 = vpack.c.b16 %v837, %v833
        %v890 = vpack.c.b16 %v842, %v838
        %v891 = vpack.c.b16 %v843, %v839
        %v892 = vpack.c.b16 %v844, %v840
        %v893 = vpack.c.b16 %v845, %v841
        %v894 = vpack.c.b16 %v850, %v846
        %v895 = vpack.c.b16 %v851, %v847
        %v896 = vpack.c.b16 %v852, %v848
        %v897 = vpack.c.b16 %v853, %v849
        %v898 = vpack.c.b16 %v858, %v854
        %v899 = vpack.c.b16 %v859, %v855
        %v900 = vpack.c.b16 %v860, %v856
        %v901 = vpack.c.b16 %v861, %v857
        %v902 = vpack.c.b16 %v866, %v862
        %v903 = vpack.c.b16 %v867, %v863
        %v904 = vpack.c.b16 %v868, %v864
        %v905 = vpack.c.b16 %v869, %v865
        %v906 = vpack.c.b16 %v874, %v870
        %v907 = vpack.c.b16 %v875, %v871
        %v908 = vpack.c.b16 %v876, %v872
        %v909 = vpack.c.b16 %v877, %v873
        %942 = vmatprep.subr.bf16.mxu0 %v907
        %943 = vmatpush1.bf16.msra.mxu0 %v906
        %944 = vmatprep.subr.bf16.mxu0 %v903
        %945 = vmatpush1.bf16.msra.mxu0 %v902
        %946 = vmatprep.subr.bf16.mxu0 %v899
        %947 = vmatpush1.bf16.msra.mxu0 %v898
        %948 = vmatprep.subr.bf16.mxu0 %v895
        %949 = vmatpush1.bf16.msra.mxu0 %v894
        %950 = vmatprep.subr.bf16.mxu0 %v891
        %951 = vmatpush1.bf16.msra.mxu0 %v890
        %952 = vmatprep.subr.bf16.mxu0 %v887
        %953 = vmatpush1.bf16.msra.mxu0 %v886
        %954 = vmatprep.subr.bf16.mxu0 %v883
        %955 = vmatpush1.bf16.msra.mxu0 %v882
        %956 = vmatprep.subr.bf16.mxu0 %v879
        %957 = vmatpush1.bf16.msra.mxu0 %v878
        %958 = vmatprep.subr.bf16.mxu0 0
        %959 = vmatpush2.bf16.msra.mxu0 0
        %960 = vmatprep.subr.bf16.mxu0 0
        %961 = vmatpush2.bf16.msra.mxu0 0
        %962 = vmatprep.subr.bf16.mxu0 0
        %963 = vmatpush2.bf16.msra.mxu0 0
        %964 = vmatprep.subr.bf16.mxu0 0
        %965 = vmatpush2.bf16.msra.mxu0 0
        %966 = vmatprep.subr.bf16.mxu0 0
        %967 = vmatpush2.bf16.msra.mxu0 0
        %968 = vmatprep.subr.bf16.mxu0 0
        %969 = vmatpush2.bf16.msra.mxu0 0
        %970 = vmatprep.subr.bf16.mxu0 0
        %971 = vmatpush2.bf16.msra.mxu0 0
        %972 = vmatprep.subr.bf16.mxu0 0
        %973 = vmatpush2.bf16.msra.mxu0 0
        %974 = vmatprep.mubr.bf16.mxu0 0
        %975 = vmatmul.mubr.bf16.gmra.mxu0 %v749
        %v976 = vpop.f32.mrf.mxu0
        %v977 = vadd.f32 0.0, %v976
        %v978 = vpop.f32.mrf.mxu0
        %v979 = vadd.f32 0.0, %v978
        %v980 = vpop.f32.mrf.mxu0
        %v981 = vpop.f32.mrf.mxu0
        %982 = vdwg.mxu0
        %983 = vmatprep.subr.bf16.mxu0 %v909
        %984 = vmatpush1.bf16.msra.mxu0 %v908
        %985 = vmatprep.subr.bf16.mxu0 %v905
        %986 = vmatpush1.bf16.msra.mxu0 %v904
        %987 = vmatprep.subr.bf16.mxu0 %v901
        %988 = vmatpush1.bf16.msra.mxu0 %v900
        %989 = vmatprep.subr.bf16.mxu0 %v897
        %990 = vmatpush1.bf16.msra.mxu0 %v896
        %991 = vmatprep.subr.bf16.mxu0 %v893
        %992 = vmatpush1.bf16.msra.mxu0 %v892
        %993 = vmatprep.subr.bf16.mxu0 %v889
        %994 = vmatpush1.bf16.msra.mxu0 %v888
        %995 = vmatprep.subr.bf16.mxu0 %v885
        %996 = vmatpush1.bf16.msra.mxu0 %v884
        %997 = vmatprep.subr.bf16.mxu0 %v881
        %998 = vmatpush1.bf16.msra.mxu0 %v880
        %999 = vmatprep.subr.bf16.mxu0 0
        %1000 = vmatpush2.bf16.msra.mxu0 0
        %1001 = vmatprep.subr.bf16.mxu0 0
        %1002 = vmatpush2.bf16.msra.mxu0 0
        %1003 = vmatprep.subr.bf16.mxu0 0
        %1004 = vmatpush2.bf16.msra.mxu0 0
        %1005 = vmatprep.subr.bf16.mxu0 0
        %1006 = vmatpush2.bf16.msra.mxu0 0
        %1007 = vmatprep.subr.bf16.mxu0 0
        %1008 = vmatpush2.bf16.msra.mxu0 0
        %1009 = vmatprep.subr.bf16.mxu0 0
        %1010 = vmatpush2.bf16.msra.mxu0 0
        %1011 = vmatprep.subr.bf16.mxu0 0
        %1012 = vmatpush2.bf16.msra.mxu0 0
        %1013 = vmatprep.subr.bf16.mxu0 0
        %1014 = vmatpush2.bf16.msra.mxu0 0
        %1015 = vmatprep.mubr.bf16.mxu0 0
        %1016 = vmatmul.mubr.bf16.gmra.mxu0 %v749
        %v1017 = vpop.f32.mrf.mxu0
        %v1018 = vadd.f32 0.0, %v1017
        %v1019 = vpop.f32.mrf.mxu0
        %v1020 = vadd.f32 0.0, %v1019
        %v1021 = vpop.f32.mrf.mxu0
        %v1022 = vpop.f32.mrf.mxu0
        %1023 = vdwg.mxu0
        %v1024 = vadd.f32 %v745, %v977
        %v1025 = vadd.f32 %v746, %v979
        %v1026 = vadd.f32 %v747, %v1018
        %v1027 = vadd.f32 %v748, %v1020
        %v1028 = vmul.f32 %v1024, 0.5
        %v1029 = vtanh.pop %v1028
        %v1030 = vmul.f32 %v1029, 0.5
        %v1031 = vadd.f32 %v1030, 0.5
        %v1032 = vmul.f32 %v1025, 0.5
        %v1033 = vtanh.pop %v1032
        %v1034 = vmul.f32 %v1033, 0.5
        %v1035 = vadd.f32 %v1034, 0.5
        %v1036 = vtanh.pop %v1026
        %v1037 = vmul.f32 %v1027, 0.5
        %v1038 = vtanh.pop %v1037
        %v1039 = vmul.f32 %v1038, 0.5
        %v1040 = vadd.f32 %v1039, 0.5
        %v1041 = vmul.f32 %v1035, %v738
        %v1042 = vmul.f32 %v1031, %v1036
        %v1043 = vadd.f32 %v1041, %v1042
        %v1044 = vtanh.pop %v1043
        %v1045 = vmul.f32 %v1040, %v1044
        %v1046 = vpack.c.bf16 %v1045, %v1045
        %s1047 = smul.addr %s740, 4
        %s1048 = scalar_lea.vmem %s272, %s1047 [#allocation5]
        %1049 = vst [vmem:[%s1048] sm:$0xf] %v1046
        %s1050 = smul.u32 %s19, 5
        %s1051 = sadd.s32 %s1050, 1
        %s1052 = smul.u32 %s1051, 8
        %s1053 = sshra.s32 %s1052, 3
        %s1054 = sand.u32 %s1052, 7
        %s1055 = smul.u32 %s1053, 4
        %s1056 = smul.addr %s1055, 8
        %s1057 = scalar_lea.vmem [#allocation4], %s1056
        %v1058 = vld [vmem:[%s1057] sm:$0xff]
        %v1059 = vld [vmem:[%s1057 + $0x8] sm:$0xff]
        %v1060 = vld [vmem:[%s1057 + $0x10] sm:$0xff]
        %v1061 = vld [vmem:[%s1057 + $0x18] sm:$0xff]
        %v1062 = vld [vmem:[%s296] sm:$0xff]
        %v1063 = vld [vmem:[%s296 + $0x8] sm:$0xff]
        %v1064 = vld [vmem:[%s296 + $0x10] sm:$0xff]
        %v1065 = vld [vmem:[%s296 + $0x18] sm:$0xff]
        %v1066 = vld [vmem:[%s296 + $0x20] sm:$0xff]
        %v1067 = vld [vmem:[%s296 + $0x28] sm:$0xff]
        %v1068 = vld [vmem:[%s296 + $0x30] sm:$0xff]
        %v1069 = vld [vmem:[%s296 + $0x38] sm:$0xff]
        %v1070 = vld [vmem:[%s296 + $0x40] sm:$0xff]
        %v1071 = vld [vmem:[%s296 + $0x48] sm:$0xff]
        %v1072 = vld [vmem:[%s296 + $0x50] sm:$0xff]
        %v1073 = vld [vmem:[%s296 + $0x58] sm:$0xff]
        %v1074 = vld [vmem:[%s296 + $0x60] sm:$0xff]
        %v1075 = vld [vmem:[%s296 + $0x68] sm:$0xff]
        %v1076 = vld [vmem:[%s296 + $0x70] sm:$0xff]
        %v1077 = vld [vmem:[%s296 + $0x78] sm:$0xff]
        %v1078 = vld [vmem:[%s296 + $0x80] sm:$0xff]
        %v1079 = vld [vmem:[%s296 + $0x88] sm:$0xff]
        %v1080 = vld [vmem:[%s296 + $0x90] sm:$0xff]
        %v1081 = vld [vmem:[%s296 + $0x98] sm:$0xff]
        %v1082 = vld [vmem:[%s296 + $0xa0] sm:$0xff]
        %v1083 = vld [vmem:[%s296 + $0xa8] sm:$0xff]
        %v1084 = vld [vmem:[%s296 + $0xb0] sm:$0xff]
        %v1085 = vld [vmem:[%s296 + $0xb8] sm:$0xff]
        %v1086 = vld [vmem:[%s296 + $0xc0] sm:$0xff]
        %v1087 = vld [vmem:[%s296 + $0xc8] sm:$0xff]
        %v1088 = vld [vmem:[%s296 + $0xd0] sm:$0xff]
        %v1089 = vld [vmem:[%s296 + $0xd8] sm:$0xff]
        %v1090 = vld [vmem:[%s296 + $0xe0] sm:$0xff]
        %v1091 = vld [vmem:[%s296 + $0xe8] sm:$0xff]
        %v1092 = vld [vmem:[%s296 + $0xf0] sm:$0xff]
        %v1093 = vld [vmem:[%s296 + $0xf8] sm:$0xff]
        %v1126 = vunpack.c.l.b16 %v1062
        %v1127 = vunpack.c.h.b16 %v1062
        %v1128 = vunpack.c.l.b16 %v1063
        %v1129 = vunpack.c.h.b16 %v1063
        %v1130 = vunpack.c.l.b16 %v1064
        %v1131 = vunpack.c.h.b16 %v1064
        %v1132 = vunpack.c.l.b16 %v1065
        %v1133 = vunpack.c.h.b16 %v1065
        %v1134 = vunpack.c.l.b16 %v1066
        %v1135 = vunpack.c.h.b16 %v1066
        %v1136 = vunpack.c.l.b16 %v1067
        %v1137 = vunpack.c.h.b16 %v1067
        %v1138 = vunpack.c.l.b16 %v1068
        %v1139 = vunpack.c.h.b16 %v1068
        %v1140 = vunpack.c.l.b16 %v1069
        %v1141 = vunpack.c.h.b16 %v1069
        %v1142 = vunpack.c.l.b16 %v1070
        %v1143 = vunpack.c.h.b16 %v1070
        %v1144 = vunpack.c.l.b16 %v1071
        %v1145 = vunpack.c.h.b16 %v1071
        %v1146 = vunpack.c.l.b16 %v1072
        %v1147 = vunpack.c.h.b16 %v1072
        %v1148 = vunpack.c.l.b16 %v1073
        %v1149 = vunpack.c.h.b16 %v1073
        %v1150 = vunpack.c.l.b16 %v1074
        %v1151 = vunpack.c.h.b16 %v1074
        %v1152 = vunpack.c.l.b16 %v1075
        %v1153 = vunpack.c.h.b16 %v1075
        %v1154 = vunpack.c.l.b16 %v1076
        %v1155 = vunpack.c.h.b16 %v1076
        %v1156 = vunpack.c.l.b16 %v1077
        %v1157 = vunpack.c.h.b16 %v1077
        %v1158 = vunpack.c.l.b16 %v1078
        %v1159 = vunpack.c.h.b16 %v1078
        %v1160 = vunpack.c.l.b16 %v1079
        %v1161 = vunpack.c.h.b16 %v1079
        %v1162 = vunpack.c.l.b16 %v1080
        %v1163 = vunpack.c.h.b16 %v1080
        %v1164 = vunpack.c.l.b16 %v1081
        %v1165 = vunpack.c.h.b16 %v1081
        %v1166 = vunpack.c.l.b16 %v1082
        %v1167 = vunpack.c.h.b16 %v1082
        %v1168 = vunpack.c.l.b16 %v1083
        %v1169 = vunpack.c.h.b16 %v1083
        %v1170 = vunpack.c.l.b16 %v1084
        %v1171 = vunpack.c.h.b16 %v1084
        %v1172 = vunpack.c.l.b16 %v1085
        %v1173 = vunpack.c.h.b16 %v1085
        %v1174 = vunpack.c.l.b16 %v1086
        %v1175 = vunpack.c.h.b16 %v1086
        %v1176 = vunpack.c.l.b16 %v1087
        %v1177 = vunpack.c.h.b16 %v1087
        %v1178 = vunpack.c.l.b16 %v1088
        %v1179 = vunpack.c.h.b16 %v1088
        %v1180 = vunpack.c.l.b16 %v1089
        %v1181 = vunpack.c.h.b16 %v1089
        %v1182 = vunpack.c.l.b16 %v1090
        %v1183 = vunpack.c.h.b16 %v1090
        %v1184 = vunpack.c.l.b16 %v1091
        %v1185 = vunpack.c.h.b16 %v1091
        %v1186 = vunpack.c.l.b16 %v1092
        %v1187 = vunpack.c.h.b16 %v1092
        %v1188 = vunpack.c.l.b16 %v1093
        %v1189 = vunpack.c.h.b16 %v1093
        %v1190 = vpack.c.b16 %v1130, %v1126
        %v1191 = vpack.c.b16 %v1131, %v1127
        %v1192 = vpack.c.b16 %v1132, %v1128
        %v1193 = vpack.c.b16 %v1133, %v1129
        %v1194 = vpack.c.b16 %v1138, %v1134
        %v1195 = vpack.c.b16 %v1139, %v1135
        %v1196 = vpack.c.b16 %v1140, %v1136
        %v1197 = vpack.c.b16 %v1141, %v1137
        %v1198 = vpack.c.b16 %v1146, %v1142
        %v1199 = vpack.c.b16 %v1147, %v1143
        %v1200 = vpack.c.b16 %v1148, %v1144
        %v1201 = vpack.c.b16 %v1149, %v1145
        %v1202 = vpack.c.b16 %v1154, %v1150
        %v1203 = vpack.c.b16 %v1155, %v1151
        %v1204 = vpack.c.b16 %v1156, %v1152
        %v1205 = vpack.c.b16 %v1157, %v1153
        %v1206 = vpack.c.b16 %v1162, %v1158
        %v1207 = vpack.c.b16 %v1163, %v1159
        %v1208 = vpack.c.b16 %v1164, %v1160
        %v1209 = vpack.c.b16 %v1165, %v1161
        %v1210 = vpack.c.b16 %v1170, %v1166
        %v1211 = vpack.c.b16 %v1171, %v1167
        %v1212 = vpack.c.b16 %v1172, %v1168
        %v1213 = vpack.c.b16 %v1173, %v1169
        %v1214 = vpack.c.b16 %v1178, %v1174
        %v1215 = vpack.c.b16 %v1179, %v1175
        %v1216 = vpack.c.b16 %v1180, %v1176
        %v1217 = vpack.c.b16 %v1181, %v1177
        %v1218 = vpack.c.b16 %v1186, %v1182
        %v1219 = vpack.c.b16 %v1187, %v1183
        %v1220 = vpack.c.b16 %v1188, %v1184
        %v1221 = vpack.c.b16 %v1189, %v1185
        %1254 = vmatprep.subr.bf16.mxu0 %v1219
        %1255 = vmatpush1.bf16.msra.mxu0 %v1218
        %1256 = vmatprep.subr.bf16.mxu0 %v1215
        %1257 = vmatpush1.bf16.msra.mxu0 %v1214
        %1258 = vmatprep.subr.bf16.mxu0 %v1211
        %1259 = vmatpush1.bf16.msra.mxu0 %v1210
        %1260 = vmatprep.subr.bf16.mxu0 %v1207
        %1261 = vmatpush1.bf16.msra.mxu0 %v1206
        %1262 = vmatprep.subr.bf16.mxu0 %v1203
        %1263 = vmatpush1.bf16.msra.mxu0 %v1202
        %1264 = vmatprep.subr.bf16.mxu0 %v1199
        %1265 = vmatpush1.bf16.msra.mxu0 %v1198
        %1266 = vmatprep.subr.bf16.mxu0 %v1195
        %1267 = vmatpush1.bf16.msra.mxu0 %v1194
        %1268 = vmatprep.subr.bf16.mxu0 %v1191
        %1269 = vmatpush1.bf16.msra.mxu0 %v1190
        %1270 = vmatprep.subr.bf16.mxu0 0
        %1271 = vmatpush2.bf16.msra.mxu0 0
        %1272 = vmatprep.subr.bf16.mxu0 0
        %1273 = vmatpush2.bf16.msra.mxu0 0
        %1274 = vmatprep.subr.bf16.mxu0 0
        %1275 = vmatpush2.bf16.msra.mxu0 0
        %1276 = vmatprep.subr.bf16.mxu0 0
        %1277 = vmatpush2.bf16.msra.mxu0 0
        %1278 = vmatprep.subr.bf16.mxu0 0
        %1279 = vmatpush2.bf16.msra.mxu0 0
        %1280 = vmatprep.subr.bf16.mxu0 0
        %1281 = vmatpush2.bf16.msra.mxu0 0
        %1282 = vmatprep.subr.bf16.mxu0 0
        %1283 = vmatpush2.bf16.msra.mxu0 0
        %1284 = vmatprep.subr.bf16.mxu0 0
        %1285 = vmatpush2.bf16.msra.mxu0 0
        %1286 = vmatprep.mubr.bf16.mxu0 0
        %1287 = vmatmul.mubr.bf16.gmra.mxu0 %v1046
        %v1288 = vpop.f32.mrf.mxu0
        %v1289 = vadd.f32 0.0, %v1288
        %v1290 = vpop.f32.mrf.mxu0
        %v1291 = vadd.f32 0.0, %v1290
        %v1292 = vpop.f32.mrf.mxu0
        %v1293 = vpop.f32.mrf.mxu0
        %1294 = vdwg.mxu0
        %1295 = vmatprep.subr.bf16.mxu0 %v1221
        %1296 = vmatpush1.bf16.msra.mxu0 %v1220
        %1297 = vmatprep.subr.bf16.mxu0 %v1217
        %1298 = vmatpush1.bf16.msra.mxu0 %v1216
        %1299 = vmatprep.subr.bf16.mxu0 %v1213
        %1300 = vmatpush1.bf16.msra.mxu0 %v1212
        %1301 = vmatprep.subr.bf16.mxu0 %v1209
        %1302 = vmatpush1.bf16.msra.mxu0 %v1208
        %1303 = vmatprep.subr.bf16.mxu0 %v1205
        %1304 = vmatpush1.bf16.msra.mxu0 %v1204
        %1305 = vmatprep.subr.bf16.mxu0 %v1201
        %1306 = vmatpush1.bf16.msra.mxu0 %v1200
        %1307 = vmatprep.subr.bf16.mxu0 %v1197
        %1308 = vmatpush1.bf16.msra.mxu0 %v1196
        %1309 = vmatprep.subr.bf16.mxu0 %v1193
        %1310 = vmatpush1.bf16.msra.mxu0 %v1192
        %1311 = vmatprep.subr.bf16.mxu0 0
        %1312 = vmatpush2.bf16.msra.mxu0 0
        %1313 = vmatprep.subr.bf16.mxu0 0
        %1314 = vmatpush2.bf16.msra.mxu0 0
        %1315 = vmatprep.subr.bf16.mxu0 0
        %1316 = vmatpush2.bf16.msra.mxu0 0
        %1317 = vmatprep.subr.bf16.mxu0 0
        %1318 = vmatpush2.bf16.msra.mxu0 0
        %1319 = vmatprep.subr.bf16.mxu0 0
        %1320 = vmatpush2.bf16.msra.mxu0 0
        %1321 = vmatprep.subr.bf16.mxu0 0
        %1322 = vmatpush2.bf16.msra.mxu0 0
        %1323 = vmatprep.subr.bf16.mxu0 0
        %1324 = vmatpush2.bf16.msra.mxu0 0
        %1325 = vmatprep.subr.bf16.mxu0 0
        %1326 = vmatpush2.bf16.msra.mxu0 0
        %1327 = vmatprep.mubr.bf16.mxu0 0
        %1328 = vmatmul.mubr.bf16.gmra.mxu0 %v1046
        %v1329 = vpop.f32.mrf.mxu0
        %v1330 = vadd.f32 0.0, %v1329
        %v1331 = vpop.f32.mrf.mxu0
        %v1332 = vadd.f32 0.0, %v1331
        %v1333 = vpop.f32.mrf.mxu0
        %v1334 = vpop.f32.mrf.mxu0
        %1335 = vdwg.mxu0
        %v1336 = vadd.f32 %v1058, %v1289
        %v1337 = vadd.f32 %v1059, %v1291
        %v1338 = vadd.f32 %v1060, %v1330
        %v1339 = vadd.f32 %v1061, %v1332
        %v1340 = vmul.f32 %v1336, 0.5
        %v1341 = vtanh.pop %v1340
        %v1342 = vmul.f32 %v1341, 0.5
        %v1343 = vadd.f32 %v1342, 0.5
        %v1344 = vmul.f32 %v1337, 0.5
        %v1345 = vtanh.pop %v1344
        %v1346 = vmul.f32 %v1345, 0.5
        %v1347 = vadd.f32 %v1346, 0.5
        %v1348 = vtanh.pop %v1338
        %v1349 = vmul.f32 %v1339, 0.5
        %v1350 = vtanh.pop %v1349
        %v1351 = vmul.f32 %v1350, 0.5
        %v1352 = vadd.f32 %v1351, 0.5
        %v1353 = vmul.f32 %v1347, %v1043
        %v1354 = vmul.f32 %v1343, %v1348
        %v1355 = vadd.f32 %v1353, %v1354
        %v1356 = vtanh.pop %v1355
        %v1357 = vmul.f32 %v1352, %v1356
        %v1358 = vpack.c.bf16 %v1357, %v1357
        %s1359 = smul.addr %s1053, 4
        %s1360 = scalar_lea.vmem %s272, %s1359 [#allocation5]
        %1361 = vst [vmem:[%s1360] sm:$0xf] %v1358
        %s1362 = smul.u32 %s19, 3
        %s1363 = sadd.s32 %s1362, 2
        %s1364 = smul.u32 %s1363, 8
        %s1365 = sshra.s32 %s1364, 3
        %s1366 = sand.u32 %s1364, 7
        %s1367 = smul.u32 %s1365, 4
        %s1368 = smul.addr %s1367, 8
        %s1369 = scalar_lea.vmem [#allocation4], %s1368
        %v1370 = vld [vmem:[%s1369] sm:$0xff]
        %v1371 = vld [vmem:[%s1369 + $0x8] sm:$0xff]
        %v1372 = vld [vmem:[%s1369 + $0x10] sm:$0xff]
        %v1373 = vld [vmem:[%s1369 + $0x18] sm:$0xff]
        %v1374 = vld [vmem:[%s296] sm:$0xff]
        %v1375 = vld [vmem:[%s296 + $0x8] sm:$0xff]
        %v1376 = vld [vmem:[%s296 + $0x10] sm:$0xff]
        %v1377 = vld [vmem:[%s296 + $0x18] sm:$0xff]
        %v1378 = vld [vmem:[%s296 + $0x20] sm:$0xff]
        %v1379 = vld [vmem:[%s296 + $0x28] sm:$0xff]
        %v1380 = vld [vmem:[%s296 + $0x30] sm:$0xff]
        %v1381 = vld [vmem:[%s296 + $0x38] sm:$0xff]
        %v1382 = vld [vmem:[%s296 + $0x40] sm:$0xff]
        %v1383 = vld [vmem:[%s296 + $0x48] sm:$0xff]
        %v1384 = vld [vmem:[%s296 + $0x50] sm:$0xff]
        %v1385 = vld [vmem:[%s296 + $0x58] sm:$0xff]
        %v1386 = vld [vmem:[%s296 + $0x60] sm:$0xff]
        %v1387 = vld [vmem:[%s296 + $0x68] sm:$0xff]
        %v1388 = vld [vmem:[%s296 + $0x70] sm:$0xff]
        %v1389 = vld [vmem:[%s296 + $0x78] sm:$0xff]
        %v1390 = vld [vmem:[%s296 + $0x80] sm:$0xff]
        %v1391 = vld [vmem:[%s296 + $0x88] sm:$0xff]
        %v1392 = vld [vmem:[%s296 + $0x90] sm:$0xff]
        %v1393 = vld [vmem:[%s296 + $0x98] sm:$0xff]
        %v1394 = vld [vmem:[%s296 + $0xa0] sm:$0xff]
        %v1395 = vld [vmem:[%s296 + $0xa8] sm:$0xff]
        %v1396 = vld [vmem:[%s296 + $0xb0] sm:$0xff]
        %v1397 = vld [vmem:[%s296 + $0xb8] sm:$0xff]
        %v1398 = vld [vmem:[%s296 + $0xc0] sm:$0xff]
        %v1399 = vld [vmem:[%s296 + $0xc8] sm:$0xff]
        %v1400 = vld [vmem:[%s296 + $0xd0] sm:$0xff]
        %v1401 = vld [vmem:[%s296 + $0xd8] sm:$0xff]
        %v1402 = vld [vmem:[%s296 + $0xe0] sm:$0xff]
        %v1403 = vld [vmem:[%s296 + $0xe8] sm:$0xff]
        %v1404 = vld [vmem:[%s296 + $0xf0] sm:$0xff]
        %v1405 = vld [vmem:[%s296 + $0xf8] sm:$0xff]
        %v1438 = vunpack.c.l.b16 %v1374
        %v1439 = vunpack.c.h.b16 %v1374
        %v1440 = vunpack.c.l.b16 %v1375
        %v1441 = vunpack.c.h.b16 %v1375
        %v1442 = vunpack.c.l.b16 %v1376
        %v1443 = vunpack.c.h.b16 %v1376
        %v1444 = vunpack.c.l.b16 %v1377
        %v1445 = vunpack.c.h.b16 %v1377
        %v1446 = vunpack.c.l.b16 %v1378
        %v1447 = vunpack.c.h.b16 %v1378
        %v1448 = vunpack.c.l.b16 %v1379
        %v1449 = vunpack.c.h.b16 %v1379
        %v1450 = vunpack.c.l.b16 %v1380
        %v1451 = vunpack.c.h.b16 %v1380
        %v1452 = vunpack.c.l.b16 %v1381
        %v1453 = vunpack.c.h.b16 %v1381
        %v1454 = vunpack.c.l.b16 %v1382
        %v1455 = vunpack.c.h.b16 %v1382
        %v1456 = vunpack.c.l.b16 %v1383
        %v1457 = vunpack.c.h.b16 %v1383
        %v1458 = vunpack.c.l.b16 %v1384
        %v1459 = vunpack.c.h.b16 %v1384
        %v1460 = vunpack.c.l.b16 %v1385
        %v1461 = vunpack.c.h.b16 %v1385
        %v1462 = vunpack.c.l.b16 %v1386
        %v1463 = vunpack.c.h.b16 %v1386
        %v1464 = vunpack.c.l.b16 %v1387
        %v1465 = vunpack.c.h.b16 %v1387
        %v1466 = vunpack.c.l.b16 %v1388
        %v1467 = vunpack.c.h.b16 %v1388
        %v1468 = vunpack.c.l.b16 %v1389
        %v1469 = vunpack.c.h.b16 %v1389
        %v1470 = vunpack.c.l.b16 %v1390
        %v1471 = vunpack.c.h.b16 %v1390
        %v1472 = vunpack.c.l.b16 %v1391
        %v1473 = vunpack.c.h.b16 %v1391
        %v1474 = vunpack.c.l.b16 %v1392
        %v1475 = vunpack.c.h.b16 %v1392
        %v1476 = vunpack.c.l.b16 %v1393
        %v1477 = vunpack.c.h.b16 %v1393
        %v1478 = vunpack.c.l.b16 %v1394
        %v1479 = vunpack.c.h.b16 %v1394
        %v1480 = vunpack.c.l.b16 %v1395
        %v1481 = vunpack.c.h.b16 %v1395
        %v1482 = vunpack.c.l.b16 %v1396
        %v1483 = vunpack.c.h.b16 %v1396
        %v1484 = vunpack.c.l.b16 %v1397
        %v1485 = vunpack.c.h.b16 %v1397
        %v1486 = vunpack.c.l.b16 %v1398
        %v1487 = vunpack.c.h.b16 %v1398
        %v1488 = vunpack.c.l.b16 %v1399
        %v1489 = vunpack.c.h.b16 %v1399
        %v1490 = vunpack.c.l.b16 %v1400
        %v1491 = vunpack.c.h.b16 %v1400
        %v1492 = vunpack.c.l.b16 %v1401
        %v1493 = vunpack.c.h.b16 %v1401
        %v1494 = vunpack.c.l.b16 %v1402
        %v1495 = vunpack.c.h.b16 %v1402
        %v1496 = vunpack.c.l.b16 %v1403
        %v1497 = vunpack.c.h.b16 %v1403
        %v1498 = vunpack.c.l.b16 %v1404
        %v1499 = vunpack.c.h.b16 %v1404
        %v1500 = vunpack.c.l.b16 %v1405
        %v1501 = vunpack.c.h.b16 %v1405
        %v1502 = vpack.c.b16 %v1442, %v1438
        %v1503 = vpack.c.b16 %v1443, %v1439
        %v1504 = vpack.c.b16 %v1444, %v1440
        %v1505 = vpack.c.b16 %v1445, %v1441
        %v1506 = vpack.c.b16 %v1450, %v1446
        %v1507 = vpack.c.b16 %v1451, %v1447
        %v1508 = vpack.c.b16 %v1452, %v1448
        %v1509 = vpack.c.b16 %v1453, %v1449
        %v1510 = vpack.c.b16 %v1458, %v1454
        %v1511 = vpack.c.b16 %v1459, %v1455
        %v1512 = vpack.c.b16 %v1460, %v1456
        %v1513 = vpack.c.b16 %v1461, %v1457
        %v1514 = vpack.c.b16 %v1466, %v1462
        %v1515 = vpack.c.b16 %v1467, %v1463
        %v1516 = vpack.c.b16 %v1468, %v1464
        %v1517 = vpack.c.b16 %v1469, %v1465
        %v1518 = vpack.c.b16 %v1474, %v1470
        %v1519 = vpack.c.b16 %v1475, %v1471
        %v1520 = vpack.c.b16 %v1476, %v1472
        %v1521 = vpack.c.b16 %v1477, %v1473
        %v1522 = vpack.c.b16 %v1482, %v1478
        %v1523 = vpack.c.b16 %v1483, %v1479
        %v1524 = vpack.c.b16 %v1484, %v1480
        %v1525 = vpack.c.b16 %v1485, %v1481
        %v1526 = vpack.c.b16 %v1490, %v1486
        %v1527 = vpack.c.b16 %v1491, %v1487
        %v1528 = vpack.c.b16 %v1492, %v1488
        %v1529 = vpack.c.b16 %v1493, %v1489
        %v1530 = vpack.c.b16 %v1498, %v1494
        %v1531 = vpack.c.b16 %v1499, %v1495
        %v1532 = vpack.c.b16 %v1500, %v1496
        %v1533 = vpack.c.b16 %v1501, %v1497
        %1566 = vmatprep.subr.bf16.mxu0 %v1531
        %1567 = vmatpush1.bf16.msra.mxu0 %v1530
        %1568 = vmatprep.subr.bf16.mxu0 %v1527
        %1569 = vmatpush1.bf16.msra.mxu0 %v1526
        %1570 = vmatprep.subr.bf16.mxu0 %v1523
        %1571 = vmatpush1.bf16.msra.mxu0 %v1522
        %1572 = vmatprep.subr.bf16.mxu0 %v1519
        %1573 = vmatpush1.bf16.msra.mxu0 %v1518
        %1574 = vmatprep.subr.bf16.mxu0 %v1515
        %1575 = vmatpush1.bf16.msra.mxu0 %v1514
        %1576 = vmatprep.subr.bf16.mxu0 %v1511
        %1577 = vmatpush1.bf16.msra.mxu0 %v1510
        %1578 = vmatprep.subr.bf16.mxu0 %v1507
        %1579 = vmatpush1.bf16.msra.mxu0 %v1506
        %1580 = vmatprep.subr.bf16.mxu0 %v1503
        %1581 = vmatpush1.bf16.msra.mxu0 %v1502
        %1582 = vmatprep.subr.bf16.mxu0 0
        %1583 = vmatpush2.bf16.msra.mxu0 0
        %1584 = vmatprep.subr.bf16.mxu0 0
        %1585 = vmatpush2.bf16.msra.mxu0 0
        %1586 = vmatprep.subr.bf16.mxu0 0
        %1587 = vmatpush2.bf16.msra.mxu0 0
        %1588 = vmatprep.subr.bf16.mxu0 0
        %1589 = vmatpush2.bf16.msra.mxu0 0
        %1590 = vmatprep.subr.bf16.mxu0 0
        %1591 = vmatpush2.bf16.msra.mxu0 0
        %1592 = vmatprep.subr.bf16.mxu0 0
        %1593 = vmatpush2.bf16.msra.mxu0 0
        %1594 = vmatprep.subr.bf16.mxu0 0
        %1595 = vmatpush2.bf16.msra.mxu0 0
        %1596 = vmatprep.subr.bf16.mxu0 0
        %1597 = vmatpush2.bf16.msra.mxu0 0
        %1598 = vmatprep.mubr.bf16.mxu0 0
        %1599 = vmatmul.mubr.bf16.gmra.mxu0 %v1358
        %v1600 = vpop.f32.mrf.mxu0
        %v1601 = vadd.f32 0.0, %v1600
        %v1602 = vpop.f32.mrf.mxu0
        %v1603 = vadd.f32 0.0, %v1602
        %v1604 = vpop.f32.mrf.mxu0
        %v1605 = vpop.f32.mrf.mxu0
        %1606 = vdwg.mxu0
        %1607 = vmatprep.subr.bf16.mxu0 %v1533
        %1608 = vmatpush1.bf16.msra.mxu0 %v1532
        %1609 = vmatprep.subr.bf16.mxu0 %v1529
        %1610 = vmatpush1.bf16.msra.mxu0 %v1528
        %1611 = vmatprep.subr.bf16.mxu0 %v1525
        %1612 = vmatpush1.bf16.msra.mxu0 %v1524
        %1613 = vmatprep.subr.bf16.mxu0 %v1521
        %1614 = vmatpush1.bf16.msra.mxu0 %v1520
        %1615 = vmatprep.subr.bf16.mxu0 %v1517
        %1616 = vmatpush1.bf16.msra.mxu0 %v1516
        %1617 = vmatprep.subr.bf16.mxu0 %v1513
        %1618 = vmatpush1.bf16.msra.mxu0 %v1512
        %1619 = vmatprep.subr.bf16.mxu0 %v1509
        %1620 = vmatpush1.bf16.msra.mxu0 %v1508
        %1621 = vmatprep.subr.bf16.mxu0 %v1505
        %1622 = vmatpush1.bf16.msra.mxu0 %v1504
        %1623 = vmatprep.subr.bf16.mxu0 0
        %1624 = vmatpush2.bf16.msra.mxu0 0
        %1625 = vmatprep.subr.bf16.mxu0 0
        %1626 = vmatpush2.bf16.msra.mxu0 0
        %1627 = vmatprep.subr.bf16.mxu0 0
        %1628 = vmatpush2.bf16.msra.mxu0 0
        %1629 = vmatprep.subr.bf16.mxu0 0
        %1630 = vmatpush2.bf16.msra.mxu0 0
        %1631 = vmatprep.subr.bf16.mxu0 0
        %1632 = vmatpush2.bf16.msra.mxu0 0
        %1633 = vmatprep.subr.bf16.mxu0 0
        %1634 = vmatpush2.bf16.msra.mxu0 0
        %1635 = vmatprep.subr.bf16.mxu0 0
        %1636 = vmatpush2.bf16.msra.mxu0 0
        %1637 = vmatprep.subr.bf16.mxu0 0
        %1638 = vmatpush2.bf16.msra.mxu0 0
        %1639 = vmatprep.mubr.bf16.mxu0 0
        %1640 = vmatmul.mubr.bf16.gmra.mxu0 %v1358
        %v1641 = vpop.f32.mrf.mxu0
        %v1642 = vadd.f32 0.0, %v1641
        %v1643 = vpop.f32.mrf.mxu0
        %v1644 = vadd.f32 0.0, %v1643
        %v1645 = vpop.f32.mrf.mxu0
        %v1646 = vpop.f32.mrf.mxu0
        %1647 = vdwg.mxu0
        %v1648 = vadd.f32 %v1370, %v1601
        %v1649 = vadd.f32 %v1371, %v1603
        %v1650 = vadd.f32 %v1372, %v1642
        %v1651 = vadd.f32 %v1373, %v1644
        %v1652 = vmul.f32 %v1648, 0.5
        %v1653 = vtanh.pop %v1652
        %v1654 = vmul.f32 %v1653, 0.5
        %v1655 = vadd.f32 %v1654, 0.5
        %v1656 = vmul.f32 %v1649, 0.5
        %v1657 = vtanh.pop %v1656
        %v1658 = vmul.f32 %v1657, 0.5
        %v1659 = vadd.f32 %v1658, 0.5
        %v1660 = vtanh.pop %v1650
        %v1661 = vmul.f32 %v1651, 0.5
        %v1662 = vtanh.pop %v1661
        %v1663 = vmul.f32 %v1662, 0.5
        %v1664 = vadd.f32 %v1663, 0.5
        %v1665 = vmul.f32 %v1659, %v1355
        %v1666 = vmul.f32 %v1655, %v1660
        %v1667 = vadd.f32 %v1665, %v1666
        %v1668 = vtanh.pop %v1667
        %v1669 = vmul.f32 %v1664, %v1668
        %v1670 = vpack.c.bf16 %v1669, %v1669
        %s1671 = smul.addr %s1365, 4
        %s1672 = scalar_lea.vmem %s272, %s1671 [#allocation5]
        %1673 = vst [vmem:[%s1672] sm:$0xf] %v1670
        %s1674 = sadd.s32 %s19, 3
        %s1675 = smul.u32 %s1674, 8
        %s1676 = sshra.s32 %s1675, 3
        %s1677 = sand.u32 %s1675, 7
        %s1678 = smul.u32 %s1676, 4
        %s1679 = smul.addr %s1678, 8
        %s1680 = scalar_lea.vmem [#allocation4], %s1679
        %v1681 = vld [vmem:[%s1680] sm:$0xff]
        %v1682 = vld [vmem:[%s1680 + $0x8] sm:$0xff]
        %v1683 = vld [vmem:[%s1680 + $0x10] sm:$0xff]
        %v1684 = vld [vmem:[%s1680 + $0x18] sm:$0xff]
        %v1685 = vld [vmem:[%s296] sm:$0xff]
        %v1686 = vld [vmem:[%s296 + $0x8] sm:$0xff]
        %v1687 = vld [vmem:[%s296 + $0x10] sm:$0xff]
        %v1688 = vld [vmem:[%s296 + $0x18] sm:$0xff]
        %v1689 = vld [vmem:[%s296 + $0x20] sm:$0xff]
        %v1690 = vld [vmem:[%s296 + $0x28] sm:$0xff]
        %v1691 = vld [vmem:[%s296 + $0x30] sm:$0xff]
        %v1692 = vld [vmem:[%s296 + $0x38] sm:$0xff]
        %v1693 = vld [vmem:[%s296 + $0x40] sm:$0xff]
        %v1694 = vld [vmem:[%s296 + $0x48] sm:$0xff]
        %v1695 = vld [vmem:[%s296 + $0x50] sm:$0xff]
        %v1696 = vld [vmem:[%s296 + $0x58] sm:$0xff]
        %v1697 = vld [vmem:[%s296 + $0x60] sm:$0xff]
        %v1698 = vld [vmem:[%s296 + $0x68] sm:$0xff]
        %v1699 = vld [vmem:[%s296 + $0x70] sm:$0xff]
        %v1700 = vld [vmem:[%s296 + $0x78] sm:$0xff]
        %v1701 = vld [vmem:[%s296 + $0x80] sm:$0xff]
        %v1702 = vld [vmem:[%s296 + $0x88] sm:$0xff]
        %v1703 = vld [vmem:[%s296 + $0x90] sm:$0xff]
        %v1704 = vld [vmem:[%s296 + $0x98] sm:$0xff]
        %v1705 = vld [vmem:[%s296 + $0xa0] sm:$0xff]
        %v1706 = vld [vmem:[%s296 + $0xa8] sm:$0xff]
        %v1707 = vld [vmem:[%s296 + $0xb0] sm:$0xff]
        %v1708 = vld [vmem:[%s296 + $0xb8] sm:$0xff]
        %v1709 = vld [vmem:[%s296 + $0xc0] sm:$0xff]
        %v1710 = vld [vmem:[%s296 + $0xc8] sm:$0xff]
        %v1711 = vld [vmem:[%s296 + $0xd0] sm:$0xff]
        %v1712 = vld [vmem:[%s296 + $0xd8] sm:$0xff]
        %v1713 = vld [vmem:[%s296 + $0xe0] sm:$0xff]
        %v1714 = vld [vmem:[%s296 + $0xe8] sm:$0xff]
        %v1715 = vld [vmem:[%s296 + $0xf0] sm:$0xff]
        %v1716 = vld [vmem:[%s296 + $0xf8] sm:$0xff]
        %v1749 = vunpack.c.l.b16 %v1685
        %v1750 = vunpack.c.h.b16 %v1685
        %v1751 = vunpack.c.l.b16 %v1686
        %v1752 = vunpack.c.h.b16 %v1686
        %v1753 = vunpack.c.l.b16 %v1687
        %v1754 = vunpack.c.h.b16 %v1687
        %v1755 = vunpack.c.l.b16 %v1688
        %v1756 = vunpack.c.h.b16 %v1688
        %v1757 = vunpack.c.l.b16 %v1689
        %v1758 = vunpack.c.h.b16 %v1689
        %v1759 = vunpack.c.l.b16 %v1690
        %v1760 = vunpack.c.h.b16 %v1690
        %v1761 = vunpack.c.l.b16 %v1691
        %v1762 = vunpack.c.h.b16 %v1691
        %v1763 = vunpack.c.l.b16 %v1692
        %v1764 = vunpack.c.h.b16 %v1692
        %v1765 = vunpack.c.l.b16 %v1693
        %v1766 = vunpack.c.h.b16 %v1693
        %v1767 = vunpack.c.l.b16 %v1694
        %v1768 = vunpack.c.h.b16 %v1694
        %v1769 = vunpack.c.l.b16 %v1695
        %v1770 = vunpack.c.h.b16 %v1695
        %v1771 = vunpack.c.l.b16 %v1696
        %v1772 = vunpack.c.h.b16 %v1696
        %v1773 = vunpack.c.l.b16 %v1697
        %v1774 = vunpack.c.h.b16 %v1697
        %v1775 = vunpack.c.l.b16 %v1698
        %v1776 = vunpack.c.h.b16 %v1698
        %v1777 = vunpack.c.l.b16 %v1699
        %v1778 = vunpack.c.h.b16 %v1699
        %v1779 = vunpack.c.l.b16 %v1700
        %v1780 = vunpack.c.h.b16 %v1700
        %v1781 = vunpack.c.l.b16 %v1701
        %v1782 = vunpack.c.h.b16 %v1701
        %v1783 = vunpack.c.l.b16 %v1702
        %v1784 = vunpack.c.h.b16 %v1702
        %v1785 = vunpack.c.l.b16 %v1703
        %v1786 = vunpack.c.h.b16 %v1703
        %v1787 = vunpack.c.l.b16 %v1704
        %v1788 = vunpack.c.h.b16 %v1704
        %v1789 = vunpack.c.l.b16 %v1705
        %v1790 = vunpack.c.h.b16 %v1705
        %v1791 = vunpack.c.l.b16 %v1706
        %v1792 = vunpack.c.h.b16 %v1706
        %v1793 = vunpack.c.l.b16 %v1707
        %v1794 = vunpack.c.h.b16 %v1707
        %v1795 = vunpack.c.l.b16 %v1708
        %v1796 = vunpack.c.h.b16 %v1708
        %v1797 = vunpack.c.l.b16 %v1709
        %v1798 = vunpack.c.h.b16 %v1709
        %v1799 = vunpack.c.l.b16 %v1710
        %v1800 = vunpack.c.h.b16 %v1710
        %v1801 = vunpack.c.l.b16 %v1711
        %v1802 = vunpack.c.h.b16 %v1711
        %v1803 = vunpack.c.l.b16 %v1712
        %v1804 = vunpack.c.h.b16 %v1712
        %v1805 = vunpack.c.l.b16 %v1713
        %v1806 = vunpack.c.h.b16 %v1713
        %v1807 = vunpack.c.l.b16 %v1714
        %v1808 = vunpack.c.h.b16 %v1714
        %v1809 = vunpack.c.l.b16 %v1715
        %v1810 = vunpack.c.h.b16 %v1715
        %v1811 = vunpack.c.l.b16 %v1716
        %v1812 = vunpack.c.h.b16 %v1716
        %v1813 = vpack.c.b16 %v1753, %v1749
        %v1814 = vpack.c.b16 %v1754, %v1750
        %v1815 = vpack.c.b16 %v1755, %v1751
        %v1816 = vpack.c.b16 %v1756, %v1752
        %v1817 = vpack.c.b16 %v1761, %v1757
        %v1818 = vpack.c.b16 %v1762, %v1758
        %v1819 = vpack.c.b16 %v1763, %v1759
        %v1820 = vpack.c.b16 %v1764, %v1760
        %v1821 = vpack.c.b16 %v1769, %v1765
        %v1822 = vpack.c.b16 %v1770, %v1766
        %v1823 = vpack.c.b16 %v1771, %v1767
        %v1824 = vpack.c.b16 %v1772, %v1768
        %v1825 = vpack.c.b16 %v1777, %v1773
        %v1826 = vpack.c.b16 %v1778, %v1774
        %v1827 = vpack.c.b16 %v1779, %v1775
        %v1828 = vpack.c.b16 %v1780, %v1776
        %v1829 = vpack.c.b16 %v1785, %v1781
        %v1830 = vpack.c.b16 %v1786, %v1782
        %v1831 = vpack.c.b16 %v1787, %v1783
        %v1832 = vpack.c.b16 %v1788, %v1784
        %v1833 = vpack.c.b16 %v1793, %v1789
        %v1834 = vpack.c.b16 %v1794, %v1790
        %v1835 = vpack.c.b16 %v1795, %v1791
        %v1836 = vpack.c.b16 %v1796, %v1792
        %v1837 = vpack.c.b16 %v1801, %v1797
        %v1838 = vpack.c.b16 %v1802, %v1798
        %v1839 = vpack.c.b16 %v1803, %v1799
        %v1840 = vpack.c.b16 %v1804, %v1800
        %v1841 = vpack.c.b16 %v1809, %v1805
        %v1842 = vpack.c.b16 %v1810, %v1806
        %v1843 = vpack.c.b16 %v1811, %v1807
        %v1844 = vpack.c.b16 %v1812, %v1808
        %1877 = vmatprep.subr.bf16.mxu0 %v1842
        %1878 = vmatpush1.bf16.msra.mxu0 %v1841
        %1879 = vmatprep.subr.bf16.mxu0 %v1838
        %1880 = vmatpush1.bf16.msra.mxu0 %v1837
        %1881 = vmatprep.subr.bf16.mxu0 %v1834
        %1882 = vmatpush1.bf16.msra.mxu0 %v1833
        %1883 = vmatprep.subr.bf16.mxu0 %v1830
        %1884 = vmatpush1.bf16.msra.mxu0 %v1829
        %1885 = vmatprep.subr.bf16.mxu0 %v1826
        %1886 = vmatpush1.bf16.msra.mxu0 %v1825
        %1887 = vmatprep.subr.bf16.mxu0 %v1822
        %1888 = vmatpush1.bf16.msra.mxu0 %v1821
        %1889 = vmatprep.subr.bf16.mxu0 %v1818
        %1890 = vmatpush1.bf16.msra.mxu0 %v1817
        %1891 = vmatprep.subr.bf16.mxu0 %v1814
        %1892 = vmatpush1.bf16.msra.mxu0 %v1813
        %1893 = vmatprep.subr.bf16.mxu0 0
        %1894 = vmatpush2.bf16.msra.mxu0 0
        %1895 = vmatprep.subr.bf16.mxu0 0
        %1896 = vmatpush2.bf16.msra.mxu0 0
        %1897 = vmatprep.subr.bf16.mxu0 0
        %1898 = vmatpush2.bf16.msra.mxu0 0
        %1899 = vmatprep.subr.bf16.mxu0 0
        %1900 = vmatpush2.bf16.msra.mxu0 0
        %1901 = vmatprep.subr.bf16.mxu0 0
        %1902 = vmatpush2.bf16.msra.mxu0 0
        %1903 = vmatprep.subr.bf16.mxu0 0
        %1904 = vmatpush2.bf16.msra.mxu0 0
        %1905 = vmatprep.subr.bf16.mxu0 0
        %1906 = vmatpush2.bf16.msra.mxu0 0
        %1907 = vmatprep.subr.bf16.mxu0 0
        %1908 = vmatpush2.bf16.msra.mxu0 0
        %1909 = vmatprep.mubr.bf16.mxu0 0
        %1910 = vmatmul.mubr.bf16.gmra.mxu0 %v1670
        %v1911 = vpop.f32.mrf.mxu0
        %v1912 = vadd.f32 0.0, %v1911
        %v1913 = vpop.f32.mrf.mxu0
        %v1914 = vadd.f32 0.0, %v1913
        %v1915 = vpop.f32.mrf.mxu0
        %v1916 = vpop.f32.mrf.mxu0
        %1917 = vdwg.mxu0
        %1918 = vmatprep.subr.bf16.mxu0 %v1844
        %1919 = vmatpush1.bf16.msra.mxu0 %v1843
        %1920 = vmatprep.subr.bf16.mxu0 %v1840
        %1921 = vmatpush1.bf16.msra.mxu0 %v1839
        %1922 = vmatprep.subr.bf16.mxu0 %v1836
        %1923 = vmatpush1.bf16.msra.mxu0 %v1835
        %1924 = vmatprep.subr.bf16.mxu0 %v1832
        %1925 = vmatpush1.bf16.msra.mxu0 %v1831
        %1926 = vmatprep.subr.bf16.mxu0 %v1828
        %1927 = vmatpush1.bf16.msra.mxu0 %v1827
        %1928 = vmatprep.subr.bf16.mxu0 %v1824
        %1929 = vmatpush1.bf16.msra.mxu0 %v1823
        %1930 = vmatprep.subr.bf16.mxu0 %v1820
        %1931 = vmatpush1.bf16.msra.mxu0 %v1819
        %1932 = vmatprep.subr.bf16.mxu0 %v1816
        %1933 = vmatpush1.bf16.msra.mxu0 %v1815
        %1934 = vmatprep.subr.bf16.mxu0 0
        %1935 = vmatpush2.bf16.msra.mxu0 0
        %1936 = vmatprep.subr.bf16.mxu0 0
        %1937 = vmatpush2.bf16.msra.mxu0 0
        %1938 = vmatprep.subr.bf16.mxu0 0
        %1939 = vmatpush2.bf16.msra.mxu0 0
        %1940 = vmatprep.subr.bf16.mxu0 0
        %1941 = vmatpush2.bf16.msra.mxu0 0
        %1942 = vmatprep.subr.bf16.mxu0 0
        %1943 = vmatpush2.bf16.msra.mxu0 0
        %1944 = vmatprep.subr.bf16.mxu0 0
        %1945 = vmatpush2.bf16.msra.mxu0 0
        %1946 = vmatprep.subr.bf16.mxu0 0
        %1947 = vmatpush2.bf16.msra.mxu0 0
        %1948 = vmatprep.subr.bf16.mxu0 0
        %1949 = vmatpush2.bf16.msra.mxu0 0
        %1950 = vmatprep.mubr.bf16.mxu0 0
        %1951 = vmatmul.mubr.bf16.gmra.mxu0 %v1670
        %v1952 = vpop.f32.mrf.mxu0
        %v1953 = vadd.f32 0.0, %v1952
        %v1954 = vpop.f32.mrf.mxu0
        %v1955 = vadd.f32 0.0, %v1954
        %v1956 = vpop.f32.mrf.mxu0
        %v1957 = vpop.f32.mrf.mxu0
        %1958 = vdwg.mxu0
        %v1959 = vadd.f32 %v1681, %v1912
        %v1960 = vadd.f32 %v1682, %v1914
        %v1961 = vadd.f32 %v1683, %v1953
        %v1962 = vadd.f32 %v1684, %v1955
        %v1963 = vmul.f32 %v1959, 0.5
        %v1964 = vtanh.pop %v1963
        %v1965 = vmul.f32 %v1964, 0.5
        %v1966 = vadd.f32 %v1965, 0.5
        %v1967 = vmul.f32 %v1960, 0.5
        %v1968 = vtanh.pop %v1967
        %v1969 = vmul.f32 %v1968, 0.5
        %v1970 = vadd.f32 %v1969, 0.5
        %v1971 = vtanh.pop %v1961
        %v1972 = vmul.f32 %v1962, 0.5
        %v1973 = vtanh.pop %v1972
        %v1974 = vmul.f32 %v1973, 0.5
        %v1975 = vadd.f32 %v1974, 0.5
        %v1976 = vmul.f32 %v1970, %v1667
        %v1977 = vmul.f32 %v1966, %v1971
        %v1978 = vadd.f32 %v1976, %v1977
        %v1979 = vtanh.pop %v1978
        %v1980 = vmul.f32 %v1975, %v1979
        %v1981 = vpack.c.bf16 %v1980, %v1980
        %s1982 = smul.addr %s1676, 4
        %s1983 = scalar_lea.vmem %s272, %s1982 [#allocation5]
        %1984 = vst [vmem:[%s1983] sm:$0xf] %v1981
        %s1985 = ssub.s32 4, %s19
        %s1986 = smul.u32 %s1985, 8
        %s1987 = sshra.s32 %s1986, 3
        %s1988 = sand.u32 %s1986, 7
        %s1989 = smul.u32 %s1987, 4
        %s1990 = smul.addr %s1989, 8
        %s1991 = scalar_lea.vmem [#allocation4], %s1990
        %v1992 = vld [vmem:[%s1991] sm:$0xff]
        %v1993 = vld [vmem:[%s1991 + $0x8] sm:$0xff]
        %v1994 = vld [vmem:[%s1991 + $0x10] sm:$0xff]
        %v1995 = vld [vmem:[%s1991 + $0x18] sm:$0xff]
        %v1996 = vld [vmem:[%s296] sm:$0xff]
        %v1997 = vld [vmem:[%s296 + $0x8] sm:$0xff]
        %v1998 = vld [vmem:[%s296 + $0x10] sm:$0xff]
        %v1999 = vld [vmem:[%s296 + $0x18] sm:$0xff]
        %v2000 = vld [vmem:[%s296 + $0x20] sm:$0xff]
        %v2001 = vld [vmem:[%s296 + $0x28] sm:$0xff]
        %v2002 = vld [vmem:[%s296 + $0x30] sm:$0xff]
        %v2003 = vld [vmem:[%s296 + $0x38] sm:$0xff]
        %v2004 = vld [vmem:[%s296 + $0x40] sm:$0xff]
        %v2005 = vld [vmem:[%s296 + $0x48] sm:$0xff]
        %v2006 = vld [vmem:[%s296 + $0x50] sm:$0xff]
        %v2007 = vld [vmem:[%s296 + $0x58] sm:$0xff]
        %v2008 = vld [vmem:[%s296 + $0x60] sm:$0xff]
        %v2009 = vld [vmem:[%s296 + $0x68] sm:$0xff]
        %v2010 = vld [vmem:[%s296 + $0x70] sm:$0xff]
        %v2011 = vld [vmem:[%s296 + $0x78] sm:$0xff]
        %v2012 = vld [vmem:[%s296 + $0x80] sm:$0xff]
        %v2013 = vld [vmem:[%s296 + $0x88] sm:$0xff]
        %v2014 = vld [vmem:[%s296 + $0x90] sm:$0xff]
        %v2015 = vld [vmem:[%s296 + $0x98] sm:$0xff]
        %v2016 = vld [vmem:[%s296 + $0xa0] sm:$0xff]
        %v2017 = vld [vmem:[%s296 + $0xa8] sm:$0xff]
        %v2018 = vld [vmem:[%s296 + $0xb0] sm:$0xff]
        %v2019 = vld [vmem:[%s296 + $0xb8] sm:$0xff]
        %v2020 = vld [vmem:[%s296 + $0xc0] sm:$0xff]
        %v2021 = vld [vmem:[%s296 + $0xc8] sm:$0xff]
        %v2022 = vld [vmem:[%s296 + $0xd0] sm:$0xff]
        %v2023 = vld [vmem:[%s296 + $0xd8] sm:$0xff]
        %v2024 = vld [vmem:[%s296 + $0xe0] sm:$0xff]
        %v2025 = vld [vmem:[%s296 + $0xe8] sm:$0xff]
        %v2026 = vld [vmem:[%s296 + $0xf0] sm:$0xff]
        %v2027 = vld [vmem:[%s296 + $0xf8] sm:$0xff]
        %v2060 = vunpack.c.l.b16 %v1996
        %v2061 = vunpack.c.h.b16 %v1996
        %v2062 = vunpack.c.l.b16 %v1997
        %v2063 = vunpack.c.h.b16 %v1997
        %v2064 = vunpack.c.l.b16 %v1998
        %v2065 = vunpack.c.h.b16 %v1998
        %v2066 = vunpack.c.l.b16 %v1999
        %v2067 = vunpack.c.h.b16 %v1999
        %v2068 = vunpack.c.l.b16 %v2000
        %v2069 = vunpack.c.h.b16 %v2000
        %v2070 = vunpack.c.l.b16 %v2001
        %v2071 = vunpack.c.h.b16 %v2001
        %v2072 = vunpack.c.l.b16 %v2002
        %v2073 = vunpack.c.h.b16 %v2002
        %v2074 = vunpack.c.l.b16 %v2003
        %v2075 = vunpack.c.h.b16 %v2003
        %v2076 = vunpack.c.l.b16 %v2004
        %v2077 = vunpack.c.h.b16 %v2004
        %v2078 = vunpack.c.l.b16 %v2005
        %v2079 = vunpack.c.h.b16 %v2005
        %v2080 = vunpack.c.l.b16 %v2006
        %v2081 = vunpack.c.h.b16 %v2006
        %v2082 = vunpack.c.l.b16 %v2007
        %v2083 = vunpack.c.h.b16 %v2007
        %v2084 = vunpack.c.l.b16 %v2008
        %v2085 = vunpack.c.h.b16 %v2008
        %v2086 = vunpack.c.l.b16 %v2009
        %v2087 = vunpack.c.h.b16 %v2009
        %v2088 = vunpack.c.l.b16 %v2010
        %v2089 = vunpack.c.h.b16 %v2010
        %v2090 = vunpack.c.l.b16 %v2011
        %v2091 = vunpack.c.h.b16 %v2011
        %v2092 = vunpack.c.l.b16 %v2012
        %v2093 = vunpack.c.h.b16 %v2012
        %v2094 = vunpack.c.l.b16 %v2013
        %v2095 = vunpack.c.h.b16 %v2013
        %v2096 = vunpack.c.l.b16 %v2014
        %v2097 = vunpack.c.h.b16 %v2014
        %v2098 = vunpack.c.l.b16 %v2015
        %v2099 = vunpack.c.h.b16 %v2015
        %v2100 = vunpack.c.l.b16 %v2016
        %v2101 = vunpack.c.h.b16 %v2016
        %v2102 = vunpack.c.l.b16 %v2017
        %v2103 = vunpack.c.h.b16 %v2017
        %v2104 = vunpack.c.l.b16 %v2018
        %v2105 = vunpack.c.h.b16 %v2018
        %v2106 = vunpack.c.l.b16 %v2019
        %v2107 = vunpack.c.h.b16 %v2019
        %v2108 = vunpack.c.l.b16 %v2020
        %v2109 = vunpack.c.h.b16 %v2020
        %v2110 = vunpack.c.l.b16 %v2021
        %v2111 = vunpack.c.h.b16 %v2021
        %v2112 = vunpack.c.l.b16 %v2022
        %v2113 = vunpack.c.h.b16 %v2022
        %v2114 = vunpack.c.l.b16 %v2023
        %v2115 = vunpack.c.h.b16 %v2023
        %v2116 = vunpack.c.l.b16 %v2024
        %v2117 = vunpack.c.h.b16 %v2024
        %v2118 = vunpack.c.l.b16 %v2025
        %v2119 = vunpack.c.h.b16 %v2025
        %v2120 = vunpack.c.l.b16 %v2026
        %v2121 = vunpack.c.h.b16 %v2026
        %v2122 = vunpack.c.l.b16 %v2027
        %v2123 = vunpack.c.h.b16 %v2027
        %v2124 = vpack.c.b16 %v2064, %v2060
        %v2125 = vpack.c.b16 %v2065, %v2061
        %v2126 = vpack.c.b16 %v2066, %v2062
        %v2127 = vpack.c.b16 %v2067, %v2063
        %v2128 = vpack.c.b16 %v2072, %v2068
        %v2129 = vpack.c.b16 %v2073, %v2069
        %v2130 = vpack.c.b16 %v2074, %v2070
        %v2131 = vpack.c.b16 %v2075, %v2071
        %v2132 = vpack.c.b16 %v2080, %v2076
        %v2133 = vpack.c.b16 %v2081, %v2077
        %v2134 = vpack.c.b16 %v2082, %v2078
        %v2135 = vpack.c.b16 %v2083, %v2079
        %v2136 = vpack.c.b16 %v2088, %v2084
        %v2137 = vpack.c.b16 %v2089, %v2085
        %v2138 = vpack.c.b16 %v2090, %v2086
        %v2139 = vpack.c.b16 %v2091, %v2087
        %v2140 = vpack.c.b16 %v2096, %v2092
        %v2141 = vpack.c.b16 %v2097, %v2093
        %v2142 = vpack.c.b16 %v2098, %v2094
        %v2143 = vpack.c.b16 %v2099, %v2095
        %v2144 = vpack.c.b16 %v2104, %v2100
        %v2145 = vpack.c.b16 %v2105, %v2101
        %v2146 = vpack.c.b16 %v2106, %v2102
        %v2147 = vpack.c.b16 %v2107, %v2103
        %v2148 = vpack.c.b16 %v2112, %v2108
        %v2149 = vpack.c.b16 %v2113, %v2109
        %v2150 = vpack.c.b16 %v2114, %v2110
        %v2151 = vpack.c.b16 %v2115, %v2111
        %v2152 = vpack.c.b16 %v2120, %v2116
        %v2153 = vpack.c.b16 %v2121, %v2117
        %v2154 = vpack.c.b16 %v2122, %v2118
        %v2155 = vpack.c.b16 %v2123, %v2119
        %2188 = vmatprep.subr.bf16.mxu0 %v2153
        %2189 = vmatpush1.bf16.msra.mxu0 %v2152
        %2190 = vmatprep.subr.bf16.mxu0 %v2149
        %2191 = vmatpush1.bf16.msra.mxu0 %v2148
        %2192 = vmatprep.subr.bf16.mxu0 %v2145
        %2193 = vmatpush1.bf16.msra.mxu0 %v2144
        %2194 = vmatprep.subr.bf16.mxu0 %v2141
        %2195 = vmatpush1.bf16.msra.mxu0 %v2140
        %2196 = vmatprep.subr.bf16.mxu0 %v2137
        %2197 = vmatpush1.bf16.msra.mxu0 %v2136
        %2198 = vmatprep.subr.bf16.mxu0 %v2133
        %2199 = vmatpush1.bf16.msra.mxu0 %v2132
        %2200 = vmatprep.subr.bf16.mxu0 %v2129
        %2201 = vmatpush1.bf16.msra.mxu0 %v2128
        %2202 = vmatprep.subr.bf16.mxu0 %v2125
        %2203 = vmatpush1.bf16.msra.mxu0 %v2124
        %2204 = vmatprep.subr.bf16.mxu0 0
        %2205 = vmatpush2.bf16.msra.mxu0 0
        %2206 = vmatprep.subr.bf16.mxu0 0
        %2207 = vmatpush2.bf16.msra.mxu0 0
        %2208 = vmatprep.subr.bf16.mxu0 0
        %2209 = vmatpush2.bf16.msra.mxu0 0
        %2210 = vmatprep.subr.bf16.mxu0 0
        %2211 = vmatpush2.bf16.msra.mxu0 0
        %2212 = vmatprep.subr.bf16.mxu0 0
        %2213 = vmatpush2.bf16.msra.mxu0 0
        %2214 = vmatprep.subr.bf16.mxu0 0
        %2215 = vmatpush2.bf16.msra.mxu0 0
        %2216 = vmatprep.subr.bf16.mxu0 0
        %2217 = vmatpush2.bf16.msra.mxu0 0
        %2218 = vmatprep.subr.bf16.mxu0 0
        %2219 = vmatpush2.bf16.msra.mxu0 0
        %2220 = vmatprep.mubr.bf16.mxu0 0
        %2221 = vmatmul.mubr.bf16.gmra.mxu0 %v1981
        %v2222 = vpop.f32.mrf.mxu0
        %v2223 = vadd.f32 0.0, %v2222
        %v2224 = vpop.f32.mrf.mxu0
        %v2225 = vadd.f32 0.0, %v2224
        %v2226 = vpop.f32.mrf.mxu0
        %v2227 = vpop.f32.mrf.mxu0
        %2228 = vdwg.mxu0
        %2229 = vmatprep.subr.bf16.mxu0 %v2155
        %2230 = vmatpush1.bf16.msra.mxu0 %v2154
        %2231 = vmatprep.subr.bf16.mxu0 %v2151
        %2232 = vmatpush1.bf16.msra.mxu0 %v2150
        %2233 = vmatprep.subr.bf16.mxu0 %v2147
        %2234 = vmatpush1.bf16.msra.mxu0 %v2146
        %2235 = vmatprep.subr.bf16.mxu0 %v2143
        %2236 = vmatpush1.bf16.msra.mxu0 %v2142
        %2237 = vmatprep.subr.bf16.mxu0 %v2139
        %2238 = vmatpush1.bf16.msra.mxu0 %v2138
        %2239 = vmatprep.subr.bf16.mxu0 %v2135
        %2240 = vmatpush1.bf16.msra.mxu0 %v2134
        %2241 = vmatprep.subr.bf16.mxu0 %v2131
        %2242 = vmatpush1.bf16.msra.mxu0 %v2130
        %2243 = vmatprep.subr.bf16.mxu0 %v2127
        %2244 = vmatpush1.bf16.msra.mxu0 %v2126
        %2245 = vmatprep.subr.bf16.mxu0 0
        %2246 = vmatpush2.bf16.msra.mxu0 0
        %2247 = vmatprep.subr.bf16.mxu0 0
        %2248 = vmatpush2.bf16.msra.mxu0 0
        %2249 = vmatprep.subr.bf16.mxu0 0
        %2250 = vmatpush2.bf16.msra.mxu0 0
        %2251 = vmatprep.subr.bf16.mxu0 0
        %2252 = vmatpush2.bf16.msra.mxu0 0
        %2253 = vmatprep.subr.bf16.mxu0 0
        %2254 = vmatpush2.bf16.msra.mxu0 0
        %2255 = vmatprep.subr.bf16.mxu0 0
        %2256 = vmatpush2.bf16.msra.mxu0 0
        %2257 = vmatprep.subr.bf16.mxu0 0
        %2258 = vmatpush2.bf16.msra.mxu0 0
        %2259 = vmatprep.subr.bf16.mxu0 0
        %2260 = vmatpush2.bf16.msra.mxu0 0
        %2261 = vmatprep.mubr.bf16.mxu0 0
        %2262 = vmatmul.mubr.bf16.gmra.mxu0 %v1981
        %v2263 = vpop.f32.mrf.mxu0
        %v2264 = vadd.f32 0.0, %v2263
        %v2265 = vpop.f32.mrf.mxu0
        %v2266 = vadd.f32 0.0, %v2265
        %v2267 = vpop.f32.mrf.mxu0
        %v2268 = vpop.f32.mrf.mxu0
        %2269 = vdwg.mxu0
        %v2270 = vadd.f32 %v1992, %v2223
        %v2271 = vadd.f32 %v1993, %v2225
        %v2272 = vadd.f32 %v1994, %v2264
        %v2273 = vadd.f32 %v1995, %v2266
        %v2274 = vmul.f32 %v2270, 0.5
        %v2275 = vtanh.pop %v2274
        %v2276 = vmul.f32 %v2275, 0.5
        %v2277 = vadd.f32 %v2276, 0.5
        %v2278 = vmul.f32 %v2271, 0.5
        %v2279 = vtanh.pop %v2278
        %v2280 = vmul.f32 %v2279, 0.5
        %v2281 = vadd.f32 %v2280, 0.5
        %v2282 = vtanh.pop %v2272
        %v2283 = vmul.f32 %v2273, 0.5
        %v2284 = vtanh.pop %v2283
        %v2285 = vmul.f32 %v2284, 0.5
        %v2286 = vadd.f32 %v2285, 0.5
        %v2287 = vmul.f32 %v2281, %v1978
        %v2288 = vmul.f32 %v2277, %v2282
        %v2289 = vadd.f32 %v2287, %v2288
        %v2290 = vtanh.pop %v2289
        %v2291 = vmul.f32 %v2286, %v2290
        %v2292 = vpack.c.bf16 %v2291, %v2291
        %s2293 = smul.addr %s1987, 4
        %s2294 = scalar_lea.vmem %s272, %s2293 [#allocation5]
        %2295 = vst [vmem:[%s2294] sm:$0xf] %v2292
        %s2296 = smul.u32 %s19, 4294967293
        %s2297 = sadd.s32 %s2296, 5
        %s2298 = smul.u32 %s2297, 8
        %s2299 = sshra.s32 %s2298, 3
        %s2300 = sand.u32 %s2298, 7
        %s2301 = smul.u32 %s2299, 4
        %s2302 = smul.addr %s2301, 8
        %s2303 = scalar_lea.vmem [#allocation4], %s2302
        %v2304 = vld [vmem:[%s2303] sm:$0xff]
        %v2305 = vld [vmem:[%s2303 + $0x8] sm:$0xff]
        %v2306 = vld [vmem:[%s2303 + $0x10] sm:$0xff]
        %v2307 = vld [vmem:[%s2303 + $0x18] sm:$0xff]
        %v2308 = vld [vmem:[%s296] sm:$0xff]
        %v2309 = vld [vmem:[%s296 + $0x8] sm:$0xff]
        %v2310 = vld [vmem:[%s296 + $0x10] sm:$0xff]
        %v2311 = vld [vmem:[%s296 + $0x18] sm:$0xff]
        %v2312 = vld [vmem:[%s296 + $0x20] sm:$0xff]
        %v2313 = vld [vmem:[%s296 + $0x28] sm:$0xff]
        %v2314 = vld [vmem:[%s296 + $0x30] sm:$0xff]
        %v2315 = vld [vmem:[%s296 + $0x38] sm:$0xff]
        %v2316 = vld [vmem:[%s296 + $0x40] sm:$0xff]
        %v2317 = vld [vmem:[%s296 + $0x48] sm:$0xff]
        %v2318 = vld [vmem:[%s296 + $0x50] sm:$0xff]
        %v2319 = vld [vmem:[%s296 + $0x58] sm:$0xff]
        %v2320 = vld [vmem:[%s296 + $0x60] sm:$0xff]
        %v2321 = vld [vmem:[%s296 + $0x68] sm:$0xff]
        %v2322 = vld [vmem:[%s296 + $0x70] sm:$0xff]
        %v2323 = vld [vmem:[%s296 + $0x78] sm:$0xff]
        %v2324 = vld [vmem:[%s296 + $0x80] sm:$0xff]
        %v2325 = vld [vmem:[%s296 + $0x88] sm:$0xff]
        %v2326 = vld [vmem:[%s296 + $0x90] sm:$0xff]
        %v2327 = vld [vmem:[%s296 + $0x98] sm:$0xff]
        %v2328 = vld [vmem:[%s296 + $0xa0] sm:$0xff]
        %v2329 = vld [vmem:[%s296 + $0xa8] sm:$0xff]
        %v2330 = vld [vmem:[%s296 + $0xb0] sm:$0xff]
        %v2331 = vld [vmem:[%s296 + $0xb8] sm:$0xff]
        %v2332 = vld [vmem:[%s296 + $0xc0] sm:$0xff]
        %v2333 = vld [vmem:[%s296 + $0xc8] sm:$0xff]
        %v2334 = vld [vmem:[%s296 + $0xd0] sm:$0xff]
        %v2335 = vld [vmem:[%s296 + $0xd8] sm:$0xff]
        %v2336 = vld [vmem:[%s296 + $0xe0] sm:$0xff]
        %v2337 = vld [vmem:[%s296 + $0xe8] sm:$0xff]
        %v2338 = vld [vmem:[%s296 + $0xf0] sm:$0xff]
        %v2339 = vld [vmem:[%s296 + $0xf8] sm:$0xff]
        %v2372 = vunpack.c.l.b16 %v2308
        %v2373 = vunpack.c.h.b16 %v2308
        %v2374 = vunpack.c.l.b16 %v2309
        %v2375 = vunpack.c.h.b16 %v2309
        %v2376 = vunpack.c.l.b16 %v2310
        %v2377 = vunpack.c.h.b16 %v2310
        %v2378 = vunpack.c.l.b16 %v2311
        %v2379 = vunpack.c.h.b16 %v2311
        %v2380 = vunpack.c.l.b16 %v2312
        %v2381 = vunpack.c.h.b16 %v2312
        %v2382 = vunpack.c.l.b16 %v2313
        %v2383 = vunpack.c.h.b16 %v2313
        %v2384 = vunpack.c.l.b16 %v2314
        %v2385 = vunpack.c.h.b16 %v2314
        %v2386 = vunpack.c.l.b16 %v2315
        %v2387 = vunpack.c.h.b16 %v2315
        %v2388 = vunpack.c.l.b16 %v2316
        %v2389 = vunpack.c.h.b16 %v2316
        %v2390 = vunpack.c.l.b16 %v2317
        %v2391 = vunpack.c.h.b16 %v2317
        %v2392 = vunpack.c.l.b16 %v2318
        %v2393 = vunpack.c.h.b16 %v2318
        %v2394 = vunpack.c.l.b16 %v2319
        %v2395 = vunpack.c.h.b16 %v2319
        %v2396 = vunpack.c.l.b16 %v2320
        %v2397 = vunpack.c.h.b16 %v2320
        %v2398 = vunpack.c.l.b16 %v2321
        %v2399 = vunpack.c.h.b16 %v2321
        %v2400 = vunpack.c.l.b16 %v2322
        %v2401 = vunpack.c.h.b16 %v2322
        %v2402 = vunpack.c.l.b16 %v2323
        %v2403 = vunpack.c.h.b16 %v2323
        %v2404 = vunpack.c.l.b16 %v2324
        %v2405 = vunpack.c.h.b16 %v2324
        %v2406 = vunpack.c.l.b16 %v2325
        %v2407 = vunpack.c.h.b16 %v2325
        %v2408 = vunpack.c.l.b16 %v2326
        %v2409 = vunpack.c.h.b16 %v2326
        %v2410 = vunpack.c.l.b16 %v2327
        %v2411 = vunpack.c.h.b16 %v2327
        %v2412 = vunpack.c.l.b16 %v2328
        %v2413 = vunpack.c.h.b16 %v2328
        %v2414 = vunpack.c.l.b16 %v2329
        %v2415 = vunpack.c.h.b16 %v2329
        %v2416 = vunpack.c.l.b16 %v2330
        %v2417 = vunpack.c.h.b16 %v2330
        %v2418 = vunpack.c.l.b16 %v2331
        %v2419 = vunpack.c.h.b16 %v2331
        %v2420 = vunpack.c.l.b16 %v2332
        %v2421 = vunpack.c.h.b16 %v2332
        %v2422 = vunpack.c.l.b16 %v2333
        %v2423 = vunpack.c.h.b16 %v2333
        %v2424 = vunpack.c.l.b16 %v2334
        %v2425 = vunpack.c.h.b16 %v2334
        %v2426 = vunpack.c.l.b16 %v2335
        %v2427 = vunpack.c.h.b16 %v2335
        %v2428 = vunpack.c.l.b16 %v2336
        %v2429 = vunpack.c.h.b16 %v2336
        %v2430 = vunpack.c.l.b16 %v2337
        %v2431 = vunpack.c.h.b16 %v2337
        %v2432 = vunpack.c.l.b16 %v2338
        %v2433 = vunpack.c.h.b16 %v2338
        %v2434 = vunpack.c.l.b16 %v2339
        %v2435 = vunpack.c.h.b16 %v2339
        %v2436 = vpack.c.b16 %v2376, %v2372
        %v2437 = vpack.c.b16 %v2377, %v2373
        %v2438 = vpack.c.b16 %v2378, %v2374
        %v2439 = vpack.c.b16 %v2379, %v2375
        %v2440 = vpack.c.b16 %v2384, %v2380
        %v2441 = vpack.c.b16 %v2385, %v2381
        %v2442 = vpack.c.b16 %v2386, %v2382
        %v2443 = vpack.c.b16 %v2387, %v2383
        %v2444 = vpack.c.b16 %v2392, %v2388
        %v2445 = vpack.c.b16 %v2393, %v2389
        %v2446 = vpack.c.b16 %v2394, %v2390
        %v2447 = vpack.c.b16 %v2395, %v2391
        %v2448 = vpack.c.b16 %v2400, %v2396
        %v2449 = vpack.c.b16 %v2401, %v2397
        %v2450 = vpack.c.b16 %v2402, %v2398
        %v2451 = vpack.c.b16 %v2403, %v2399
        %v2452 = vpack.c.b16 %v2408, %v2404
        %v2453 = vpack.c.b16 %v2409, %v2405
        %v2454 = vpack.c.b16 %v2410, %v2406
        %v2455 = vpack.c.b16 %v2411, %v2407
        %v2456 = vpack.c.b16 %v2416, %v2412
        %v2457 = vpack.c.b16 %v2417, %v2413
        %v2458 = vpack.c.b16 %v2418, %v2414
        %v2459 = vpack.c.b16 %v2419, %v2415
        %v2460 = vpack.c.b16 %v2424, %v2420
        %v2461 = vpack.c.b16 %v2425, %v2421
        %v2462 = vpack.c.b16 %v2426, %v2422
        %v2463 = vpack.c.b16 %v2427, %v2423
        %v2464 = vpack.c.b16 %v2432, %v2428
        %v2465 = vpack.c.b16 %v2433, %v2429
        %v2466 = vpack.c.b16 %v2434, %v2430
        %v2467 = vpack.c.b16 %v2435, %v2431
        %2500 = vmatprep.subr.bf16.mxu0 %v2465
        %2501 = vmatpush1.bf16.msra.mxu0 %v2464
        %2502 = vmatprep.subr.bf16.mxu0 %v2461
        %2503 = vmatpush1.bf16.msra.mxu0 %v2460
        %2504 = vmatprep.subr.bf16.mxu0 %v2457
        %2505 = vmatpush1.bf16.msra.mxu0 %v2456
        %2506 = vmatprep.subr.bf16.mxu0 %v2453
        %2507 = vmatpush1.bf16.msra.mxu0 %v2452
        %2508 = vmatprep.subr.bf16.mxu0 %v2449
        %2509 = vmatpush1.bf16.msra.mxu0 %v2448
        %2510 = vmatprep.subr.bf16.mxu0 %v2445
        %2511 = vmatpush1.bf16.msra.mxu0 %v2444
        %2512 = vmatprep.subr.bf16.mxu0 %v2441
        %2513 = vmatpush1.bf16.msra.mxu0 %v2440
        %2514 = vmatprep.subr.bf16.mxu0 %v2437
        %2515 = vmatpush1.bf16.msra.mxu0 %v2436
        %2516 = vmatprep.subr.bf16.mxu0 0
        %2517 = vmatpush2.bf16.msra.mxu0 0
        %2518 = vmatprep.subr.bf16.mxu0 0
        %2519 = vmatpush2.bf16.msra.mxu0 0
        %2520 = vmatprep.subr.bf16.mxu0 0
        %2521 = vmatpush2.bf16.msra.mxu0 0
        %2522 = vmatprep.subr.bf16.mxu0 0
        %2523 = vmatpush2.bf16.msra.mxu0 0
        %2524 = vmatprep.subr.bf16.mxu0 0
        %2525 = vmatpush2.bf16.msra.mxu0 0
        %2526 = vmatprep.subr.bf16.mxu0 0
        %2527 = vmatpush2.bf16.msra.mxu0 0
        %2528 = vmatprep.subr.bf16.mxu0 0
        %2529 = vmatpush2.bf16.msra.mxu0 0
        %2530 = vmatprep.subr.bf16.mxu0 0
        %2531 = vmatpush2.bf16.msra.mxu0 0
        %2532 = vmatprep.mubr.bf16.mxu0 0
        %2533 = vmatmul.mubr.bf16.gmra.mxu0 %v2292
        %v2534 = vpop.f32.mrf.mxu0
        %v2535 = vadd.f32 0.0, %v2534
        %v2536 = vpop.f32.mrf.mxu0
        %v2537 = vadd.f32 0.0, %v2536
        %v2538 = vpop.f32.mrf.mxu0
        %v2539 = vpop.f32.mrf.mxu0
        %2540 = vdwg.mxu0
        %2541 = vmatprep.subr.bf16.mxu0 %v2467
        %2542 = vmatpush1.bf16.msra.mxu0 %v2466
        %2543 = vmatprep.subr.bf16.mxu0 %v2463
        %2544 = vmatpush1.bf16.msra.mxu0 %v2462
        %2545 = vmatprep.subr.bf16.mxu0 %v2459
        %2546 = vmatpush1.bf16.msra.mxu0 %v2458
        %2547 = vmatprep.subr.bf16.mxu0 %v2455
        %2548 = vmatpush1.bf16.msra.mxu0 %v2454
        %2549 = vmatprep.subr.bf16.mxu0 %v2451
        %2550 = vmatpush1.bf16.msra.mxu0 %v2450
        %2551 = vmatprep.subr.bf16.mxu0 %v2447
        %2552 = vmatpush1.bf16.msra.mxu0 %v2446
        %2553 = vmatprep.subr.bf16.mxu0 %v2443
        %2554 = vmatpush1.bf16.msra.mxu0 %v2442
        %2555 = vmatprep.subr.bf16.mxu0 %v2439
        %2556 = vmatpush1.bf16.msra.mxu0 %v2438
        %2557 = vmatprep.subr.bf16.mxu0 0
        %2558 = vmatpush2.bf16.msra.mxu0 0
        %2559 = vmatprep.subr.bf16.mxu0 0
        %2560 = vmatpush2.bf16.msra.mxu0 0
        %2561 = vmatprep.subr.bf16.mxu0 0
        %2562 = vmatpush2.bf16.msra.mxu0 0
        %2563 = vmatprep.subr.bf16.mxu0 0
        %2564 = vmatpush2.bf16.msra.mxu0 0
        %2565 = vmatprep.subr.bf16.mxu0 0
        %2566 = vmatpush2.bf16.msra.mxu0 0
        %2567 = vmatprep.subr.bf16.mxu0 0
        %2568 = vmatpush2.bf16.msra.mxu0 0
        %2569 = vmatprep.subr.bf16.mxu0 0
        %2570 = vmatpush2.bf16.msra.mxu0 0
        %2571 = vmatprep.subr.bf16.mxu0 0
        %2572 = vmatpush2.bf16.msra.mxu0 0
        %2573 = vmatprep.mubr.bf16.mxu0 0
        %2574 = vmatmul.mubr.bf16.gmra.mxu0 %v2292
        %v2575 = vpop.f32.mrf.mxu0
        %v2576 = vadd.f32 0.0, %v2575
        %v2577 = vpop.f32.mrf.mxu0
        %v2578 = vadd.f32 0.0, %v2577
        %v2579 = vpop.f32.mrf.mxu0
        %v2580 = vpop.f32.mrf.mxu0
        %2581 = vdwg.mxu0
        %v2582 = vadd.f32 %v2304, %v2535
        %v2583 = vadd.f32 %v2305, %v2537
        %v2584 = vadd.f32 %v2306, %v2576
        %v2585 = vadd.f32 %v2307, %v2578
        %v2586 = vmul.f32 %v2582, 0.5
        %v2587 = vtanh.pop %v2586
        %v2588 = vmul.f32 %v2587, 0.5
        %v2589 = vadd.f32 %v2588, 0.5
        %v2590 = vmul.f32 %v2583, 0.5
        %v2591 = vtanh.pop %v2590
        %v2592 = vmul.f32 %v2591, 0.5
        %v2593 = vadd.f32 %v2592, 0.5
        %v2594 = vtanh.pop %v2584
        %v2595 = vmul.f32 %v2585, 0.5
        %v2596 = vtanh.pop %v2595
        %v2597 = vmul.f32 %v2596, 0.5
        %v2598 = vadd.f32 %v2597, 0.5
        %v2599 = vmul.f32 %v2593, %v2289
        %v2600 = vmul.f32 %v2589, %v2594
        %v2601 = vadd.f32 %v2599, %v2600
        %v2602 = vtanh.pop %v2601
        %v2603 = vmul.f32 %v2598, %v2602
        %v2604 = vpack.c.bf16 %v2603, %v2603
        %s2605 = smul.addr %s2299, 4
        %s2606 = scalar_lea.vmem %s272, %s2605 [#allocation5]
        %2607 = vst [vmem:[%s2606] sm:$0xf] %v2604
        %s2608 = smul.u32 %s19, 4294967291
        %s2609 = sadd.s32 %s2608, 6
        %s2610 = smul.u32 %s2609, 8
        %s2611 = sshra.s32 %s2610, 3
        %s2612 = sand.u32 %s2610, 7
        %s2613 = smul.u32 %s2611, 4
        %s2614 = smul.addr %s2613, 8
        %s2615 = scalar_lea.vmem [#allocation4], %s2614
        %v2616 = vld [vmem:[%s2615] sm:$0xff]
        %v2617 = vld [vmem:[%s2615 + $0x8] sm:$0xff]
        %v2618 = vld [vmem:[%s2615 + $0x10] sm:$0xff]
        %v2619 = vld [vmem:[%s2615 + $0x18] sm:$0xff]
        %v2620 = vld [vmem:[%s296] sm:$0xff]
        %v2621 = vld [vmem:[%s296 + $0x8] sm:$0xff]
        %v2622 = vld [vmem:[%s296 + $0x10] sm:$0xff]
        %v2623 = vld [vmem:[%s296 + $0x18] sm:$0xff]
        %v2624 = vld [vmem:[%s296 + $0x20] sm:$0xff]
        %v2625 = vld [vmem:[%s296 + $0x28] sm:$0xff]
        %v2626 = vld [vmem:[%s296 + $0x30] sm:$0xff]
        %v2627 = vld [vmem:[%s296 + $0x38] sm:$0xff]
        %v2628 = vld [vmem:[%s296 + $0x40] sm:$0xff]
        %v2629 = vld [vmem:[%s296 + $0x48] sm:$0xff]
        %v2630 = vld [vmem:[%s296 + $0x50] sm:$0xff]
        %v2631 = vld [vmem:[%s296 + $0x58] sm:$0xff]
        %v2632 = vld [vmem:[%s296 + $0x60] sm:$0xff]
        %v2633 = vld [vmem:[%s296 + $0x68] sm:$0xff]
        %v2634 = vld [vmem:[%s296 + $0x70] sm:$0xff]
        %v2635 = vld [vmem:[%s296 + $0x78] sm:$0xff]
        %v2636 = vld [vmem:[%s296 + $0x80] sm:$0xff]
        %v2637 = vld [vmem:[%s296 + $0x88] sm:$0xff]
        %v2638 = vld [vmem:[%s296 + $0x90] sm:$0xff]
        %v2639 = vld [vmem:[%s296 + $0x98] sm:$0xff]
        %v2640 = vld [vmem:[%s296 + $0xa0] sm:$0xff]
        %v2641 = vld [vmem:[%s296 + $0xa8] sm:$0xff]
        %v2642 = vld [vmem:[%s296 + $0xb0] sm:$0xff]
        %v2643 = vld [vmem:[%s296 + $0xb8] sm:$0xff]
        %v2644 = vld [vmem:[%s296 + $0xc0] sm:$0xff]
        %v2645 = vld [vmem:[%s296 + $0xc8] sm:$0xff]
        %v2646 = vld [vmem:[%s296 + $0xd0] sm:$0xff]
        %v2647 = vld [vmem:[%s296 + $0xd8] sm:$0xff]
        %v2648 = vld [vmem:[%s296 + $0xe0] sm:$0xff]
        %v2649 = vld [vmem:[%s296 + $0xe8] sm:$0xff]
        %v2650 = vld [vmem:[%s296 + $0xf0] sm:$0xff]
        %v2651 = vld [vmem:[%s296 + $0xf8] sm:$0xff]
        %v2684 = vunpack.c.l.b16 %v2620
        %v2685 = vunpack.c.h.b16 %v2620
        %v2686 = vunpack.c.l.b16 %v2621
        %v2687 = vunpack.c.h.b16 %v2621
        %v2688 = vunpack.c.l.b16 %v2622
        %v2689 = vunpack.c.h.b16 %v2622
        %v2690 = vunpack.c.l.b16 %v2623
        %v2691 = vunpack.c.h.b16 %v2623
        %v2692 = vunpack.c.l.b16 %v2624
        %v2693 = vunpack.c.h.b16 %v2624
        %v2694 = vunpack.c.l.b16 %v2625
        %v2695 = vunpack.c.h.b16 %v2625
        %v2696 = vunpack.c.l.b16 %v2626
        %v2697 = vunpack.c.h.b16 %v2626
        %v2698 = vunpack.c.l.b16 %v2627
        %v2699 = vunpack.c.h.b16 %v2627
        %v2700 = vunpack.c.l.b16 %v2628
        %v2701 = vunpack.c.h.b16 %v2628
        %v2702 = vunpack.c.l.b16 %v2629
        %v2703 = vunpack.c.h.b16 %v2629
        %v2704 = vunpack.c.l.b16 %v2630
        %v2705 = vunpack.c.h.b16 %v2630
        %v2706 = vunpack.c.l.b16 %v2631
        %v2707 = vunpack.c.h.b16 %v2631
        %v2708 = vunpack.c.l.b16 %v2632
        %v2709 = vunpack.c.h.b16 %v2632
        %v2710 = vunpack.c.l.b16 %v2633
        %v2711 = vunpack.c.h.b16 %v2633
        %v2712 = vunpack.c.l.b16 %v2634
        %v2713 = vunpack.c.h.b16 %v2634
        %v2714 = vunpack.c.l.b16 %v2635
        %v2715 = vunpack.c.h.b16 %v2635
        %v2716 = vunpack.c.l.b16 %v2636
        %v2717 = vunpack.c.h.b16 %v2636
        %v2718 = vunpack.c.l.b16 %v2637
        %v2719 = vunpack.c.h.b16 %v2637
        %v2720 = vunpack.c.l.b16 %v2638
        %v2721 = vunpack.c.h.b16 %v2638
        %v2722 = vunpack.c.l.b16 %v2639
        %v2723 = vunpack.c.h.b16 %v2639
        %v2724 = vunpack.c.l.b16 %v2640
        %v2725 = vunpack.c.h.b16 %v2640
        %v2726 = vunpack.c.l.b16 %v2641
        %v2727 = vunpack.c.h.b16 %v2641
        %v2728 = vunpack.c.l.b16 %v2642
        %v2729 = vunpack.c.h.b16 %v2642
        %v2730 = vunpack.c.l.b16 %v2643
        %v2731 = vunpack.c.h.b16 %v2643
        %v2732 = vunpack.c.l.b16 %v2644
        %v2733 = vunpack.c.h.b16 %v2644
        %v2734 = vunpack.c.l.b16 %v2645
        %v2735 = vunpack.c.h.b16 %v2645
        %v2736 = vunpack.c.l.b16 %v2646
        %v2737 = vunpack.c.h.b16 %v2646
        %v2738 = vunpack.c.l.b16 %v2647
        %v2739 = vunpack.c.h.b16 %v2647
        %v2740 = vunpack.c.l.b16 %v2648
        %v2741 = vunpack.c.h.b16 %v2648
        %v2742 = vunpack.c.l.b16 %v2649
        %v2743 = vunpack.c.h.b16 %v2649
        %v2744 = vunpack.c.l.b16 %v2650
        %v2745 = vunpack.c.h.b16 %v2650
        %v2746 = vunpack.c.l.b16 %v2651
        %v2747 = vunpack.c.h.b16 %v2651
        %v2748 = vpack.c.b16 %v2688, %v2684
        %v2749 = vpack.c.b16 %v2689, %v2685
        %v2750 = vpack.c.b16 %v2690, %v2686
        %v2751 = vpack.c.b16 %v2691, %v2687
        %v2752 = vpack.c.b16 %v2696, %v2692
        %v2753 = vpack.c.b16 %v2697, %v2693
        %v2754 = vpack.c.b16 %v2698, %v2694
        %v2755 = vpack.c.b16 %v2699, %v2695
        %v2756 = vpack.c.b16 %v2704, %v2700
        %v2757 = vpack.c.b16 %v2705, %v2701
        %v2758 = vpack.c.b16 %v2706, %v2702
        %v2759 = vpack.c.b16 %v2707, %v2703
        %v2760 = vpack.c.b16 %v2712, %v2708
        %v2761 = vpack.c.b16 %v2713, %v2709
        %v2762 = vpack.c.b16 %v2714, %v2710
        %v2763 = vpack.c.b16 %v2715, %v2711
        %v2764 = vpack.c.b16 %v2720, %v2716
        %v2765 = vpack.c.b16 %v2721, %v2717
        %v2766 = vpack.c.b16 %v2722, %v2718
        %v2767 = vpack.c.b16 %v2723, %v2719
        %v2768 = vpack.c.b16 %v2728, %v2724
        %v2769 = vpack.c.b16 %v2729, %v2725
        %v2770 = vpack.c.b16 %v2730, %v2726
        %v2771 = vpack.c.b16 %v2731, %v2727
        %v2772 = vpack.c.b16 %v2736, %v2732
        %v2773 = vpack.c.b16 %v2737, %v2733
        %v2774 = vpack.c.b16 %v2738, %v2734
        %v2775 = vpack.c.b16 %v2739, %v2735
        %v2776 = vpack.c.b16 %v2744, %v2740
        %v2777 = vpack.c.b16 %v2745, %v2741
        %v2778 = vpack.c.b16 %v2746, %v2742
        %v2779 = vpack.c.b16 %v2747, %v2743
        %2812 = vmatprep.subr.bf16.mxu0 %v2777
        %2813 = vmatpush1.bf16.msra.mxu0 %v2776
        %2814 = vmatprep.subr.bf16.mxu0 %v2773
        %2815 = vmatpush1.bf16.msra.mxu0 %v2772
        %2816 = vmatprep.subr.bf16.mxu0 %v2769
        %2817 = vmatpush1.bf16.msra.mxu0 %v2768
        %2818 = vmatprep.subr.bf16.mxu0 %v2765
        %2819 = vmatpush1.bf16.msra.mxu0 %v2764
        %2820 = vmatprep.subr.bf16.mxu0 %v2761
        %2821 = vmatpush1.bf16.msra.mxu0 %v2760
        %2822 = vmatprep.subr.bf16.mxu0 %v2757
        %2823 = vmatpush1.bf16.msra.mxu0 %v2756
        %2824 = vmatprep.subr.bf16.mxu0 %v2753
        %2825 = vmatpush1.bf16.msra.mxu0 %v2752
        %2826 = vmatprep.subr.bf16.mxu0 %v2749
        %2827 = vmatpush1.bf16.msra.mxu0 %v2748
        %2828 = vmatprep.subr.bf16.mxu0 0
        %2829 = vmatpush2.bf16.msra.mxu0 0
        %2830 = vmatprep.subr.bf16.mxu0 0
        %2831 = vmatpush2.bf16.msra.mxu0 0
        %2832 = vmatprep.subr.bf16.mxu0 0
        %2833 = vmatpush2.bf16.msra.mxu0 0
        %2834 = vmatprep.subr.bf16.mxu0 0
        %2835 = vmatpush2.bf16.msra.mxu0 0
        %2836 = vmatprep.subr.bf16.mxu0 0
        %2837 = vmatpush2.bf16.msra.mxu0 0
        %2838 = vmatprep.subr.bf16.mxu0 0
        %2839 = vmatpush2.bf16.msra.mxu0 0
        %2840 = vmatprep.subr.bf16.mxu0 0
        %2841 = vmatpush2.bf16.msra.mxu0 0
        %2842 = vmatprep.subr.bf16.mxu0 0
        %2843 = vmatpush2.bf16.msra.mxu0 0
        %2844 = vmatprep.mubr.bf16.mxu0 0
        %2845 = vmatmul.mubr.bf16.gmra.mxu0 %v2604
        %v2846 = vpop.f32.mrf.mxu0
        %v2847 = vadd.f32 0.0, %v2846
        %v2848 = vpop.f32.mrf.mxu0
        %v2849 = vadd.f32 0.0, %v2848
        %v2850 = vpop.f32.mrf.mxu0
        %v2851 = vpop.f32.mrf.mxu0
        %2852 = vdwg.mxu0
        %2853 = vmatprep.subr.bf16.mxu0 %v2779
        %2854 = vmatpush1.bf16.msra.mxu0 %v2778
        %2855 = vmatprep.subr.bf16.mxu0 %v2775
        %2856 = vmatpush1.bf16.msra.mxu0 %v2774
        %2857 = vmatprep.subr.bf16.mxu0 %v2771
        %2858 = vmatpush1.bf16.msra.mxu0 %v2770
        %2859 = vmatprep.subr.bf16.mxu0 %v2767
        %2860 = vmatpush1.bf16.msra.mxu0 %v2766
        %2861 = vmatprep.subr.bf16.mxu0 %v2763
        %2862 = vmatpush1.bf16.msra.mxu0 %v2762
        %2863 = vmatprep.subr.bf16.mxu0 %v2759
        %2864 = vmatpush1.bf16.msra.mxu0 %v2758
        %2865 = vmatprep.subr.bf16.mxu0 %v2755
        %2866 = vmatpush1.bf16.msra.mxu0 %v2754
        %2867 = vmatprep.subr.bf16.mxu0 %v2751
        %2868 = vmatpush1.bf16.msra.mxu0 %v2750
        %2869 = vmatprep.subr.bf16.mxu0 0
        %2870 = vmatpush2.bf16.msra.mxu0 0
        %2871 = vmatprep.subr.bf16.mxu0 0
        %2872 = vmatpush2.bf16.msra.mxu0 0
        %2873 = vmatprep.subr.bf16.mxu0 0
        %2874 = vmatpush2.bf16.msra.mxu0 0
        %2875 = vmatprep.subr.bf16.mxu0 0
        %2876 = vmatpush2.bf16.msra.mxu0 0
        %2877 = vmatprep.subr.bf16.mxu0 0
        %2878 = vmatpush2.bf16.msra.mxu0 0
        %2879 = vmatprep.subr.bf16.mxu0 0
        %2880 = vmatpush2.bf16.msra.mxu0 0
        %2881 = vmatprep.subr.bf16.mxu0 0
        %2882 = vmatpush2.bf16.msra.mxu0 0
        %2883 = vmatprep.subr.bf16.mxu0 0
        %2884 = vmatpush2.bf16.msra.mxu0 0
        %2885 = vmatprep.mubr.bf16.mxu0 0
        %2886 = vmatmul.mubr.bf16.gmra.mxu0 %v2604
        %v2887 = vpop.f32.mrf.mxu0
        %v2888 = vadd.f32 0.0, %v2887
        %v2889 = vpop.f32.mrf.mxu0
        %v2890 = vadd.f32 0.0, %v2889
        %v2891 = vpop.f32.mrf.mxu0
        %v2892 = vpop.f32.mrf.mxu0
        %2893 = vdwg.mxu0
        %v2894 = vadd.f32 %v2616, %v2847
        %v2895 = vadd.f32 %v2617, %v2849
        %v2896 = vadd.f32 %v2618, %v2888
        %v2897 = vadd.f32 %v2619, %v2890
        %v2898 = vmul.f32 %v2894, 0.5
        %v2899 = vtanh.pop %v2898
        %v2900 = vmul.f32 %v2899, 0.5
        %v2901 = vadd.f32 %v2900, 0.5
        %v2902 = vmul.f32 %v2895, 0.5
        %v2903 = vtanh.pop %v2902
        %v2904 = vmul.f32 %v2903, 0.5
        %v2905 = vadd.f32 %v2904, 0.5
        %v2906 = vtanh.pop %v2896
        %v2907 = vmul.f32 %v2897, 0.5
        %v2908 = vtanh.pop %v2907
        %v2909 = vmul.f32 %v2908, 0.5
        %v2910 = vadd.f32 %v2909, 0.5
        %v2911 = vmul.f32 %v2905, %v2601
        %v2912 = vmul.f32 %v2901, %v2906
        %v2913 = vadd.f32 %v2911, %v2912
        %v2914 = vtanh.pop %v2913
        %v2915 = vmul.f32 %v2910, %v2914
        %v2916 = vpack.c.bf16 %v2915, %v2915
        %s2917 = smul.addr %s2611, 4
        %s2918 = scalar_lea.vmem %s272, %s2917 [#allocation5]
        %2919 = vst [vmem:[%s2918] sm:$0xf] %v2916
        %s2920 = smul.u32 %s19, 4294967289
        %s2921 = sadd.s32 %s2920, 7
        %s2922 = smul.u32 %s2921, 8
        %s2923 = sshra.s32 %s2922, 3
        %s2924 = sand.u32 %s2922, 7
        %s2925 = smul.u32 %s2923, 4
        %s2926 = smul.addr %s2925, 8
        %s2927 = scalar_lea.vmem [#allocation4], %s2926
        %v2928 = vld [vmem:[%s2927] sm:$0xff]
        %v2929 = vld [vmem:[%s2927 + $0x8] sm:$0xff]
        %v2930 = vld [vmem:[%s2927 + $0x10] sm:$0xff]
        %v2931 = vld [vmem:[%s2927 + $0x18] sm:$0xff]
        %v2932 = vld [vmem:[%s296] sm:$0xff]
        %v2933 = vld [vmem:[%s296 + $0x8] sm:$0xff]
        %v2934 = vld [vmem:[%s296 + $0x10] sm:$0xff]
        %v2935 = vld [vmem:[%s296 + $0x18] sm:$0xff]
        %v2936 = vld [vmem:[%s296 + $0x20] sm:$0xff]
        %v2937 = vld [vmem:[%s296 + $0x28] sm:$0xff]
        %v2938 = vld [vmem:[%s296 + $0x30] sm:$0xff]
        %v2939 = vld [vmem:[%s296 + $0x38] sm:$0xff]
        %v2940 = vld [vmem:[%s296 + $0x40] sm:$0xff]
        %v2941 = vld [vmem:[%s296 + $0x48] sm:$0xff]
        %v2942 = vld [vmem:[%s296 + $0x50] sm:$0xff]
        %v2943 = vld [vmem:[%s296 + $0x58] sm:$0xff]
        %v2944 = vld [vmem:[%s296 + $0x60] sm:$0xff]
        %v2945 = vld [vmem:[%s296 + $0x68] sm:$0xff]
        %v2946 = vld [vmem:[%s296 + $0x70] sm:$0xff]
        %v2947 = vld [vmem:[%s296 + $0x78] sm:$0xff]
        %v2948 = vld [vmem:[%s296 + $0x80] sm:$0xff]
        %v2949 = vld [vmem:[%s296 + $0x88] sm:$0xff]
        %v2950 = vld [vmem:[%s296 + $0x90] sm:$0xff]
        %v2951 = vld [vmem:[%s296 + $0x98] sm:$0xff]
        %v2952 = vld [vmem:[%s296 + $0xa0] sm:$0xff]
        %v2953 = vld [vmem:[%s296 + $0xa8] sm:$0xff]
        %v2954 = vld [vmem:[%s296 + $0xb0] sm:$0xff]
        %v2955 = vld [vmem:[%s296 + $0xb8] sm:$0xff]
        %v2956 = vld [vmem:[%s296 + $0xc0] sm:$0xff]
        %v2957 = vld [vmem:[%s296 + $0xc8] sm:$0xff]
        %v2958 = vld [vmem:[%s296 + $0xd0] sm:$0xff]
        %v2959 = vld [vmem:[%s296 + $0xd8] sm:$0xff]
        %v2960 = vld [vmem:[%s296 + $0xe0] sm:$0xff]
        %v2961 = vld [vmem:[%s296 + $0xe8] sm:$0xff]
        %v2962 = vld [vmem:[%s296 + $0xf0] sm:$0xff]
        %v2963 = vld [vmem:[%s296 + $0xf8] sm:$0xff]
        %v2996 = vunpack.c.l.b16 %v2932
        %v2997 = vunpack.c.h.b16 %v2932
        %v2998 = vunpack.c.l.b16 %v2933
        %v2999 = vunpack.c.h.b16 %v2933
        %v3000 = vunpack.c.l.b16 %v2934
        %v3001 = vunpack.c.h.b16 %v2934
        %v3002 = vunpack.c.l.b16 %v2935
        %v3003 = vunpack.c.h.b16 %v2935
        %v3004 = vunpack.c.l.b16 %v2936
        %v3005 = vunpack.c.h.b16 %v2936
        %v3006 = vunpack.c.l.b16 %v2937
        %v3007 = vunpack.c.h.b16 %v2937
        %v3008 = vunpack.c.l.b16 %v2938
        %v3009 = vunpack.c.h.b16 %v2938
        %v3010 = vunpack.c.l.b16 %v2939
        %v3011 = vunpack.c.h.b16 %v2939
        %v3012 = vunpack.c.l.b16 %v2940
        %v3013 = vunpack.c.h.b16 %v2940
        %v3014 = vunpack.c.l.b16 %v2941
        %v3015 = vunpack.c.h.b16 %v2941
        %v3016 = vunpack.c.l.b16 %v2942
        %v3017 = vunpack.c.h.b16 %v2942
        %v3018 = vunpack.c.l.b16 %v2943
        %v3019 = vunpack.c.h.b16 %v2943
        %v3020 = vunpack.c.l.b16 %v2944
        %v3021 = vunpack.c.h.b16 %v2944
        %v3022 = vunpack.c.l.b16 %v2945
        %v3023 = vunpack.c.h.b16 %v2945
        %v3024 = vunpack.c.l.b16 %v2946
        %v3025 = vunpack.c.h.b16 %v2946
        %v3026 = vunpack.c.l.b16 %v2947
        %v3027 = vunpack.c.h.b16 %v2947
        %v3028 = vunpack.c.l.b16 %v2948
        %v3029 = vunpack.c.h.b16 %v2948
        %v3030 = vunpack.c.l.b16 %v2949
        %v3031 = vunpack.c.h.b16 %v2949
        %v3032 = vunpack.c.l.b16 %v2950
        %v3033 = vunpack.c.h.b16 %v2950
        %v3034 = vunpack.c.l.b16 %v2951
        %v3035 = vunpack.c.h.b16 %v2951
        %v3036 = vunpack.c.l.b16 %v2952
        %v3037 = vunpack.c.h.b16 %v2952
        %v3038 = vunpack.c.l.b16 %v2953
        %v3039 = vunpack.c.h.b16 %v2953
        %v3040 = vunpack.c.l.b16 %v2954
        %v3041 = vunpack.c.h.b16 %v2954
        %v3042 = vunpack.c.l.b16 %v2955
        %v3043 = vunpack.c.h.b16 %v2955
        %v3044 = vunpack.c.l.b16 %v2956
        %v3045 = vunpack.c.h.b16 %v2956
        %v3046 = vunpack.c.l.b16 %v2957
        %v3047 = vunpack.c.h.b16 %v2957
        %v3048 = vunpack.c.l.b16 %v2958
        %v3049 = vunpack.c.h.b16 %v2958
        %v3050 = vunpack.c.l.b16 %v2959
        %v3051 = vunpack.c.h.b16 %v2959
        %v3052 = vunpack.c.l.b16 %v2960
        %v3053 = vunpack.c.h.b16 %v2960
        %v3054 = vunpack.c.l.b16 %v2961
        %v3055 = vunpack.c.h.b16 %v2961
        %v3056 = vunpack.c.l.b16 %v2962
        %v3057 = vunpack.c.h.b16 %v2962
        %v3058 = vunpack.c.l.b16 %v2963
        %v3059 = vunpack.c.h.b16 %v2963
        %v3060 = vpack.c.b16 %v3000, %v2996
        %v3061 = vpack.c.b16 %v3001, %v2997
        %v3062 = vpack.c.b16 %v3002, %v2998
        %v3063 = vpack.c.b16 %v3003, %v2999
        %v3064 = vpack.c.b16 %v3008, %v3004
        %v3065 = vpack.c.b16 %v3009, %v3005
        %v3066 = vpack.c.b16 %v3010, %v3006
        %v3067 = vpack.c.b16 %v3011, %v3007
        %v3068 = vpack.c.b16 %v3016, %v3012
        %v3069 = vpack.c.b16 %v3017, %v3013
        %v3070 = vpack.c.b16 %v3018, %v3014
        %v3071 = vpack.c.b16 %v3019, %v3015
        %v3072 = vpack.c.b16 %v3024, %v3020
        %v3073 = vpack.c.b16 %v3025, %v3021
        %v3074 = vpack.c.b16 %v3026, %v3022
        %v3075 = vpack.c.b16 %v3027, %v3023
        %v3076 = vpack.c.b16 %v3032, %v3028
        %v3077 = vpack.c.b16 %v3033, %v3029
        %v3078 = vpack.c.b16 %v3034, %v3030
        %v3079 = vpack.c.b16 %v3035, %v3031
        %v3080 = vpack.c.b16 %v3040, %v3036
        %v3081 = vpack.c.b16 %v3041, %v3037
        %v3082 = vpack.c.b16 %v3042, %v3038
        %v3083 = vpack.c.b16 %v3043, %v3039
        %v3084 = vpack.c.b16 %v3048, %v3044
        %v3085 = vpack.c.b16 %v3049, %v3045
        %v3086 = vpack.c.b16 %v3050, %v3046
        %v3087 = vpack.c.b16 %v3051, %v3047
        %v3088 = vpack.c.b16 %v3056, %v3052
        %v3089 = vpack.c.b16 %v3057, %v3053
        %v3090 = vpack.c.b16 %v3058, %v3054
        %v3091 = vpack.c.b16 %v3059, %v3055
        %3124 = vmatprep.subr.bf16.mxu0 %v3089
        %3125 = vmatpush1.bf16.msra.mxu0 %v3088
        %3126 = vmatprep.subr.bf16.mxu0 %v3085
        %3127 = vmatpush1.bf16.msra.mxu0 %v3084
        %3128 = vmatprep.subr.bf16.mxu0 %v3081
        %3129 = vmatpush1.bf16.msra.mxu0 %v3080
        %3130 = vmatprep.subr.bf16.mxu0 %v3077
        %3131 = vmatpush1.bf16.msra.mxu0 %v3076
        %3132 = vmatprep.subr.bf16.mxu0 %v3073
        %3133 = vmatpush1.bf16.msra.mxu0 %v3072
        %3134 = vmatprep.subr.bf16.mxu0 %v3069
        %3135 = vmatpush1.bf16.msra.mxu0 %v3068
        %3136 = vmatprep.subr.bf16.mxu0 %v3065
        %3137 = vmatpush1.bf16.msra.mxu0 %v3064
        %3138 = vmatprep.subr.bf16.mxu0 %v3061
        %3139 = vmatpush1.bf16.msra.mxu0 %v3060
        %3140 = vmatprep.subr.bf16.mxu0 0
        %3141 = vmatpush2.bf16.msra.mxu0 0
        %3142 = vmatprep.subr.bf16.mxu0 0
        %3143 = vmatpush2.bf16.msra.mxu0 0
        %3144 = vmatprep.subr.bf16.mxu0 0
        %3145 = vmatpush2.bf16.msra.mxu0 0
        %3146 = vmatprep.subr.bf16.mxu0 0
        %3147 = vmatpush2.bf16.msra.mxu0 0
        %3148 = vmatprep.subr.bf16.mxu0 0
        %3149 = vmatpush2.bf16.msra.mxu0 0
        %3150 = vmatprep.subr.bf16.mxu0 0
        %3151 = vmatpush2.bf16.msra.mxu0 0
        %3152 = vmatprep.subr.bf16.mxu0 0
        %3153 = vmatpush2.bf16.msra.mxu0 0
        %3154 = vmatprep.subr.bf16.mxu0 0
        %3155 = vmatpush2.bf16.msra.mxu0 0
        %3156 = vmatprep.mubr.bf16.mxu0 0
        %3157 = vmatmul.mubr.bf16.gmra.mxu0 %v2916
        %v3158 = vpop.f32.mrf.mxu0
        %v3159 = vadd.f32 0.0, %v3158
        %v3160 = vpop.f32.mrf.mxu0
        %v3161 = vadd.f32 0.0, %v3160
        %v3162 = vpop.f32.mrf.mxu0
        %v3163 = vpop.f32.mrf.mxu0
        %3164 = vdwg.mxu0
        %3165 = vmatprep.subr.bf16.mxu0 %v3091
        %3166 = vmatpush1.bf16.msra.mxu0 %v3090
        %3167 = vmatprep.subr.bf16.mxu0 %v3087
        %3168 = vmatpush1.bf16.msra.mxu0 %v3086
        %3169 = vmatprep.subr.bf16.mxu0 %v3083
        %3170 = vmatpush1.bf16.msra.mxu0 %v3082
        %3171 = vmatprep.subr.bf16.mxu0 %v3079
        %3172 = vmatpush1.bf16.msra.mxu0 %v3078
        %3173 = vmatprep.subr.bf16.mxu0 %v3075
        %3174 = vmatpush1.bf16.msra.mxu0 %v3074
        %3175 = vmatprep.subr.bf16.mxu0 %v3071
        %3176 = vmatpush1.bf16.msra.mxu0 %v3070
        %3177 = vmatprep.subr.bf16.mxu0 %v3067
        %3178 = vmatpush1.bf16.msra.mxu0 %v3066
        %3179 = vmatprep.subr.bf16.mxu0 %v3063
        %3180 = vmatpush1.bf16.msra.mxu0 %v3062
        %3181 = vmatprep.subr.bf16.mxu0 0
        %3182 = vmatpush2.bf16.msra.mxu0 0
        %3183 = vmatprep.subr.bf16.mxu0 0
        %3184 = vmatpush2.bf16.msra.mxu0 0
        %3185 = vmatprep.subr.bf16.mxu0 0
        %3186 = vmatpush2.bf16.msra.mxu0 0
        %3187 = vmatprep.subr.bf16.mxu0 0
        %3188 = vmatpush2.bf16.msra.mxu0 0
        %3189 = vmatprep.subr.bf16.mxu0 0
        %3190 = vmatpush2.bf16.msra.mxu0 0
        %3191 = vmatprep.subr.bf16.mxu0 0
        %3192 = vmatpush2.bf16.msra.mxu0 0
        %3193 = vmatprep.subr.bf16.mxu0 0
        %3194 = vmatpush2.bf16.msra.mxu0 0
        %3195 = vmatprep.subr.bf16.mxu0 0
        %3196 = vmatpush2.bf16.msra.mxu0 0
        %3197 = vmatprep.mubr.bf16.mxu0 0
        %3198 = vmatmul.mubr.bf16.gmra.mxu0 %v2916
        %v3199 = vpop.f32.mrf.mxu0
        %v3200 = vadd.f32 0.0, %v3199
        %v3201 = vpop.f32.mrf.mxu0
        %v3202 = vadd.f32 0.0, %v3201
        %v3203 = vpop.f32.mrf.mxu0
        %v3204 = vpop.f32.mrf.mxu0
        %3205 = vdwg.mxu0
        %v3206 = vadd.f32 %v2928, %v3159
        %v3207 = vadd.f32 %v2929, %v3161
        %v3208 = vadd.f32 %v2930, %v3200
        %v3209 = vadd.f32 %v2931, %v3202
        %v3210 = vmul.f32 %v3206, 0.5
        %v3211 = vtanh.pop %v3210
        %v3212 = vmul.f32 %v3211, 0.5
        %v3213 = vadd.f32 %v3212, 0.5
        %v3214 = vmul.f32 %v3207, 0.5
        %v3215 = vtanh.pop %v3214
        %v3216 = vmul.f32 %v3215, 0.5
        %v3217 = vadd.f32 %v3216, 0.5
        %v3218 = vtanh.pop %v3208
        %v3219 = vmul.f32 %v3209, 0.5
        %v3220 = vtanh.pop %v3219
        %v3221 = vmul.f32 %v3220, 0.5
        %v3222 = vadd.f32 %v3221, 0.5
        %v3223 = vmul.f32 %v3217, %v2913
        %v3224 = vmul.f32 %v3213, %v3218
        %v3225 = vadd.f32 %v3223, %v3224
        %v3226 = vtanh.pop %v3225
        %v3227 = vmul.f32 %v3222, %v3226
        %v3228 = vpack.c.bf16 %v3227, %v3227
        %s3229 = smul.addr %s2923, 4
        %s3230 = scalar_lea.vmem %s272, %s3229 [#allocation5]
        %3231 = vst [vmem:[%s3230] sm:$0xf] %v3228
        %3232 = vst [vmem:[#allocation2] sm:$0xff] %v3227
        %3233 = vst [vmem:[#allocation3] sm:$0xff] %v3225
        %s3234 = sand.u32 %s157, 1
        %s3235 = sand.u32 %s157, 1
        %s3236 = smul.addr %s3235, 32
        %s3237 = scalar_lea.vmem [#allocation5], %s3236
        // Predicated region
        $region41: #{_lambda_.2} parent=35 // pred_check
          %p3238 = pneg %p167
        $region42: #{_lambda_.2} parent=35 // pred_check_branch
          %3240 = sbr.rel (%p3238) target = $region44
        $region43: #{_lambda_.2} parent=35 // pred_region
          %s3241 = smul.u32 %s20, 2
          %s3242 = ssub.s32 0, %s3241
          %s3243 = smul.u32 %s19, %s3242
          %s3244 = sadd.s32 %s20, %s3243
          %s3245 = smul.u32 8, %s3244
          %s3246 = smul.addr %s3245, 2
          %s3247 = sadd.s32 %s19, %s3246
          %s3248 = smul.addr %s3247, 4
          %s3249 = scalar_lea.vmem %s4, %s3248
          // Predicated region
          $region45: #{_lambda_.2} parent=43 // pred_check
            _
          $region46: #{_lambda_.2} parent=43 // pred_check_branch
            %3251 = sbr.rel (0) target = $region48
          $region47: #{_lambda_.2} parent=43 // pred_region
            // Predicated region
            $region49: #{_lambda_.2} parent=47 // pred_check
              _
            $region50: #{_lambda_.2} parent=47 // pred_check_branch
              %3253 = sbr.rel target = $region52
            $region51: #{_lambda_.2} parent=47 // pred_region
              // Predicated region
              $region64: #{_lambda_.2} parent=51 // pred_check
                _
              $region65: #{_lambda_.2} parent=51 // pred_check_branch
                %3283 = sbr.rel (0) target = $region67
              $region66: #{_lambda_.2} parent=51 // pred_region
                loop: start=0, step=1, limit=1
                $region68: #{_lambda_.2} parent=66 // loop_pre_header
                  _
                $region69: #{_lambda_.2} parent=66 // loop_header
                  %s3285 = sphi 0, %s3289
                  %p3286 = scmp.ge.s32.totalorder %s3285, 1
                  %s3290 = sphi %s3237, %s3237
                  %s3291 = sphi %s3249, %s3249
                $region70: #{_lambda_.2} parent=66 // loop_header_branch
                  %3288 = sbr.rel (%p3286) target = $region74
                $region71: #{_lambda_.2} parent=66 // loop_body
                  _
                $region72: #{_lambda_.2} parent=66 // loop_footer
                  %s3289 = sadd.s32 1, %s3285
                $region73: #{_lambda_.2} parent=66 // loop_footer_branch
                  %3284 = sbr.rel target = $region69
                $region74: #{_lambda_.2} parent=66 // loop_exit
                  _
                %s3293 = ssub.s32 16, 1
                loop: start=0, step=1, limit=1
                $region75: #{_lambda_.2} parent=66 // loop_pre_header
                  _
                $region76: #{_lambda_.2} parent=66 // loop_header
                  %s3295 = sphi 0, %s3299
                  %p3296 = scmp.ge.s32.totalorder %s3295, 1
                  %s3300 = sphi %s3237, %s3237
                  %s3301 = sphi %s3249, %s3249
                $region77: #{_lambda_.2} parent=66 // loop_header_branch
                  %3298 = sbr.rel (%p3296) target = $region81
                $region78: #{_lambda_.2} parent=66 // loop_body
                  %v3302 = vld [vmem:[%s3300] sm:%s3293]
                  %3303 = vst [vmem:[%s3301] sm:%s3293] %v3302
                  %v3304 = vld [vmem:[%s3300 + $0x4] sm:%s3293]
                  %3305 = vst [vmem:[%s3301 + $0x8] sm:%s3293] %v3304
                  %v3306 = vld [vmem:[%s3300 + $0x8] sm:%s3293]
                  %3307 = vst [vmem:[%s3301 + $0x10] sm:%s3293] %v3306
                  %v3308 = vld [vmem:[%s3300 + $0xc] sm:%s3293]
                  %3309 = vst [vmem:[%s3301 + $0x18] sm:%s3293] %v3308
                  %v3310 = vld [vmem:[%s3300 + $0x10] sm:%s3293]
                  %3311 = vst [vmem:[%s3301 + $0x20] sm:%s3293] %v3310
                  %v3312 = vld [vmem:[%s3300 + $0x14] sm:%s3293]
                  %3313 = vst [vmem:[%s3301 + $0x28] sm:%s3293] %v3312
                  %v3314 = vld [vmem:[%s3300 + $0x18] sm:%s3293]
                  %3315 = vst [vmem:[%s3301 + $0x30] sm:%s3293] %v3314
                  %v3316 = vld [vmem:[%s3300 + $0x1c] sm:%s3293]
                  %3317 = vst [vmem:[%s3301 + $0x38] sm:%s3293] %v3316
                $region79: #{_lambda_.2} parent=66 // loop_footer
                  %s3299 = sadd.s32 1, %s3295
                $region80: #{_lambda_.2} parent=66 // loop_footer_branch
                  %3294 = sbr.rel target = $region76
                $region81: #{_lambda_.2} parent=66 // loop_exit
                  _
              $region67: #{_lambda_.2} parent=51 // pred_fallthru
                _
            $region52: #{_lambda_.2} parent=47 // pred_fallthru
              _
            // Predicated region
            $region53: #{_lambda_.2} parent=47 // pred_check
              _
            $region54: #{_lambda_.2} parent=47 // pred_check_branch
              %3255 = sbr.rel (0) target = $region56
            $region55: #{_lambda_.2} parent=47 // pred_region
              %s3257 = ssub.s32 16, 1
              loop: start=0, step=1, limit=1
              $region57: #{_lambda_.2} parent=55 // loop_pre_header
                _
              $region58: #{_lambda_.2} parent=55 // loop_header
                %s3259 = sphi 0, %s3263
                %p3260 = scmp.ge.s32.totalorder %s3259, 1
                %s3264 = sphi %s3237, %s3237
                %s3265 = sphi %s3249, %s3249
              $region59: #{_lambda_.2} parent=55 // loop_header_branch
                %3262 = sbr.rel (%p3260) target = $region63
              $region60: #{_lambda_.2} parent=55 // loop_body
                %v3266 = vld [vmem:[%s3264] sm:%s3257]
                %3267 = vst [vmem:[%s3265] sm:%s3257] %v3266
                %v3268 = vld [vmem:[%s3264 + $0x4] sm:%s3257]
                %3269 = vst [vmem:[%s3265 + $0x8] sm:%s3257] %v3268
                %v3270 = vld [vmem:[%s3264 + $0x8] sm:%s3257]
                %3271 = vst [vmem:[%s3265 + $0x10] sm:%s3257] %v3270
                %v3272 = vld [vmem:[%s3264 + $0xc] sm:%s3257]
                %3273 = vst [vmem:[%s3265 + $0x18] sm:%s3257] %v3272
                %v3274 = vld [vmem:[%s3264 + $0x10] sm:%s3257]
                %3275 = vst [vmem:[%s3265 + $0x20] sm:%s3257] %v3274
                %v3276 = vld [vmem:[%s3264 + $0x14] sm:%s3257]
                %3277 = vst [vmem:[%s3265 + $0x28] sm:%s3257] %v3276
                %v3278 = vld [vmem:[%s3264 + $0x18] sm:%s3257]
                %3279 = vst [vmem:[%s3265 + $0x30] sm:%s3257] %v3278
                %v3280 = vld [vmem:[%s3264 + $0x1c] sm:%s3257]
                %3281 = vst [vmem:[%s3265 + $0x38] sm:%s3257] %v3280
              $region61: #{_lambda_.2} parent=55 // loop_footer
                %s3263 = sadd.s32 1, %s3259
              $region62: #{_lambda_.2} parent=55 // loop_footer_branch
                %3258 = sbr.rel target = $region58
              $region63: #{_lambda_.2} parent=55 // loop_exit
                _
            $region56: #{_lambda_.2} parent=47 // pred_fallthru
              _
          $region48: #{_lambda_.2} parent=43 // pred_fallthru
            _
          %3318 = vnop
        $region44: #{_lambda_.2} parent=35 // pred_fallthru
          _
      $region36: #{_lambda_.2} parent=5 // pred_fallthru
        _
      %p3319 = scmp.le.s32.totalorder 2, %s10
      // Predicated region
      $region82: #{_lambda_.2} parent=5 // pred_check
        %p3320 = pneg %p3319
      $region83: #{_lambda_.2} parent=5 // pred_check_branch
        %3322 = sbr.rel (%p3320) target = $region85
      $region84: #{_lambda_.2} parent=5 // pred_region
        %s3323 = ssub.s32 %s10, 2
        // Predicated region
        $region86: #{_lambda_.2} parent=84 // pred_check
          %p3324 = pneg %p173
        $region87: #{_lambda_.2} parent=84 // pred_check_branch
          %3326 = sbr.rel (%p3324) target = $region89
        $region88: #{_lambda_.2} parent=84 // pred_region
          %s3327 = sand.u32 %s158, 1
          %s3328 = sand.u32 %s158, 1
          %s3329 = smul.addr %s3328, 32
          %s3330 = scalar_lea.vmem [#allocation5], %s3329
        $region89: #{_lambda_.2} parent=84 // pred_fallthru
          _
      $region85: #{_lambda_.2} parent=5 // pred_fallthru
        _
    $region6: #{_lambda_.2} parent=1 // loop_footer
      %s14 = sadd.s32 1, %s10
    $region7: #{_lambda_.2} parent=1 // loop_footer_branch
      %9 = sbr.rel target = $region3
    $region8: #{_lambda_.2} parent=1 // loop_exit
      _

// kernel: _lambda_.3
$region0: #{_lambda_.3}
  #allocation0 [shape = 'u32[]', space=smem, size = 0x4, offset = 0x4, fixed_abs, tag = 'smem constant byte address 0x4 - core index']
  #allocation1 [shape = 'u32[144,128]{1,0:T(1,128)}', space=vmem, size = 0x12000, scoped, tag = 'internal scratch']
  #allocation2 [shape = 'f32[8,128]{1,0:T(8,128)}', space=vmem, size = 0x1000, scoped, tag = 'scratch operand']
  #allocation3 [shape = 'f32[8,128]{1,0:T(8,128)}', space=vmem, size = 0x1000, scoped, tag = 'scratch operand']
  #allocation4 [shape = 'f32[64,512]{1,0:T(8,128)}', space=vmem, size = 0x20000, scoped, tag = 'scratch operand']
  %s0 = inlined_call_operand.vmem [shape: bf16[64,256], index: 0, kind: input, shape index: {}]
  %s1 = inlined_call_operand.vmem [shape: bf16[2,256,512], index: 1, kind: input, shape index: {}]
  %s2 = inlined_call_operand.vmem [shape: bf16[2,128,512], index: 2, kind: input, shape index: {}]
  %s3 = inlined_call_operand.vmem [shape: f32[2,1,512], index: 3, kind: input, shape index: {}]
  %s4 = inlined_call_operand.vmem [shape: bf16[64,256], index: 4, kind: output, shape index: {}]
  %s5 = sld [smem:[#allocation0]]
  $region90: #{_lambda_.3} parent=0
    _
  %s7 = ssub.s32 1, %s5
  %s8 = scalar_select 0, %s7, %s5
  $region1: #{_lambda_.3} parent=0
    #allocation5 [shape = 'u8[32768]{0}', space=vmem, size = 0x8000, scoped, tag = 'output window, operand 0']
    loop: start=0, step=1, limit=4
    $region2: #{_lambda_.3} parent=1 // loop_pre_header
      _
    $region3: #{_lambda_.3} parent=1 // loop_header
      %s10 = sphi 0, %s14
      %p11 = scmp.ge.s32.totalorder %s10, 4
      %s17 = sphi 0, %s29
      %s18 = sphi 0, %s25
      %s19 = sphi 0, %s17
      %s20 = sphi 0, %s18
      %s21 = sphi 0, %s19
      %s22 = sphi 0, %s20
      %s40 = sphi 0, %s42
      %s43 = sphi 0, %s40
      %s44 = sphi 0, %s43
      %s60 = sphi 0, %s44
      %s66 = sphi 0, %s68
      %s69 = sphi 0, %s66
      %s70 = sphi 0, %s69
      %s86 = sphi 0, %s70
      %s92 = sphi 0, %s94
      %s95 = sphi 0, %s92
      %s96 = sphi 0, %s95
      %s112 = sphi 0, %s96
      %s118 = sphi 0, %s120
      %s121 = sphi 0, %s118
      %s122 = sphi 0, %s121
      %s138 = sphi 0, %s122
      %s154 = sphi 0, %s156
      %s157 = sphi 0, %s154
      %s158 = sphi 0, %s157
      %s174 = sphi 0, %s158
    $region4: #{_lambda_.3} parent=1 // loop_header_branch
      %13 = sbr.rel (%p11) target = $region8
    $region5: #{_lambda_.3} parent=1 // loop_body
      %s15 = ssub.s32 %s10, 1
      %s16 = ssub.s32 %s10, 2
      %s23 = sadd.s32 1, %s18
      %p24 = scmp.ge.s32.totalorder %s23, 1
      %s25 = scalar_select %p24, 0, %s23
      %s26 = sadd.s32 1, %s17
      %s27 = scalar_select %p24, %s26, %s17
      %p28 = scmp.ge.s32.totalorder %s27, 2
      %s29 = scalar_select %p28, 0, %s27
      %s30 = smul.u32 %s18, 2
      %s31 = ssub.s32 0, %s30
      %s32 = smul.u32 %s17, %s31
      %s33 = sadd.s32 %s18, %s32
      %s34 = smul.u32 %s25, 2
      %s35 = ssub.s32 0, %s34
      %s36 = smul.u32 %s29, %s35
      %s37 = sadd.s32 %s25, %s36
      %s38 = ssub.s32 %s33, %s37
      %p39 = scmp.eq.s32.totalorder %s38, 0
      %s41 = sadd.s32 %s40, 1
      %s42 = scalar_select %p39, %s40, %s41
      %p45 = pneg %p39
      %p46 = scmp.eq.s32.totalorder %s10, 1
      %p47 = por %p45, %p46
      %p48 = scmp.ne.s32.totalorder %s40, %s43
      %p49 = scmp.eq.s32.totalorder %s10, 0
      %p50 = por %p48, %p49
      %p51 = scmp.ne.s32.totalorder %s40, %s43
      %p52 = scmp.eq.s32.totalorder %s15, 1
      %p53 = por %p51, %p52
      %p54 = scmp.ne.s32.totalorder %s43, %s44
      %p55 = scmp.eq.s32.totalorder %s15, 0
      %p56 = por %p54, %p55
      %p57 = scmp.ne.s32.totalorder %s43, %s44
      %p58 = scmp.eq.s32.totalorder %s16, 1
      %p59 = por %p57, %p58
      %p61 = scmp.ne.s32.totalorder %s44, %s60
      %p62 = scmp.eq.s32.totalorder %s16, 0
      %p63 = por %p61, %p62
      %s64 = ssub.s32 %s17, %s29
      %p65 = scmp.eq.s32.totalorder %s64, 0
      %s67 = sadd.s32 %s66, 1
      %s68 = scalar_select %p65, %s66, %s67
      %p71 = pneg %p65
      %p72 = scmp.eq.s32.totalorder %s10, 1
      %p73 = por %p71, %p72
      %p74 = scmp.ne.s32.totalorder %s66, %s69
      %p75 = scmp.eq.s32.totalorder %s10, 0
      %p76 = por %p74, %p75
      %p77 = scmp.ne.s32.totalorder %s66, %s69
      %p78 = scmp.eq.s32.totalorder %s15, 1
      %p79 = por %p77, %p78
      %p80 = scmp.ne.s32.totalorder %s69, %s70
      %p81 = scmp.eq.s32.totalorder %s15, 0
      %p82 = por %p80, %p81
      %p83 = scmp.ne.s32.totalorder %s69, %s70
      %p84 = scmp.eq.s32.totalorder %s16, 1
      %p85 = por %p83, %p84
      %p87 = scmp.ne.s32.totalorder %s70, %s86
      %p88 = scmp.eq.s32.totalorder %s16, 0
      %p89 = por %p87, %p88
      %s90 = ssub.s32 %s17, %s29
      %p91 = scmp.eq.s32.totalorder %s90, 0
      %s93 = sadd.s32 %s92, 1
      %s94 = scalar_select %p91, %s92, %s93
      %p97 = pneg %p91
      %p98 = scmp.eq.s32.totalorder %s10, 1
      %p99 = por %p97, %p98
      %p100 = scmp.ne.s32.totalorder %s92, %s95
      %p101 = scmp.eq.s32.totalorder %s10, 0
      %p102 = por %p100, %p101
      %p103 = scmp.ne.s32.totalorder %s92, %s95
      %p104 = scmp.eq.s32.totalorder %s15, 1
      %p105 = por %p103, %p104
      %p106 = scmp.ne.s32.totalorder %s95, %s96
      %p107 = scmp.eq.s32.totalorder %s15, 0
      %p108 = por %p106, %p107
      %p109 = scmp.ne.s32.totalorder %s95, %s96
      %p110 = scmp.eq.s32.totalorder %s16, 1
      %p111 = por %p109, %p110
      %p113 = scmp.ne.s32.totalorder %s96, %s112
      %p114 = scmp.eq.s32.totalorder %s16, 0
      %p115 = por %p113, %p114
      %s116 = ssub.s32 %s17, %s29
      %p117 = scmp.eq.s32.totalorder %s116, 0
      %s119 = sadd.s32 %s118, 1
      %s120 = scalar_select %p117, %s118, %s119
      %p123 = pneg %p117
      %p124 = scmp.eq.s32.totalorder %s10, 1
      %p125 = por %p123, %p124
      %p126 = scmp.ne.s32.totalorder %s118, %s121
      %p127 = scmp.eq.s32.totalorder %s10, 0
      %p128 = por %p126, %p127
      %p129 = scmp.ne.s32.totalorder %s118, %s121
      %p130 = scmp.eq.s32.totalorder %s15, 1
      %p131 = por %p129, %p130
      %p132 = scmp.ne.s32.totalorder %s121, %s122
      %p133 = scmp.eq.s32.totalorder %s15, 0
      %p134 = por %p132, %p133
      %p135 = scmp.ne.s32.totalorder %s121, %s122
      %p136 = scmp.eq.s32.totalorder %s16, 1
      %p137 = por %p135, %p136
      %p139 = scmp.ne.s32.totalorder %s122, %s138
      %p140 = scmp.eq.s32.totalorder %s16, 0
      %p141 = por %p139, %p140
      %s142 = smul.u32 %s18, 2
      %s143 = ssub.s32 0, %s142
      %s144 = smul.u32 %s17, %s143
      %s145 = sadd.s32 %s18, %s144
      %s146 = smul.u32 %s25, 2
      %s147 = ssub.s32 0, %s146
      %s148 = smul.u32 %s29, %s147
      %s149 = sadd.s32 %s25, %s148
      %s150 = ssub.s32 %s145, %s149
      %s151 = ssub.s32 %s17, %s29
      %s152 = sor.u32 %s150, %s151
      %p153 = scmp.eq.s32.totalorder %s152, 0
      %s155 = sadd.s32 %s154, 1
      %s156 = scalar_select %p153, %s154, %s155
      %p159 = pneg %p153
      %p160 = scmp.eq.s32.totalorder %s10, 1
      %p161 = por %p159, %p160
      %p162 = scmp.ne.s32.totalorder %s154, %s157
      %p163 = scmp.eq.s32.totalorder %s10, 0
      %p164 = por %p162, %p163
      %p165 = scmp.ne.s32.totalorder %s154, %s157
      %p166 = scmp.eq.s32.totalorder %s15, 1
      %p167 = por %p165, %p166
      %p168 = scmp.ne.s32.totalorder %s157, %s158
      %p169 = scmp.eq.s32.totalorder %s15, 0
      %p170 = por %p168, %p169
      %p171 = scmp.ne.s32.totalorder %s157, %s158
      %p172 = scmp.eq.s32.totalorder %s16, 1
      %p173 = por %p171, %p172
      %p175 = scmp.ne.s32.totalorder %s158, %s174
      %p176 = scmp.eq.s32.totalorder %s16, 0
      %p177 = por %p175, %p176
      %p178 = scmp.le.s32.totalorder 1, %s10
      %p179 = scmp.lt.s32.totalorder %s10, 3
      %p180 = pnand %p178, %p179
      %p181 = pneg %p180
      // Predicated region
      $region9: #{_lambda_.3} parent=5 // pred_check
        _
      $region10: #{_lambda_.3} parent=5 // pred_check_branch
        %183 = sbr.rel (%p180) target = $region12
      $region11: #{_lambda_.3} parent=5 // pred_region
        %s184 = ssub.s32 %s10, 1
      $region12: #{_lambda_.3} parent=5 // pred_fallthru
        _
      %p185 = scmp.lt.s32.totalorder %s10, 2
      // Predicated region
      $region13: #{_lambda_.3} parent=5 // pred_check
        %p186 = pneg %p185
      $region14: #{_lambda_.3} parent=5 // pred_check_branch
        %188 = sbr.rel (%p186) target = $region16
      $region15: #{_lambda_.3} parent=5 // pred_region
        // Predicated region
        $region17: #{_lambda_.3} parent=15 // pred_check
          %p189 = pneg %p50
        $region18: #{_lambda_.3} parent=15 // pred_check_branch
          %191 = sbr.rel (%p189) target = $region20
        $region19: #{_lambda_.3} parent=15 // pred_region
          %s192 = smul.u32 %s18, 2
          %s193 = ssub.s32 0, %s192
          %s194 = smul.u32 %s17, %s193
          %s195 = sadd.s32 %s18, %s194
          %s196 = smul.u32 8, %s195
          %p197 = scmp.lt.s32.totalorder %s196, 7
          %s198 = scalar_select %p197, %s196, 7
          %s199 = smul.addr %s198, 2
          %s200 = smul.addr %s199, 4
          %s201 = scalar_lea.vmem %s0, %s200
          %s202 = smul.u32 %s18, 2
          %s203 = ssub.s32 0, %s202
          %s204 = smul.u32 %s17, %s203
          %s205 = sadd.s32 %s18, %s204
          %s206 = smul.u32 8, %s205
        $region20: #{_lambda_.3} parent=15 // pred_fallthru
          _
        // Predicated region
        $region21: #{_lambda_.3} parent=15 // pred_check
          %p207 = pneg %p76
        $region22: #{_lambda_.3} parent=15 // pred_check_branch
          %209 = sbr.rel (%p207) target = $region24
        $region23: #{_lambda_.3} parent=15 // pred_region
          %p210 = scmp.lt.s32.totalorder %s17, 1
          %s211 = scalar_select %p210, %s17, 1
          %s212 = smul.addr %s211, 128
          %s213 = smul.addr %s212, 4
          %s214 = scalar_lea.vmem %s1, %s213
        $region24: #{_lambda_.3} parent=15 // pred_fallthru
          _
        // Predicated region
        $region25: #{_lambda_.3} parent=15 // pred_check
          %p215 = pneg %p102
        $region26: #{_lambda_.3} parent=15 // pred_check_branch
          %217 = sbr.rel (%p215) target = $region28
        $region27: #{_lambda_.3} parent=15 // pred_region
          %p218 = scmp.lt.s32.totalorder %s17, 1
          %s219 = scalar_select %p218, %s17, 1
          %s220 = smul.addr %s219, 64
          %s221 = smul.addr %s220, 4
          %s222 = scalar_lea.vmem %s2, %s221
        $region28: #{_lambda_.3} parent=15 // pred_fallthru
          _
        // Predicated region
        $region29: #{_lambda_.3} parent=15 // pred_check
          %p223 = pneg %p128
        $region30: #{_lambda_.3} parent=15 // pred_check_branch
          %225 = sbr.rel (%p223) target = $region32
        $region31: #{_lambda_.3} parent=15 // pred_region
          %p226 = scmp.lt.s32.totalorder %s17, 1
          %s227 = scalar_select %p226, %s17, 1
          %s228 = smul.addr %s227, 4
          %s229 = scalar_lea.vmem %s3, %s228
        $region32: #{_lambda_.3} parent=15 // pred_fallthru
          _
      $region16: #{_lambda_.3} parent=5 // pred_fallthru
        _
      %p230 = scmp.le.s32.totalorder 1, %s10
      %p231 = scmp.lt.s32.totalorder %s10, 3
      %p232 = pnand %p230, %p231
      %p233 = pneg %p232
      // Predicated region
      $region33: #{_lambda_.3} parent=5 // pred_check
        _
      $region34: #{_lambda_.3} parent=5 // pred_check_branch
        %235 = sbr.rel (%p232) target = $region36
      $region35: #{_lambda_.3} parent=5 // pred_region
        %s236 = ssub.s32 %s10, 1
        %s237 = smul.u32 %s20, 2
        %s238 = ssub.s32 0, %s237
        %s239 = smul.u32 %s19, %s238
        %s240 = sadd.s32 %s20, %s239
        %s241 = smul.u32 8, %s240
        %p242 = scmp.lt.s32.totalorder %s241, 7
        %s243 = scalar_select %p242, %s241, 7
        %s244 = smul.addr %s243, 2
        %s245 = smul.addr %s244, 4
        %s246 = scalar_lea.vmem %s0, %s245
        %p247 = pneg %p56
        %p248 = pneg %p53
        %p249 = scmp.lt.s32.totalorder %s19, 1
        %s250 = scalar_select %p249, %s19, 1
        %s251 = smul.addr %s250, 128
        %s252 = smul.addr %s251, 4
        %s253 = scalar_lea.vmem %s1, %s252
        %p254 = pneg %p82
        %p255 = pneg %p79
        %p256 = scmp.lt.s32.totalorder %s19, 1
        %s257 = scalar_select %p256, %s19, 1
        %s258 = smul.addr %s257, 64
        %s259 = smul.addr %s258, 4
        %s260 = scalar_lea.vmem %s2, %s259
        %p261 = pneg %p108
        %p262 = pneg %p105
        %p263 = scmp.lt.s32.totalorder %s19, 1
        %s264 = scalar_select %p263, %s19, 1
        %s265 = smul.addr %s264, 4
        %s266 = scalar_lea.vmem %s3, %s265
        %p267 = pneg %p134
        %p268 = pneg %p131
        %p269 = pneg %p170
        %p270 = pneg %p167
        %s271 = sand.u32 %s157, 1
        %s272 = sand.u32 %s157, 1
        %s273 = smul.addr %s272, 32
        %s274 = scalar_lea.vmem [#allocation5], %s273
        %s275 = smul.u32 %s20, 2
        %s276 = ssub.s32 0, %s275
        %s277 = smul.u32 %s19, %s276
        %s278 = sadd.s32 %s20, %s277
        %s279 = smul.u32 8, %s278
        %p280 = scmp.lt.s32.totalorder %s279, 7
        %s281 = scalar_select %p280, %s279, 7
        %s282 = smul.addr %s281, 2
        %s283 = smul.addr %s282, 4
        %s284 = scalar_lea.vmem %s0, %s283
        %s285 = smul.u32 %s20, 2
        %s286 = ssub.s32 0, %s285
        %s287 = smul.u32 %s19, %s286
        %s288 = sadd.s32 %s20, %s287
        %s289 = smul.u32 8, %s288
        %p290 = scmp.lt.s32.totalorder %s19, 1
        %s291 = scalar_select %p290, %s19, 1
        %s292 = smul.addr %s291, 128
        %s293 = smul.addr %s292, 4
        %s294 = scalar_lea.vmem %s1, %s293
        %p295 = scmp.lt.s32.totalorder %s19, 1
        %s296 = scalar_select %p295, %s19, 1
        %s297 = smul.addr %s296, 64
        %s298 = smul.addr %s297, 4
        %s299 = scalar_lea.vmem %s2, %s298
        %p300 = scmp.lt.s32.totalorder %s19, 1
        %s301 = scalar_select %p300, %s19, 1
        %s302 = smul.addr %s301, 4
        %s303 = scalar_lea.vmem %s3, %s302
        %s304 = smul.u32 %s20, 2
        %s305 = ssub.s32 0, %s304
        %s306 = smul.u32 %s19, %s305
        %s307 = sadd.s32 %s20, %s306
        %s308 = smul.u32 8, %s307
        %p310 = scmp.eq.s32.totalorder %s20, 0
        // Predicated region
        $region37: #{_lambda_.3} parent=35 // pred_check
          %p311 = pneg %p310
        $region38: #{_lambda_.3} parent=35 // pred_check_branch
          %313 = sbr.rel (%p311) target = $region40
        $region39: #{_lambda_.3} parent=35 // pred_region
          %314 = vst [vmem:[#allocation2] sm:$0xff] 0.0
          %315 = vst [vmem:[#allocation3] sm:$0xff] 0.0
        $region40: #{_lambda_.3} parent=35 // pred_fallthru
          _
        %v316 = vld [vmem:[%s284] sm:$0xff]
        %v317 = vld [vmem:[%s284 + $0x8] sm:$0xff]
        %v318 = vld [vmem:[%s284 + $0x10] sm:$0xff]
        %v319 = vld [vmem:[%s284 + $0x18] sm:$0xff]
        %v320 = vld [vmem:[%s284 + $0x20] sm:$0xff]
        %v321 = vld [vmem:[%s284 + $0x28] sm:$0xff]
        %v322 = vld [vmem:[%s284 + $0x30] sm:$0xff]
        %v323 = vld [vmem:[%s284 + $0x38] sm:$0xff]
        %v324 = vld [vmem:[%s294] sm:$0xff]
        %v325 = vld [vmem:[%s294 + $0x8] sm:$0xff]
        %v326 = vld [vmem:[%s294 + $0x10] sm:$0xff]
        %v327 = vld [vmem:[%s294 + $0x18] sm:$0xff]
        %v328 = vld [vmem:[%s294 + $0x20] sm:$0xff]
        %v329 = vld [vmem:[%s294 + $0x28] sm:$0xff]
        %v330 = vld [vmem:[%s294 + $0x30] sm:$0xff]
        %v331 = vld [vmem:[%s294 + $0x38] sm:$0xff]
        %v332 = vld [vmem:[%s294 + $0x40] sm:$0xff]
        %v333 = vld [vmem:[%s294 + $0x48] sm:$0xff]
        %v334 = vld [vmem:[%s294 + $0x50] sm:$0xff]
        %v335 = vld [vmem:[%s294 + $0x58] sm:$0xff]
        %v336 = vld [vmem:[%s294 + $0x60] sm:$0xff]
        %v337 = vld [vmem:[%s294 + $0x68] sm:$0xff]
        %v338 = vld [vmem:[%s294 + $0x70] sm:$0xff]
        %v339 = vld [vmem:[%s294 + $0x78] sm:$0xff]
        %v340 = vld [vmem:[%s294 + $0x80] sm:$0xff]
        %v341 = vld [vmem:[%s294 + $0x88] sm:$0xff]
        %v342 = vld [vmem:[%s294 + $0x90] sm:$0xff]
        %v343 = vld [vmem:[%s294 + $0x98] sm:$0xff]
        %v344 = vld [vmem:[%s294 + $0xa0] sm:$0xff]
        %v345 = vld [vmem:[%s294 + $0xa8] sm:$0xff]
        %v346 = vld [vmem:[%s294 + $0xb0] sm:$0xff]
        %v347 = vld [vmem:[%s294 + $0xb8] sm:$0xff]
        %v348 = vld [vmem:[%s294 + $0xc0] sm:$0xff]
        %v349 = vld [vmem:[%s294 + $0xc8] sm:$0xff]
        %v350 = vld [vmem:[%s294 + $0xd0] sm:$0xff]
        %v351 = vld [vmem:[%s294 + $0xd8] sm:$0xff]
        %v352 = vld [vmem:[%s294 + $0xe0] sm:$0xff]
        %v353 = vld [vmem:[%s294 + $0xe8] sm:$0xff]
        %v354 = vld [vmem:[%s294 + $0xf0] sm:$0xff]
        %v355 = vld [vmem:[%s294 + $0xf8] sm:$0xff]
        %v356 = vld [vmem:[%s294 + $0x100] sm:$0xff]
        %v357 = vld [vmem:[%s294 + $0x108] sm:$0xff]
        %v358 = vld [vmem:[%s294 + $0x110] sm:$0xff]
        %v359 = vld [vmem:[%s294 + $0x118] sm:$0xff]
        %v360 = vld [vmem:[%s294 + $0x120] sm:$0xff]
        %v361 = vld [vmem:[%s294 + $0x128] sm:$0xff]
        %v362 = vld [vmem:[%s294 + $0x130] sm:$0xff]
        %v363 = vld [vmem:[%s294 + $0x138] sm:$0xff]
        %v364 = vld [vmem:[%s294 + $0x140] sm:$0xff]
        %v365 = vld [vmem:[%s294 + $0x148] sm:$0xff]
        %v366 = vld [vmem:[%s294 + $0x150] sm:$0xff]
        %v367 = vld [vmem:[%s294 + $0x158] sm:$0xff]
        %v368 = vld [vmem:[%s294 + $0x160] sm:$0xff]
        %v369 = vld [vmem:[%s294 + $0x168] sm:$0xff]
        %v370 = vld [vmem:[%s294 + $0x170] sm:$0xff]
        %v371 = vld [vmem:[%s294 + $0x178] sm:$0xff]
        %v372 = vld [vmem:[%s294 + $0x180] sm:$0xff]
        %v373 = vld [vmem:[%s294 + $0x188] sm:$0xff]
        %v374 = vld [vmem:[%s294 + $0x190] sm:$0xff]
        %v375 = vld [vmem:[%s294 + $0x198] sm:$0xff]
        %v376 = vld [vmem:[%s294 + $0x1a0] sm:$0xff]
        %v377 = vld [vmem:[%s294 + $0x1a8] sm:$0xff]
        %v378 = vld [vmem:[%s294 + $0x1b0] sm:$0xff]
        %v379 = vld [vmem:[%s294 + $0x1b8] sm:$0xff]
        %v380 = vld [vmem:[%s294 + $0x1c0] sm:$0xff]
        %v381 = vld [vmem:[%s294 + $0x1c8] sm:$0xff]
        %v382 = vld [vmem:[%s294 + $0x1d0] sm:$0xff]
        %v383 = vld [vmem:[%s294 + $0x1d8] sm:$0xff]
        %v384 = vld [vmem:[%s294 + $0x1e0] sm:$0xff]
        %v385 = vld [vmem:[%s294 + $0x1e8] sm:$0xff]
        %v386 = vld [vmem:[%s294 + $0x1f0] sm:$0xff]
        %v387 = vld [vmem:[%s294 + $0x1f8] sm:$0xff]
        %v388 = vld [vmem:[%s303] sm:$0xf]
        %v390 = vlaneseq
        %v391 = vshrl.u32 %v390, 7
        %v392 = vsub.s32 0, %v391
        %v393 = vrot.slane %v388, %v392
        %v394 = vlaneseq
        %v395 = vshrl.u32 %v394, 7
        %v396 = vsub.s32 1, %v395
        %v397 = vrot.slane %v388, %v396
        %v398 = vlaneseq
        %v399 = vshrl.u32 %v398, 7
        %v400 = vsub.s32 2, %v399
        %v401 = vrot.slane %v388, %v400
        %v402 = vlaneseq
        %v403 = vshrl.u32 %v402, 7
        %v404 = vsub.s32 3, %v403
        %v405 = vrot.slane %v388, %v404
        %v418 = vunpack.c.l.b16 %v316
        %v419 = vunpack.c.h.b16 %v316
        %v420 = vunpack.c.l.b16 %v317
        %v421 = vunpack.c.h.b16 %v317
        %v422 = vunpack.c.l.b16 %v318
        %v423 = vunpack.c.h.b16 %v318
        %v424 = vunpack.c.l.b16 %v319
        %v425 = vunpack.c.h.b16 %v319
        %v426 = vunpack.c.l.b16 %v320
        %v427 = vunpack.c.h.b16 %v320
        %v428 = vunpack.c.l.b16 %v321
        %v429 = vunpack.c.h.b16 %v321
        %v430 = vunpack.c.l.b16 %v322
        %v431 = vunpack.c.h.b16 %v322
        %v432 = vunpack.c.l.b16 %v323
        %v433 = vunpack.c.h.b16 %v323
        %v434 = vpack.c.b16 %v420, %v418
        %v435 = vpack.c.b16 %v421, %v419
        %v436 = vpack.c.b16 %v424, %v422
        %v437 = vpack.c.b16 %v425, %v423
        %v438 = vpack.c.b16 %v428, %v426
        %v439 = vpack.c.b16 %v429, %v427
        %v440 = vpack.c.b16 %v432, %v430
        %v441 = vpack.c.b16 %v433, %v431
        %v514 = vunpack.c.l.b16 %v324
        %v515 = vunpack.c.h.b16 %v324
        %v516 = vunpack.c.l.b16 %v325
        %v517 = vunpack.c.h.b16 %v325
        %v518 = vunpack.c.l.b16 %v326
        %v519 = vunpack.c.h.b16 %v326
        %v520 = vunpack.c.l.b16 %v327
        %v521 = vunpack.c.h.b16 %v327
        %v522 = vunpack.c.l.b16 %v328
        %v523 = vunpack.c.h.b16 %v328
        %v524 = vunpack.c.l.b16 %v329
        %v525 = vunpack.c.h.b16 %v329
        %v526 = vunpack.c.l.b16 %v330
        %v527 = vunpack.c.h.b16 %v330
        %v528 = vunpack.c.l.b16 %v331
        %v529 = vunpack.c.h.b16 %v331
        %v530 = vunpack.c.l.b16 %v332
        %v531 = vunpack.c.h.b16 %v332
        %v532 = vunpack.c.l.b16 %v333
        %v533 = vunpack.c.h.b16 %v333
        %v534 = vunpack.c.l.b16 %v334
        %v535 = vunpack.c.h.b16 %v334
        %v536 = vunpack.c.l.b16 %v335
        %v537 = vunpack.c.h.b16 %v335
        %v538 = vunpack.c.l.b16 %v336
        %v539 = vunpack.c.h.b16 %v336
        %v540 = vunpack.c.l.b16 %v337
        %v541 = vunpack.c.h.b16 %v337
        %v542 = vunpack.c.l.b16 %v338
        %v543 = vunpack.c.h.b16 %v338
        %v544 = vunpack.c.l.b16 %v339
        %v545 = vunpack.c.h.b16 %v339
        %v546 = vunpack.c.l.b16 %v340
        %v547 = vunpack.c.h.b16 %v340
        %v548 = vunpack.c.l.b16 %v341
        %v549 = vunpack.c.h.b16 %v341
        %v550 = vunpack.c.l.b16 %v342
        %v551 = vunpack.c.h.b16 %v342
        %v552 = vunpack.c.l.b16 %v343
        %v553 = vunpack.c.h.b16 %v343
        %v554 = vunpack.c.l.b16 %v344
        %v555 = vunpack.c.h.b16 %v344
        %v556 = vunpack.c.l.b16 %v345
        %v557 = vunpack.c.h.b16 %v345
        %v558 = vunpack.c.l.b16 %v346
        %v559 = vunpack.c.h.b16 %v346
        %v560 = vunpack.c.l.b16 %v347
        %v561 = vunpack.c.h.b16 %v347
        %v562 = vunpack.c.l.b16 %v348
        %v563 = vunpack.c.h.b16 %v348
        %v564 = vunpack.c.l.b16 %v349
        %v565 = vunpack.c.h.b16 %v349
        %v566 = vunpack.c.l.b16 %v350
        %v567 = vunpack.c.h.b16 %v350
        %v568 = vunpack.c.l.b16 %v351
        %v569 = vunpack.c.h.b16 %v351
        %v570 = vunpack.c.l.b16 %v352
        %v571 = vunpack.c.h.b16 %v352
        %v572 = vunpack.c.l.b16 %v353
        %v573 = vunpack.c.h.b16 %v353
        %v574 = vunpack.c.l.b16 %v354
        %v575 = vunpack.c.h.b16 %v354
        %v576 = vunpack.c.l.b16 %v355
        %v577 = vunpack.c.h.b16 %v355
        %v578 = vunpack.c.l.b16 %v356
        %v579 = vunpack.c.h.b16 %v356
        %v580 = vunpack.c.l.b16 %v357
        %v581 = vunpack.c.h.b16 %v357
        %v582 = vunpack.c.l.b16 %v358
        %v583 = vunpack.c.h.b16 %v358
        %v584 = vunpack.c.l.b16 %v359
        %v585 = vunpack.c.h.b16 %v359
        %v586 = vunpack.c.l.b16 %v360
        %v587 = vunpack.c.h.b16 %v360
        %v588 = vunpack.c.l.b16 %v361
        %v589 = vunpack.c.h.b16 %v361
        %v590 = vunpack.c.l.b16 %v362
        %v591 = vunpack.c.h.b16 %v362
        %v592 = vunpack.c.l.b16 %v363
        %v593 = vunpack.c.h.b16 %v363
        %v594 = vunpack.c.l.b16 %v364
        %v595 = vunpack.c.h.b16 %v364
        %v596 = vunpack.c.l.b16 %v365
        %v597 = vunpack.c.h.b16 %v365
        %v598 = vunpack.c.l.b16 %v366
        %v599 = vunpack.c.h.b16 %v366
        %v600 = vunpack.c.l.b16 %v367
        %v601 = vunpack.c.h.b16 %v367
        %v602 = vunpack.c.l.b16 %v368
        %v603 = vunpack.c.h.b16 %v368
        %v604 = vunpack.c.l.b16 %v369
        %v605 = vunpack.c.h.b16 %v369
        %v606 = vunpack.c.l.b16 %v370
        %v607 = vunpack.c.h.b16 %v370
        %v608 = vunpack.c.l.b16 %v371
        %v609 = vunpack.c.h.b16 %v371
        %v610 = vunpack.c.l.b16 %v372
        %v611 = vunpack.c.h.b16 %v372
        %v612 = vunpack.c.l.b16 %v373
        %v613 = vunpack.c.h.b16 %v373
        %v614 = vunpack.c.l.b16 %v374
        %v615 = vunpack.c.h.b16 %v374
        %v616 = vunpack.c.l.b16 %v375
        %v617 = vunpack.c.h.b16 %v375
        %v618 = vunpack.c.l.b16 %v376
        %v619 = vunpack.c.h.b16 %v376
        %v620 = vunpack.c.l.b16 %v377
        %v621 = vunpack.c.h.b16 %v377
        %v622 = vunpack.c.l.b16 %v378
        %v623 = vunpack.c.h.b16 %v378
        %v624 = vunpack.c.l.b16 %v379
        %v625 = vunpack.c.h.b16 %v379
        %v626 = vunpack.c.l.b16 %v380
        %v627 = vunpack.c.h.b16 %v380
        %v628 = vunpack.c.l.b16 %v381
        %v629 = vunpack.c.h.b16 %v381
        %v630 = vunpack.c.l.b16 %v382
        %v631 = vunpack.c.h.b16 %v382
        %v632 = vunpack.c.l.b16 %v383
        %v633 = vunpack.c.h.b16 %v383
        %v634 = vunpack.c.l.b16 %v384
        %v635 = vunpack.c.h.b16 %v384
        %v636 = vunpack.c.l.b16 %v385
        %v637 = vunpack.c.h.b16 %v385
        %v638 = vunpack.c.l.b16 %v386
        %v639 = vunpack.c.h.b16 %v386
        %v640 = vunpack.c.l.b16 %v387
        %v641 = vunpack.c.h.b16 %v387
        %v642 = vpack.c.b16 %v518, %v514
        %v643 = vpack.c.b16 %v519, %v515
        %v644 = vpack.c.b16 %v520, %v516
        %v645 = vpack.c.b16 %v521, %v517
        %v646 = vpack.c.b16 %v526, %v522
        %v647 = vpack.c.b16 %v527, %v523
        %v648 = vpack.c.b16 %v528, %v524
        %v649 = vpack.c.b16 %v529, %v525
        %v650 = vpack.c.b16 %v534, %v530
        %v651 = vpack.c.b16 %v535, %v531
        %v652 = vpack.c.b16 %v536, %v532
        %v653 = vpack.c.b16 %v537, %v533
        %v654 = vpack.c.b16 %v542, %v538
        %v655 = vpack.c.b16 %v543, %v539
        %v656 = vpack.c.b16 %v544, %v540
        %v657 = vpack.c.b16 %v545, %v541
        %v658 = vpack.c.b16 %v550, %v546
        %v659 = vpack.c.b16 %v551, %v547
        %v660 = vpack.c.b16 %v552, %v548
        %v661 = vpack.c.b16 %v553, %v549
        %v662 = vpack.c.b16 %v558, %v554
        %v663 = vpack.c.b16 %v559, %v555
        %v664 = vpack.c.b16 %v560, %v556
        %v665 = vpack.c.b16 %v561, %v557
        %v666 = vpack.c.b16 %v566, %v562
        %v667 = vpack.c.b16 %v567, %v563
        %v668 = vpack.c.b16 %v568, %v564
        %v669 = vpack.c.b16 %v569, %v565
        %v670 = vpack.c.b16 %v574, %v570
        %v671 = vpack.c.b16 %v575, %v571
        %v672 = vpack.c.b16 %v576, %v572
        %v673 = vpack.c.b16 %v577, %v573
        %v674 = vpack.c.b16 %v582, %v578
        %v675 = vpack.c.b16 %v583, %v579
        %v676 = vpack.c.b16 %v584, %v580
        %v677 = vpack.c.b16 %v585, %v581
        %v678 = vpack.c.b16 %v590, %v586
        %v679 = vpack.c.b16 %v591, %v587
        %v680 = vpack.c.b16 %v592, %v588
        %v681 = vpack.c.b16 %v593, %v589
        %v682 = vpack.c.b16 %v598, %v594
        %v683 = vpack.c.b16 %v599, %v595
        %v684 = vpack.c.b16 %v600, %v596
        %v685 = vpack.c.b16 %v601, %v597
        %v686 = vpack.c.b16 %v606, %v602
        %v687 = vpack.c.b16 %v607, %v603
        %v688 = vpack.c.b16 %v608, %v604
        %v689 = vpack.c.b16 %v609, %v605
        %v690 = vpack.c.b16 %v614, %v610
        %v691 = vpack.c.b16 %v615, %v611
        %v692 = vpack.c.b16 %v616, %v612
        %v693 = vpack.c.b16 %v617, %v613
        %v694 = vpack.c.b16 %v622, %v618
        %v695 = vpack.c.b16 %v623, %v619
        %v696 = vpack.c.b16 %v624, %v620
        %v697 = vpack.c.b16 %v625, %v621
        %v698 = vpack.c.b16 %v630, %v626
        %v699 = vpack.c.b16 %v631, %v627
        %v700 = vpack.c.b16 %v632, %v628
        %v701 = vpack.c.b16 %v633, %v629
        %v702 = vpack.c.b16 %v638, %v634
        %v703 = vpack.c.b16 %v639, %v635
        %v704 = vpack.c.b16 %v640, %v636
        %v705 = vpack.c.b16 %v641, %v637
        %770 = vmatprep.subr.bf16.mxu0 %v671
        %771 = vmatpush1.bf16.msra.mxu0 %v670
        %772 = vmatprep.subr.bf16.mxu0 %v667
        %773 = vmatpush1.bf16.msra.mxu0 %v666
        %774 = vmatprep.subr.bf16.mxu0 %v663
        %775 = vmatpush1.bf16.msra.mxu0 %v662
        %776 = vmatprep.subr.bf16.mxu0 %v659
        %777 = vmatpush1.bf16.msra.mxu0 %v658
        %778 = vmatprep.subr.bf16.mxu0 %v655
        %779 = vmatpush1.bf16.msra.mxu0 %v654
        %780 = vmatprep.subr.bf16.mxu0 %v651
        %781 = vmatpush1.bf16.msra.mxu0 %v650
        %782 = vmatprep.subr.bf16.mxu0 %v647
        %783 = vmatpush1.bf16.msra.mxu0 %v646
        %784 = vmatprep.subr.bf16.mxu0 %v643
        %785 = vmatpush1.bf16.msra.mxu0 %v642
        %786 = vmatprep.subr.bf16.mxu0 %v703
        %787 = vmatpush2.bf16.msra.mxu0 %v702
        %788 = vmatprep.subr.bf16.mxu0 %v699
        %789 = vmatpush2.bf16.msra.mxu0 %v698
        %790 = vmatprep.subr.bf16.mxu0 %v695
        %791 = vmatpush2.bf16.msra.mxu0 %v694
        %792 = vmatprep.subr.bf16.mxu0 %v691
        %793 = vmatpush2.bf16.msra.mxu0 %v690
        %794 = vmatprep.subr.bf16.mxu0 %v687
        %795 = vmatpush2.bf16.msra.mxu0 %v686
        %796 = vmatprep.subr.bf16.mxu0 %v683
        %797 = vmatpush2.bf16.msra.mxu0 %v682
        %798 = vmatprep.subr.bf16.mxu0 %v679
        %799 = vmatpush2.bf16.msra.mxu0 %v678
        %800 = vmatprep.subr.bf16.mxu0 %v675
        %801 = vmatpush2.bf16.msra.mxu0 %v674
        %802 = vmatprep.mubr.bf16.mxu0 %v435
        %803 = vmatmul.mubr.bf16.gmra.mxu0 %v434
        %v804 = vpop.f32.mrf.mxu0
        %v805 = vadd.f32 %v393, %v804
        %v806 = vpop.f32.mrf.mxu0
        %v807 = vadd.f32 %v397, %v806
        %v808 = vpop.f32.mrf.mxu0
        %v809 = vadd.f32 %v393, %v808
        %v810 = vpop.f32.mrf.mxu0
        %v811 = vadd.f32 %v397, %v810
        %812 = vmatprep.mubr.bf16.mxu0 %v437
        %813 = vmatmul.mubr.bf16.gmra.mxu0 %v436
        %v814 = vpop.f32.mrf.mxu0
        %v815 = vadd.f32 %v393, %v814
        %v816 = vpop.f32.mrf.mxu0
        %v817 = vadd.f32 %v397, %v816
        %v818 = vpop.f32.mrf.mxu0
        %v819 = vadd.f32 %v393, %v818
        %v820 = vpop.f32.mrf.mxu0
        %v821 = vadd.f32 %v397, %v820
        %822 = vmatprep.mubr.bf16.mxu0 %v439
        %823 = vmatmul.mubr.bf16.gmra.mxu0 %v438
        %v824 = vpop.f32.mrf.mxu0
        %v825 = vadd.f32 %v393, %v824
        %v826 = vpop.f32.mrf.mxu0
        %v827 = vadd.f32 %v397, %v826
        %v828 = vpop.f32.mrf.mxu0
        %v829 = vadd.f32 %v393, %v828
        %v830 = vpop.f32.mrf.mxu0
        %v831 = vadd.f32 %v397, %v830
        %832 = vmatprep.mubr.bf16.mxu0 %v441
        %833 = vmatmul.mubr.bf16.gmra.mxu0 %v440
        %v834 = vpop.f32.mrf.mxu0
        %v835 = vadd.f32 %v393, %v834
        %v836 = vpop.f32.mrf.mxu0
        %v837 = vadd.f32 %v397, %v836
        %v838 = vpop.f32.mrf.mxu0
        %v839 = vadd.f32 %v393, %v838
        %v840 = vpop.f32.mrf.mxu0
        %v841 = vadd.f32 %v397, %v840
        %842 = vdwg.mxu0
        %843 = vmatprep.subr.bf16.mxu0 %v673
        %844 = vmatpush1.bf16.msra.mxu0 %v672
        %845 = vmatprep.subr.bf16.mxu0 %v669
        %846 = vmatpush1.bf16.msra.mxu0 %v668
        %847 = vmatprep.subr.bf16.mxu0 %v665
        %848 = vmatpush1.bf16.msra.mxu0 %v664
        %849 = vmatprep.subr.bf16.mxu0 %v661
        %850 = vmatpush1.bf16.msra.mxu0 %v660
        %851 = vmatprep.subr.bf16.mxu0 %v657
        %852 = vmatpush1.bf16.msra.mxu0 %v656
        %853 = vmatprep.subr.bf16.mxu0 %v653
        %854 = vmatpush1.bf16.msra.mxu0 %v652
        %855 = vmatprep.subr.bf16.mxu0 %v649
        %856 = vmatpush1.bf16.msra.mxu0 %v648
        %857 = vmatprep.subr.bf16.mxu0 %v645
        %858 = vmatpush1.bf16.msra.mxu0 %v644
        %859 = vmatprep.subr.bf16.mxu0 %v705
        %860 = vmatpush2.bf16.msra.mxu0 %v704
        %861 = vmatprep.subr.bf16.mxu0 %v701
        %862 = vmatpush2.bf16.msra.mxu0 %v700
        %863 = vmatprep.subr.bf16.mxu0 %v697
        %864 = vmatpush2.bf16.msra.mxu0 %v696
        %865 = vmatprep.subr.bf16.mxu0 %v693
        %866 = vmatpush2.bf16.msra.mxu0 %v692
        %867 = vmatprep.subr.bf16.mxu0 %v689
        %868 = vmatpush2.bf16.msra.mxu0 %v688
        %869 = vmatprep.subr.bf16.mxu0 %v685
        %870 = vmatpush2.bf16.msra.mxu0 %v684
        %871 = vmatprep.subr.bf16.mxu0 %v681
        %872 = vmatpush2.bf16.msra.mxu0 %v680
        %873 = vmatprep.subr.bf16.mxu0 %v677
        %874 = vmatpush2.bf16.msra.mxu0 %v676
        %875 = vmatprep.mubr.bf16.mxu0 %v435
        %876 = vmatmul.mubr.bf16.gmra.mxu0 %v434
        %v877 = vpop.f32.mrf.mxu0
        %v878 = vadd.f32 %v401, %v877
        %v879 = vpop.f32.mrf.mxu0
        %v880 = vadd.f32 %v405, %v879
        %v881 = vpop.f32.mrf.mxu0
        %v882 = vadd.f32 %v401, %v881
        %v883 = vpop.f32.mrf.mxu0
        %v884 = vadd.f32 %v405, %v883
        %885 = vmatprep.mubr.bf16.mxu0 %v437
        %886 = vmatmul.mubr.bf16.gmra.mxu0 %v436
        %v887 = vpop.f32.mrf.mxu0
        %v888 = vadd.f32 %v401, %v887
        %v889 = vpop.f32.mrf.mxu0
        %v890 = vadd.f32 %v405, %v889
        %v891 = vpop.f32.mrf.mxu0
        %v892 = vadd.f32 %v401, %v891
        %v893 = vpop.f32.mrf.mxu0
        %v894 = vadd.f32 %v405, %v893
        %895 = vmatprep.mubr.bf16.mxu0 %v439
        %896 = vmatmul.mubr.bf16.gmra.mxu0 %v438
        %v897 = vpop.f32.mrf.mxu0
        %v898 = vadd.f32 %v401, %v897
        %v899 = vpop.f32.mrf.mxu0
        %v900 = vadd.f32 %v405, %v899
        %v901 = vpop.f32.mrf.mxu0
        %v902 = vadd.f32 %v401, %v901
        %v903 = vpop.f32.mrf.mxu0
        %v904 = vadd.f32 %v405, %v903
        %905 = vmatprep.mubr.bf16.mxu0 %v441
        %906 = vmatmul.mubr.bf16.gmra.mxu0 %v440
        %v907 = vpop.f32.mrf.mxu0
        %v908 = vadd.f32 %v401, %v907
        %v909 = vpop.f32.mrf.mxu0
        %v910 = vadd.f32 %v405, %v909
        %v911 = vpop.f32.mrf.mxu0
        %v912 = vadd.f32 %v401, %v911
        %v913 = vpop.f32.mrf.mxu0
        %v914 = vadd.f32 %v405, %v913
        %915 = vdwg.mxu0
        %916 = vst [vmem:[#allocation4] sm:$0xff] %v805
        %917 = vst [vmem:[#allocation4 + $0x8] sm:$0xff] %v807
        %918 = vst [vmem:[#allocation4 + $0x10] sm:$0xff] %v878
        %919 = vst [vmem:[#allocation4 + $0x18] sm:$0xff] %v880
        %920 = vst [vmem:[#allocation4 + $0x20] sm:$0xff] %v809
        %921 = vst [vmem:[#allocation4 + $0x28] sm:$0xff] %v811
        %922 = vst [vmem:[#allocation4 + $0x30] sm:$0xff] %v882
        %923 = vst [vmem:[#allocation4 + $0x38] sm:$0xff] %v884
        %924 = vst [vmem:[#allocation4 + $0x40] sm:$0xff] %v815
        %925 = vst [vmem:[#allocation4 + $0x48] sm:$0xff] %v817
        %926 = vst [vmem:[#allocation4 + $0x50] sm:$0xff] %v888
        %927 = vst [vmem:[#allocation4 + $0x58] sm:$0xff] %v890
        %928 = vst [vmem:[#allocation4 + $0x60] sm:$0xff] %v819
        %929 = vst [vmem:[#allocation4 + $0x68] sm:$0xff] %v821
        %930 = vst [vmem:[#allocation4 + $0x70] sm:$0xff] %v892
        %931 = vst [vmem:[#allocation4 + $0x78] sm:$0xff] %v894
        %932 = vst [vmem:[#allocation4 + $0x80] sm:$0xff] %v825
        %933 = vst [vmem:[#allocation4 + $0x88] sm:$0xff] %v827
        %934 = vst [vmem:[#allocation4 + $0x90] sm:$0xff] %v898
        %935 = vst [vmem:[#allocation4 + $0x98] sm:$0xff] %v900
        %936 = vst [vmem:[#allocation4 + $0xa0] sm:$0xff] %v829
        %937 = vst [vmem:[#allocation4 + $0xa8] sm:$0xff] %v831
        %938 = vst [vmem:[#allocation4 + $0xb0] sm:$0xff] %v902
        %939 = vst [vmem:[#allocation4 + $0xb8] sm:$0xff] %v904
        %940 = vst [vmem:[#allocation4 + $0xc0] sm:$0xff] %v835
        %941 = vst [vmem:[#allocation4 + $0xc8] sm:$0xff] %v837
        %942 = vst [vmem:[#allocation4 + $0xd0] sm:$0xff] %v908
        %943 = vst [vmem:[#allocation4 + $0xd8] sm:$0xff] %v910
        %944 = vst [vmem:[#allocation4 + $0xe0] sm:$0xff] %v839
        %945 = vst [vmem:[#allocation4 + $0xe8] sm:$0xff] %v841
        %946 = vst [vmem:[#allocation4 + $0xf0] sm:$0xff] %v912
        %947 = vst [vmem:[#allocation4 + $0xf8] sm:$0xff] %v914
        %v948 = vld [vmem:[#allocation2] sm:$0xff]
        %v949 = vld [vmem:[#allocation3] sm:$0xff]
        %s950 = smul.u32 %s19, 56
        %s951 = sshra.s32 %s950, 3
        %s952 = sand.u32 %s950, 7
        %s953 = smul.u32 %s951, 4
        %s954 = smul.addr %s953, 8
        %s955 = scalar_lea.vmem [#allocation4], %s954
        %v956 = vld [vmem:[%s955] sm:$0xff]
        %v957 = vld [vmem:[%s955 + $0x8] sm:$0xff]
        %v958 = vld [vmem:[%s955 + $0x10] sm:$0xff]
        %v959 = vld [vmem:[%s955 + $0x18] sm:$0xff]
        %v960 = vpack.c.bf16 %v948, %v948
        %v961 = vld [vmem:[%s299] sm:$0xff]
        %v962 = vld [vmem:[%s299 + $0x8] sm:$0xff]
        %v963 = vld [vmem:[%s299 + $0x10] sm:$0xff]
        %v964 = vld [vmem:[%s299 + $0x18] sm:$0xff]
        %v965 = vld [vmem:[%s299 + $0x20] sm:$0xff]
        %v966 = vld [vmem:[%s299 + $0x28] sm:$0xff]
        %v967 = vld [vmem:[%s299 + $0x30] sm:$0xff]
        %v968 = vld [vmem:[%s299 + $0x38] sm:$0xff]
        %v969 = vld [vmem:[%s299 + $0x40] sm:$0xff]
        %v970 = vld [vmem:[%s299 + $0x48] sm:$0xff]
        %v971 = vld [vmem:[%s299 + $0x50] sm:$0xff]
        %v972 = vld [vmem:[%s299 + $0x58] sm:$0xff]
        %v973 = vld [vmem:[%s299 + $0x60] sm:$0xff]
        %v974 = vld [vmem:[%s299 + $0x68] sm:$0xff]
        %v975 = vld [vmem:[%s299 + $0x70] sm:$0xff]
        %v976 = vld [vmem:[%s299 + $0x78] sm:$0xff]
        %v977 = vld [vmem:[%s299 + $0x80] sm:$0xff]
        %v978 = vld [vmem:[%s299 + $0x88] sm:$0xff]
        %v979 = vld [vmem:[%s299 + $0x90] sm:$0xff]
        %v980 = vld [vmem:[%s299 + $0x98] sm:$0xff]
        %v981 = vld [vmem:[%s299 + $0xa0] sm:$0xff]
        %v982 = vld [vmem:[%s299 + $0xa8] sm:$0xff]
        %v983 = vld [vmem:[%s299 + $0xb0] sm:$0xff]
        %v984 = vld [vmem:[%s299 + $0xb8] sm:$0xff]
        %v985 = vld [vmem:[%s299 + $0xc0] sm:$0xff]
        %v986 = vld [vmem:[%s299 + $0xc8] sm:$0xff]
        %v987 = vld [vmem:[%s299 + $0xd0] sm:$0xff]
        %v988 = vld [vmem:[%s299 + $0xd8] sm:$0xff]
        %v989 = vld [vmem:[%s299 + $0xe0] sm:$0xff]
        %v990 = vld [vmem:[%s299 + $0xe8] sm:$0xff]
        %v991 = vld [vmem:[%s299 + $0xf0] sm:$0xff]
        %v992 = vld [vmem:[%s299 + $0xf8] sm:$0xff]
        %v1025 = vunpack.c.l.b16 %v961
        %v1026 = vunpack.c.h.b16 %v961
        %v1027 = vunpack.c.l.b16 %v962
        %v1028 = vunpack.c.h.b16 %v962
        %v1029 = vunpack.c.l.b16 %v963
        %v1030 = vunpack.c.h.b16 %v963
        %v1031 = vunpack.c.l.b16 %v964
        %v1032 = vunpack.c.h.b16 %v964
        %v1033 = vunpack.c.l.b16 %v965
        %v1034 = vunpack.c.h.b16 %v965
        %v1035 = vunpack.c.l.b16 %v966
        %v1036 = vunpack.c.h.b16 %v966
        %v1037 = vunpack.c.l.b16 %v967
        %v1038 = vunpack.c.h.b16 %v967
        %v1039 = vunpack.c.l.b16 %v968
        %v1040 = vunpack.c.h.b16 %v968
        %v1041 = vunpack.c.l.b16 %v969
        %v1042 = vunpack.c.h.b16 %v969
        %v1043 = vunpack.c.l.b16 %v970
        %v1044 = vunpack.c.h.b16 %v970
        %v1045 = vunpack.c.l.b16 %v971
        %v1046 = vunpack.c.h.b16 %v971
        %v1047 = vunpack.c.l.b16 %v972
        %v1048 = vunpack.c.h.b16 %v972
        %v1049 = vunpack.c.l.b16 %v973
        %v1050 = vunpack.c.h.b16 %v973
        %v1051 = vunpack.c.l.b16 %v974
        %v1052 = vunpack.c.h.b16 %v974
        %v1053 = vunpack.c.l.b16 %v975
        %v1054 = vunpack.c.h.b16 %v975
        %v1055 = vunpack.c.l.b16 %v976
        %v1056 = vunpack.c.h.b16 %v976
        %v1057 = vunpack.c.l.b16 %v977
        %v1058 = vunpack.c.h.b16 %v977
        %v1059 = vunpack.c.l.b16 %v978
        %v1060 = vunpack.c.h.b16 %v978
        %v1061 = vunpack.c.l.b16 %v979
        %v1062 = vunpack.c.h.b16 %v979
        %v1063 = vunpack.c.l.b16 %v980
        %v1064 = vunpack.c.h.b16 %v980
        %v1065 = vunpack.c.l.b16 %v981
        %v1066 = vunpack.c.h.b16 %v981
        %v1067 = vunpack.c.l.b16 %v982
        %v1068 = vunpack.c.h.b16 %v982
        %v1069 = vunpack.c.l.b16 %v983
        %v1070 = vunpack.c.h.b16 %v983
        %v1071 = vunpack.c.l.b16 %v984
        %v1072 = vunpack.c.h.b16 %v984
        %v1073 = vunpack.c.l.b16 %v985
        %v1074 = vunpack.c.h.b16 %v985
        %v1075 = vunpack.c.l.b16 %v986
        %v1076 = vunpack.c.h.b16 %v986
        %v1077 = vunpack.c.l.b16 %v987
        %v1078 = vunpack.c.h.b16 %v987
        %v1079 = vunpack.c.l.b16 %v988
        %v1080 = vunpack.c.h.b16 %v988
        %v1081 = vunpack.c.l.b16 %v989
        %v1082 = vunpack.c.h.b16 %v989
        %v1083 = vunpack.c.l.b16 %v990
        %v1084 = vunpack.c.h.b16 %v990
        %v1085 = vunpack.c.l.b16 %v991
        %v1086 = vunpack.c.h.b16 %v991
        %v1087 = vunpack.c.l.b16 %v992
        %v1088 = vunpack.c.h.b16 %v992
        %v1089 = vpack.c.b16 %v1029, %v1025
        %v1090 = vpack.c.b16 %v1030, %v1026
        %v1091 = vpack.c.b16 %v1031, %v1027
        %v1092 = vpack.c.b16 %v1032, %v1028
        %v1093 = vpack.c.b16 %v1037, %v1033
        %v1094 = vpack.c.b16 %v1038, %v1034
        %v1095 = vpack.c.b16 %v1039, %v1035
        %v1096 = vpack.c.b16 %v1040, %v1036
        %v1097 = vpack.c.b16 %v1045, %v1041
        %v1098 = vpack.c.b16 %v1046, %v1042
        %v1099 = vpack.c.b16 %v1047, %v1043
        %v1100 = vpack.c.b16 %v1048, %v1044
        %v1101 = vpack.c.b16 %v1053, %v1049
        %v1102 = vpack.c.b16 %v1054, %v1050
        %v1103 = vpack.c.b16 %v1055, %v1051
        %v1104 = vpack.c.b16 %v1056, %v1052
        %v1105 = vpack.c.b16 %v1061, %v1057
        %v1106 = vpack.c.b16 %v1062, %v1058
        %v1107 = vpack.c.b16 %v1063, %v1059
        %v1108 = vpack.c.b16 %v1064, %v1060
        %v1109 = vpack.c.b16 %v1069, %v1065
        %v1110 = vpack.c.b16 %v1070, %v1066
        %v1111 = vpack.c.b16 %v1071, %v1067
        %v1112 = vpack.c.b16 %v1072, %v1068
        %v1113 = vpack.c.b16 %v1077, %v1073
        %v1114 = vpack.c.b16 %v1078, %v1074
        %v1115 = vpack.c.b16 %v1079, %v1075
        %v1116 = vpack.c.b16 %v1080, %v1076
        %v1117 = vpack.c.b16 %v1085, %v1081
        %v1118 = vpack.c.b16 %v1086, %v1082
        %v1119 = vpack.c.b16 %v1087, %v1083
        %v1120 = vpack.c.b16 %v1088, %v1084
        %1153 = vmatprep.subr.bf16.mxu0 %v1118
        %1154 = vmatpush1.bf16.msra.mxu0 %v1117
        %1155 = vmatprep.subr.bf16.mxu0 %v1114
        %1156 = vmatpush1.bf16.msra.mxu0 %v1113
        %1157 = vmatprep.subr.bf16.mxu0 %v1110
        %1158 = vmatpush1.bf16.msra.mxu0 %v1109
        %1159 = vmatprep.subr.bf16.mxu0 %v1106
        %1160 = vmatpush1.bf16.msra.mxu0 %v1105
        %1161 = vmatprep.subr.bf16.mxu0 %v1102
        %1162 = vmatpush1.bf16.msra.mxu0 %v1101
        %1163 = vmatprep.subr.bf16.mxu0 %v1098
        %1164 = vmatpush1.bf16.msra.mxu0 %v1097
        %1165 = vmatprep.subr.bf16.mxu0 %v1094
        %1166 = vmatpush1.bf16.msra.mxu0 %v1093
        %1167 = vmatprep.subr.bf16.mxu0 %v1090
        %1168 = vmatpush1.bf16.msra.mxu0 %v1089
        %1169 = vmatprep.subr.bf16.mxu0 0
        %1170 = vmatpush2.bf16.msra.mxu0 0
        %1171 = vmatprep.subr.bf16.mxu0 0
        %1172 = vmatpush2.bf16.msra.mxu0 0
        %1173 = vmatprep.subr.bf16.mxu0 0
        %1174 = vmatpush2.bf16.msra.mxu0 0
        %1175 = vmatprep.subr.bf16.mxu0 0
        %1176 = vmatpush2.bf16.msra.mxu0 0
        %1177 = vmatprep.subr.bf16.mxu0 0
        %1178 = vmatpush2.bf16.msra.mxu0 0
        %1179 = vmatprep.subr.bf16.mxu0 0
        %1180 = vmatpush2.bf16.msra.mxu0 0
        %1181 = vmatprep.subr.bf16.mxu0 0
        %1182 = vmatpush2.bf16.msra.mxu0 0
        %1183 = vmatprep.subr.bf16.mxu0 0
        %1184 = vmatpush2.bf16.msra.mxu0 0
        %1185 = vmatprep.mubr.bf16.mxu0 0
        %1186 = vmatmul.mubr.bf16.gmra.mxu0 %v960
        %v1187 = vpop.f32.mrf.mxu0
        %v1188 = vadd.f32 0.0, %v1187
        %v1189 = vpop.f32.mrf.mxu0
        %v1190 = vadd.f32 0.0, %v1189
        %v1191 = vpop.f32.mrf.mxu0
        %v1192 = vpop.f32.mrf.mxu0
        %1193 = vdwg.mxu0
        %1194 = vmatprep.subr.bf16.mxu0 %v1120
        %1195 = vmatpush1.bf16.msra.mxu0 %v1119
        %1196 = vmatprep.subr.bf16.mxu0 %v1116
        %1197 = vmatpush1.bf16.msra.mxu0 %v1115
        %1198 = vmatprep.subr.bf16.mxu0 %v1112
        %1199 = vmatpush1.bf16.msra.mxu0 %v1111
        %1200 = vmatprep.subr.bf16.mxu0 %v1108
        %1201 = vmatpush1.bf16.msra.mxu0 %v1107
        %1202 = vmatprep.subr.bf16.mxu0 %v1104
        %1203 = vmatpush1.bf16.msra.mxu0 %v1103
        %1204 = vmatprep.subr.bf16.mxu0 %v1100
        %1205 = vmatpush1.bf16.msra.mxu0 %v1099
        %1206 = vmatprep.subr.bf16.mxu0 %v1096
        %1207 = vmatpush1.bf16.msra.mxu0 %v1095
        %1208 = vmatprep.subr.bf16.mxu0 %v1092
        %1209 = vmatpush1.bf16.msra.mxu0 %v1091
        %1210 = vmatprep.subr.bf16.mxu0 0
        %1211 = vmatpush2.bf16.msra.mxu0 0
        %1212 = vmatprep.subr.bf16.mxu0 0
        %1213 = vmatpush2.bf16.msra.mxu0 0
        %1214 = vmatprep.subr.bf16.mxu0 0
        %1215 = vmatpush2.bf16.msra.mxu0 0
        %1216 = vmatprep.subr.bf16.mxu0 0
        %1217 = vmatpush2.bf16.msra.mxu0 0
        %1218 = vmatprep.subr.bf16.mxu0 0
        %1219 = vmatpush2.bf16.msra.mxu0 0
        %1220 = vmatprep.subr.bf16.mxu0 0
        %1221 = vmatpush2.bf16.msra.mxu0 0
        %1222 = vmatprep.subr.bf16.mxu0 0
        %1223 = vmatpush2.bf16.msra.mxu0 0
        %1224 = vmatprep.subr.bf16.mxu0 0
        %1225 = vmatpush2.bf16.msra.mxu0 0
        %1226 = vmatprep.mubr.bf16.mxu0 0
        %1227 = vmatmul.mubr.bf16.gmra.mxu0 %v960
        %v1228 = vpop.f32.mrf.mxu0
        %v1229 = vadd.f32 0.0, %v1228
        %v1230 = vpop.f32.mrf.mxu0
        %v1231 = vadd.f32 0.0, %v1230
        %v1232 = vpop.f32.mrf.mxu0
        %v1233 = vpop.f32.mrf.mxu0
        %1234 = vdwg.mxu0
        %v1235 = vadd.f32 %v956, %v1188
        %v1236 = vadd.f32 %v957, %v1190
        %v1237 = vadd.f32 %v958, %v1229
        %v1238 = vadd.f32 %v959, %v1231
        %v1239 = vmul.f32 %v1235, 0.5
        %v1240 = vtanh.pop %v1239
        %v1241 = vmul.f32 %v1240, 0.5
        %v1242 = vadd.f32 %v1241, 0.5
        %v1243 = vmul.f32 %v1236, 0.5
        %v1244 = vtanh.pop %v1243
        %v1245 = vmul.f32 %v1244, 0.5
        %v1246 = vadd.f32 %v1245, 0.5
        %v1247 = vtanh.pop %v1237
        %v1248 = vmul.f32 %v1238, 0.5
        %v1249 = vtanh.pop %v1248
        %v1250 = vmul.f32 %v1249, 0.5
        %v1251 = vadd.f32 %v1250, 0.5
        %v1252 = vmul.f32 %v1246, %v949
        %v1253 = vmul.f32 %v1242, %v1247
        %v1254 = vadd.f32 %v1252, %v1253
        %v1255 = vtanh.pop %v1254
        %v1256 = vmul.f32 %v1251, %v1255
        %v1257 = vpack.c.bf16 %v1256, %v1256
        %s1258 = smul.addr %s951, 4
        %s1259 = scalar_lea.vmem %s274, %s1258 [#allocation5]
        %1260 = vst [vmem:[%s1259] sm:$0xf] %v1257
        %s1261 = smul.u32 %s19, 5
        %s1262 = sadd.s32 %s1261, 1
        %s1263 = smul.u32 %s1262, 8
        %s1264 = sshra.s32 %s1263, 3
        %s1265 = sand.u32 %s1263, 7
        %s1266 = smul.u32 %s1264, 4
        %s1267 = smul.addr %s1266, 8
        %s1268 = scalar_lea.vmem [#allocation4], %s1267
        %v1269 = vld [vmem:[%s1268] sm:$0xff]
        %v1270 = vld [vmem:[%s1268 + $0x8] sm:$0xff]
        %v1271 = vld [vmem:[%s1268 + $0x10] sm:$0xff]
        %v1272 = vld [vmem:[%s1268 + $0x18] sm:$0xff]
        %v1273 = vld [vmem:[%s299] sm:$0xff]
        %v1274 = vld [vmem:[%s299 + $0x8] sm:$0xff]
        %v1275 = vld [vmem:[%s299 + $0x10] sm:$0xff]
        %v1276 = vld [vmem:[%s299 + $0x18] sm:$0xff]
        %v1277 = vld [vmem:[%s299 + $0x20] sm:$0xff]
        %v1278 = vld [vmem:[%s299 + $0x28] sm:$0xff]
        %v1279 = vld [vmem:[%s299 + $0x30] sm:$0xff]
        %v1280 = vld [vmem:[%s299 + $0x38] sm:$0xff]
        %v1281 = vld [vmem:[%s299 + $0x40] sm:$0xff]
        %v1282 = vld [vmem:[%s299 + $0x48] sm:$0xff]
        %v1283 = vld [vmem:[%s299 + $0x50] sm:$0xff]
        %v1284 = vld [vmem:[%s299 + $0x58] sm:$0xff]
        %v1285 = vld [vmem:[%s299 + $0x60] sm:$0xff]
        %v1286 = vld [vmem:[%s299 + $0x68] sm:$0xff]
        %v1287 = vld [vmem:[%s299 + $0x70] sm:$0xff]
        %v1288 = vld [vmem:[%s299 + $0x78] sm:$0xff]
        %v1289 = vld [vmem:[%s299 + $0x80] sm:$0xff]
        %v1290 = vld [vmem:[%s299 + $0x88] sm:$0xff]
        %v1291 = vld [vmem:[%s299 + $0x90] sm:$0xff]
        %v1292 = vld [vmem:[%s299 + $0x98] sm:$0xff]
        %v1293 = vld [vmem:[%s299 + $0xa0] sm:$0xff]
        %v1294 = vld [vmem:[%s299 + $0xa8] sm:$0xff]
        %v1295 = vld [vmem:[%s299 + $0xb0] sm:$0xff]
        %v1296 = vld [vmem:[%s299 + $0xb8] sm:$0xff]
        %v1297 = vld [vmem:[%s299 + $0xc0] sm:$0xff]
        %v1298 = vld [vmem:[%s299 + $0xc8] sm:$0xff]
        %v1299 = vld [vmem:[%s299 + $0xd0] sm:$0xff]
        %v1300 = vld [vmem:[%s299 + $0xd8] sm:$0xff]
        %v1301 = vld [vmem:[%s299 + $0xe0] sm:$0xff]
        %v1302 = vld [vmem:[%s299 + $0xe8] sm:$0xff]
        %v1303 = vld [vmem:[%s299 + $0xf0] sm:$0xff]
        %v1304 = vld [vmem:[%s299 + $0xf8] sm:$0xff]
        %v1337 = vunpack.c.l.b16 %v1273
        %v1338 = vunpack.c.h.b16 %v1273
        %v1339 = vunpack.c.l.b16 %v1274
        %v1340 = vunpack.c.h.b16 %v1274
        %v1341 = vunpack.c.l.b16 %v1275
        %v1342 = vunpack.c.h.b16 %v1275
        %v1343 = vunpack.c.l.b16 %v1276
        %v1344 = vunpack.c.h.b16 %v1276
        %v1345 = vunpack.c.l.b16 %v1277
        %v1346 = vunpack.c.h.b16 %v1277
        %v1347 = vunpack.c.l.b16 %v1278
        %v1348 = vunpack.c.h.b16 %v1278
        %v1349 = vunpack.c.l.b16 %v1279
        %v1350 = vunpack.c.h.b16 %v1279
        %v1351 = vunpack.c.l.b16 %v1280
        %v1352 = vunpack.c.h.b16 %v1280
        %v1353 = vunpack.c.l.b16 %v1281
        %v1354 = vunpack.c.h.b16 %v1281
        %v1355 = vunpack.c.l.b16 %v1282
        %v1356 = vunpack.c.h.b16 %v1282
        %v1357 = vunpack.c.l.b16 %v1283
        %v1358 = vunpack.c.h.b16 %v1283
        %v1359 = vunpack.c.l.b16 %v1284
        %v1360 = vunpack.c.h.b16 %v1284
        %v1361 = vunpack.c.l.b16 %v1285
        %v1362 = vunpack.c.h.b16 %v1285
        %v1363 = vunpack.c.l.b16 %v1286
        %v1364 = vunpack.c.h.b16 %v1286
        %v1365 = vunpack.c.l.b16 %v1287
        %v1366 = vunpack.c.h.b16 %v1287
        %v1367 = vunpack.c.l.b16 %v1288
        %v1368 = vunpack.c.h.b16 %v1288
        %v1369 = vunpack.c.l.b16 %v1289
        %v1370 = vunpack.c.h.b16 %v1289
        %v1371 = vunpack.c.l.b16 %v1290
        %v1372 = vunpack.c.h.b16 %v1290
        %v1373 = vunpack.c.l.b16 %v1291
        %v1374 = vunpack.c.h.b16 %v1291
        %v1375 = vunpack.c.l.b16 %v1292
        %v1376 = vunpack.c.h.b16 %v1292
        %v1377 = vunpack.c.l.b16 %v1293
        %v1378 = vunpack.c.h.b16 %v1293
        %v1379 = vunpack.c.l.b16 %v1294
        %v1380 = vunpack.c.h.b16 %v1294
        %v1381 = vunpack.c.l.b16 %v1295
        %v1382 = vunpack.c.h.b16 %v1295
        %v1383 = vunpack.c.l.b16 %v1296
        %v1384 = vunpack.c.h.b16 %v1296
        %v1385 = vunpack.c.l.b16 %v1297
        %v1386 = vunpack.c.h.b16 %v1297
        %v1387 = vunpack.c.l.b16 %v1298
        %v1388 = vunpack.c.h.b16 %v1298
        %v1389 = vunpack.c.l.b16 %v1299
        %v1390 = vunpack.c.h.b16 %v1299
        %v1391 = vunpack.c.l.b16 %v1300
        %v1392 = vunpack.c.h.b16 %v1300
        %v1393 = vunpack.c.l.b16 %v1301
        %v1394 = vunpack.c.h.b16 %v1301
        %v1395 = vunpack.c.l.b16 %v1302
        %v1396 = vunpack.c.h.b16 %v1302
        %v1397 = vunpack.c.l.b16 %v1303
        %v1398 = vunpack.c.h.b16 %v1303
        %v1399 = vunpack.c.l.b16 %v1304
        %v1400 = vunpack.c.h.b16 %v1304
        %v1401 = vpack.c.b16 %v1341, %v1337
        %v1402 = vpack.c.b16 %v1342, %v1338
        %v1403 = vpack.c.b16 %v1343, %v1339
        %v1404 = vpack.c.b16 %v1344, %v1340
        %v1405 = vpack.c.b16 %v1349, %v1345
        %v1406 = vpack.c.b16 %v1350, %v1346
        %v1407 = vpack.c.b16 %v1351, %v1347
        %v1408 = vpack.c.b16 %v1352, %v1348
        %v1409 = vpack.c.b16 %v1357, %v1353
        %v1410 = vpack.c.b16 %v1358, %v1354
        %v1411 = vpack.c.b16 %v1359, %v1355
        %v1412 = vpack.c.b16 %v1360, %v1356
        %v1413 = vpack.c.b16 %v1365, %v1361
        %v1414 = vpack.c.b16 %v1366, %v1362
        %v1415 = vpack.c.b16 %v1367, %v1363
        %v1416 = vpack.c.b16 %v1368, %v1364
        %v1417 = vpack.c.b16 %v1373, %v1369
        %v1418 = vpack.c.b16 %v1374, %v1370
        %v1419 = vpack.c.b16 %v1375, %v1371
        %v1420 = vpack.c.b16 %v1376, %v1372
        %v1421 = vpack.c.b16 %v1381, %v1377
        %v1422 = vpack.c.b16 %v1382, %v1378
        %v1423 = vpack.c.b16 %v1383, %v1379
        %v1424 = vpack.c.b16 %v1384, %v1380
        %v1425 = vpack.c.b16 %v1389, %v1385
        %v1426 = vpack.c.b16 %v1390, %v1386
        %v1427 = vpack.c.b16 %v1391, %v1387
        %v1428 = vpack.c.b16 %v1392, %v1388
        %v1429 = vpack.c.b16 %v1397, %v1393
        %v1430 = vpack.c.b16 %v1398, %v1394
        %v1431 = vpack.c.b16 %v1399, %v1395
        %v1432 = vpack.c.b16 %v1400, %v1396
        %1465 = vmatprep.subr.bf16.mxu0 %v1430
        %1466 = vmatpush1.bf16.msra.mxu0 %v1429
        %1467 = vmatprep.subr.bf16.mxu0 %v1426
        %1468 = vmatpush1.bf16.msra.mxu0 %v1425
        %1469 = vmatprep.subr.bf16.mxu0 %v1422
        %1470 = vmatpush1.bf16.msra.mxu0 %v1421
        %1471 = vmatprep.subr.bf16.mxu0 %v1418
        %1472 = vmatpush1.bf16.msra.mxu0 %v1417
        %1473 = vmatprep.subr.bf16.mxu0 %v1414
        %1474 = vmatpush1.bf16.msra.mxu0 %v1413
        %1475 = vmatprep.subr.bf16.mxu0 %v1410
        %1476 = vmatpush1.bf16.msra.mxu0 %v1409
        %1477 = vmatprep.subr.bf16.mxu0 %v1406
        %1478 = vmatpush1.bf16.msra.mxu0 %v1405
        %1479 = vmatprep.subr.bf16.mxu0 %v1402
        %1480 = vmatpush1.bf16.msra.mxu0 %v1401
        %1481 = vmatprep.subr.bf16.mxu0 0
        %1482 = vmatpush2.bf16.msra.mxu0 0
        %1483 = vmatprep.subr.bf16.mxu0 0
        %1484 = vmatpush2.bf16.msra.mxu0 0
        %1485 = vmatprep.subr.bf16.mxu0 0
        %1486 = vmatpush2.bf16.msra.mxu0 0
        %1487 = vmatprep.subr.bf16.mxu0 0
        %1488 = vmatpush2.bf16.msra.mxu0 0
        %1489 = vmatprep.subr.bf16.mxu0 0
        %1490 = vmatpush2.bf16.msra.mxu0 0
        %1491 = vmatprep.subr.bf16.mxu0 0
        %1492 = vmatpush2.bf16.msra.mxu0 0
        %1493 = vmatprep.subr.bf16.mxu0 0
        %1494 = vmatpush2.bf16.msra.mxu0 0
        %1495 = vmatprep.subr.bf16.mxu0 0
        %1496 = vmatpush2.bf16.msra.mxu0 0
        %1497 = vmatprep.mubr.bf16.mxu0 0
        %1498 = vmatmul.mubr.bf16.gmra.mxu0 %v1257
        %v1499 = vpop.f32.mrf.mxu0
        %v1500 = vadd.f32 0.0, %v1499
        %v1501 = vpop.f32.mrf.mxu0
        %v1502 = vadd.f32 0.0, %v1501
        %v1503 = vpop.f32.mrf.mxu0
        %v1504 = vpop.f32.mrf.mxu0
        %1505 = vdwg.mxu0
        %1506 = vmatprep.subr.bf16.mxu0 %v1432
        %1507 = vmatpush1.bf16.msra.mxu0 %v1431
        %1508 = vmatprep.subr.bf16.mxu0 %v1428
        %1509 = vmatpush1.bf16.msra.mxu0 %v1427
        %1510 = vmatprep.subr.bf16.mxu0 %v1424
        %1511 = vmatpush1.bf16.msra.mxu0 %v1423
        %1512 = vmatprep.subr.bf16.mxu0 %v1420
        %1513 = vmatpush1.bf16.msra.mxu0 %v1419
        %1514 = vmatprep.subr.bf16.mxu0 %v1416
        %1515 = vmatpush1.bf16.msra.mxu0 %v1415
        %1516 = vmatprep.subr.bf16.mxu0 %v1412
        %1517 = vmatpush1.bf16.msra.mxu0 %v1411
        %1518 = vmatprep.subr.bf16.mxu0 %v1408
        %1519 = vmatpush1.bf16.msra.mxu0 %v1407
        %1520 = vmatprep.subr.bf16.mxu0 %v1404
        %1521 = vmatpush1.bf16.msra.mxu0 %v1403
        %1522 = vmatprep.subr.bf16.mxu0 0
        %1523 = vmatpush2.bf16.msra.mxu0 0
        %1524 = vmatprep.subr.bf16.mxu0 0
        %1525 = vmatpush2.bf16.msra.mxu0 0
        %1526 = vmatprep.subr.bf16.mxu0 0
        %1527 = vmatpush2.bf16.msra.mxu0 0
        %1528 = vmatprep.subr.bf16.mxu0 0
        %1529 = vmatpush2.bf16.msra.mxu0 0
        %1530 = vmatprep.subr.bf16.mxu0 0
        %1531 = vmatpush2.bf16.msra.mxu0 0
        %1532 = vmatprep.subr.bf16.mxu0 0
        %1533 = vmatpush2.bf16.msra.mxu0 0
        %1534 = vmatprep.subr.bf16.mxu0 0
        %1535 = vmatpush2.bf16.msra.mxu0 0
        %1536 = vmatprep.subr.bf16.mxu0 0
        %1537 = vmatpush2.bf16.msra.mxu0 0
        %1538 = vmatprep.mubr.bf16.mxu0 0
        %1539 = vmatmul.mubr.bf16.gmra.mxu0 %v1257
        %v1540 = vpop.f32.mrf.mxu0
        %v1541 = vadd.f32 0.0, %v1540
        %v1542 = vpop.f32.mrf.mxu0
        %v1543 = vadd.f32 0.0, %v1542
        %v1544 = vpop.f32.mrf.mxu0
        %v1545 = vpop.f32.mrf.mxu0
        %1546 = vdwg.mxu0
        %v1547 = vadd.f32 %v1269, %v1500
        %v1548 = vadd.f32 %v1270, %v1502
        %v1549 = vadd.f32 %v1271, %v1541
        %v1550 = vadd.f32 %v1272, %v1543
        %v1551 = vmul.f32 %v1547, 0.5
        %v1552 = vtanh.pop %v1551
        %v1553 = vmul.f32 %v1552, 0.5
        %v1554 = vadd.f32 %v1553, 0.5
        %v1555 = vmul.f32 %v1548, 0.5
        %v1556 = vtanh.pop %v1555
        %v1557 = vmul.f32 %v1556, 0.5
        %v1558 = vadd.f32 %v1557, 0.5
        %v1559 = vtanh.pop %v1549
        %v1560 = vmul.f32 %v1550, 0.5
        %v1561 = vtanh.pop %v1560
        %v1562 = vmul.f32 %v1561, 0.5
        %v1563 = vadd.f32 %v1562, 0.5
        %v1564 = vmul.f32 %v1558, %v1254
        %v1565 = vmul.f32 %v1554, %v1559
        %v1566 = vadd.f32 %v1564, %v1565
        %v1567 = vtanh.pop %v1566
        %v1568 = vmul.f32 %v1563, %v1567
        %v1569 = vpack.c.bf16 %v1568, %v1568
        %s1570 = smul.addr %s1264, 4
        %s1571 = scalar_lea.vmem %s274, %s1570 [#allocation5]
        %1572 = vst [vmem:[%s1571] sm:$0xf] %v1569
        %s1573 = smul.u32 %s19, 3
        %s1574 = sadd.s32 %s1573, 2
        %s1575 = smul.u32 %s1574, 8
        %s1576 = sshra.s32 %s1575, 3
        %s1577 = sand.u32 %s1575, 7
        %s1578 = smul.u32 %s1576, 4
        %s1579 = smul.addr %s1578, 8
        %s1580 = scalar_lea.vmem [#allocation4], %s1579
        %v1581 = vld [vmem:[%s1580] sm:$0xff]
        %v1582 = vld [vmem:[%s1580 + $0x8] sm:$0xff]
        %v1583 = vld [vmem:[%s1580 + $0x10] sm:$0xff]
        %v1584 = vld [vmem:[%s1580 + $0x18] sm:$0xff]
        %v1585 = vld [vmem:[%s299] sm:$0xff]
        %v1586 = vld [vmem:[%s299 + $0x8] sm:$0xff]
        %v1587 = vld [vmem:[%s299 + $0x10] sm:$0xff]
        %v1588 = vld [vmem:[%s299 + $0x18] sm:$0xff]
        %v1589 = vld [vmem:[%s299 + $0x20] sm:$0xff]
        %v1590 = vld [vmem:[%s299 + $0x28] sm:$0xff]
        %v1591 = vld [vmem:[%s299 + $0x30] sm:$0xff]
        %v1592 = vld [vmem:[%s299 + $0x38] sm:$0xff]
        %v1593 = vld [vmem:[%s299 + $0x40] sm:$0xff]
        %v1594 = vld [vmem:[%s299 + $0x48] sm:$0xff]
        %v1595 = vld [vmem:[%s299 + $0x50] sm:$0xff]
        %v1596 = vld [vmem:[%s299 + $0x58] sm:$0xff]
        %v1597 = vld [vmem:[%s299 + $0x60] sm:$0xff]
        %v1598 = vld [vmem:[%s299 + $0x68] sm:$0xff]
        %v1599 = vld [vmem:[%s299 + $0x70] sm:$0xff]
        %v1600 = vld [vmem:[%s299 + $0x78] sm:$0xff]
        %v1601 = vld [vmem:[%s299 + $0x80] sm:$0xff]
        %v1602 = vld [vmem:[%s299 + $0x88] sm:$0xff]
        %v1603 = vld [vmem:[%s299 + $0x90] sm:$0xff]
        %v1604 = vld [vmem:[%s299 + $0x98] sm:$0xff]
        %v1605 = vld [vmem:[%s299 + $0xa0] sm:$0xff]
        %v1606 = vld [vmem:[%s299 + $0xa8] sm:$0xff]
        %v1607 = vld [vmem:[%s299 + $0xb0] sm:$0xff]
        %v1608 = vld [vmem:[%s299 + $0xb8] sm:$0xff]
        %v1609 = vld [vmem:[%s299 + $0xc0] sm:$0xff]
        %v1610 = vld [vmem:[%s299 + $0xc8] sm:$0xff]
        %v1611 = vld [vmem:[%s299 + $0xd0] sm:$0xff]
        %v1612 = vld [vmem:[%s299 + $0xd8] sm:$0xff]
        %v1613 = vld [vmem:[%s299 + $0xe0] sm:$0xff]
        %v1614 = vld [vmem:[%s299 + $0xe8] sm:$0xff]
        %v1615 = vld [vmem:[%s299 + $0xf0] sm:$0xff]
        %v1616 = vld [vmem:[%s299 + $0xf8] sm:$0xff]
        %v1649 = vunpack.c.l.b16 %v1585
        %v1650 = vunpack.c.h.b16 %v1585
        %v1651 = vunpack.c.l.b16 %v1586
        %v1652 = vunpack.c.h.b16 %v1586
        %v1653 = vunpack.c.l.b16 %v1587
        %v1654 = vunpack.c.h.b16 %v1587
        %v1655 = vunpack.c.l.b16 %v1588
        %v1656 = vunpack.c.h.b16 %v1588
        %v1657 = vunpack.c.l.b16 %v1589
        %v1658 = vunpack.c.h.b16 %v1589
        %v1659 = vunpack.c.l.b16 %v1590
        %v1660 = vunpack.c.h.b16 %v1590
        %v1661 = vunpack.c.l.b16 %v1591
        %v1662 = vunpack.c.h.b16 %v1591
        %v1663 = vunpack.c.l.b16 %v1592
        %v1664 = vunpack.c.h.b16 %v1592
        %v1665 = vunpack.c.l.b16 %v1593
        %v1666 = vunpack.c.h.b16 %v1593
        %v1667 = vunpack.c.l.b16 %v1594
        %v1668 = vunpack.c.h.b16 %v1594
        %v1669 = vunpack.c.l.b16 %v1595
        %v1670 = vunpack.c.h.b16 %v1595
        %v1671 = vunpack.c.l.b16 %v1596
        %v1672 = vunpack.c.h.b16 %v1596
        %v1673 = vunpack.c.l.b16 %v1597
        %v1674 = vunpack.c.h.b16 %v1597
        %v1675 = vunpack.c.l.b16 %v1598
        %v1676 = vunpack.c.h.b16 %v1598
        %v1677 = vunpack.c.l.b16 %v1599
        %v1678 = vunpack.c.h.b16 %v1599
        %v1679 = vunpack.c.l.b16 %v1600
        %v1680 = vunpack.c.h.b16 %v1600
        %v1681 = vunpack.c.l.b16 %v1601
        %v1682 = vunpack.c.h.b16 %v1601
        %v1683 = vunpack.c.l.b16 %v1602
        %v1684 = vunpack.c.h.b16 %v1602
        %v1685 = vunpack.c.l.b16 %v1603
        %v1686 = vunpack.c.h.b16 %v1603
        %v1687 = vunpack.c.l.b16 %v1604
        %v1688 = vunpack.c.h.b16 %v1604
        %v1689 = vunpack.c.l.b16 %v1605
        %v1690 = vunpack.c.h.b16 %v1605
        %v1691 = vunpack.c.l.b16 %v1606
        %v1692 = vunpack.c.h.b16 %v1606
        %v1693 = vunpack.c.l.b16 %v1607
        %v1694 = vunpack.c.h.b16 %v1607
        %v1695 = vunpack.c.l.b16 %v1608
        %v1696 = vunpack.c.h.b16 %v1608
        %v1697 = vunpack.c.l.b16 %v1609
        %v1698 = vunpack.c.h.b16 %v1609
        %v1699 = vunpack.c.l.b16 %v1610
        %v1700 = vunpack.c.h.b16 %v1610
        %v1701 = vunpack.c.l.b16 %v1611
        %v1702 = vunpack.c.h.b16 %v1611
        %v1703 = vunpack.c.l.b16 %v1612
        %v1704 = vunpack.c.h.b16 %v1612
        %v1705 = vunpack.c.l.b16 %v1613
        %v1706 = vunpack.c.h.b16 %v1613
        %v1707 = vunpack.c.l.b16 %v1614
        %v1708 = vunpack.c.h.b16 %v1614
        %v1709 = vunpack.c.l.b16 %v1615
        %v1710 = vunpack.c.h.b16 %v1615
        %v1711 = vunpack.c.l.b16 %v1616
        %v1712 = vunpack.c.h.b16 %v1616
        %v1713 = vpack.c.b16 %v1653, %v1649
        %v1714 = vpack.c.b16 %v1654, %v1650
        %v1715 = vpack.c.b16 %v1655, %v1651
        %v1716 = vpack.c.b16 %v1656, %v1652
        %v1717 = vpack.c.b16 %v1661, %v1657
        %v1718 = vpack.c.b16 %v1662, %v1658
        %v1719 = vpack.c.b16 %v1663, %v1659
        %v1720 = vpack.c.b16 %v1664, %v1660
        %v1721 = vpack.c.b16 %v1669, %v1665
        %v1722 = vpack.c.b16 %v1670, %v1666
        %v1723 = vpack.c.b16 %v1671, %v1667
        %v1724 = vpack.c.b16 %v1672, %v1668
        %v1725 = vpack.c.b16 %v1677, %v1673
        %v1726 = vpack.c.b16 %v1678, %v1674
        %v1727 = vpack.c.b16 %v1679, %v1675
        %v1728 = vpack.c.b16 %v1680, %v1676
        %v1729 = vpack.c.b16 %v1685, %v1681
        %v1730 = vpack.c.b16 %v1686, %v1682
        %v1731 = vpack.c.b16 %v1687, %v1683
        %v1732 = vpack.c.b16 %v1688, %v1684
        %v1733 = vpack.c.b16 %v1693, %v1689
        %v1734 = vpack.c.b16 %v1694, %v1690
        %v1735 = vpack.c.b16 %v1695, %v1691
        %v1736 = vpack.c.b16 %v1696, %v1692
        %v1737 = vpack.c.b16 %v1701, %v1697
        %v1738 = vpack.c.b16 %v1702, %v1698
        %v1739 = vpack.c.b16 %v1703, %v1699
        %v1740 = vpack.c.b16 %v1704, %v1700
        %v1741 = vpack.c.b16 %v1709, %v1705
        %v1742 = vpack.c.b16 %v1710, %v1706
        %v1743 = vpack.c.b16 %v1711, %v1707
        %v1744 = vpack.c.b16 %v1712, %v1708
        %1777 = vmatprep.subr.bf16.mxu0 %v1742
        %1778 = vmatpush1.bf16.msra.mxu0 %v1741
        %1779 = vmatprep.subr.bf16.mxu0 %v1738
        %1780 = vmatpush1.bf16.msra.mxu0 %v1737
        %1781 = vmatprep.subr.bf16.mxu0 %v1734
        %1782 = vmatpush1.bf16.msra.mxu0 %v1733
        %1783 = vmatprep.subr.bf16.mxu0 %v1730
        %1784 = vmatpush1.bf16.msra.mxu0 %v1729
        %1785 = vmatprep.subr.bf16.mxu0 %v1726
        %1786 = vmatpush1.bf16.msra.mxu0 %v1725
        %1787 = vmatprep.subr.bf16.mxu0 %v1722
        %1788 = vmatpush1.bf16.msra.mxu0 %v1721
        %1789 = vmatprep.subr.bf16.mxu0 %v1718
        %1790 = vmatpush1.bf16.msra.mxu0 %v1717
        %1791 = vmatprep.subr.bf16.mxu0 %v1714
        %1792 = vmatpush1.bf16.msra.mxu0 %v1713
        %1793 = vmatprep.subr.bf16.mxu0 0
        %1794 = vmatpush2.bf16.msra.mxu0 0
        %1795 = vmatprep.subr.bf16.mxu0 0
        %1796 = vmatpush2.bf16.msra.mxu0 0
        %1797 = vmatprep.subr.bf16.mxu0 0
        %1798 = vmatpush2.bf16.msra.mxu0 0
        %1799 = vmatprep.subr.bf16.mxu0 0
        %1800 = vmatpush2.bf16.msra.mxu0 0
        %1801 = vmatprep.subr.bf16.mxu0 0
        %1802 = vmatpush2.bf16.msra.mxu0 0
        %1803 = vmatprep.subr.bf16.mxu0 0
        %1804 = vmatpush2.bf16.msra.mxu0 0
        %1805 = vmatprep.subr.bf16.mxu0 0
        %1806 = vmatpush2.bf16.msra.mxu0 0
        %1807 = vmatprep.subr.bf16.mxu0 0
        %1808 = vmatpush2.bf16.msra.mxu0 0
        %1809 = vmatprep.mubr.bf16.mxu0 0
        %1810 = vmatmul.mubr.bf16.gmra.mxu0 %v1569
        %v1811 = vpop.f32.mrf.mxu0
        %v1812 = vadd.f32 0.0, %v1811
        %v1813 = vpop.f32.mrf.mxu0
        %v1814 = vadd.f32 0.0, %v1813
        %v1815 = vpop.f32.mrf.mxu0
        %v1816 = vpop.f32.mrf.mxu0
        %1817 = vdwg.mxu0
        %1818 = vmatprep.subr.bf16.mxu0 %v1744
        %1819 = vmatpush1.bf16.msra.mxu0 %v1743
        %1820 = vmatprep.subr.bf16.mxu0 %v1740
        %1821 = vmatpush1.bf16.msra.mxu0 %v1739
        %1822 = vmatprep.subr.bf16.mxu0 %v1736
        %1823 = vmatpush1.bf16.msra.mxu0 %v1735
        %1824 = vmatprep.subr.bf16.mxu0 %v1732
        %1825 = vmatpush1.bf16.msra.mxu0 %v1731
        %1826 = vmatprep.subr.bf16.mxu0 %v1728
        %1827 = vmatpush1.bf16.msra.mxu0 %v1727
        %1828 = vmatprep.subr.bf16.mxu0 %v1724
        %1829 = vmatpush1.bf16.msra.mxu0 %v1723
        %1830 = vmatprep.subr.bf16.mxu0 %v1720
        %1831 = vmatpush1.bf16.msra.mxu0 %v1719
        %1832 = vmatprep.subr.bf16.mxu0 %v1716
        %1833 = vmatpush1.bf16.msra.mxu0 %v1715
        %1834 = vmatprep.subr.bf16.mxu0 0
        %1835 = vmatpush2.bf16.msra.mxu0 0
        %1836 = vmatprep.subr.bf16.mxu0 0
        %1837 = vmatpush2.bf16.msra.mxu0 0
        %1838 = vmatprep.subr.bf16.mxu0 0
        %1839 = vmatpush2.bf16.msra.mxu0 0
        %1840 = vmatprep.subr.bf16.mxu0 0
        %1841 = vmatpush2.bf16.msra.mxu0 0
        %1842 = vmatprep.subr.bf16.mxu0 0
        %1843 = vmatpush2.bf16.msra.mxu0 0
        %1844 = vmatprep.subr.bf16.mxu0 0
        %1845 = vmatpush2.bf16.msra.mxu0 0
        %1846 = vmatprep.subr.bf16.mxu0 0
        %1847 = vmatpush2.bf16.msra.mxu0 0
        %1848 = vmatprep.subr.bf16.mxu0 0
        %1849 = vmatpush2.bf16.msra.mxu0 0
        %1850 = vmatprep.mubr.bf16.mxu0 0
        %1851 = vmatmul.mubr.bf16.gmra.mxu0 %v1569
        %v1852 = vpop.f32.mrf.mxu0
        %v1853 = vadd.f32 0.0, %v1852
        %v1854 = vpop.f32.mrf.mxu0
        %v1855 = vadd.f32 0.0, %v1854
        %v1856 = vpop.f32.mrf.mxu0
        %v1857 = vpop.f32.mrf.mxu0
        %1858 = vdwg.mxu0
        %v1859 = vadd.f32 %v1581, %v1812
        %v1860 = vadd.f32 %v1582, %v1814
        %v1861 = vadd.f32 %v1583, %v1853
        %v1862 = vadd.f32 %v1584, %v1855
        %v1863 = vmul.f32 %v1859, 0.5
        %v1864 = vtanh.pop %v1863
        %v1865 = vmul.f32 %v1864, 0.5
        %v1866 = vadd.f32 %v1865, 0.5
        %v1867 = vmul.f32 %v1860, 0.5
        %v1868 = vtanh.pop %v1867
        %v1869 = vmul.f32 %v1868, 0.5
        %v1870 = vadd.f32 %v1869, 0.5
        %v1871 = vtanh.pop %v1861
        %v1872 = vmul.f32 %v1862, 0.5
        %v1873 = vtanh.pop %v1872
        %v1874 = vmul.f32 %v1873, 0.5
        %v1875 = vadd.f32 %v1874, 0.5
        %v1876 = vmul.f32 %v1870, %v1566
        %v1877 = vmul.f32 %v1866, %v1871
        %v1878 = vadd.f32 %v1876, %v1877
        %v1879 = vtanh.pop %v1878
        %v1880 = vmul.f32 %v1875, %v1879
        %v1881 = vpack.c.bf16 %v1880, %v1880
        %s1882 = smul.addr %s1576, 4
        %s1883 = scalar_lea.vmem %s274, %s1882 [#allocation5]
        %1884 = vst [vmem:[%s1883] sm:$0xf] %v1881
        %s1885 = sadd.s32 %s19, 3
        %s1886 = smul.u32 %s1885, 8
        %s1887 = sshra.s32 %s1886, 3
        %s1888 = sand.u32 %s1886, 7
        %s1889 = smul.u32 %s1887, 4
        %s1890 = smul.addr %s1889, 8
        %s1891 = scalar_lea.vmem [#allocation4], %s1890
        %v1892 = vld [vmem:[%s1891] sm:$0xff]
        %v1893 = vld [vmem:[%s1891 + $0x8] sm:$0xff]
        %v1894 = vld [vmem:[%s1891 + $0x10] sm:$0xff]
        %v1895 = vld [vmem:[%s1891 + $0x18] sm:$0xff]
        %v1896 = vld [vmem:[%s299] sm:$0xff]
        %v1897 = vld [vmem:[%s299 + $0x8] sm:$0xff]
        %v1898 = vld [vmem:[%s299 + $0x10] sm:$0xff]
        %v1899 = vld [vmem:[%s299 + $0x18] sm:$0xff]
        %v1900 = vld [vmem:[%s299 + $0x20] sm:$0xff]
        %v1901 = vld [vmem:[%s299 + $0x28] sm:$0xff]
        %v1902 = vld [vmem:[%s299 + $0x30] sm:$0xff]
        %v1903 = vld [vmem:[%s299 + $0x38] sm:$0xff]
        %v1904 = vld [vmem:[%s299 + $0x40] sm:$0xff]
        %v1905 = vld [vmem:[%s299 + $0x48] sm:$0xff]
        %v1906 = vld [vmem:[%s299 + $0x50] sm:$0xff]
        %v1907 = vld [vmem:[%s299 + $0x58] sm:$0xff]
        %v1908 = vld [vmem:[%s299 + $0x60] sm:$0xff]
        %v1909 = vld [vmem:[%s299 + $0x68] sm:$0xff]
        %v1910 = vld [vmem:[%s299 + $0x70] sm:$0xff]
        %v1911 = vld [vmem:[%s299 + $0x78] sm:$0xff]
        %v1912 = vld [vmem:[%s299 + $0x80] sm:$0xff]
        %v1913 = vld [vmem:[%s299 + $0x88] sm:$0xff]
        %v1914 = vld [vmem:[%s299 + $0x90] sm:$0xff]
        %v1915 = vld [vmem:[%s299 + $0x98] sm:$0xff]
        %v1916 = vld [vmem:[%s299 + $0xa0] sm:$0xff]
        %v1917 = vld [vmem:[%s299 + $0xa8] sm:$0xff]
        %v1918 = vld [vmem:[%s299 + $0xb0] sm:$0xff]
        %v1919 = vld [vmem:[%s299 + $0xb8] sm:$0xff]
        %v1920 = vld [vmem:[%s299 + $0xc0] sm:$0xff]
        %v1921 = vld [vmem:[%s299 + $0xc8] sm:$0xff]
        %v1922 = vld [vmem:[%s299 + $0xd0] sm:$0xff]
        %v1923 = vld [vmem:[%s299 + $0xd8] sm:$0xff]
        %v1924 = vld [vmem:[%s299 + $0xe0] sm:$0xff]
        %v1925 = vld [vmem:[%s299 + $0xe8] sm:$0xff]
        %v1926 = vld [vmem:[%s299 + $0xf0] sm:$0xff]
        %v1927 = vld [vmem:[%s299 + $0xf8] sm:$0xff]
        %v1960 = vunpack.c.l.b16 %v1896
        %v1961 = vunpack.c.h.b16 %v1896
        %v1962 = vunpack.c.l.b16 %v1897
        %v1963 = vunpack.c.h.b16 %v1897
        %v1964 = vunpack.c.l.b16 %v1898
        %v1965 = vunpack.c.h.b16 %v1898
        %v1966 = vunpack.c.l.b16 %v1899
        %v1967 = vunpack.c.h.b16 %v1899
        %v1968 = vunpack.c.l.b16 %v1900
        %v1969 = vunpack.c.h.b16 %v1900
        %v1970 = vunpack.c.l.b16 %v1901
        %v1971 = vunpack.c.h.b16 %v1901
        %v1972 = vunpack.c.l.b16 %v1902
        %v1973 = vunpack.c.h.b16 %v1902
        %v1974 = vunpack.c.l.b16 %v1903
        %v1975 = vunpack.c.h.b16 %v1903
        %v1976 = vunpack.c.l.b16 %v1904
        %v1977 = vunpack.c.h.b16 %v1904
        %v1978 = vunpack.c.l.b16 %v1905
        %v1979 = vunpack.c.h.b16 %v1905
        %v1980 = vunpack.c.l.b16 %v1906
        %v1981 = vunpack.c.h.b16 %v1906
        %v1982 = vunpack.c.l.b16 %v1907
        %v1983 = vunpack.c.h.b16 %v1907
        %v1984 = vunpack.c.l.b16 %v1908
        %v1985 = vunpack.c.h.b16 %v1908
        %v1986 = vunpack.c.l.b16 %v1909
        %v1987 = vunpack.c.h.b16 %v1909
        %v1988 = vunpack.c.l.b16 %v1910
        %v1989 = vunpack.c.h.b16 %v1910
        %v1990 = vunpack.c.l.b16 %v1911
        %v1991 = vunpack.c.h.b16 %v1911
        %v1992 = vunpack.c.l.b16 %v1912
        %v1993 = vunpack.c.h.b16 %v1912
        %v1994 = vunpack.c.l.b16 %v1913
        %v1995 = vunpack.c.h.b16 %v1913
        %v1996 = vunpack.c.l.b16 %v1914
        %v1997 = vunpack.c.h.b16 %v1914
        %v1998 = vunpack.c.l.b16 %v1915
        %v1999 = vunpack.c.h.b16 %v1915
        %v2000 = vunpack.c.l.b16 %v1916
        %v2001 = vunpack.c.h.b16 %v1916
        %v2002 = vunpack.c.l.b16 %v1917
        %v2003 = vunpack.c.h.b16 %v1917
        %v2004 = vunpack.c.l.b16 %v1918
        %v2005 = vunpack.c.h.b16 %v1918
        %v2006 = vunpack.c.l.b16 %v1919
        %v2007 = vunpack.c.h.b16 %v1919
        %v2008 = vunpack.c.l.b16 %v1920
        %v2009 = vunpack.c.h.b16 %v1920
        %v2010 = vunpack.c.l.b16 %v1921
        %v2011 = vunpack.c.h.b16 %v1921
        %v2012 = vunpack.c.l.b16 %v1922
        %v2013 = vunpack.c.h.b16 %v1922
        %v2014 = vunpack.c.l.b16 %v1923
        %v2015 = vunpack.c.h.b16 %v1923
        %v2016 = vunpack.c.l.b16 %v1924
        %v2017 = vunpack.c.h.b16 %v1924
        %v2018 = vunpack.c.l.b16 %v1925
        %v2019 = vunpack.c.h.b16 %v1925
        %v2020 = vunpack.c.l.b16 %v1926
        %v2021 = vunpack.c.h.b16 %v1926
        %v2022 = vunpack.c.l.b16 %v1927
        %v2023 = vunpack.c.h.b16 %v1927
        %v2024 = vpack.c.b16 %v1964, %v1960
        %v2025 = vpack.c.b16 %v1965, %v1961
        %v2026 = vpack.c.b16 %v1966, %v1962
        %v2027 = vpack.c.b16 %v1967, %v1963
        %v2028 = vpack.c.b16 %v1972, %v1968
        %v2029 = vpack.c.b16 %v1973, %v1969
        %v2030 = vpack.c.b16 %v1974, %v1970
        %v2031 = vpack.c.b16 %v1975, %v1971
        %v2032 = vpack.c.b16 %v1980, %v1976
        %v2033 = vpack.c.b16 %v1981, %v1977
        %v2034 = vpack.c.b16 %v1982, %v1978
        %v2035 = vpack.c.b16 %v1983, %v1979
        %v2036 = vpack.c.b16 %v1988, %v1984
        %v2037 = vpack.c.b16 %v1989, %v1985
        %v2038 = vpack.c.b16 %v1990, %v1986
        %v2039 = vpack.c.b16 %v1991, %v1987
        %v2040 = vpack.c.b16 %v1996, %v1992
        %v2041 = vpack.c.b16 %v1997, %v1993
        %v2042 = vpack.c.b16 %v1998, %v1994
        %v2043 = vpack.c.b16 %v1999, %v1995
        %v2044 = vpack.c.b16 %v2004, %v2000
        %v2045 = vpack.c.b16 %v2005, %v2001
        %v2046 = vpack.c.b16 %v2006, %v2002
        %v2047 = vpack.c.b16 %v2007, %v2003
        %v2048 = vpack.c.b16 %v2012, %v2008
        %v2049 = vpack.c.b16 %v2013, %v2009
        %v2050 = vpack.c.b16 %v2014, %v2010
        %v2051 = vpack.c.b16 %v2015, %v2011
        %v2052 = vpack.c.b16 %v2020, %v2016
        %v2053 = vpack.c.b16 %v2021, %v2017
        %v2054 = vpack.c.b16 %v2022, %v2018
        %v2055 = vpack.c.b16 %v2023, %v2019
        %2088 = vmatprep.subr.bf16.mxu0 %v2053
        %2089 = vmatpush1.bf16.msra.mxu0 %v2052
        %2090 = vmatprep.subr.bf16.mxu0 %v2049
        %2091 = vmatpush1.bf16.msra.mxu0 %v2048
        %2092 = vmatprep.subr.bf16.mxu0 %v2045
        %2093 = vmatpush1.bf16.msra.mxu0 %v2044
        %2094 = vmatprep.subr.bf16.mxu0 %v2041
        %2095 = vmatpush1.bf16.msra.mxu0 %v2040
        %2096 = vmatprep.subr.bf16.mxu0 %v2037
        %2097 = vmatpush1.bf16.msra.mxu0 %v2036
        %2098 = vmatprep.subr.bf16.mxu0 %v2033
        %2099 = vmatpush1.bf16.msra.mxu0 %v2032
        %2100 = vmatprep.subr.bf16.mxu0 %v2029
        %2101 = vmatpush1.bf16.msra.mxu0 %v2028
        %2102 = vmatprep.subr.bf16.mxu0 %v2025
        %2103 = vmatpush1.bf16.msra.mxu0 %v2024
        %2104 = vmatprep.subr.bf16.mxu0 0
        %2105 = vmatpush2.bf16.msra.mxu0 0
        %2106 = vmatprep.subr.bf16.mxu0 0
        %2107 = vmatpush2.bf16.msra.mxu0 0
        %2108 = vmatprep.subr.bf16.mxu0 0
        %2109 = vmatpush2.bf16.msra.mxu0 0
        %2110 = vmatprep.subr.bf16.mxu0 0
        %2111 = vmatpush2.bf16.msra.mxu0 0
        %2112 = vmatprep.subr.bf16.mxu0 0
        %2113 = vmatpush2.bf16.msra.mxu0 0
        %2114 = vmatprep.subr.bf16.mxu0 0
        %2115 = vmatpush2.bf16.msra.mxu0 0
        %2116 = vmatprep.subr.bf16.mxu0 0
        %2117 = vmatpush2.bf16.msra.mxu0 0
        %2118 = vmatprep.subr.bf16.mxu0 0
        %2119 = vmatpush2.bf16.msra.mxu0 0
        %2120 = vmatprep.mubr.bf16.mxu0 0
        %2121 = vmatmul.mubr.bf16.gmra.mxu0 %v1881
        %v2122 = vpop.f32.mrf.mxu0
        %v2123 = vadd.f32 0.0, %v2122
        %v2124 = vpop.f32.mrf.mxu0
        %v2125 = vadd.f32 0.0, %v2124
        %v2126 = vpop.f32.mrf.mxu0
        %v2127 = vpop.f32.mrf.mxu0
        %2128 = vdwg.mxu0
        %2129 = vmatprep.subr.bf16.mxu0 %v2055
        %2130 = vmatpush1.bf16.msra.mxu0 %v2054
        %2131 = vmatprep.subr.bf16.mxu0 %v2051
        %2132 = vmatpush1.bf16.msra.mxu0 %v2050
        %2133 = vmatprep.subr.bf16.mxu0 %v2047
        %2134 = vmatpush1.bf16.msra.mxu0 %v2046
        %2135 = vmatprep.subr.bf16.mxu0 %v2043
        %2136 = vmatpush1.bf16.msra.mxu0 %v2042
        %2137 = vmatprep.subr.bf16.mxu0 %v2039
        %2138 = vmatpush1.bf16.msra.mxu0 %v2038
        %2139 = vmatprep.subr.bf16.mxu0 %v2035
        %2140 = vmatpush1.bf16.msra.mxu0 %v2034
        %2141 = vmatprep.subr.bf16.mxu0 %v2031
        %2142 = vmatpush1.bf16.msra.mxu0 %v2030
        %2143 = vmatprep.subr.bf16.mxu0 %v2027
        %2144 = vmatpush1.bf16.msra.mxu0 %v2026
        %2145 = vmatprep.subr.bf16.mxu0 0
        %2146 = vmatpush2.bf16.msra.mxu0 0
        %2147 = vmatprep.subr.bf16.mxu0 0
        %2148 = vmatpush2.bf16.msra.mxu0 0
        %2149 = vmatprep.subr.bf16.mxu0 0
        %2150 = vmatpush2.bf16.msra.mxu0 0
        %2151 = vmatprep.subr.bf16.mxu0 0
        %2152 = vmatpush2.bf16.msra.mxu0 0
        %2153 = vmatprep.subr.bf16.mxu0 0
        %2154 = vmatpush2.bf16.msra.mxu0 0
        %2155 = vmatprep.subr.bf16.mxu0 0
        %2156 = vmatpush2.bf16.msra.mxu0 0
        %2157 = vmatprep.subr.bf16.mxu0 0
        %2158 = vmatpush2.bf16.msra.mxu0 0
        %2159 = vmatprep.subr.bf16.mxu0 0
        %2160 = vmatpush2.bf16.msra.mxu0 0
        %2161 = vmatprep.mubr.bf16.mxu0 0
        %2162 = vmatmul.mubr.bf16.gmra.mxu0 %v1881
        %v2163 = vpop.f32.mrf.mxu0
        %v2164 = vadd.f32 0.0, %v2163
        %v2165 = vpop.f32.mrf.mxu0
        %v2166 = vadd.f32 0.0, %v2165
        %v2167 = vpop.f32.mrf.mxu0
        %v2168 = vpop.f32.mrf.mxu0
        %2169 = vdwg.mxu0
        %v2170 = vadd.f32 %v1892, %v2123
        %v2171 = vadd.f32 %v1893, %v2125
        %v2172 = vadd.f32 %v1894, %v2164
        %v2173 = vadd.f32 %v1895, %v2166
        %v2174 = vmul.f32 %v2170, 0.5
        %v2175 = vtanh.pop %v2174
        %v2176 = vmul.f32 %v2175, 0.5
        %v2177 = vadd.f32 %v2176, 0.5
        %v2178 = vmul.f32 %v2171, 0.5
        %v2179 = vtanh.pop %v2178
        %v2180 = vmul.f32 %v2179, 0.5
        %v2181 = vadd.f32 %v2180, 0.5
        %v2182 = vtanh.pop %v2172
        %v2183 = vmul.f32 %v2173, 0.5
        %v2184 = vtanh.pop %v2183
        %v2185 = vmul.f32 %v2184, 0.5
        %v2186 = vadd.f32 %v2185, 0.5
        %v2187 = vmul.f32 %v2181, %v1878
        %v2188 = vmul.f32 %v2177, %v2182
        %v2189 = vadd.f32 %v2187, %v2188
        %v2190 = vtanh.pop %v2189
        %v2191 = vmul.f32 %v2186, %v2190
        %v2192 = vpack.c.bf16 %v2191, %v2191
        %s2193 = smul.addr %s1887, 4
        %s2194 = scalar_lea.vmem %s274, %s2193 [#allocation5]
        %2195 = vst [vmem:[%s2194] sm:$0xf] %v2192
        %s2196 = ssub.s32 4, %s19
        %s2197 = smul.u32 %s2196, 8
        %s2198 = sshra.s32 %s2197, 3
        %s2199 = sand.u32 %s2197, 7
        %s2200 = smul.u32 %s2198, 4
        %s2201 = smul.addr %s2200, 8
        %s2202 = scalar_lea.vmem [#allocation4], %s2201
        %v2203 = vld [vmem:[%s2202] sm:$0xff]
        %v2204 = vld [vmem:[%s2202 + $0x8] sm:$0xff]
        %v2205 = vld [vmem:[%s2202 + $0x10] sm:$0xff]
        %v2206 = vld [vmem:[%s2202 + $0x18] sm:$0xff]
        %v2207 = vld [vmem:[%s299] sm:$0xff]
        %v2208 = vld [vmem:[%s299 + $0x8] sm:$0xff]
        %v2209 = vld [vmem:[%s299 + $0x10] sm:$0xff]
        %v2210 = vld [vmem:[%s299 + $0x18] sm:$0xff]
        %v2211 = vld [vmem:[%s299 + $0x20] sm:$0xff]
        %v2212 = vld [vmem:[%s299 + $0x28] sm:$0xff]
        %v2213 = vld [vmem:[%s299 + $0x30] sm:$0xff]
        %v2214 = vld [vmem:[%s299 + $0x38] sm:$0xff]
        %v2215 = vld [vmem:[%s299 + $0x40] sm:$0xff]
        %v2216 = vld [vmem:[%s299 + $0x48] sm:$0xff]
        %v2217 = vld [vmem:[%s299 + $0x50] sm:$0xff]
        %v2218 = vld [vmem:[%s299 + $0x58] sm:$0xff]
        %v2219 = vld [vmem:[%s299 + $0x60] sm:$0xff]
        %v2220 = vld [vmem:[%s299 + $0x68] sm:$0xff]
        %v2221 = vld [vmem:[%s299 + $0x70] sm:$0xff]
        %v2222 = vld [vmem:[%s299 + $0x78] sm:$0xff]
        %v2223 = vld [vmem:[%s299 + $0x80] sm:$0xff]
        %v2224 = vld [vmem:[%s299 + $0x88] sm:$0xff]
        %v2225 = vld [vmem:[%s299 + $0x90] sm:$0xff]
        %v2226 = vld [vmem:[%s299 + $0x98] sm:$0xff]
        %v2227 = vld [vmem:[%s299 + $0xa0] sm:$0xff]
        %v2228 = vld [vmem:[%s299 + $0xa8] sm:$0xff]
        %v2229 = vld [vmem:[%s299 + $0xb0] sm:$0xff]
        %v2230 = vld [vmem:[%s299 + $0xb8] sm:$0xff]
        %v2231 = vld [vmem:[%s299 + $0xc0] sm:$0xff]
        %v2232 = vld [vmem:[%s299 + $0xc8] sm:$0xff]
        %v2233 = vld [vmem:[%s299 + $0xd0] sm:$0xff]
        %v2234 = vld [vmem:[%s299 + $0xd8] sm:$0xff]
        %v2235 = vld [vmem:[%s299 + $0xe0] sm:$0xff]
        %v2236 = vld [vmem:[%s299 + $0xe8] sm:$0xff]
        %v2237 = vld [vmem:[%s299 + $0xf0] sm:$0xff]
        %v2238 = vld [vmem:[%s299 + $0xf8] sm:$0xff]
        %v2271 = vunpack.c.l.b16 %v2207
        %v2272 = vunpack.c.h.b16 %v2207
        %v2273 = vunpack.c.l.b16 %v2208
        %v2274 = vunpack.c.h.b16 %v2208
        %v2275 = vunpack.c.l.b16 %v2209
        %v2276 = vunpack.c.h.b16 %v2209
        %v2277 = vunpack.c.l.b16 %v2210
        %v2278 = vunpack.c.h.b16 %v2210
        %v2279 = vunpack.c.l.b16 %v2211
        %v2280 = vunpack.c.h.b16 %v2211
        %v2281 = vunpack.c.l.b16 %v2212
        %v2282 = vunpack.c.h.b16 %v2212
        %v2283 = vunpack.c.l.b16 %v2213
        %v2284 = vunpack.c.h.b16 %v2213
        %v2285 = vunpack.c.l.b16 %v2214
        %v2286 = vunpack.c.h.b16 %v2214
        %v2287 = vunpack.c.l.b16 %v2215
        %v2288 = vunpack.c.h.b16 %v2215
        %v2289 = vunpack.c.l.b16 %v2216
        %v2290 = vunpack.c.h.b16 %v2216
        %v2291 = vunpack.c.l.b16 %v2217
        %v2292 = vunpack.c.h.b16 %v2217
        %v2293 = vunpack.c.l.b16 %v2218
        %v2294 = vunpack.c.h.b16 %v2218
        %v2295 = vunpack.c.l.b16 %v2219
        %v2296 = vunpack.c.h.b16 %v2219
        %v2297 = vunpack.c.l.b16 %v2220
        %v2298 = vunpack.c.h.b16 %v2220
        %v2299 = vunpack.c.l.b16 %v2221
        %v2300 = vunpack.c.h.b16 %v2221
        %v2301 = vunpack.c.l.b16 %v2222
        %v2302 = vunpack.c.h.b16 %v2222
        %v2303 = vunpack.c.l.b16 %v2223
        %v2304 = vunpack.c.h.b16 %v2223
        %v2305 = vunpack.c.l.b16 %v2224
        %v2306 = vunpack.c.h.b16 %v2224
        %v2307 = vunpack.c.l.b16 %v2225
        %v2308 = vunpack.c.h.b16 %v2225
        %v2309 = vunpack.c.l.b16 %v2226
        %v2310 = vunpack.c.h.b16 %v2226
        %v2311 = vunpack.c.l.b16 %v2227
        %v2312 = vunpack.c.h.b16 %v2227
        %v2313 = vunpack.c.l.b16 %v2228
        %v2314 = vunpack.c.h.b16 %v2228
        %v2315 = vunpack.c.l.b16 %v2229
        %v2316 = vunpack.c.h.b16 %v2229
        %v2317 = vunpack.c.l.b16 %v2230
        %v2318 = vunpack.c.h.b16 %v2230
        %v2319 = vunpack.c.l.b16 %v2231
        %v2320 = vunpack.c.h.b16 %v2231
        %v2321 = vunpack.c.l.b16 %v2232
        %v2322 = vunpack.c.h.b16 %v2232
        %v2323 = vunpack.c.l.b16 %v2233
        %v2324 = vunpack.c.h.b16 %v2233
        %v2325 = vunpack.c.l.b16 %v2234
        %v2326 = vunpack.c.h.b16 %v2234
        %v2327 = vunpack.c.l.b16 %v2235
        %v2328 = vunpack.c.h.b16 %v2235
        %v2329 = vunpack.c.l.b16 %v2236
        %v2330 = vunpack.c.h.b16 %v2236
        %v2331 = vunpack.c.l.b16 %v2237
        %v2332 = vunpack.c.h.b16 %v2237
        %v2333 = vunpack.c.l.b16 %v2238
        %v2334 = vunpack.c.h.b16 %v2238
        %v2335 = vpack.c.b16 %v2275, %v2271
        %v2336 = vpack.c.b16 %v2276, %v2272
        %v2337 = vpack.c.b16 %v2277, %v2273
        %v2338 = vpack.c.b16 %v2278, %v2274
        %v2339 = vpack.c.b16 %v2283, %v2279
        %v2340 = vpack.c.b16 %v2284, %v2280
        %v2341 = vpack.c.b16 %v2285, %v2281
        %v2342 = vpack.c.b16 %v2286, %v2282
        %v2343 = vpack.c.b16 %v2291, %v2287
        %v2344 = vpack.c.b16 %v2292, %v2288
        %v2345 = vpack.c.b16 %v2293, %v2289
        %v2346 = vpack.c.b16 %v2294, %v2290
        %v2347 = vpack.c.b16 %v2299, %v2295
        %v2348 = vpack.c.b16 %v2300, %v2296
        %v2349 = vpack.c.b16 %v2301, %v2297
        %v2350 = vpack.c.b16 %v2302, %v2298
        %v2351 = vpack.c.b16 %v2307, %v2303
        %v2352 = vpack.c.b16 %v2308, %v2304
        %v2353 = vpack.c.b16 %v2309, %v2305
        %v2354 = vpack.c.b16 %v2310, %v2306
        %v2355 = vpack.c.b16 %v2315, %v2311
        %v2356 = vpack.c.b16 %v2316, %v2312
        %v2357 = vpack.c.b16 %v2317, %v2313
        %v2358 = vpack.c.b16 %v2318, %v2314
        %v2359 = vpack.c.b16 %v2323, %v2319
        %v2360 = vpack.c.b16 %v2324, %v2320
        %v2361 = vpack.c.b16 %v2325, %v2321
        %v2362 = vpack.c.b16 %v2326, %v2322
        %v2363 = vpack.c.b16 %v2331, %v2327
        %v2364 = vpack.c.b16 %v2332, %v2328
        %v2365 = vpack.c.b16 %v2333, %v2329
        %v2366 = vpack.c.b16 %v2334, %v2330
        %2399 = vmatprep.subr.bf16.mxu0 %v2364
        %2400 = vmatpush1.bf16.msra.mxu0 %v2363
        %2401 = vmatprep.subr.bf16.mxu0 %v2360
        %2402 = vmatpush1.bf16.msra.mxu0 %v2359
        %2403 = vmatprep.subr.bf16.mxu0 %v2356
        %2404 = vmatpush1.bf16.msra.mxu0 %v2355
        %2405 = vmatprep.subr.bf16.mxu0 %v2352
        %2406 = vmatpush1.bf16.msra.mxu0 %v2351
        %2407 = vmatprep.subr.bf16.mxu0 %v2348
        %2408 = vmatpush1.bf16.msra.mxu0 %v2347
        %2409 = vmatprep.subr.bf16.mxu0 %v2344
        %2410 = vmatpush1.bf16.msra.mxu0 %v2343
        %2411 = vmatprep.subr.bf16.mxu0 %v2340
        %2412 = vmatpush1.bf16.msra.mxu0 %v2339
        %2413 = vmatprep.subr.bf16.mxu0 %v2336
        %2414 = vmatpush1.bf16.msra.mxu0 %v2335
        %2415 = vmatprep.subr.bf16.mxu0 0
        %2416 = vmatpush2.bf16.msra.mxu0 0
        %2417 = vmatprep.subr.bf16.mxu0 0
        %2418 = vmatpush2.bf16.msra.mxu0 0
        %2419 = vmatprep.subr.bf16.mxu0 0
        %2420 = vmatpush2.bf16.msra.mxu0 0
        %2421 = vmatprep.subr.bf16.mxu0 0
        %2422 = vmatpush2.bf16.msra.mxu0 0
        %2423 = vmatprep.subr.bf16.mxu0 0
        %2424 = vmatpush2.bf16.msra.mxu0 0
        %2425 = vmatprep.subr.bf16.mxu0 0
        %2426 = vmatpush2.bf16.msra.mxu0 0
        %2427 = vmatprep.subr.bf16.mxu0 0
        %2428 = vmatpush2.bf16.msra.mxu0 0
        %2429 = vmatprep.subr.bf16.mxu0 0
        %2430 = vmatpush2.bf16.msra.mxu0 0
        %2431 = vmatprep.mubr.bf16.mxu0 0
        %2432 = vmatmul.mubr.bf16.gmra.mxu0 %v2192
        %v2433 = vpop.f32.mrf.mxu0
        %v2434 = vadd.f32 0.0, %v2433
        %v2435 = vpop.f32.mrf.mxu0
        %v2436 = vadd.f32 0.0, %v2435
        %v2437 = vpop.f32.mrf.mxu0
        %v2438 = vpop.f32.mrf.mxu0
        %2439 = vdwg.mxu0
        %2440 = vmatprep.subr.bf16.mxu0 %v2366
        %2441 = vmatpush1.bf16.msra.mxu0 %v2365
        %2442 = vmatprep.subr.bf16.mxu0 %v2362
        %2443 = vmatpush1.bf16.msra.mxu0 %v2361
        %2444 = vmatprep.subr.bf16.mxu0 %v2358
        %2445 = vmatpush1.bf16.msra.mxu0 %v2357
        %2446 = vmatprep.subr.bf16.mxu0 %v2354
        %2447 = vmatpush1.bf16.msra.mxu0 %v2353
        %2448 = vmatprep.subr.bf16.mxu0 %v2350
        %2449 = vmatpush1.bf16.msra.mxu0 %v2349
        %2450 = vmatprep.subr.bf16.mxu0 %v2346
        %2451 = vmatpush1.bf16.msra.mxu0 %v2345
        %2452 = vmatprep.subr.bf16.mxu0 %v2342
        %2453 = vmatpush1.bf16.msra.mxu0 %v2341
        %2454 = vmatprep.subr.bf16.mxu0 %v2338
        %2455 = vmatpush1.bf16.msra.mxu0 %v2337
        %2456 = vmatprep.subr.bf16.mxu0 0
        %2457 = vmatpush2.bf16.msra.mxu0 0
        %2458 = vmatprep.subr.bf16.mxu0 0
        %2459 = vmatpush2.bf16.msra.mxu0 0
        %2460 = vmatprep.subr.bf16.mxu0 0
        %2461 = vmatpush2.bf16.msra.mxu0 0
        %2462 = vmatprep.subr.bf16.mxu0 0
        %2463 = vmatpush2.bf16.msra.mxu0 0
        %2464 = vmatprep.subr.bf16.mxu0 0
        %2465 = vmatpush2.bf16.msra.mxu0 0
        %2466 = vmatprep.subr.bf16.mxu0 0
        %2467 = vmatpush2.bf16.msra.mxu0 0
        %2468 = vmatprep.subr.bf16.mxu0 0
        %2469 = vmatpush2.bf16.msra.mxu0 0
        %2470 = vmatprep.subr.bf16.mxu0 0
        %2471 = vmatpush2.bf16.msra.mxu0 0
        %2472 = vmatprep.mubr.bf16.mxu0 0
        %2473 = vmatmul.mubr.bf16.gmra.mxu0 %v2192
        %v2474 = vpop.f32.mrf.mxu0
        %v2475 = vadd.f32 0.0, %v2474
        %v2476 = vpop.f32.mrf.mxu0
        %v2477 = vadd.f32 0.0, %v2476
        %v2478 = vpop.f32.mrf.mxu0
        %v2479 = vpop.f32.mrf.mxu0
        %2480 = vdwg.mxu0
        %v2481 = vadd.f32 %v2203, %v2434
        %v2482 = vadd.f32 %v2204, %v2436
        %v2483 = vadd.f32 %v2205, %v2475
        %v2484 = vadd.f32 %v2206, %v2477
        %v2485 = vmul.f32 %v2481, 0.5
        %v2486 = vtanh.pop %v2485
        %v2487 = vmul.f32 %v2486, 0.5
        %v2488 = vadd.f32 %v2487, 0.5
        %v2489 = vmul.f32 %v2482, 0.5
        %v2490 = vtanh.pop %v2489
        %v2491 = vmul.f32 %v2490, 0.5
        %v2492 = vadd.f32 %v2491, 0.5
        %v2493 = vtanh.pop %v2483
        %v2494 = vmul.f32 %v2484, 0.5
        %v2495 = vtanh.pop %v2494
        %v2496 = vmul.f32 %v2495, 0.5
        %v2497 = vadd.f32 %v2496, 0.5
        %v2498 = vmul.f32 %v2492, %v2189
        %v2499 = vmul.f32 %v2488, %v2493
        %v2500 = vadd.f32 %v2498, %v2499
        %v2501 = vtanh.pop %v2500
        %v2502 = vmul.f32 %v2497, %v2501
        %v2503 = vpack.c.bf16 %v2502, %v2502
        %s2504 = smul.addr %s2198, 4
        %s2505 = scalar_lea.vmem %s274, %s2504 [#allocation5]
        %2506 = vst [vmem:[%s2505] sm:$0xf] %v2503
        %s2507 = smul.u32 %s19, 4294967293
        %s2508 = sadd.s32 %s2507, 5
        %s2509 = smul.u32 %s2508, 8
        %s2510 = sshra.s32 %s2509, 3
        %s2511 = sand.u32 %s2509, 7
        %s2512 = smul.u32 %s2510, 4
        %s2513 = smul.addr %s2512, 8
        %s2514 = scalar_lea.vmem [#allocation4], %s2513
        %v2515 = vld [vmem:[%s2514] sm:$0xff]
        %v2516 = vld [vmem:[%s2514 + $0x8] sm:$0xff]
        %v2517 = vld [vmem:[%s2514 + $0x10] sm:$0xff]
        %v2518 = vld [vmem:[%s2514 + $0x18] sm:$0xff]
        %v2519 = vld [vmem:[%s299] sm:$0xff]
        %v2520 = vld [vmem:[%s299 + $0x8] sm:$0xff]
        %v2521 = vld [vmem:[%s299 + $0x10] sm:$0xff]
        %v2522 = vld [vmem:[%s299 + $0x18] sm:$0xff]
        %v2523 = vld [vmem:[%s299 + $0x20] sm:$0xff]
        %v2524 = vld [vmem:[%s299 + $0x28] sm:$0xff]
        %v2525 = vld [vmem:[%s299 + $0x30] sm:$0xff]
        %v2526 = vld [vmem:[%s299 + $0x38] sm:$0xff]
        %v2527 = vld [vmem:[%s299 + $0x40] sm:$0xff]
        %v2528 = vld [vmem:[%s299 + $0x48] sm:$0xff]
        %v2529 = vld [vmem:[%s299 + $0x50] sm:$0xff]
        %v2530 = vld [vmem:[%s299 + $0x58] sm:$0xff]
        %v2531 = vld [vmem:[%s299 + $0x60] sm:$0xff]
        %v2532 = vld [vmem:[%s299 + $0x68] sm:$0xff]
        %v2533 = vld [vmem:[%s299 + $0x70] sm:$0xff]
        %v2534 = vld [vmem:[%s299 + $0x78] sm:$0xff]
        %v2535 = vld [vmem:[%s299 + $0x80] sm:$0xff]
        %v2536 = vld [vmem:[%s299 + $0x88] sm:$0xff]
        %v2537 = vld [vmem:[%s299 + $0x90] sm:$0xff]
        %v2538 = vld [vmem:[%s299 + $0x98] sm:$0xff]
        %v2539 = vld [vmem:[%s299 + $0xa0] sm:$0xff]
        %v2540 = vld [vmem:[%s299 + $0xa8] sm:$0xff]
        %v2541 = vld [vmem:[%s299 + $0xb0] sm:$0xff]
        %v2542 = vld [vmem:[%s299 + $0xb8] sm:$0xff]
        %v2543 = vld [vmem:[%s299 + $0xc0] sm:$0xff]
        %v2544 = vld [vmem:[%s299 + $0xc8] sm:$0xff]
        %v2545 = vld [vmem:[%s299 + $0xd0] sm:$0xff]
        %v2546 = vld [vmem:[%s299 + $0xd8] sm:$0xff]
        %v2547 = vld [vmem:[%s299 + $0xe0] sm:$0xff]
        %v2548 = vld [vmem:[%s299 + $0xe8] sm:$0xff]
        %v2549 = vld [vmem:[%s299 + $0xf0] sm:$0xff]
        %v2550 = vld [vmem:[%s299 + $0xf8] sm:$0xff]
        %v2583 = vunpack.c.l.b16 %v2519
        %v2584 = vunpack.c.h.b16 %v2519
        %v2585 = vunpack.c.l.b16 %v2520
        %v2586 = vunpack.c.h.b16 %v2520
        %v2587 = vunpack.c.l.b16 %v2521
        %v2588 = vunpack.c.h.b16 %v2521
        %v2589 = vunpack.c.l.b16 %v2522
        %v2590 = vunpack.c.h.b16 %v2522
        %v2591 = vunpack.c.l.b16 %v2523
        %v2592 = vunpack.c.h.b16 %v2523
        %v2593 = vunpack.c.l.b16 %v2524
        %v2594 = vunpack.c.h.b16 %v2524
        %v2595 = vunpack.c.l.b16 %v2525
        %v2596 = vunpack.c.h.b16 %v2525
        %v2597 = vunpack.c.l.b16 %v2526
        %v2598 = vunpack.c.h.b16 %v2526
        %v2599 = vunpack.c.l.b16 %v2527
        %v2600 = vunpack.c.h.b16 %v2527
        %v2601 = vunpack.c.l.b16 %v2528
        %v2602 = vunpack.c.h.b16 %v2528
        %v2603 = vunpack.c.l.b16 %v2529
        %v2604 = vunpack.c.h.b16 %v2529
        %v2605 = vunpack.c.l.b16 %v2530
        %v2606 = vunpack.c.h.b16 %v2530
        %v2607 = vunpack.c.l.b16 %v2531
        %v2608 = vunpack.c.h.b16 %v2531
        %v2609 = vunpack.c.l.b16 %v2532
        %v2610 = vunpack.c.h.b16 %v2532
        %v2611 = vunpack.c.l.b16 %v2533
        %v2612 = vunpack.c.h.b16 %v2533
        %v2613 = vunpack.c.l.b16 %v2534
        %v2614 = vunpack.c.h.b16 %v2534
        %v2615 = vunpack.c.l.b16 %v2535
        %v2616 = vunpack.c.h.b16 %v2535
        %v2617 = vunpack.c.l.b16 %v2536
        %v2618 = vunpack.c.h.b16 %v2536
        %v2619 = vunpack.c.l.b16 %v2537
        %v2620 = vunpack.c.h.b16 %v2537
        %v2621 = vunpack.c.l.b16 %v2538
        %v2622 = vunpack.c.h.b16 %v2538
        %v2623 = vunpack.c.l.b16 %v2539
        %v2624 = vunpack.c.h.b16 %v2539
        %v2625 = vunpack.c.l.b16 %v2540
        %v2626 = vunpack.c.h.b16 %v2540
        %v2627 = vunpack.c.l.b16 %v2541
        %v2628 = vunpack.c.h.b16 %v2541
        %v2629 = vunpack.c.l.b16 %v2542
        %v2630 = vunpack.c.h.b16 %v2542
        %v2631 = vunpack.c.l.b16 %v2543
        %v2632 = vunpack.c.h.b16 %v2543
        %v2633 = vunpack.c.l.b16 %v2544
        %v2634 = vunpack.c.h.b16 %v2544
        %v2635 = vunpack.c.l.b16 %v2545
        %v2636 = vunpack.c.h.b16 %v2545
        %v2637 = vunpack.c.l.b16 %v2546
        %v2638 = vunpack.c.h.b16 %v2546
        %v2639 = vunpack.c.l.b16 %v2547
        %v2640 = vunpack.c.h.b16 %v2547
        %v2641 = vunpack.c.l.b16 %v2548
        %v2642 = vunpack.c.h.b16 %v2548
        %v2643 = vunpack.c.l.b16 %v2549
        %v2644 = vunpack.c.h.b16 %v2549
        %v2645 = vunpack.c.l.b16 %v2550
        %v2646 = vunpack.c.h.b16 %v2550
        %v2647 = vpack.c.b16 %v2587, %v2583
        %v2648 = vpack.c.b16 %v2588, %v2584
        %v2649 = vpack.c.b16 %v2589, %v2585
        %v2650 = vpack.c.b16 %v2590, %v2586
        %v2651 = vpack.c.b16 %v2595, %v2591
        %v2652 = vpack.c.b16 %v2596, %v2592
        %v2653 = vpack.c.b16 %v2597, %v2593
        %v2654 = vpack.c.b16 %v2598, %v2594
        %v2655 = vpack.c.b16 %v2603, %v2599
        %v2656 = vpack.c.b16 %v2604, %v2600
        %v2657 = vpack.c.b16 %v2605, %v2601
        %v2658 = vpack.c.b16 %v2606, %v2602
        %v2659 = vpack.c.b16 %v2611, %v2607
        %v2660 = vpack.c.b16 %v2612, %v2608
        %v2661 = vpack.c.b16 %v2613, %v2609
        %v2662 = vpack.c.b16 %v2614, %v2610
        %v2663 = vpack.c.b16 %v2619, %v2615
        %v2664 = vpack.c.b16 %v2620, %v2616
        %v2665 = vpack.c.b16 %v2621, %v2617
        %v2666 = vpack.c.b16 %v2622, %v2618
        %v2667 = vpack.c.b16 %v2627, %v2623
        %v2668 = vpack.c.b16 %v2628, %v2624
        %v2669 = vpack.c.b16 %v2629, %v2625
        %v2670 = vpack.c.b16 %v2630, %v2626
        %v2671 = vpack.c.b16 %v2635, %v2631
        %v2672 = vpack.c.b16 %v2636, %v2632
        %v2673 = vpack.c.b16 %v2637, %v2633
        %v2674 = vpack.c.b16 %v2638, %v2634
        %v2675 = vpack.c.b16 %v2643, %v2639
        %v2676 = vpack.c.b16 %v2644, %v2640
        %v2677 = vpack.c.b16 %v2645, %v2641
        %v2678 = vpack.c.b16 %v2646, %v2642
        %2711 = vmatprep.subr.bf16.mxu0 %v2676
        %2712 = vmatpush1.bf16.msra.mxu0 %v2675
        %2713 = vmatprep.subr.bf16.mxu0 %v2672
        %2714 = vmatpush1.bf16.msra.mxu0 %v2671
        %2715 = vmatprep.subr.bf16.mxu0 %v2668
        %2716 = vmatpush1.bf16.msra.mxu0 %v2667
        %2717 = vmatprep.subr.bf16.mxu0 %v2664
        %2718 = vmatpush1.bf16.msra.mxu0 %v2663
        %2719 = vmatprep.subr.bf16.mxu0 %v2660
        %2720 = vmatpush1.bf16.msra.mxu0 %v2659
        %2721 = vmatprep.subr.bf16.mxu0 %v2656
        %2722 = vmatpush1.bf16.msra.mxu0 %v2655
        %2723 = vmatprep.subr.bf16.mxu0 %v2652
        %2724 = vmatpush1.bf16.msra.mxu0 %v2651
        %2725 = vmatprep.subr.bf16.mxu0 %v2648
        %2726 = vmatpush1.bf16.msra.mxu0 %v2647
        %2727 = vmatprep.subr.bf16.mxu0 0
        %2728 = vmatpush2.bf16.msra.mxu0 0
        %2729 = vmatprep.subr.bf16.mxu0 0
        %2730 = vmatpush2.bf16.msra.mxu0 0
        %2731 = vmatprep.subr.bf16.mxu0 0
        %2732 = vmatpush2.bf16.msra.mxu0 0
        %2733 = vmatprep.subr.bf16.mxu0 0
        %2734 = vmatpush2.bf16.msra.mxu0 0
        %2735 = vmatprep.subr.bf16.mxu0 0
        %2736 = vmatpush2.bf16.msra.mxu0 0
        %2737 = vmatprep.subr.bf16.mxu0 0
        %2738 = vmatpush2.bf16.msra.mxu0 0
        %2739 = vmatprep.subr.bf16.mxu0 0
        %2740 = vmatpush2.bf16.msra.mxu0 0
        %2741 = vmatprep.subr.bf16.mxu0 0
        %2742 = vmatpush2.bf16.msra.mxu0 0
        %2743 = vmatprep.mubr.bf16.mxu0 0
        %2744 = vmatmul.mubr.bf16.gmra.mxu0 %v2503
        %v2745 = vpop.f32.mrf.mxu0
        %v2746 = vadd.f32 0.0, %v2745
        %v2747 = vpop.f32.mrf.mxu0
        %v2748 = vadd.f32 0.0, %v2747
        %v2749 = vpop.f32.mrf.mxu0
        %v2750 = vpop.f32.mrf.mxu0
        %2751 = vdwg.mxu0
        %2752 = vmatprep.subr.bf16.mxu0 %v2678
        %2753 = vmatpush1.bf16.msra.mxu0 %v2677
        %2754 = vmatprep.subr.bf16.mxu0 %v2674
        %2755 = vmatpush1.bf16.msra.mxu0 %v2673
        %2756 = vmatprep.subr.bf16.mxu0 %v2670
        %2757 = vmatpush1.bf16.msra.mxu0 %v2669
        %2758 = vmatprep.subr.bf16.mxu0 %v2666
        %2759 = vmatpush1.bf16.msra.mxu0 %v2665
        %2760 = vmatprep.subr.bf16.mxu0 %v2662
        %2761 = vmatpush1.bf16.msra.mxu0 %v2661
        %2762 = vmatprep.subr.bf16.mxu0 %v2658
        %2763 = vmatpush1.bf16.msra.mxu0 %v2657
        %2764 = vmatprep.subr.bf16.mxu0 %v2654
        %2765 = vmatpush1.bf16.msra.mxu0 %v2653
        %2766 = vmatprep.subr.bf16.mxu0 %v2650
        %2767 = vmatpush1.bf16.msra.mxu0 %v2649
        %2768 = vmatprep.subr.bf16.mxu0 0
        %2769 = vmatpush2.bf16.msra.mxu0 0
        %2770 = vmatprep.subr.bf16.mxu0 0
        %2771 = vmatpush2.bf16.msra.mxu0 0
        %2772 = vmatprep.subr.bf16.mxu0 0
        %2773 = vmatpush2.bf16.msra.mxu0 0
        %2774 = vmatprep.subr.bf16.mxu0 0
        %2775 = vmatpush2.bf16.msra.mxu0 0
        %2776 = vmatprep.subr.bf16.mxu0 0
        %2777 = vmatpush2.bf16.msra.mxu0 0
        %2778 = vmatprep.subr.bf16.mxu0 0
        %2779 = vmatpush2.bf16.msra.mxu0 0
        %2780 = vmatprep.subr.bf16.mxu0 0
        %2781 = vmatpush2.bf16.msra.mxu0 0
        %2782 = vmatprep.subr.bf16.mxu0 0
        %2783 = vmatpush2.bf16.msra.mxu0 0
        %2784 = vmatprep.mubr.bf16.mxu0 0
        %2785 = vmatmul.mubr.bf16.gmra.mxu0 %v2503
        %v2786 = vpop.f32.mrf.mxu0
        %v2787 = vadd.f32 0.0, %v2786
        %v2788 = vpop.f32.mrf.mxu0
        %v2789 = vadd.f32 0.0, %v2788
        %v2790 = vpop.f32.mrf.mxu0
        %v2791 = vpop.f32.mrf.mxu0
        %2792 = vdwg.mxu0
        %v2793 = vadd.f32 %v2515, %v2746
        %v2794 = vadd.f32 %v2516, %v2748
        %v2795 = vadd.f32 %v2517, %v2787
        %v2796 = vadd.f32 %v2518, %v2789
        %v2797 = vmul.f32 %v2793, 0.5
        %v2798 = vtanh.pop %v2797
        %v2799 = vmul.f32 %v2798, 0.5
        %v2800 = vadd.f32 %v2799, 0.5
        %v2801 = vmul.f32 %v2794, 0.5
        %v2802 = vtanh.pop %v2801
        %v2803 = vmul.f32 %v2802, 0.5
        %v2804 = vadd.f32 %v2803, 0.5
        %v2805 = vtanh.pop %v2795
        %v2806 = vmul.f32 %v2796, 0.5
        %v2807 = vtanh.pop %v2806
        %v2808 = vmul.f32 %v2807, 0.5
        %v2809 = vadd.f32 %v2808, 0.5
        %v2810 = vmul.f32 %v2804, %v2500
        %v2811 = vmul.f32 %v2800, %v2805
        %v2812 = vadd.f32 %v2810, %v2811
        %v2813 = vtanh.pop %v2812
        %v2814 = vmul.f32 %v2809, %v2813
        %v2815 = vpack.c.bf16 %v2814, %v2814
        %s2816 = smul.addr %s2510, 4
        %s2817 = scalar_lea.vmem %s274, %s2816 [#allocation5]
        %2818 = vst [vmem:[%s2817] sm:$0xf] %v2815
        %s2819 = smul.u32 %s19, 4294967291
        %s2820 = sadd.s32 %s2819, 6
        %s2821 = smul.u32 %s2820, 8
        %s2822 = sshra.s32 %s2821, 3
        %s2823 = sand.u32 %s2821, 7
        %s2824 = smul.u32 %s2822, 4
        %s2825 = smul.addr %s2824, 8
        %s2826 = scalar_lea.vmem [#allocation4], %s2825
        %v2827 = vld [vmem:[%s2826] sm:$0xff]
        %v2828 = vld [vmem:[%s2826 + $0x8] sm:$0xff]
        %v2829 = vld [vmem:[%s2826 + $0x10] sm:$0xff]
        %v2830 = vld [vmem:[%s2826 + $0x18] sm:$0xff]
        %v2831 = vld [vmem:[%s299] sm:$0xff]
        %v2832 = vld [vmem:[%s299 + $0x8] sm:$0xff]
        %v2833 = vld [vmem:[%s299 + $0x10] sm:$0xff]
        %v2834 = vld [vmem:[%s299 + $0x18] sm:$0xff]
        %v2835 = vld [vmem:[%s299 + $0x20] sm:$0xff]
        %v2836 = vld [vmem:[%s299 + $0x28] sm:$0xff]
        %v2837 = vld [vmem:[%s299 + $0x30] sm:$0xff]
        %v2838 = vld [vmem:[%s299 + $0x38] sm:$0xff]
        %v2839 = vld [vmem:[%s299 + $0x40] sm:$0xff]
        %v2840 = vld [vmem:[%s299 + $0x48] sm:$0xff]
        %v2841 = vld [vmem:[%s299 + $0x50] sm:$0xff]
        %v2842 = vld [vmem:[%s299 + $0x58] sm:$0xff]
        %v2843 = vld [vmem:[%s299 + $0x60] sm:$0xff]
        %v2844 = vld [vmem:[%s299 + $0x68] sm:$0xff]
        %v2845 = vld [vmem:[%s299 + $0x70] sm:$0xff]
        %v2846 = vld [vmem:[%s299 + $0x78] sm:$0xff]
        %v2847 = vld [vmem:[%s299 + $0x80] sm:$0xff]
        %v2848 = vld [vmem:[%s299 + $0x88] sm:$0xff]
        %v2849 = vld [vmem:[%s299 + $0x90] sm:$0xff]
        %v2850 = vld [vmem:[%s299 + $0x98] sm:$0xff]
        %v2851 = vld [vmem:[%s299 + $0xa0] sm:$0xff]
        %v2852 = vld [vmem:[%s299 + $0xa8] sm:$0xff]
        %v2853 = vld [vmem:[%s299 + $0xb0] sm:$0xff]
        %v2854 = vld [vmem:[%s299 + $0xb8] sm:$0xff]
        %v2855 = vld [vmem:[%s299 + $0xc0] sm:$0xff]
        %v2856 = vld [vmem:[%s299 + $0xc8] sm:$0xff]
        %v2857 = vld [vmem:[%s299 + $0xd0] sm:$0xff]
        %v2858 = vld [vmem:[%s299 + $0xd8] sm:$0xff]
        %v2859 = vld [vmem:[%s299 + $0xe0] sm:$0xff]
        %v2860 = vld [vmem:[%s299 + $0xe8] sm:$0xff]
        %v2861 = vld [vmem:[%s299 + $0xf0] sm:$0xff]
        %v2862 = vld [vmem:[%s299 + $0xf8] sm:$0xff]
        %v2895 = vunpack.c.l.b16 %v2831
        %v2896 = vunpack.c.h.b16 %v2831
        %v2897 = vunpack.c.l.b16 %v2832
        %v2898 = vunpack.c.h.b16 %v2832
        %v2899 = vunpack.c.l.b16 %v2833
        %v2900 = vunpack.c.h.b16 %v2833
        %v2901 = vunpack.c.l.b16 %v2834
        %v2902 = vunpack.c.h.b16 %v2834
        %v2903 = vunpack.c.l.b16 %v2835
        %v2904 = vunpack.c.h.b16 %v2835
        %v2905 = vunpack.c.l.b16 %v2836
        %v2906 = vunpack.c.h.b16 %v2836
        %v2907 = vunpack.c.l.b16 %v2837
        %v2908 = vunpack.c.h.b16 %v2837
        %v2909 = vunpack.c.l.b16 %v2838
        %v2910 = vunpack.c.h.b16 %v2838
        %v2911 = vunpack.c.l.b16 %v2839
        %v2912 = vunpack.c.h.b16 %v2839
        %v2913 = vunpack.c.l.b16 %v2840
        %v2914 = vunpack.c.h.b16 %v2840
        %v2915 = vunpack.c.l.b16 %v2841
        %v2916 = vunpack.c.h.b16 %v2841
        %v2917 = vunpack.c.l.b16 %v2842
        %v2918 = vunpack.c.h.b16 %v2842
        %v2919 = vunpack.c.l.b16 %v2843
        %v2920 = vunpack.c.h.b16 %v2843
        %v2921 = vunpack.c.l.b16 %v2844
        %v2922 = vunpack.c.h.b16 %v2844
        %v2923 = vunpack.c.l.b16 %v2845
        %v2924 = vunpack.c.h.b16 %v2845
        %v2925 = vunpack.c.l.b16 %v2846
        %v2926 = vunpack.c.h.b16 %v2846
        %v2927 = vunpack.c.l.b16 %v2847
        %v2928 = vunpack.c.h.b16 %v2847
        %v2929 = vunpack.c.l.b16 %v2848
        %v2930 = vunpack.c.h.b16 %v2848
        %v2931 = vunpack.c.l.b16 %v2849
        %v2932 = vunpack.c.h.b16 %v2849
        %v2933 = vunpack.c.l.b16 %v2850
        %v2934 = vunpack.c.h.b16 %v2850
        %v2935 = vunpack.c.l.b16 %v2851
        %v2936 = vunpack.c.h.b16 %v2851
        %v2937 = vunpack.c.l.b16 %v2852
        %v2938 = vunpack.c.h.b16 %v2852
        %v2939 = vunpack.c.l.b16 %v2853
        %v2940 = vunpack.c.h.b16 %v2853
        %v2941 = vunpack.c.l.b16 %v2854
        %v2942 = vunpack.c.h.b16 %v2854
        %v2943 = vunpack.c.l.b16 %v2855
        %v2944 = vunpack.c.h.b16 %v2855
        %v2945 = vunpack.c.l.b16 %v2856
        %v2946 = vunpack.c.h.b16 %v2856
        %v2947 = vunpack.c.l.b16 %v2857
        %v2948 = vunpack.c.h.b16 %v2857
        %v2949 = vunpack.c.l.b16 %v2858
        %v2950 = vunpack.c.h.b16 %v2858
        %v2951 = vunpack.c.l.b16 %v2859
        %v2952 = vunpack.c.h.b16 %v2859
        %v2953 = vunpack.c.l.b16 %v2860
        %v2954 = vunpack.c.h.b16 %v2860
        %v2955 = vunpack.c.l.b16 %v2861
        %v2956 = vunpack.c.h.b16 %v2861
        %v2957 = vunpack.c.l.b16 %v2862
        %v2958 = vunpack.c.h.b16 %v2862
        %v2959 = vpack.c.b16 %v2899, %v2895
        %v2960 = vpack.c.b16 %v2900, %v2896
        %v2961 = vpack.c.b16 %v2901, %v2897
        %v2962 = vpack.c.b16 %v2902, %v2898
        %v2963 = vpack.c.b16 %v2907, %v2903
        %v2964 = vpack.c.b16 %v2908, %v2904
        %v2965 = vpack.c.b16 %v2909, %v2905
        %v2966 = vpack.c.b16 %v2910, %v2906
        %v2967 = vpack.c.b16 %v2915, %v2911
        %v2968 = vpack.c.b16 %v2916, %v2912
        %v2969 = vpack.c.b16 %v2917, %v2913
        %v2970 = vpack.c.b16 %v2918, %v2914
        %v2971 = vpack.c.b16 %v2923, %v2919
        %v2972 = vpack.c.b16 %v2924, %v2920
        %v2973 = vpack.c.b16 %v2925, %v2921
        %v2974 = vpack.c.b16 %v2926, %v2922
        %v2975 = vpack.c.b16 %v2931, %v2927
        %v2976 = vpack.c.b16 %v2932, %v2928
        %v2977 = vpack.c.b16 %v2933, %v2929
        %v2978 = vpack.c.b16 %v2934, %v2930
        %v2979 = vpack.c.b16 %v2939, %v2935
        %v2980 = vpack.c.b16 %v2940, %v2936
        %v2981 = vpack.c.b16 %v2941, %v2937
        %v2982 = vpack.c.b16 %v2942, %v2938
        %v2983 = vpack.c.b16 %v2947, %v2943
        %v2984 = vpack.c.b16 %v2948, %v2944
        %v2985 = vpack.c.b16 %v2949, %v2945
        %v2986 = vpack.c.b16 %v2950, %v2946
        %v2987 = vpack.c.b16 %v2955, %v2951
        %v2988 = vpack.c.b16 %v2956, %v2952
        %v2989 = vpack.c.b16 %v2957, %v2953
        %v2990 = vpack.c.b16 %v2958, %v2954
        %3023 = vmatprep.subr.bf16.mxu0 %v2988
        %3024 = vmatpush1.bf16.msra.mxu0 %v2987
        %3025 = vmatprep.subr.bf16.mxu0 %v2984
        %3026 = vmatpush1.bf16.msra.mxu0 %v2983
        %3027 = vmatprep.subr.bf16.mxu0 %v2980
        %3028 = vmatpush1.bf16.msra.mxu0 %v2979
        %3029 = vmatprep.subr.bf16.mxu0 %v2976
        %3030 = vmatpush1.bf16.msra.mxu0 %v2975
        %3031 = vmatprep.subr.bf16.mxu0 %v2972
        %3032 = vmatpush1.bf16.msra.mxu0 %v2971
        %3033 = vmatprep.subr.bf16.mxu0 %v2968
        %3034 = vmatpush1.bf16.msra.mxu0 %v2967
        %3035 = vmatprep.subr.bf16.mxu0 %v2964
        %3036 = vmatpush1.bf16.msra.mxu0 %v2963
        %3037 = vmatprep.subr.bf16.mxu0 %v2960
        %3038 = vmatpush1.bf16.msra.mxu0 %v2959
        %3039 = vmatprep.subr.bf16.mxu0 0
        %3040 = vmatpush2.bf16.msra.mxu0 0
        %3041 = vmatprep.subr.bf16.mxu0 0
        %3042 = vmatpush2.bf16.msra.mxu0 0
        %3043 = vmatprep.subr.bf16.mxu0 0
        %3044 = vmatpush2.bf16.msra.mxu0 0
        %3045 = vmatprep.subr.bf16.mxu0 0
        %3046 = vmatpush2.bf16.msra.mxu0 0
        %3047 = vmatprep.subr.bf16.mxu0 0
        %3048 = vmatpush2.bf16.msra.mxu0 0
        %3049 = vmatprep.subr.bf16.mxu0 0
        %3050 = vmatpush2.bf16.msra.mxu0 0
        %3051 = vmatprep.subr.bf16.mxu0 0
        %3052 = vmatpush2.bf16.msra.mxu0 0
        %3053 = vmatprep.subr.bf16.mxu0 0
        %3054 = vmatpush2.bf16.msra.mxu0 0
        %3055 = vmatprep.mubr.bf16.mxu0 0
        %3056 = vmatmul.mubr.bf16.gmra.mxu0 %v2815
        %v3057 = vpop.f32.mrf.mxu0
        %v3058 = vadd.f32 0.0, %v3057
        %v3059 = vpop.f32.mrf.mxu0
        %v3060 = vadd.f32 0.0, %v3059
        %v3061 = vpop.f32.mrf.mxu0
        %v3062 = vpop.f32.mrf.mxu0
        %3063 = vdwg.mxu0
        %3064 = vmatprep.subr.bf16.mxu0 %v2990
        %3065 = vmatpush1.bf16.msra.mxu0 %v2989
        %3066 = vmatprep.subr.bf16.mxu0 %v2986
        %3067 = vmatpush1.bf16.msra.mxu0 %v2985
        %3068 = vmatprep.subr.bf16.mxu0 %v2982
        %3069 = vmatpush1.bf16.msra.mxu0 %v2981
        %3070 = vmatprep.subr.bf16.mxu0 %v2978
        %3071 = vmatpush1.bf16.msra.mxu0 %v2977
        %3072 = vmatprep.subr.bf16.mxu0 %v2974
        %3073 = vmatpush1.bf16.msra.mxu0 %v2973
        %3074 = vmatprep.subr.bf16.mxu0 %v2970
        %3075 = vmatpush1.bf16.msra.mxu0 %v2969
        %3076 = vmatprep.subr.bf16.mxu0 %v2966
        %3077 = vmatpush1.bf16.msra.mxu0 %v2965
        %3078 = vmatprep.subr.bf16.mxu0 %v2962
        %3079 = vmatpush1.bf16.msra.mxu0 %v2961
        %3080 = vmatprep.subr.bf16.mxu0 0
        %3081 = vmatpush2.bf16.msra.mxu0 0
        %3082 = vmatprep.subr.bf16.mxu0 0
        %3083 = vmatpush2.bf16.msra.mxu0 0
        %3084 = vmatprep.subr.bf16.mxu0 0
        %3085 = vmatpush2.bf16.msra.mxu0 0
        %3086 = vmatprep.subr.bf16.mxu0 0
        %3087 = vmatpush2.bf16.msra.mxu0 0
        %3088 = vmatprep.subr.bf16.mxu0 0
        %3089 = vmatpush2.bf16.msra.mxu0 0
        %3090 = vmatprep.subr.bf16.mxu0 0
        %3091 = vmatpush2.bf16.msra.mxu0 0
        %3092 = vmatprep.subr.bf16.mxu0 0
        %3093 = vmatpush2.bf16.msra.mxu0 0
        %3094 = vmatprep.subr.bf16.mxu0 0
        %3095 = vmatpush2.bf16.msra.mxu0 0
        %3096 = vmatprep.mubr.bf16.mxu0 0
        %3097 = vmatmul.mubr.bf16.gmra.mxu0 %v2815
        %v3098 = vpop.f32.mrf.mxu0
        %v3099 = vadd.f32 0.0, %v3098
        %v3100 = vpop.f32.mrf.mxu0
        %v3101 = vadd.f32 0.0, %v3100
        %v3102 = vpop.f32.mrf.mxu0
        %v3103 = vpop.f32.mrf.mxu0
        %3104 = vdwg.mxu0
        %v3105 = vadd.f32 %v2827, %v3058
        %v3106 = vadd.f32 %v2828, %v3060
        %v3107 = vadd.f32 %v2829, %v3099
        %v3108 = vadd.f32 %v2830, %v3101
        %v3109 = vmul.f32 %v3105, 0.5
        %v3110 = vtanh.pop %v3109
        %v3111 = vmul.f32 %v3110, 0.5
        %v3112 = vadd.f32 %v3111, 0.5
        %v3113 = vmul.f32 %v3106, 0.5
        %v3114 = vtanh.pop %v3113
        %v3115 = vmul.f32 %v3114, 0.5
        %v3116 = vadd.f32 %v3115, 0.5
        %v3117 = vtanh.pop %v3107
        %v3118 = vmul.f32 %v3108, 0.5
        %v3119 = vtanh.pop %v3118
        %v3120 = vmul.f32 %v3119, 0.5
        %v3121 = vadd.f32 %v3120, 0.5
        %v3122 = vmul.f32 %v3116, %v2812
        %v3123 = vmul.f32 %v3112, %v3117
        %v3124 = vadd.f32 %v3122, %v3123
        %v3125 = vtanh.pop %v3124
        %v3126 = vmul.f32 %v3121, %v3125
        %v3127 = vpack.c.bf16 %v3126, %v3126
        %s3128 = smul.addr %s2822, 4
        %s3129 = scalar_lea.vmem %s274, %s3128 [#allocation5]
        %3130 = vst [vmem:[%s3129] sm:$0xf] %v3127
        %s3131 = smul.u32 %s19, 4294967289
        %s3132 = sadd.s32 %s3131, 7
        %s3133 = smul.u32 %s3132, 8
        %s3134 = sshra.s32 %s3133, 3
        %s3135 = sand.u32 %s3133, 7
        %s3136 = smul.u32 %s3134, 4
        %s3137 = smul.addr %s3136, 8
        %s3138 = scalar_lea.vmem [#allocation4], %s3137
        %v3139 = vld [vmem:[%s3138] sm:$0xff]
        %v3140 = vld [vmem:[%s3138 + $0x8] sm:$0xff]
        %v3141 = vld [vmem:[%s3138 + $0x10] sm:$0xff]
        %v3142 = vld [vmem:[%s3138 + $0x18] sm:$0xff]
        %v3143 = vld [vmem:[%s299] sm:$0xff]
        %v3144 = vld [vmem:[%s299 + $0x8] sm:$0xff]
        %v3145 = vld [vmem:[%s299 + $0x10] sm:$0xff]
        %v3146 = vld [vmem:[%s299 + $0x18] sm:$0xff]
        %v3147 = vld [vmem:[%s299 + $0x20] sm:$0xff]
        %v3148 = vld [vmem:[%s299 + $0x28] sm:$0xff]
        %v3149 = vld [vmem:[%s299 + $0x30] sm:$0xff]
        %v3150 = vld [vmem:[%s299 + $0x38] sm:$0xff]
        %v3151 = vld [vmem:[%s299 + $0x40] sm:$0xff]
        %v3152 = vld [vmem:[%s299 + $0x48] sm:$0xff]
        %v3153 = vld [vmem:[%s299 + $0x50] sm:$0xff]
        %v3154 = vld [vmem:[%s299 + $0x58] sm:$0xff]
        %v3155 = vld [vmem:[%s299 + $0x60] sm:$0xff]
        %v3156 = vld [vmem:[%s299 + $0x68] sm:$0xff]
        %v3157 = vld [vmem:[%s299 + $0x70] sm:$0xff]
        %v3158 = vld [vmem:[%s299 + $0x78] sm:$0xff]
        %v3159 = vld [vmem:[%s299 + $0x80] sm:$0xff]
        %v3160 = vld [vmem:[%s299 + $0x88] sm:$0xff]
        %v3161 = vld [vmem:[%s299 + $0x90] sm:$0xff]
        %v3162 = vld [vmem:[%s299 + $0x98] sm:$0xff]
        %v3163 = vld [vmem:[%s299 + $0xa0] sm:$0xff]
        %v3164 = vld [vmem:[%s299 + $0xa8] sm:$0xff]
        %v3165 = vld [vmem:[%s299 + $0xb0] sm:$0xff]
        %v3166 = vld [vmem:[%s299 + $0xb8] sm:$0xff]
        %v3167 = vld [vmem:[%s299 + $0xc0] sm:$0xff]
        %v3168 = vld [vmem:[%s299 + $0xc8] sm:$0xff]
        %v3169 = vld [vmem:[%s299 + $0xd0] sm:$0xff]
        %v3170 = vld [vmem:[%s299 + $0xd8] sm:$0xff]
        %v3171 = vld [vmem:[%s299 + $0xe0] sm:$0xff]
        %v3172 = vld [vmem:[%s299 + $0xe8] sm:$0xff]
        %v3173 = vld [vmem:[%s299 + $0xf0] sm:$0xff]
        %v3174 = vld [vmem:[%s299 + $0xf8] sm:$0xff]
        %v3207 = vunpack.c.l.b16 %v3143
        %v3208 = vunpack.c.h.b16 %v3143
        %v3209 = vunpack.c.l.b16 %v3144
        %v3210 = vunpack.c.h.b16 %v3144
        %v3211 = vunpack.c.l.b16 %v3145
        %v3212 = vunpack.c.h.b16 %v3145
        %v3213 = vunpack.c.l.b16 %v3146
        %v3214 = vunpack.c.h.b16 %v3146
        %v3215 = vunpack.c.l.b16 %v3147
        %v3216 = vunpack.c.h.b16 %v3147
        %v3217 = vunpack.c.l.b16 %v3148
        %v3218 = vunpack.c.h.b16 %v3148
        %v3219 = vunpack.c.l.b16 %v3149
        %v3220 = vunpack.c.h.b16 %v3149
        %v3221 = vunpack.c.l.b16 %v3150
        %v3222 = vunpack.c.h.b16 %v3150
        %v3223 = vunpack.c.l.b16 %v3151
        %v3224 = vunpack.c.h.b16 %v3151
        %v3225 = vunpack.c.l.b16 %v3152
        %v3226 = vunpack.c.h.b16 %v3152
        %v3227 = vunpack.c.l.b16 %v3153
        %v3228 = vunpack.c.h.b16 %v3153
        %v3229 = vunpack.c.l.b16 %v3154
        %v3230 = vunpack.c.h.b16 %v3154
        %v3231 = vunpack.c.l.b16 %v3155
        %v3232 = vunpack.c.h.b16 %v3155
        %v3233 = vunpack.c.l.b16 %v3156
        %v3234 = vunpack.c.h.b16 %v3156
        %v3235 = vunpack.c.l.b16 %v3157
        %v3236 = vunpack.c.h.b16 %v3157
        %v3237 = vunpack.c.l.b16 %v3158
        %v3238 = vunpack.c.h.b16 %v3158
        %v3239 = vunpack.c.l.b16 %v3159
        %v3240 = vunpack.c.h.b16 %v3159
        %v3241 = vunpack.c.l.b16 %v3160
        %v3242 = vunpack.c.h.b16 %v3160
        %v3243 = vunpack.c.l.b16 %v3161
        %v3244 = vunpack.c.h.b16 %v3161
        %v3245 = vunpack.c.l.b16 %v3162
        %v3246 = vunpack.c.h.b16 %v3162
        %v3247 = vunpack.c.l.b16 %v3163
        %v3248 = vunpack.c.h.b16 %v3163
        %v3249 = vunpack.c.l.b16 %v3164
        %v3250 = vunpack.c.h.b16 %v3164
        %v3251 = vunpack.c.l.b16 %v3165
        %v3252 = vunpack.c.h.b16 %v3165
        %v3253 = vunpack.c.l.b16 %v3166
        %v3254 = vunpack.c.h.b16 %v3166
        %v3255 = vunpack.c.l.b16 %v3167
        %v3256 = vunpack.c.h.b16 %v3167
        %v3257 = vunpack.c.l.b16 %v3168
        %v3258 = vunpack.c.h.b16 %v3168
        %v3259 = vunpack.c.l.b16 %v3169
        %v3260 = vunpack.c.h.b16 %v3169
        %v3261 = vunpack.c.l.b16 %v3170
        %v3262 = vunpack.c.h.b16 %v3170
        %v3263 = vunpack.c.l.b16 %v3171
        %v3264 = vunpack.c.h.b16 %v3171
        %v3265 = vunpack.c.l.b16 %v3172
        %v3266 = vunpack.c.h.b16 %v3172
        %v3267 = vunpack.c.l.b16 %v3173
        %v3268 = vunpack.c.h.b16 %v3173
        %v3269 = vunpack.c.l.b16 %v3174
        %v3270 = vunpack.c.h.b16 %v3174
        %v3271 = vpack.c.b16 %v3211, %v3207
        %v3272 = vpack.c.b16 %v3212, %v3208
        %v3273 = vpack.c.b16 %v3213, %v3209
        %v3274 = vpack.c.b16 %v3214, %v3210
        %v3275 = vpack.c.b16 %v3219, %v3215
        %v3276 = vpack.c.b16 %v3220, %v3216
        %v3277 = vpack.c.b16 %v3221, %v3217
        %v3278 = vpack.c.b16 %v3222, %v3218
        %v3279 = vpack.c.b16 %v3227, %v3223
        %v3280 = vpack.c.b16 %v3228, %v3224
        %v3281 = vpack.c.b16 %v3229, %v3225
        %v3282 = vpack.c.b16 %v3230, %v3226
        %v3283 = vpack.c.b16 %v3235, %v3231
        %v3284 = vpack.c.b16 %v3236, %v3232
        %v3285 = vpack.c.b16 %v3237, %v3233
        %v3286 = vpack.c.b16 %v3238, %v3234
        %v3287 = vpack.c.b16 %v3243, %v3239
        %v3288 = vpack.c.b16 %v3244, %v3240
        %v3289 = vpack.c.b16 %v3245, %v3241
        %v3290 = vpack.c.b16 %v3246, %v3242
        %v3291 = vpack.c.b16 %v3251, %v3247
        %v3292 = vpack.c.b16 %v3252, %v3248
        %v3293 = vpack.c.b16 %v3253, %v3249
        %v3294 = vpack.c.b16 %v3254, %v3250
        %v3295 = vpack.c.b16 %v3259, %v3255
        %v3296 = vpack.c.b16 %v3260, %v3256
        %v3297 = vpack.c.b16 %v3261, %v3257
        %v3298 = vpack.c.b16 %v3262, %v3258
        %v3299 = vpack.c.b16 %v3267, %v3263
        %v3300 = vpack.c.b16 %v3268, %v3264
        %v3301 = vpack.c.b16 %v3269, %v3265
        %v3302 = vpack.c.b16 %v3270, %v3266
        %3335 = vmatprep.subr.bf16.mxu0 %v3300
        %3336 = vmatpush1.bf16.msra.mxu0 %v3299
        %3337 = vmatprep.subr.bf16.mxu0 %v3296
        %3338 = vmatpush1.bf16.msra.mxu0 %v3295
        %3339 = vmatprep.subr.bf16.mxu0 %v3292
        %3340 = vmatpush1.bf16.msra.mxu0 %v3291
        %3341 = vmatprep.subr.bf16.mxu0 %v3288
        %3342 = vmatpush1.bf16.msra.mxu0 %v3287
        %3343 = vmatprep.subr.bf16.mxu0 %v3284
        %3344 = vmatpush1.bf16.msra.mxu0 %v3283
        %3345 = vmatprep.subr.bf16.mxu0 %v3280
        %3346 = vmatpush1.bf16.msra.mxu0 %v3279
        %3347 = vmatprep.subr.bf16.mxu0 %v3276
        %3348 = vmatpush1.bf16.msra.mxu0 %v3275
        %3349 = vmatprep.subr.bf16.mxu0 %v3272
        %3350 = vmatpush1.bf16.msra.mxu0 %v3271
        %3351 = vmatprep.subr.bf16.mxu0 0
        %3352 = vmatpush2.bf16.msra.mxu0 0
        %3353 = vmatprep.subr.bf16.mxu0 0
        %3354 = vmatpush2.bf16.msra.mxu0 0
        %3355 = vmatprep.subr.bf16.mxu0 0
        %3356 = vmatpush2.bf16.msra.mxu0 0
        %3357 = vmatprep.subr.bf16.mxu0 0
        %3358 = vmatpush2.bf16.msra.mxu0 0
        %3359 = vmatprep.subr.bf16.mxu0 0
        %3360 = vmatpush2.bf16.msra.mxu0 0
        %3361 = vmatprep.subr.bf16.mxu0 0
        %3362 = vmatpush2.bf16.msra.mxu0 0
        %3363 = vmatprep.subr.bf16.mxu0 0
        %3364 = vmatpush2.bf16.msra.mxu0 0
        %3365 = vmatprep.subr.bf16.mxu0 0
        %3366 = vmatpush2.bf16.msra.mxu0 0
        %3367 = vmatprep.mubr.bf16.mxu0 0
        %3368 = vmatmul.mubr.bf16.gmra.mxu0 %v3127
        %v3369 = vpop.f32.mrf.mxu0
        %v3370 = vadd.f32 0.0, %v3369
        %v3371 = vpop.f32.mrf.mxu0
        %v3372 = vadd.f32 0.0, %v3371
        %v3373 = vpop.f32.mrf.mxu0
        %v3374 = vpop.f32.mrf.mxu0
        %3375 = vdwg.mxu0
        %3376 = vmatprep.subr.bf16.mxu0 %v3302
        %3377 = vmatpush1.bf16.msra.mxu0 %v3301
        %3378 = vmatprep.subr.bf16.mxu0 %v3298
        %3379 = vmatpush1.bf16.msra.mxu0 %v3297
        %3380 = vmatprep.subr.bf16.mxu0 %v3294
        %3381 = vmatpush1.bf16.msra.mxu0 %v3293
        %3382 = vmatprep.subr.bf16.mxu0 %v3290
        %3383 = vmatpush1.bf16.msra.mxu0 %v3289
        %3384 = vmatprep.subr.bf16.mxu0 %v3286
        %3385 = vmatpush1.bf16.msra.mxu0 %v3285
        %3386 = vmatprep.subr.bf16.mxu0 %v3282
        %3387 = vmatpush1.bf16.msra.mxu0 %v3281
        %3388 = vmatprep.subr.bf16.mxu0 %v3278
        %3389 = vmatpush1.bf16.msra.mxu0 %v3277
        %3390 = vmatprep.subr.bf16.mxu0 %v3274
        %3391 = vmatpush1.bf16.msra.mxu0 %v3273
        %3392 = vmatprep.subr.bf16.mxu0 0
        %3393 = vmatpush2.bf16.msra.mxu0 0
        %3394 = vmatprep.subr.bf16.mxu0 0
        %3395 = vmatpush2.bf16.msra.mxu0 0
        %3396 = vmatprep.subr.bf16.mxu0 0
        %3397 = vmatpush2.bf16.msra.mxu0 0
        %3398 = vmatprep.subr.bf16.mxu0 0
        %3399 = vmatpush2.bf16.msra.mxu0 0
        %3400 = vmatprep.subr.bf16.mxu0 0
        %3401 = vmatpush2.bf16.msra.mxu0 0
        %3402 = vmatprep.subr.bf16.mxu0 0
        %3403 = vmatpush2.bf16.msra.mxu0 0
        %3404 = vmatprep.subr.bf16.mxu0 0
        %3405 = vmatpush2.bf16.msra.mxu0 0
        %3406 = vmatprep.subr.bf16.mxu0 0
        %3407 = vmatpush2.bf16.msra.mxu0 0
        %3408 = vmatprep.mubr.bf16.mxu0 0
        %3409 = vmatmul.mubr.bf16.gmra.mxu0 %v3127
        %v3410 = vpop.f32.mrf.mxu0
        %v3411 = vadd.f32 0.0, %v3410
        %v3412 = vpop.f32.mrf.mxu0
        %v3413 = vadd.f32 0.0, %v3412
        %v3414 = vpop.f32.mrf.mxu0
        %v3415 = vpop.f32.mrf.mxu0
        %3416 = vdwg.mxu0
        %v3417 = vadd.f32 %v3139, %v3370
        %v3418 = vadd.f32 %v3140, %v3372
        %v3419 = vadd.f32 %v3141, %v3411
        %v3420 = vadd.f32 %v3142, %v3413
        %v3421 = vmul.f32 %v3417, 0.5
        %v3422 = vtanh.pop %v3421
        %v3423 = vmul.f32 %v3422, 0.5
        %v3424 = vadd.f32 %v3423, 0.5
        %v3425 = vmul.f32 %v3418, 0.5
        %v3426 = vtanh.pop %v3425
        %v3427 = vmul.f32 %v3426, 0.5
        %v3428 = vadd.f32 %v3427, 0.5
        %v3429 = vtanh.pop %v3419
        %v3430 = vmul.f32 %v3420, 0.5
        %v3431 = vtanh.pop %v3430
        %v3432 = vmul.f32 %v3431, 0.5
        %v3433 = vadd.f32 %v3432, 0.5
        %v3434 = vmul.f32 %v3428, %v3124
        %v3435 = vmul.f32 %v3424, %v3429
        %v3436 = vadd.f32 %v3434, %v3435
        %v3437 = vtanh.pop %v3436
        %v3438 = vmul.f32 %v3433, %v3437
        %v3439 = vpack.c.bf16 %v3438, %v3438
        %s3440 = smul.addr %s3134, 4
        %s3441 = scalar_lea.vmem %s274, %s3440 [#allocation5]
        %3442 = vst [vmem:[%s3441] sm:$0xf] %v3439
        %3443 = vst [vmem:[#allocation2] sm:$0xff] %v3438
        %3444 = vst [vmem:[#allocation3] sm:$0xff] %v3436
        %s3445 = sand.u32 %s157, 1
        %s3446 = sand.u32 %s157, 1
        %s3447 = smul.addr %s3446, 32
        %s3448 = scalar_lea.vmem [#allocation5], %s3447
        // Predicated region
        $region41: #{_lambda_.3} parent=35 // pred_check
          %p3449 = pneg %p167
        $region42: #{_lambda_.3} parent=35 // pred_check_branch
          %3451 = sbr.rel (%p3449) target = $region44
        $region43: #{_lambda_.3} parent=35 // pred_region
          %s3452 = smul.u32 %s20, 2
          %s3453 = ssub.s32 0, %s3452
          %s3454 = smul.u32 %s19, %s3453
          %s3455 = sadd.s32 %s20, %s3454
          %s3456 = smul.u32 8, %s3455
          %s3457 = smul.addr %s3456, 2
          %s3458 = sadd.s32 %s19, %s3457
          %s3459 = smul.addr %s3458, 4
          %s3460 = scalar_lea.vmem %s4, %s3459
          // Predicated region
          $region45: #{_lambda_.3} parent=43 // pred_check
            _
          $region46: #{_lambda_.3} parent=43 // pred_check_branch
            %3462 = sbr.rel (0) target = $region48
          $region47: #{_lambda_.3} parent=43 // pred_region
            // Predicated region
            $region49: #{_lambda_.3} parent=47 // pred_check
              _
            $region50: #{_lambda_.3} parent=47 // pred_check_branch
              %3464 = sbr.rel target = $region52
            $region51: #{_lambda_.3} parent=47 // pred_region
              // Predicated region
              $region64: #{_lambda_.3} parent=51 // pred_check
                _
              $region65: #{_lambda_.3} parent=51 // pred_check_branch
                %3494 = sbr.rel (0) target = $region67
              $region66: #{_lambda_.3} parent=51 // pred_region
                loop: start=0, step=1, limit=1
                $region68: #{_lambda_.3} parent=66 // loop_pre_header
                  _
                $region69: #{_lambda_.3} parent=66 // loop_header
                  %s3496 = sphi 0, %s3500
                  %p3497 = scmp.ge.s32.totalorder %s3496, 1
                  %s3501 = sphi %s3448, %s3448
                  %s3502 = sphi %s3460, %s3460
                $region70: #{_lambda_.3} parent=66 // loop_header_branch
                  %3499 = sbr.rel (%p3497) target = $region74
                $region71: #{_lambda_.3} parent=66 // loop_body
                  _
                $region72: #{_lambda_.3} parent=66 // loop_footer
                  %s3500 = sadd.s32 1, %s3496
                $region73: #{_lambda_.3} parent=66 // loop_footer_branch
                  %3495 = sbr.rel target = $region69
                $region74: #{_lambda_.3} parent=66 // loop_exit
                  _
                %s3504 = ssub.s32 16, 1
                loop: start=0, step=1, limit=1
                $region75: #{_lambda_.3} parent=66 // loop_pre_header
                  _
                $region76: #{_lambda_.3} parent=66 // loop_header
                  %s3506 = sphi 0, %s3510
                  %p3507 = scmp.ge.s32.totalorder %s3506, 1
                  %s3511 = sphi %s3448, %s3448
                  %s3512 = sphi %s3460, %s3460
                $region77: #{_lambda_.3} parent=66 // loop_header_branch
                  %3509 = sbr.rel (%p3507) target = $region81
                $region78: #{_lambda_.3} parent=66 // loop_body
                  %v3513 = vld [vmem:[%s3511] sm:%s3504]
                  %3514 = vst [vmem:[%s3512] sm:%s3504] %v3513
                  %v3515 = vld [vmem:[%s3511 + $0x4] sm:%s3504]
                  %3516 = vst [vmem:[%s3512 + $0x8] sm:%s3504] %v3515
                  %v3517 = vld [vmem:[%s3511 + $0x8] sm:%s3504]
                  %3518 = vst [vmem:[%s3512 + $0x10] sm:%s3504] %v3517
                  %v3519 = vld [vmem:[%s3511 + $0xc] sm:%s3504]
                  %3520 = vst [vmem:[%s3512 + $0x18] sm:%s3504] %v3519
                  %v3521 = vld [vmem:[%s3511 + $0x10] sm:%s3504]
                  %3522 = vst [vmem:[%s3512 + $0x20] sm:%s3504] %v3521
                  %v3523 = vld [vmem:[%s3511 + $0x14] sm:%s3504]
                  %3524 = vst [vmem:[%s3512 + $0x28] sm:%s3504] %v3523
                  %v3525 = vld [vmem:[%s3511 + $0x18] sm:%s3504]
                  %3526 = vst [vmem:[%s3512 + $0x30] sm:%s3504] %v3525
                  %v3527 = vld [vmem:[%s3511 + $0x1c] sm:%s3504]
                  %3528 = vst [vmem:[%s3512 + $0x38] sm:%s3504] %v3527
                $region79: #{_lambda_.3} parent=66 // loop_footer
                  %s3510 = sadd.s32 1, %s3506
                $region80: #{_lambda_.3} parent=66 // loop_footer_branch
                  %3505 = sbr.rel target = $region76
                $region81: #{_lambda_.3} parent=66 // loop_exit
                  _
              $region67: #{_lambda_.3} parent=51 // pred_fallthru
                _
            $region52: #{_lambda_.3} parent=47 // pred_fallthru
              _
            // Predicated region
            $region53: #{_lambda_.3} parent=47 // pred_check
              _
            $region54: #{_lambda_.3} parent=47 // pred_check_branch
              %3466 = sbr.rel (0) target = $region56
            $region55: #{_lambda_.3} parent=47 // pred_region
              %s3468 = ssub.s32 16, 1
              loop: start=0, step=1, limit=1
              $region57: #{_lambda_.3} parent=55 // loop_pre_header
                _
              $region58: #{_lambda_.3} parent=55 // loop_header
                %s3470 = sphi 0, %s3474
                %p3471 = scmp.ge.s32.totalorder %s3470, 1
                %s3475 = sphi %s3448, %s3448
                %s3476 = sphi %s3460, %s3460
              $region59: #{_lambda_.3} parent=55 // loop_header_branch
                %3473 = sbr.rel (%p3471) target = $region63
              $region60: #{_lambda_.3} parent=55 // loop_body
                %v3477 = vld [vmem:[%s3475] sm:%s3468]
                %3478 = vst [vmem:[%s3476] sm:%s3468] %v3477
                %v3479 = vld [vmem:[%s3475 + $0x4] sm:%s3468]
                %3480 = vst [vmem:[%s3476 + $0x8] sm:%s3468] %v3479
                %v3481 = vld [vmem:[%s3475 + $0x8] sm:%s3468]
                %3482 = vst [vmem:[%s3476 + $0x10] sm:%s3468] %v3481
                %v3483 = vld [vmem:[%s3475 + $0xc] sm:%s3468]
                %3484 = vst [vmem:[%s3476 + $0x18] sm:%s3468] %v3483
                %v3485 = vld [vmem:[%s3475 + $0x10] sm:%s3468]
                %3486 = vst [vmem:[%s3476 + $0x20] sm:%s3468] %v3485
                %v3487 = vld [vmem:[%s3475 + $0x14] sm:%s3468]
                %3488 = vst [vmem:[%s3476 + $0x28] sm:%s3468] %v3487
                %v3489 = vld [vmem:[%s3475 + $0x18] sm:%s3468]
                %3490 = vst [vmem:[%s3476 + $0x30] sm:%s3468] %v3489
                %v3491 = vld [vmem:[%s3475 + $0x1c] sm:%s3468]
                %3492 = vst [vmem:[%s3476 + $0x38] sm:%s3468] %v3491
              $region61: #{_lambda_.3} parent=55 // loop_footer
                %s3474 = sadd.s32 1, %s3470
              $region62: #{_lambda_.3} parent=55 // loop_footer_branch
                %3469 = sbr.rel target = $region58
              $region63: #{_lambda_.3} parent=55 // loop_exit
                _
            $region56: #{_lambda_.3} parent=47 // pred_fallthru
              _
          $region48: #{_lambda_.3} parent=43 // pred_fallthru
            _
          %3529 = vnop
        $region44: #{_lambda_.3} parent=35 // pred_fallthru
          _
      $region36: #{_lambda_.3} parent=5 // pred_fallthru
        _
      %p3530 = scmp.le.s32.totalorder 2, %s10
      // Predicated region
      $region82: #{_lambda_.3} parent=5 // pred_check
        %p3531 = pneg %p3530
      $region83: #{_lambda_.3} parent=5 // pred_check_branch
        %3533 = sbr.rel (%p3531) target = $region85
      $region84: #{_lambda_.3} parent=5 // pred_region
        %s3534 = ssub.s32 %s10, 2
        // Predicated region
        $region86: #{_lambda_.3} parent=84 // pred_check
          %p3535 = pneg %p173
        $region87: #{_lambda_.3} parent=84 // pred_check_branch
          %3537 = sbr.rel (%p3535) target = $region89
        $region88: #{_lambda_.3} parent=84 // pred_region
          %s3538 = sand.u32 %s158, 1
          %s3539 = sand.u32 %s158, 1
          %s3540 = smul.addr %s3539, 32
          %s3541 = scalar_lea.vmem [#allocation5], %s3540
        $region89: #{_lambda_.3} parent=84 // pred_fallthru
          _
      $region85: #{_lambda_.3} parent=5 // pred_fallthru
        _
    $region6: #{_lambda_.3} parent=1 // loop_footer
      %s14 = sadd.s32 1, %s10
    $region7: #{_lambda_.3} parent=1 // loop_footer_branch
      %9 = sbr.rel target = $region3
    $region8: #{_lambda_.3} parent=1 // loop_exit
      _

</llo_original>
